<compile_context>
chip_gen: v6e
topology: v6e:2x2x1
jax: 0.10.0
libtpu: 0.0.40
codegen_flags: <defaults>
</compile_context>

<pallas_src>
import functools

import jax
import jax.numpy as jnp
from jax.experimental import pallas as pl
from jax.experimental.pallas import tpu as pltpu


def linear_kernel(x_ref, w_ref, b_ref, o_ref, *, use_bf16_mxu=False):
    """K-reduction matmul with bias fused into the accumulator init.

    Grid = (N // tn, K // tk); axis 1 (K) is the innermost reduction axis and
    the output tile (constant block index along K) is the resident accumulator.
    """
    k = pl.program_id(1)

    x = x_ref[...]
    w = w_ref[...]
    if use_bf16_mxu:
        x = x.astype(jnp.bfloat16)
        w = w.astype(jnp.bfloat16)
    prod = jnp.dot(x, w, preferred_element_type=jnp.float32)

    @pl.when(k == 0)
    def _():
        # Init accumulator with (first partial product + bias): no separate
        # zero-init pass and no bias epilogue.  b_ref is (1, tn) -> broadcasts
        # over the M rows.
        o_ref[...] = (prod + b_ref[...]).astype(o_ref.dtype)

    @pl.when(k != 0)
    def _():
        o_ref[...] += prod.astype(o_ref.dtype)


def _tensorcores_per_chip():
    """Best-effort detection: v7x has 2 TensorCores per chip, v5e/v6e have 1."""
    try:
        kind = jax.devices()[0].device_kind.lower()
    except Exception:
        return 1
    if "v7" in kind or "7x" in kind:
        return 2
    return 1


def linear_pallas(x, w, b, *, tn=None, tk=768, use_bf16_mxu=False):
    """x: (M, K) f32, w: (K, N) f32, b: (N,) f32 -> (M, N) f32."""
    M, K = x.shape
    K2, N = w.shape
    assert K == K2 and b.shape == (N,)

    if tn is None:
        # Split N only when there are 2 TensorCores to shard across (v7x);
        # on single-TC parts keep the whole N so X is streamed exactly once.
        if _tensorcores_per_chip() >= 2 and (N // 2) % 128 == 0:
            tn = N // 2
        else:
            tn = N

    assert N % tn == 0 and K % tk == 0
    assert M % 8 == 0 and tn % 128 == 0 and tk % 128 == 0

    n_splits = N // tn
    b2d = b.reshape(1, N)

    cost = pl.CostEstimate(
        flops=2 * M * K * N,
        transcendentals=0,
        # X is streamed once per N slab; W, bias and output move once.
        bytes_accessed=(M * K * n_splits + K * N + N + M * N) * 4,
    )

    kernel = functools.partial(linear_kernel, use_bf16_mxu=use_bf16_mxu)

    return pl.pallas_call(
        kernel,
        out_shape=jax.ShapeDtypeStruct((M, N), x.dtype),
        grid_spec=pltpu.PrefetchScalarGridSpec(
            num_scalar_prefetch=0,
            grid=(n_splits, K // tk),
            in_specs=[
                pl.BlockSpec((M, tk), lambda j, k: (0, k)),   # x: full rows, K-chunk
                pl.BlockSpec((tk, tn), lambda j, k: (k, j)),  # w: K-chunk, N-slab
                pl.BlockSpec((1, tn), lambda j, k: (0, j)),   # bias: N-slab (resident per j)
            ],
            out_specs=pl.BlockSpec((M, tn), lambda j, k: (0, j)),
        ),
        compiler_params=pltpu.CompilerParams(
            dimension_semantics=("parallel", "arbitrary"),
        ),
        cost_estimate=cost,
    )(x, w, b2d)


class MPallas:
    """Mirror of the PyTorch module M (Linear(3072, 768, bias=True))."""

    def __init__(self, key, in_features=3072, out_features=768, dtype=jnp.float32):
        self.in_features = in_features
        self.out_features = out_features
        k_w, k_b = jax.random.split(key)
        bound = 1.0 / (in_features ** 0.5)
        # Store weight as (K, N) so the kernel computes x @ w directly.
        self.weight = jax.random.uniform(
            k_w, (in_features, out_features), dtype, minval=-bound, maxval=bound
        )
        self.bias = jax.random.uniform(
            k_b, (out_features,), dtype, minval=-bound, maxval=bound
        )

    def __call__(self, x433):
        # x433: (B, S, K)
        B, S, K = x433.shape
        x2d = x433.reshape(B * S, K)
        y2d = linear_pallas(x2d, self.weight, self.bias)
        return y2d.reshape(B, S, self.out_features)


if __name__ == "__main__":
    key = jax.random.PRNGKey(0)
    k_x, k_params = jax.random.split(key)

    # Input matching the module's forward: torch.Size([1, 384, 3072])
    x433 = jax.random.normal(k_x, (1, 384, 3072), dtype=jnp.float32)

    model = MPallas(k_params)
    y = model(x433)
    y = jax.block_until_ready(y)

    # Cross-check against plain JAX reference
    y_ref = x433 @ model.weight + model.bias
    assert y.shape == (1, 384, 768), y.shape
    assert jnp.allclose(y, y_ref, atol=1e-4, rtol=1e-4), "mismatch vs reference"

    print("KERNEL_OK")
</pallas_src>

<mosaic_0001>
module attributes {stable_mosaic.version = 11 : i64} {
  func.func @linear_kernel(%arg0: i32, %arg1: i32, %arg2: memref<384x768xf32, #tpu.memory_space<vmem>>, %arg3: memref<768x768xf32, #tpu.memory_space<vmem>>, %arg4: memref<1x768xf32, #tpu.memory_space<vmem>>, %arg5: memref<384x768xf32, #tpu.memory_space<vmem>>) attributes {dimension_semantics = [#tpu.dimension_semantics<parallel>, #tpu.dimension_semantics<arbitrary>], iteration_bounds = array<i64: 1, 4>, scalar_prefetch = 0 : i64, scratch_operands = 0 : i64, tpu.core_type = #tpu.core_type<tc>, window_params = [{transform_indices = @transform_0, window_bounds = array<i64: 384, 768>}, {transform_indices = @transform_1, window_bounds = array<i64: 768, 768>}, {transform_indices = @transform_2, window_bounds = array<i64: 1, 768>}, {transform_indices = @transform_3, window_bounds = array<i64: 384, 768>}]} {
    %c0 = arith.constant 0 : index
    %c0_0 = arith.constant 0 : index
    %0 = vector.load %arg2[%c0, %c0_0] : memref<384x768xf32, #tpu.memory_space<vmem>>, vector<384x768xf32>
    %c0_1 = arith.constant 0 : index
    %c0_2 = arith.constant 0 : index
    %1 = vector.load %arg3[%c0_1, %c0_2] : memref<768x768xf32, #tpu.memory_space<vmem>>, vector<768x768xf32>
    %cst = arith.constant dense<0.000000e+00> : vector<384x768xf32>
    %2 = tpu.matmul %0, %1, %cst {dimension_numbers = #tpu.dot_dimension_numbers<[1], [0], [0], [1], [0, 0, 1, 1], [], []>} : vector<384x768xf32>, vector<768x768xf32>, vector<384x768xf32> -> vector<384x768xf32>
    %c0_i32 = arith.constant 0 : i32
    %3 = arith.cmpi eq, %arg1, %c0_i32 : i32
    %4 = arith.extui %3 : i1 to i32
    %c0_i32_3 = arith.constant 0 : i32
    %5 = arith.cmpi ne, %4, %c0_i32_3 : i32
    scf.if %5 {
      %c0_6 = arith.constant 0 : index
      %c0_7 = arith.constant 0 : index
      %9 = vector.load %arg4[%c0_6, %c0_7] : memref<1x768xf32, #tpu.memory_space<vmem>>, vector<1x768xf32>
      %10 = vector.broadcast %9 : vector<1x768xf32> to vector<384x768xf32>
      %11 = arith.addf %2, %10 : vector<384x768xf32>
      %c0_8 = arith.constant 0 : index
      %c0_9 = arith.constant 0 : index
      %12 = vector.load %arg5[%c0_8, %c0_9] : memref<384x768xf32, #tpu.memory_space<vmem>>, vector<384x768xf32>
      tpu.vector_store %arg5[%c0_8, %c0_9], %11 {strides = array<i32>} : memref<384x768xf32, #tpu.memory_space<vmem>>, vector<384x768xf32>,
    } else {
    }
    %c0_i32_4 = arith.constant 0 : i32
    %6 = arith.cmpi ne, %arg1, %c0_i32_4 : i32
    %7 = arith.extui %6 : i1 to i32
    %c0_i32_5 = arith.constant 0 : i32
    %8 = arith.cmpi ne, %7, %c0_i32_5 : i32
    scf.if %8 {
      %c0_6 = arith.constant 0 : index
      %c0_7 = arith.constant 0 : index
      %9 = vector.load %arg5[%c0_6, %c0_7] : memref<384x768xf32, #tpu.memory_space<vmem>>, vector<384x768xf32>
      %10 = arith.addf %9, %2 : vector<384x768xf32>
      %c0_8 = arith.constant 0 : index
      %c0_9 = arith.constant 0 : index
      %11 = vector.load %arg5[%c0_8, %c0_9] : memref<384x768xf32, #tpu.memory_space<vmem>>, vector<384x768xf32>
      tpu.vector_store %arg5[%c0_8, %c0_9], %10 {strides = array<i32>} : memref<384x768xf32, #tpu.memory_space<vmem>>, vector<384x768xf32>,
    } else {
    }
    return
  }
  func.func @transform_0(%arg0: i32, %arg1: i32) -> (i32, i32) {
    %c0_i32 = arith.constant 0 : i32
    %c0_i32_0 = arith.constant 0 : i32
    return %c0_i32, %arg1 : i32, i32
  }
  func.func @transform_1(%arg0: i32, %arg1: i32) -> (i32, i32) {
    %c0_i32 = arith.constant 0 : i32
    return %arg1, %arg0 : i32, i32
  }
  func.func @transform_2(%arg0: i32, %arg1: i32) -> (i32, i32) {
    %c0_i32 = arith.constant 0 : i32
    %c0_i32_0 = arith.constant 0 : i32
    return %c0_i32, %arg0 : i32, i32
  }
  func.func @transform_3(%arg0: i32, %arg1: i32) -> (i32, i32) {
    %c0_i32 = arith.constant 0 : i32
    %c0_i32_0 = arith.constant 0 : i32
    return %c0_i32, %arg0 : i32, i32
  }
}

</mosaic_0001>

<llo_original>
// kernel: tpu_custom_call.1
$region0: #{tpu_custom_call.1}
  #allocation0 [shape = 'u32[]', space=smem, size = 0x4, offset = 0x4, fixed_abs, tag = 'smem constant byte address 0x4 - core index']
  #allocation1 [shape = 'u32[144,128]{1,0:T(1,128)}', space=vmem, size = 0x12000, scoped, tag = 'internal scratch']
  %s0 = inlined_call_operand.hbm [shape: f32[384,3072], index: 0, kind: input, shape index: {}]
  %s1 = inlined_call_operand.hbm [shape: f32[3072,768], index: 1, kind: input, shape index: {}]
  %s2 = inlined_call_operand.hbm [shape: f32[1,768], index: 2, kind: input, shape index: {}]
  %s3 = inlined_call_operand.hbm [shape: f32[384,768], index: 3, kind: output, shape index: {}]
  %s4 = sld [smem:[#allocation0]]
  $region65: #{tpu_custom_call.1} parent=0
    _
  %s6 = ssub.s32 1, %s4
  %s7 = scalar_select 0, %s6, %s4
  $region1: #{tpu_custom_call.1} parent=0
    #allocation2 [shape = 'u8[2359296]{0}', space=vmem, size = 0x240000, scoped, tag = 'input window, operand 0']
    #allocation3 [shape = 's32[2]{0}', space=sflag, size = 0x8, scoped, tag = 'scoped memory for tpu_custom_call.1']
    #allocation4 [shape = 's32[2]{0}', space=sflag, size = 0x8, scoped, tag = 'scoped memory for tpu_custom_call.1']
    #allocation5 [shape = 'u8[4718592]{0}', space=vmem, size = 0x480000, scoped, tag = 'input window, operand 1']
    #allocation6 [shape = 's32[2]{0}', space=sflag, size = 0x8, scoped, tag = 'scoped memory for tpu_custom_call.1']
    #allocation7 [shape = 'u8[3072]{0}', space=vmem, size = 0xc00, scoped, tag = 'input window, operand 2, single buffered']
    #allocation8 [shape = 'u8[1179648]{0}', space=vmem, size = 0x120000, scoped, tag = 'output window, operand 0, single buffered']
    %8 = vsyncpa [#allocation3], 0
    %s9 = scalar_lea.sflag [#allocation3], 1
    %10 = vsyncpa %s9, 0
    %11 = vsyncpa [#allocation6], 0
    %s12 = scalar_lea.sflag [#allocation6], 1
    %13 = vsyncpa %s12, 0
    %14 = vsyncpa [#allocation4], 0
    loop: start=0, step=1, limit=6
    $region2: #{tpu_custom_call.1} parent=1 // loop_pre_header
      _
    $region3: #{tpu_custom_call.1} parent=1 // loop_header
      %s16 = sphi 0, %s20
      %p17 = scmp.ge.s32.totalorder %s16, 6
      %s23 = sphi 0, %s35
      %s24 = sphi 0, %s31
      %s25 = sphi 0, %s23
      %s26 = sphi 0, %s24
      %s27 = sphi 0, %s25
      %s28 = sphi 0, %s26
      %s38 = sphi 0, %s40
      %s41 = sphi 0, %s38
      %s42 = sphi 0, %s41
      %s58 = sphi 0, %s42
      %s66 = sphi 0, %s68
      %s69 = sphi 0, %s66
      %s70 = sphi 0, %s69
      %s86 = sphi 0, %s70
      %s92 = sphi 0, %s94
      %s95 = sphi 0, %s92
      %s96 = sphi 0, %s95
      %s112 = sphi 0, %s96
      %s118 = sphi 0, %s120
      %s121 = sphi 0, %s118
      %s122 = sphi 0, %s121
      %s138 = sphi 0, %s122
    $region4: #{tpu_custom_call.1} parent=1 // loop_header_branch
      %19 = sbr.rel (%p17) target = $region8
    $region5: #{tpu_custom_call.1} parent=1 // loop_body
      %s21 = ssub.s32 %s16, 1
      %s22 = ssub.s32 %s16, 2
      %s29 = sadd.s32 1, %s24
      %p30 = scmp.ge.s32.totalorder %s29, 4
      %s31 = scalar_select %p30, 0, %s29
      %s32 = sadd.s32 1, %s23
      %s33 = scalar_select %p30, %s32, %s23
      %p34 = scmp.ge.s32.totalorder %s33, 1
      %s35 = scalar_select %p34, 0, %s33
      %s36 = ssub.s32 %s24, %s31
      %p37 = scmp.eq.s32.totalorder %s36, 0
      %s39 = sadd.s32 %s38, 1
      %s40 = scalar_select %p37, %s38, %s39
      %p43 = pneg %p37
      %p44 = scmp.eq.s32.totalorder %s16, 3
      %p45 = por %p43, %p44
      %p46 = scmp.ne.s32.totalorder %s38, %s41
      %p47 = scmp.eq.s32.totalorder %s16, 0
      %p48 = por %p46, %p47
      %p49 = scmp.ne.s32.totalorder %s38, %s41
      %p50 = scmp.eq.s32.totalorder %s21, 3
      %p51 = por %p49, %p50
      %p52 = scmp.ne.s32.totalorder %s41, %s42
      %p53 = scmp.eq.s32.totalorder %s21, 0
      %p54 = por %p52, %p53
      %p55 = scmp.ne.s32.totalorder %s41, %s42
      %p56 = scmp.eq.s32.totalorder %s22, 3
      %p57 = por %p55, %p56
      %p59 = scmp.ne.s32.totalorder %s42, %s58
      %p60 = scmp.eq.s32.totalorder %s22, 0
      %p61 = por %p59, %p60
      %s62 = ssub.s32 %s24, %s31
      %s63 = ssub.s32 %s23, %s35
      %s64 = sor.u32 %s62, %s63
      %p65 = scmp.eq.s32.totalorder %s64, 0
      %s67 = sadd.s32 %s66, 1
      %s68 = scalar_select %p65, %s66, %s67
      %p71 = pneg %p65
      %p72 = scmp.eq.s32.totalorder %s16, 3
      %p73 = por %p71, %p72
      %p74 = scmp.ne.s32.totalorder %s66, %s69
      %p75 = scmp.eq.s32.totalorder %s16, 0
      %p76 = por %p74, %p75
      %p77 = scmp.ne.s32.totalorder %s66, %s69
      %p78 = scmp.eq.s32.totalorder %s21, 3
      %p79 = por %p77, %p78
      %p80 = scmp.ne.s32.totalorder %s69, %s70
      %p81 = scmp.eq.s32.totalorder %s21, 0
      %p82 = por %p80, %p81
      %p83 = scmp.ne.s32.totalorder %s69, %s70
      %p84 = scmp.eq.s32.totalorder %s22, 3
      %p85 = por %p83, %p84
      %p87 = scmp.ne.s32.totalorder %s70, %s86
      %p88 = scmp.eq.s32.totalorder %s22, 0
      %p89 = por %p87, %p88
      %s90 = ssub.s32 %s23, %s35
      %p91 = scmp.eq.s32.totalorder %s90, 0
      %s93 = sadd.s32 %s92, 1
      %s94 = scalar_select %p91, %s92, %s93
      %p97 = pneg %p91
      %p98 = scmp.eq.s32.totalorder %s16, 3
      %p99 = por %p97, %p98
      %p100 = scmp.ne.s32.totalorder %s92, %s95
      %p101 = scmp.eq.s32.totalorder %s16, 0
      %p102 = por %p100, %p101
      %p103 = scmp.ne.s32.totalorder %s92, %s95
      %p104 = scmp.eq.s32.totalorder %s21, 3
      %p105 = por %p103, %p104
      %p106 = scmp.ne.s32.totalorder %s95, %s96
      %p107 = scmp.eq.s32.totalorder %s21, 0
      %p108 = por %p106, %p107
      %p109 = scmp.ne.s32.totalorder %s95, %s96
      %p110 = scmp.eq.s32.totalorder %s22, 3
      %p111 = por %p109, %p110
      %p113 = scmp.ne.s32.totalorder %s96, %s112
      %p114 = scmp.eq.s32.totalorder %s22, 0
      %p115 = por %p113, %p114
      %s116 = ssub.s32 %s23, %s35
      %p117 = scmp.eq.s32.totalorder %s116, 0
      %s119 = sadd.s32 %s118, 1
      %s120 = scalar_select %p117, %s118, %s119
      %p123 = pneg %p117
      %p124 = scmp.eq.s32.totalorder %s16, 3
      %p125 = por %p123, %p124
      %p126 = scmp.ne.s32.totalorder %s118, %s121
      %p127 = scmp.eq.s32.totalorder %s16, 0
      %p128 = por %p126, %p127
      %p129 = scmp.ne.s32.totalorder %s118, %s121
      %p130 = scmp.eq.s32.totalorder %s21, 3
      %p131 = por %p129, %p130
      %p132 = scmp.ne.s32.totalorder %s121, %s122
      %p133 = scmp.eq.s32.totalorder %s21, 0
      %p134 = por %p132, %p133
      %p135 = scmp.ne.s32.totalorder %s121, %s122
      %p136 = scmp.eq.s32.totalorder %s22, 3
      %p137 = por %p135, %p136
      %p139 = scmp.ne.s32.totalorder %s122, %s138
      %p140 = scmp.eq.s32.totalorder %s22, 0
      %p141 = por %p139, %p140
      %p142 = scmp.le.s32.totalorder 1, %s16
      %p143 = scmp.lt.s32.totalorder %s16, 5
      %p144 = pnand %p142, %p143
      %p145 = pneg %p144
      // Predicated region
      $region9: #{tpu_custom_call.1} parent=5 // pred_check
        _
      $region10: #{tpu_custom_call.1} parent=5 // pred_check_branch
        %147 = sbr.rel (%p144) target = $region12
      $region11: #{tpu_custom_call.1} parent=5 // pred_region
        %s148 = ssub.s32 %s16, 1
        // Predicated region
        $region13: #{tpu_custom_call.1} parent=11 // pred_check
          %p149 = pneg %p108
        $region14: #{tpu_custom_call.1} parent=11 // pred_check_branch
          %151 = sbr.rel (%p149) target = $region16
        $region15: #{tpu_custom_call.1} parent=11 // pred_region
          %s152 = smul.u32 6, %s25
          %s154 = ssub.s32 96, 96
          %155 = vsyncadd [#allocation6], %s154
          %s156 = smul.addr %s152, 16
          %s157 = scalar_lea.hbm %s2, %s156
          %s159 = sshll.u32 [#allocation7], 4
          %s160 = int_to_ptr.vmem [resolvable:$true] %s159
          %162 = dma.hbm_to_vmem [thread:$0]  %s157, 96, %s160, [#allocation6]
        $region16: #{tpu_custom_call.1} parent=11 // pred_fallthru
          _
      $region12: #{tpu_custom_call.1} parent=5 // pred_fallthru
        _
      %p163 = scmp.lt.s32.totalorder %s16, 4
      // Predicated region
      $region17: #{tpu_custom_call.1} parent=5 // pred_check
        %p164 = pneg %p163
      $region18: #{tpu_custom_call.1} parent=5 // pred_check_branch
        %166 = sbr.rel (%p164) target = $region20
      $region19: #{tpu_custom_call.1} parent=5 // pred_region
        // Predicated region
        $region21: #{tpu_custom_call.1} parent=19 // pred_check
          %p167 = pneg %p48
        $region22: #{tpu_custom_call.1} parent=19 // pred_check_branch
          %169 = sbr.rel (%p167) target = $region24
        $region23: #{tpu_custom_call.1} parent=19 // pred_region
          %s170 = sand.u32 %s38, 1
          %s171 = scalar_lea.sflag [#allocation3], %s170
          %s172 = sand.u32 %s38, 1
          %s173 = smul.addr %s172, 2304
          %s174 = scalar_lea.vmem [#allocation2], %s173
          %s175 = smul.u32 6, %s24
          %s177 = ssub.s32 36864, 36864
          %178 = vsyncadd %s171, %s177
          %s179 = smul.addr %s175, 128
          %s180 = scalar_lea.hbm %s0, %s179
          %s181 = sshll.u32 %s174, 4
          %s182 = int_to_ptr.vmem [resolvable:$true] %s181
          %187 = dma.hbm_to_vmem [thread:$0]  %s180, 36864, %s182, %s171, 3072, 768, 48
        $region24: #{tpu_custom_call.1} parent=19 // pred_fallthru
          _
        // Predicated region
        $region25: #{tpu_custom_call.1} parent=19 // pred_check
          %p188 = pneg %p76
        $region26: #{tpu_custom_call.1} parent=19 // pred_check_branch
          %190 = sbr.rel (%p188) target = $region28
        $region27: #{tpu_custom_call.1} parent=19 // pred_region
          %s191 = sand.u32 %s16, 1
          %s192 = scalar_lea.sflag [#allocation6], %s191
          %s193 = sand.u32 %s66, 1
          %s194 = smul.addr %s193, 4608
          %s195 = scalar_lea.vmem [#allocation5], %s194
          %s196 = smul.u32 96, %s24
          %s197 = smul.u32 6, %s23
          %s199 = ssub.s32 73728, 73728
          %200 = vsyncadd %s192, %s199
          %s201 = smul.addr %s196, 6
          %s202 = sadd.s32 %s197, %s201
          %s203 = smul.addr %s202, 128
          %s204 = scalar_lea.hbm %s1, %s203
          %s205 = sshll.u32 %s195, 4
          %s206 = int_to_ptr.vmem [resolvable:$true] %s205
          %211 = dma.hbm_to_vmem [thread:$0]  %s204, 73728, %s206, %s192, 768, 768, 48
        $region28: #{tpu_custom_call.1} parent=19 // pred_fallthru
          _
      $region20: #{tpu_custom_call.1} parent=5 // pred_fallthru
        _
      %p212 = scmp.le.s32.totalorder 1, %s16
      %p213 = scmp.lt.s32.totalorder %s16, 5
      %p214 = pnand %p212, %p213
      %p215 = pneg %p214
      // Predicated region
      $region29: #{tpu_custom_call.1} parent=5 // pred_check
        _
      $region30: #{tpu_custom_call.1} parent=5 // pred_check_branch
        %217 = sbr.rel (%p214) target = $region32
      $region31: #{tpu_custom_call.1} parent=5 // pred_region
        %s218 = ssub.s32 %s16, 1
        %s219 = sand.u32 %s41, 1
        %s220 = scalar_lea.sflag [#allocation3], %s219
        %s221 = sand.u32 %s41, 1
        %s222 = smul.addr %s221, 2304
        %s223 = scalar_lea.vmem [#allocation2], %s222
        // Predicated region
        $region33: #{tpu_custom_call.1} parent=31 // pred_check
          %p224 = pneg %p54
        $region34: #{tpu_custom_call.1} parent=31 // pred_check_branch
          %226 = sbr.rel (%p224) target = $region36
        $region35: #{tpu_custom_call.1} parent=31 // pred_region
          %227 = dma.done %s220, 36864
        $region36: #{tpu_custom_call.1} parent=31 // pred_fallthru
          _
        %s228 = sand.u32 %s21, 1
        %s229 = scalar_lea.sflag [#allocation6], %s228
        %s230 = sand.u32 %s69, 1
        %s231 = smul.addr %s230, 4608
        %s232 = scalar_lea.vmem [#allocation5], %s231
        // Predicated region
        $region37: #{tpu_custom_call.1} parent=31 // pred_check
          %p233 = pneg %p82
        $region38: #{tpu_custom_call.1} parent=31 // pred_check_branch
          %235 = sbr.rel (%p233) target = $region40
        $region39: #{tpu_custom_call.1} parent=31 // pred_region
          %236 = dma.done %s229, 73728
        $region40: #{tpu_custom_call.1} parent=31 // pred_fallthru
          _
        // Predicated region
        $region41: #{tpu_custom_call.1} parent=31 // pred_check
          %p237 = pneg %p108
        $region42: #{tpu_custom_call.1} parent=31 // pred_check_branch
          %239 = sbr.rel (%p237) target = $region44
        $region43: #{tpu_custom_call.1} parent=31 // pred_region
          %240 = dma.done [#allocation6], 96
        $region44: #{tpu_custom_call.1} parent=31 // pred_fallthru
          _
        %s241 = sand.u32 %s41, 1
        %s242 = scalar_lea.sflag [#allocation3], %s241
        %s243 = sand.u32 %s41, 1
        %s244 = smul.addr %s243, 2304
        %s245 = scalar_lea.vmem [#allocation2], %s244
        %p246 = pneg %p54
        %p247 = pneg %p51
        %s248 = sand.u32 %s21, 1
        %s249 = scalar_lea.sflag [#allocation6], %s248
        %s250 = sand.u32 %s69, 1
        %s251 = smul.addr %s250, 4608
        %s252 = scalar_lea.vmem [#allocation5], %s251
        %p253 = pneg %p82
        %p254 = pneg %p79
        %p255 = pneg %p108
        %p256 = pneg %p105
        %p257 = pneg %p134
        %p258 = pneg %p131
        %s259 = smul.u32 6, %s26
        %s260 = smul.u32 96, %s26
        %s261 = smul.u32 6, %s25
        %s262 = smul.u32 6, %s25
        %s263 = smul.u32 6, %s25
        %v264 = vld [vmem:[%s223] sm:$0xff]
        %v265 = vld [vmem:[%s223 + $0x8] sm:$0xff]
        %v266 = vld [vmem:[%s223 + $0x10] sm:$0xff]
        %v267 = vld [vmem:[%s223 + $0x18] sm:$0xff]
        %v268 = vld [vmem:[%s223 + $0x20] sm:$0xff]
        %v269 = vld [vmem:[%s223 + $0x28] sm:$0xff]
        %v270 = vld [vmem:[%s223 + $0x30] sm:$0xff]
        %v271 = vld [vmem:[%s223 + $0x38] sm:$0xff]
        %v272 = vld [vmem:[%s223 + $0x40] sm:$0xff]
        %v273 = vld [vmem:[%s223 + $0x48] sm:$0xff]
        %v274 = vld [vmem:[%s223 + $0x50] sm:$0xff]
        %v275 = vld [vmem:[%s223 + $0x58] sm:$0xff]
        %v276 = vld [vmem:[%s223 + $0x60] sm:$0xff]
        %v277 = vld [vmem:[%s223 + $0x68] sm:$0xff]
        %v278 = vld [vmem:[%s223 + $0x70] sm:$0xff]
        %v279 = vld [vmem:[%s223 + $0x78] sm:$0xff]
        %v280 = vld [vmem:[%s223 + $0x80] sm:$0xff]
        %v281 = vld [vmem:[%s223 + $0x88] sm:$0xff]
        %v282 = vld [vmem:[%s223 + $0x90] sm:$0xff]
        %v283 = vld [vmem:[%s223 + $0x98] sm:$0xff]
        %v284 = vld [vmem:[%s223 + $0xa0] sm:$0xff]
        %v285 = vld [vmem:[%s223 + $0xa8] sm:$0xff]
        %v286 = vld [vmem:[%s223 + $0xb0] sm:$0xff]
        %v287 = vld [vmem:[%s223 + $0xb8] sm:$0xff]
        %v288 = vld [vmem:[%s223 + $0xc0] sm:$0xff]
        %v289 = vld [vmem:[%s223 + $0xc8] sm:$0xff]
        %v290 = vld [vmem:[%s223 + $0xd0] sm:$0xff]
        %v291 = vld [vmem:[%s223 + $0xd8] sm:$0xff]
        %v292 = vld [vmem:[%s223 + $0xe0] sm:$0xff]
        %v293 = vld [vmem:[%s223 + $0xe8] sm:$0xff]
        %v294 = vld [vmem:[%s223 + $0xf0] sm:$0xff]
        %v295 = vld [vmem:[%s223 + $0xf8] sm:$0xff]
        %v296 = vld [vmem:[%s223 + $0x100] sm:$0xff]
        %v297 = vld [vmem:[%s223 + $0x108] sm:$0xff]
        %v298 = vld [vmem:[%s223 + $0x110] sm:$0xff]
        %v299 = vld [vmem:[%s223 + $0x118] sm:$0xff]
        %v300 = vld [vmem:[%s223 + $0x120] sm:$0xff]
        %v301 = vld [vmem:[%s223 + $0x128] sm:$0xff]
        %v302 = vld [vmem:[%s223 + $0x130] sm:$0xff]
        %v303 = vld [vmem:[%s223 + $0x138] sm:$0xff]
        %v304 = vld [vmem:[%s223 + $0x140] sm:$0xff]
        %v305 = vld [vmem:[%s223 + $0x148] sm:$0xff]
        %v306 = vld [vmem:[%s223 + $0x150] sm:$0xff]
        %v307 = vld [vmem:[%s223 + $0x158] sm:$0xff]
        %v308 = vld [vmem:[%s223 + $0x160] sm:$0xff]
        %v309 = vld [vmem:[%s223 + $0x168] sm:$0xff]
        %v310 = vld [vmem:[%s223 + $0x170] sm:$0xff]
        %v311 = vld [vmem:[%s223 + $0x178] sm:$0xff]
        %v312 = vld [vmem:[%s223 + $0x180] sm:$0xff]
        %v313 = vld [vmem:[%s223 + $0x188] sm:$0xff]
        %v314 = vld [vmem:[%s223 + $0x190] sm:$0xff]
        %v315 = vld [vmem:[%s223 + $0x198] sm:$0xff]
        %v316 = vld [vmem:[%s223 + $0x1a0] sm:$0xff]
        %v317 = vld [vmem:[%s223 + $0x1a8] sm:$0xff]
        %v318 = vld [vmem:[%s223 + $0x1b0] sm:$0xff]
        %v319 = vld [vmem:[%s223 + $0x1b8] sm:$0xff]
        %v320 = vld [vmem:[%s223 + $0x1c0] sm:$0xff]
        %v321 = vld [vmem:[%s223 + $0x1c8] sm:$0xff]
        %v322 = vld [vmem:[%s223 + $0x1d0] sm:$0xff]
        %v323 = vld [vmem:[%s223 + $0x1d8] sm:$0xff]
        %v324 = vld [vmem:[%s223 + $0x1e0] sm:$0xff]
        %v325 = vld [vmem:[%s223 + $0x1e8] sm:$0xff]
        %v326 = vld [vmem:[%s223 + $0x1f0] sm:$0xff]
        %v327 = vld [vmem:[%s223 + $0x1f8] sm:$0xff]
        %v328 = vld [vmem:[%s223 + $0x200] sm:$0xff]
        %v329 = vld [vmem:[%s223 + $0x208] sm:$0xff]
        %v330 = vld [vmem:[%s223 + $0x210] sm:$0xff]
        %v331 = vld [vmem:[%s223 + $0x218] sm:$0xff]
        %v332 = vld [vmem:[%s223 + $0x220] sm:$0xff]
        %v333 = vld [vmem:[%s223 + $0x228] sm:$0xff]
        %v334 = vld [vmem:[%s223 + $0x230] sm:$0xff]
        %v335 = vld [vmem:[%s223 + $0x238] sm:$0xff]
        %v336 = vld [vmem:[%s223 + $0x240] sm:$0xff]
        %v337 = vld [vmem:[%s223 + $0x248] sm:$0xff]
        %v338 = vld [vmem:[%s223 + $0x250] sm:$0xff]
        %v339 = vld [vmem:[%s223 + $0x258] sm:$0xff]
        %v340 = vld [vmem:[%s223 + $0x260] sm:$0xff]
        %v341 = vld [vmem:[%s223 + $0x268] sm:$0xff]
        %v342 = vld [vmem:[%s223 + $0x270] sm:$0xff]
        %v343 = vld [vmem:[%s223 + $0x278] sm:$0xff]
        %v344 = vld [vmem:[%s223 + $0x280] sm:$0xff]
        %v345 = vld [vmem:[%s223 + $0x288] sm:$0xff]
        %v346 = vld [vmem:[%s223 + $0x290] sm:$0xff]
        %v347 = vld [vmem:[%s223 + $0x298] sm:$0xff]
        %v348 = vld [vmem:[%s223 + $0x2a0] sm:$0xff]
        %v349 = vld [vmem:[%s223 + $0x2a8] sm:$0xff]
        %v350 = vld [vmem:[%s223 + $0x2b0] sm:$0xff]
        %v351 = vld [vmem:[%s223 + $0x2b8] sm:$0xff]
        %v352 = vld [vmem:[%s223 + $0x2c0] sm:$0xff]
        %v353 = vld [vmem:[%s223 + $0x2c8] sm:$0xff]
        %v354 = vld [vmem:[%s223 + $0x2d0] sm:$0xff]
        %v355 = vld [vmem:[%s223 + $0x2d8] sm:$0xff]
        %v356 = vld [vmem:[%s223 + $0x2e0] sm:$0xff]
        %v357 = vld [vmem:[%s223 + $0x2e8] sm:$0xff]
        %v358 = vld [vmem:[%s223 + $0x2f0] sm:$0xff]
        %v359 = vld [vmem:[%s223 + $0x2f8] sm:$0xff]
        %v360 = vld [vmem:[%s223 + $0x300] sm:$0xff]
        %v361 = vld [vmem:[%s223 + $0x308] sm:$0xff]
        %v362 = vld [vmem:[%s223 + $0x310] sm:$0xff]
        %v363 = vld [vmem:[%s223 + $0x318] sm:$0xff]
        %v364 = vld [vmem:[%s223 + $0x320] sm:$0xff]
        %v365 = vld [vmem:[%s223 + $0x328] sm:$0xff]
        %v366 = vld [vmem:[%s223 + $0x330] sm:$0xff]
        %v367 = vld [vmem:[%s223 + $0x338] sm:$0xff]
        %v368 = vld [vmem:[%s223 + $0x340] sm:$0xff]
        %v369 = vld [vmem:[%s223 + $0x348] sm:$0xff]
        %v370 = vld [vmem:[%s223 + $0x350] sm:$0xff]
        %v371 = vld [vmem:[%s223 + $0x358] sm:$0xff]
        %v372 = vld [vmem:[%s223 + $0x360] sm:$0xff]
        %v373 = vld [vmem:[%s223 + $0x368] sm:$0xff]
        %v374 = vld [vmem:[%s223 + $0x370] sm:$0xff]
        %v375 = vld [vmem:[%s223 + $0x378] sm:$0xff]
        %v376 = vld [vmem:[%s223 + $0x380] sm:$0xff]
        %v377 = vld [vmem:[%s223 + $0x388] sm:$0xff]
        %v378 = vld [vmem:[%s223 + $0x390] sm:$0xff]
        %v379 = vld [vmem:[%s223 + $0x398] sm:$0xff]
        %v380 = vld [vmem:[%s223 + $0x3a0] sm:$0xff]
        %v381 = vld [vmem:[%s223 + $0x3a8] sm:$0xff]
        %v382 = vld [vmem:[%s223 + $0x3b0] sm:$0xff]
        %v383 = vld [vmem:[%s223 + $0x3b8] sm:$0xff]
        %v384 = vld [vmem:[%s223 + $0x3c0] sm:$0xff]
        %v385 = vld [vmem:[%s223 + $0x3c8] sm:$0xff]
        %v386 = vld [vmem:[%s223 + $0x3d0] sm:$0xff]
        %v387 = vld [vmem:[%s223 + $0x3d8] sm:$0xff]
        %v388 = vld [vmem:[%s223 + $0x3e0] sm:$0xff]
        %v389 = vld [vmem:[%s223 + $0x3e8] sm:$0xff]
        %v390 = vld [vmem:[%s223 + $0x3f0] sm:$0xff]
        %v391 = vld [vmem:[%s223 + $0x3f8] sm:$0xff]
        %v392 = vld [vmem:[%s223 + $0x400] sm:$0xff]
        %v393 = vld [vmem:[%s223 + $0x408] sm:$0xff]
        %v394 = vld [vmem:[%s223 + $0x410] sm:$0xff]
        %v395 = vld [vmem:[%s223 + $0x418] sm:$0xff]
        %v396 = vld [vmem:[%s223 + $0x420] sm:$0xff]
        %v397 = vld [vmem:[%s223 + $0x428] sm:$0xff]
        %v398 = vld [vmem:[%s223 + $0x430] sm:$0xff]
        %v399 = vld [vmem:[%s223 + $0x438] sm:$0xff]
        %v400 = vld [vmem:[%s223 + $0x440] sm:$0xff]
        %v401 = vld [vmem:[%s223 + $0x448] sm:$0xff]
        %v402 = vld [vmem:[%s223 + $0x450] sm:$0xff]
        %v403 = vld [vmem:[%s223 + $0x458] sm:$0xff]
        %v404 = vld [vmem:[%s223 + $0x460] sm:$0xff]
        %v405 = vld [vmem:[%s223 + $0x468] sm:$0xff]
        %v406 = vld [vmem:[%s223 + $0x470] sm:$0xff]
        %v407 = vld [vmem:[%s223 + $0x478] sm:$0xff]
        %v408 = vld [vmem:[%s223 + $0x480] sm:$0xff]
        %v409 = vld [vmem:[%s223 + $0x488] sm:$0xff]
        %v410 = vld [vmem:[%s223 + $0x490] sm:$0xff]
        %v411 = vld [vmem:[%s223 + $0x498] sm:$0xff]
        %v412 = vld [vmem:[%s223 + $0x4a0] sm:$0xff]
        %v413 = vld [vmem:[%s223 + $0x4a8] sm:$0xff]
        %v414 = vld [vmem:[%s223 + $0x4b0] sm:$0xff]
        %v415 = vld [vmem:[%s223 + $0x4b8] sm:$0xff]
        %v416 = vld [vmem:[%s223 + $0x4c0] sm:$0xff]
        %v417 = vld [vmem:[%s223 + $0x4c8] sm:$0xff]
        %v418 = vld [vmem:[%s223 + $0x4d0] sm:$0xff]
        %v419 = vld [vmem:[%s223 + $0x4d8] sm:$0xff]
        %v420 = vld [vmem:[%s223 + $0x4e0] sm:$0xff]
        %v421 = vld [vmem:[%s223 + $0x4e8] sm:$0xff]
        %v422 = vld [vmem:[%s223 + $0x4f0] sm:$0xff]
        %v423 = vld [vmem:[%s223 + $0x4f8] sm:$0xff]
        %v424 = vld [vmem:[%s223 + $0x500] sm:$0xff]
        %v425 = vld [vmem:[%s223 + $0x508] sm:$0xff]
        %v426 = vld [vmem:[%s223 + $0x510] sm:$0xff]
        %v427 = vld [vmem:[%s223 + $0x518] sm:$0xff]
        %v428 = vld [vmem:[%s223 + $0x520] sm:$0xff]
        %v429 = vld [vmem:[%s223 + $0x528] sm:$0xff]
        %v430 = vld [vmem:[%s223 + $0x530] sm:$0xff]
        %v431 = vld [vmem:[%s223 + $0x538] sm:$0xff]
        %v432 = vld [vmem:[%s223 + $0x540] sm:$0xff]
        %v433 = vld [vmem:[%s223 + $0x548] sm:$0xff]
        %v434 = vld [vmem:[%s223 + $0x550] sm:$0xff]
        %v435 = vld [vmem:[%s223 + $0x558] sm:$0xff]
        %v436 = vld [vmem:[%s223 + $0x560] sm:$0xff]
        %v437 = vld [vmem:[%s223 + $0x568] sm:$0xff]
        %v438 = vld [vmem:[%s223 + $0x570] sm:$0xff]
        %v439 = vld [vmem:[%s223 + $0x578] sm:$0xff]
        %v440 = vld [vmem:[%s223 + $0x580] sm:$0xff]
        %v441 = vld [vmem:[%s223 + $0x588] sm:$0xff]
        %v442 = vld [vmem:[%s223 + $0x590] sm:$0xff]
        %v443 = vld [vmem:[%s223 + $0x598] sm:$0xff]
        %v444 = vld [vmem:[%s223 + $0x5a0] sm:$0xff]
        %v445 = vld [vmem:[%s223 + $0x5a8] sm:$0xff]
        %v446 = vld [vmem:[%s223 + $0x5b0] sm:$0xff]
        %v447 = vld [vmem:[%s223 + $0x5b8] sm:$0xff]
        %v448 = vld [vmem:[%s223 + $0x5c0] sm:$0xff]
        %v449 = vld [vmem:[%s223 + $0x5c8] sm:$0xff]
        %v450 = vld [vmem:[%s223 + $0x5d0] sm:$0xff]
        %v451 = vld [vmem:[%s223 + $0x5d8] sm:$0xff]
        %v452 = vld [vmem:[%s223 + $0x5e0] sm:$0xff]
        %v453 = vld [vmem:[%s223 + $0x5e8] sm:$0xff]
        %v454 = vld [vmem:[%s223 + $0x5f0] sm:$0xff]
        %v455 = vld [vmem:[%s223 + $0x5f8] sm:$0xff]
        %v456 = vld [vmem:[%s223 + $0x600] sm:$0xff]
        %v457 = vld [vmem:[%s223 + $0x608] sm:$0xff]
        %v458 = vld [vmem:[%s223 + $0x610] sm:$0xff]
        %v459 = vld [vmem:[%s223 + $0x618] sm:$0xff]
        %v460 = vld [vmem:[%s223 + $0x620] sm:$0xff]
        %v461 = vld [vmem:[%s223 + $0x628] sm:$0xff]
        %v462 = vld [vmem:[%s223 + $0x630] sm:$0xff]
        %v463 = vld [vmem:[%s223 + $0x638] sm:$0xff]
        %v464 = vld [vmem:[%s223 + $0x640] sm:$0xff]
        %v465 = vld [vmem:[%s223 + $0x648] sm:$0xff]
        %v466 = vld [vmem:[%s223 + $0x650] sm:$0xff]
        %v467 = vld [vmem:[%s223 + $0x658] sm:$0xff]
        %v468 = vld [vmem:[%s223 + $0x660] sm:$0xff]
        %v469 = vld [vmem:[%s223 + $0x668] sm:$0xff]
        %v470 = vld [vmem:[%s223 + $0x670] sm:$0xff]
        %v471 = vld [vmem:[%s223 + $0x678] sm:$0xff]
        %v472 = vld [vmem:[%s223 + $0x680] sm:$0xff]
        %v473 = vld [vmem:[%s223 + $0x688] sm:$0xff]
        %v474 = vld [vmem:[%s223 + $0x690] sm:$0xff]
        %v475 = vld [vmem:[%s223 + $0x698] sm:$0xff]
        %v476 = vld [vmem:[%s223 + $0x6a0] sm:$0xff]
        %v477 = vld [vmem:[%s223 + $0x6a8] sm:$0xff]
        %v478 = vld [vmem:[%s223 + $0x6b0] sm:$0xff]
        %v479 = vld [vmem:[%s223 + $0x6b8] sm:$0xff]
        %v480 = vld [vmem:[%s223 + $0x6c0] sm:$0xff]
        %v481 = vld [vmem:[%s223 + $0x6c8] sm:$0xff]
        %v482 = vld [vmem:[%s223 + $0x6d0] sm:$0xff]
        %v483 = vld [vmem:[%s223 + $0x6d8] sm:$0xff]
        %v484 = vld [vmem:[%s223 + $0x6e0] sm:$0xff]
        %v485 = vld [vmem:[%s223 + $0x6e8] sm:$0xff]
        %v486 = vld [vmem:[%s223 + $0x6f0] sm:$0xff]
        %v487 = vld [vmem:[%s223 + $0x6f8] sm:$0xff]
        %v488 = vld [vmem:[%s223 + $0x700] sm:$0xff]
        %v489 = vld [vmem:[%s223 + $0x708] sm:$0xff]
        %v490 = vld [vmem:[%s223 + $0x710] sm:$0xff]
        %v491 = vld [vmem:[%s223 + $0x718] sm:$0xff]
        %v492 = vld [vmem:[%s223 + $0x720] sm:$0xff]
        %v493 = vld [vmem:[%s223 + $0x728] sm:$0xff]
        %v494 = vld [vmem:[%s223 + $0x730] sm:$0xff]
        %v495 = vld [vmem:[%s223 + $0x738] sm:$0xff]
        %v496 = vld [vmem:[%s223 + $0x740] sm:$0xff]
        %v497 = vld [vmem:[%s223 + $0x748] sm:$0xff]
        %v498 = vld [vmem:[%s223 + $0x750] sm:$0xff]
        %v499 = vld [vmem:[%s223 + $0x758] sm:$0xff]
        %v500 = vld [vmem:[%s223 + $0x760] sm:$0xff]
        %v501 = vld [vmem:[%s223 + $0x768] sm:$0xff]
        %v502 = vld [vmem:[%s223 + $0x770] sm:$0xff]
        %v503 = vld [vmem:[%s223 + $0x778] sm:$0xff]
        %v504 = vld [vmem:[%s223 + $0x780] sm:$0xff]
        %v505 = vld [vmem:[%s223 + $0x788] sm:$0xff]
        %v506 = vld [vmem:[%s223 + $0x790] sm:$0xff]
        %v507 = vld [vmem:[%s223 + $0x798] sm:$0xff]
        %v508 = vld [vmem:[%s223 + $0x7a0] sm:$0xff]
        %v509 = vld [vmem:[%s223 + $0x7a8] sm:$0xff]
        %v510 = vld [vmem:[%s223 + $0x7b0] sm:$0xff]
        %v511 = vld [vmem:[%s223 + $0x7b8] sm:$0xff]
        %v512 = vld [vmem:[%s223 + $0x7c0] sm:$0xff]
        %v513 = vld [vmem:[%s223 + $0x7c8] sm:$0xff]
        %v514 = vld [vmem:[%s223 + $0x7d0] sm:$0xff]
        %v515 = vld [vmem:[%s223 + $0x7d8] sm:$0xff]
        %v516 = vld [vmem:[%s223 + $0x7e0] sm:$0xff]
        %v517 = vld [vmem:[%s223 + $0x7e8] sm:$0xff]
        %v518 = vld [vmem:[%s223 + $0x7f0] sm:$0xff]
        %v519 = vld [vmem:[%s223 + $0x7f8] sm:$0xff]
        %v520 = vld [vmem:[%s223 + $0x800] sm:$0xff]
        %v521 = vld [vmem:[%s223 + $0x808] sm:$0xff]
        %v522 = vld [vmem:[%s223 + $0x810] sm:$0xff]
        %v523 = vld [vmem:[%s223 + $0x818] sm:$0xff]
        %v524 = vld [vmem:[%s223 + $0x820] sm:$0xff]
        %v525 = vld [vmem:[%s223 + $0x828] sm:$0xff]
        %v526 = vld [vmem:[%s223 + $0x830] sm:$0xff]
        %v527 = vld [vmem:[%s223 + $0x838] sm:$0xff]
        %v528 = vld [vmem:[%s223 + $0x840] sm:$0xff]
        %v529 = vld [vmem:[%s223 + $0x848] sm:$0xff]
        %v530 = vld [vmem:[%s223 + $0x850] sm:$0xff]
        %v531 = vld [vmem:[%s223 + $0x858] sm:$0xff]
        %v532 = vld [vmem:[%s223 + $0x860] sm:$0xff]
        %v533 = vld [vmem:[%s223 + $0x868] sm:$0xff]
        %v534 = vld [vmem:[%s223 + $0x870] sm:$0xff]
        %v535 = vld [vmem:[%s223 + $0x878] sm:$0xff]
        %v536 = vld [vmem:[%s223 + $0x880] sm:$0xff]
        %v537 = vld [vmem:[%s223 + $0x888] sm:$0xff]
        %v538 = vld [vmem:[%s223 + $0x890] sm:$0xff]
        %v539 = vld [vmem:[%s223 + $0x898] sm:$0xff]
        %v540 = vld [vmem:[%s223 + $0x8a0] sm:$0xff]
        %v541 = vld [vmem:[%s223 + $0x8a8] sm:$0xff]
        %v542 = vld [vmem:[%s223 + $0x8b0] sm:$0xff]
        %v543 = vld [vmem:[%s223 + $0x8b8] sm:$0xff]
        %v544 = vld [vmem:[%s223 + $0x8c0] sm:$0xff]
        %v545 = vld [vmem:[%s223 + $0x8c8] sm:$0xff]
        %v546 = vld [vmem:[%s223 + $0x8d0] sm:$0xff]
        %v547 = vld [vmem:[%s223 + $0x8d8] sm:$0xff]
        %v548 = vld [vmem:[%s223 + $0x8e0] sm:$0xff]
        %v549 = vld [vmem:[%s223 + $0x8e8] sm:$0xff]
        %v550 = vld [vmem:[%s223 + $0x8f0] sm:$0xff]
        %v551 = vld [vmem:[%s223 + $0x8f8] sm:$0xff]
        %v552 = vld [vmem:[%s232] sm:$0xff]
        %v553 = vld [vmem:[%s232 + $0x8] sm:$0xff]
        %v554 = vld [vmem:[%s232 + $0x10] sm:$0xff]
        %v555 = vld [vmem:[%s232 + $0x18] sm:$0xff]
        %v556 = vld [vmem:[%s232 + $0x20] sm:$0xff]
        %v557 = vld [vmem:[%s232 + $0x28] sm:$0xff]
        %v558 = vld [vmem:[%s232 + $0x30] sm:$0xff]
        %v559 = vld [vmem:[%s232 + $0x38] sm:$0xff]
        %v560 = vld [vmem:[%s232 + $0x40] sm:$0xff]
        %v561 = vld [vmem:[%s232 + $0x48] sm:$0xff]
        %v562 = vld [vmem:[%s232 + $0x50] sm:$0xff]
        %v563 = vld [vmem:[%s232 + $0x58] sm:$0xff]
        %v564 = vld [vmem:[%s232 + $0x60] sm:$0xff]
        %v565 = vld [vmem:[%s232 + $0x68] sm:$0xff]
        %v566 = vld [vmem:[%s232 + $0x70] sm:$0xff]
        %v567 = vld [vmem:[%s232 + $0x78] sm:$0xff]
        %v568 = vld [vmem:[%s232 + $0x80] sm:$0xff]
        %v569 = vld [vmem:[%s232 + $0x88] sm:$0xff]
        %v570 = vld [vmem:[%s232 + $0x90] sm:$0xff]
        %v571 = vld [vmem:[%s232 + $0x98] sm:$0xff]
        %v572 = vld [vmem:[%s232 + $0xa0] sm:$0xff]
        %v573 = vld [vmem:[%s232 + $0xa8] sm:$0xff]
        %v574 = vld [vmem:[%s232 + $0xb0] sm:$0xff]
        %v575 = vld [vmem:[%s232 + $0xb8] sm:$0xff]
        %v576 = vld [vmem:[%s232 + $0xc0] sm:$0xff]
        %v577 = vld [vmem:[%s232 + $0xc8] sm:$0xff]
        %v578 = vld [vmem:[%s232 + $0xd0] sm:$0xff]
        %v579 = vld [vmem:[%s232 + $0xd8] sm:$0xff]
        %v580 = vld [vmem:[%s232 + $0xe0] sm:$0xff]
        %v581 = vld [vmem:[%s232 + $0xe8] sm:$0xff]
        %v582 = vld [vmem:[%s232 + $0xf0] sm:$0xff]
        %v583 = vld [vmem:[%s232 + $0xf8] sm:$0xff]
        %v584 = vld [vmem:[%s232 + $0x100] sm:$0xff]
        %v585 = vld [vmem:[%s232 + $0x108] sm:$0xff]
        %v586 = vld [vmem:[%s232 + $0x110] sm:$0xff]
        %v587 = vld [vmem:[%s232 + $0x118] sm:$0xff]
        %v588 = vld [vmem:[%s232 + $0x120] sm:$0xff]
        %v589 = vld [vmem:[%s232 + $0x128] sm:$0xff]
        %v590 = vld [vmem:[%s232 + $0x130] sm:$0xff]
        %v591 = vld [vmem:[%s232 + $0x138] sm:$0xff]
        %v592 = vld [vmem:[%s232 + $0x140] sm:$0xff]
        %v593 = vld [vmem:[%s232 + $0x148] sm:$0xff]
        %v594 = vld [vmem:[%s232 + $0x150] sm:$0xff]
        %v595 = vld [vmem:[%s232 + $0x158] sm:$0xff]
        %v596 = vld [vmem:[%s232 + $0x160] sm:$0xff]
        %v597 = vld [vmem:[%s232 + $0x168] sm:$0xff]
        %v598 = vld [vmem:[%s232 + $0x170] sm:$0xff]
        %v599 = vld [vmem:[%s232 + $0x178] sm:$0xff]
        %v600 = vld [vmem:[%s232 + $0x180] sm:$0xff]
        %v601 = vld [vmem:[%s232 + $0x188] sm:$0xff]
        %v602 = vld [vmem:[%s232 + $0x190] sm:$0xff]
        %v603 = vld [vmem:[%s232 + $0x198] sm:$0xff]
        %v604 = vld [vmem:[%s232 + $0x1a0] sm:$0xff]
        %v605 = vld [vmem:[%s232 + $0x1a8] sm:$0xff]
        %v606 = vld [vmem:[%s232 + $0x1b0] sm:$0xff]
        %v607 = vld [vmem:[%s232 + $0x1b8] sm:$0xff]
        %v608 = vld [vmem:[%s232 + $0x1c0] sm:$0xff]
        %v609 = vld [vmem:[%s232 + $0x1c8] sm:$0xff]
        %v610 = vld [vmem:[%s232 + $0x1d0] sm:$0xff]
        %v611 = vld [vmem:[%s232 + $0x1d8] sm:$0xff]
        %v612 = vld [vmem:[%s232 + $0x1e0] sm:$0xff]
        %v613 = vld [vmem:[%s232 + $0x1e8] sm:$0xff]
        %v614 = vld [vmem:[%s232 + $0x1f0] sm:$0xff]
        %v615 = vld [vmem:[%s232 + $0x1f8] sm:$0xff]
        %v616 = vld [vmem:[%s232 + $0x200] sm:$0xff]
        %v617 = vld [vmem:[%s232 + $0x208] sm:$0xff]
        %v618 = vld [vmem:[%s232 + $0x210] sm:$0xff]
        %v619 = vld [vmem:[%s232 + $0x218] sm:$0xff]
        %v620 = vld [vmem:[%s232 + $0x220] sm:$0xff]
        %v621 = vld [vmem:[%s232 + $0x228] sm:$0xff]
        %v622 = vld [vmem:[%s232 + $0x230] sm:$0xff]
        %v623 = vld [vmem:[%s232 + $0x238] sm:$0xff]
        %v624 = vld [vmem:[%s232 + $0x240] sm:$0xff]
        %v625 = vld [vmem:[%s232 + $0x248] sm:$0xff]
        %v626 = vld [vmem:[%s232 + $0x250] sm:$0xff]
        %v627 = vld [vmem:[%s232 + $0x258] sm:$0xff]
        %v628 = vld [vmem:[%s232 + $0x260] sm:$0xff]
        %v629 = vld [vmem:[%s232 + $0x268] sm:$0xff]
        %v630 = vld [vmem:[%s232 + $0x270] sm:$0xff]
        %v631 = vld [vmem:[%s232 + $0x278] sm:$0xff]
        %v632 = vld [vmem:[%s232 + $0x280] sm:$0xff]
        %v633 = vld [vmem:[%s232 + $0x288] sm:$0xff]
        %v634 = vld [vmem:[%s232 + $0x290] sm:$0xff]
        %v635 = vld [vmem:[%s232 + $0x298] sm:$0xff]
        %v636 = vld [vmem:[%s232 + $0x2a0] sm:$0xff]
        %v637 = vld [vmem:[%s232 + $0x2a8] sm:$0xff]
        %v638 = vld [vmem:[%s232 + $0x2b0] sm:$0xff]
        %v639 = vld [vmem:[%s232 + $0x2b8] sm:$0xff]
        %v640 = vld [vmem:[%s232 + $0x2c0] sm:$0xff]
        %v641 = vld [vmem:[%s232 + $0x2c8] sm:$0xff]
        %v642 = vld [vmem:[%s232 + $0x2d0] sm:$0xff]
        %v643 = vld [vmem:[%s232 + $0x2d8] sm:$0xff]
        %v644 = vld [vmem:[%s232 + $0x2e0] sm:$0xff]
        %v645 = vld [vmem:[%s232 + $0x2e8] sm:$0xff]
        %v646 = vld [vmem:[%s232 + $0x2f0] sm:$0xff]
        %v647 = vld [vmem:[%s232 + $0x2f8] sm:$0xff]
        %v648 = vld [vmem:[%s232 + $0x300] sm:$0xff]
        %v649 = vld [vmem:[%s232 + $0x308] sm:$0xff]
        %v650 = vld [vmem:[%s232 + $0x310] sm:$0xff]
        %v651 = vld [vmem:[%s232 + $0x318] sm:$0xff]
        %v652 = vld [vmem:[%s232 + $0x320] sm:$0xff]
        %v653 = vld [vmem:[%s232 + $0x328] sm:$0xff]
        %v654 = vld [vmem:[%s232 + $0x330] sm:$0xff]
        %v655 = vld [vmem:[%s232 + $0x338] sm:$0xff]
        %v656 = vld [vmem:[%s232 + $0x340] sm:$0xff]
        %v657 = vld [vmem:[%s232 + $0x348] sm:$0xff]
        %v658 = vld [vmem:[%s232 + $0x350] sm:$0xff]
        %v659 = vld [vmem:[%s232 + $0x358] sm:$0xff]
        %v660 = vld [vmem:[%s232 + $0x360] sm:$0xff]
        %v661 = vld [vmem:[%s232 + $0x368] sm:$0xff]
        %v662 = vld [vmem:[%s232 + $0x370] sm:$0xff]
        %v663 = vld [vmem:[%s232 + $0x378] sm:$0xff]
        %v664 = vld [vmem:[%s232 + $0x380] sm:$0xff]
        %v665 = vld [vmem:[%s232 + $0x388] sm:$0xff]
        %v666 = vld [vmem:[%s232 + $0x390] sm:$0xff]
        %v667 = vld [vmem:[%s232 + $0x398] sm:$0xff]
        %v668 = vld [vmem:[%s232 + $0x3a0] sm:$0xff]
        %v669 = vld [vmem:[%s232 + $0x3a8] sm:$0xff]
        %v670 = vld [vmem:[%s232 + $0x3b0] sm:$0xff]
        %v671 = vld [vmem:[%s232 + $0x3b8] sm:$0xff]
        %v672 = vld [vmem:[%s232 + $0x3c0] sm:$0xff]
        %v673 = vld [vmem:[%s232 + $0x3c8] sm:$0xff]
        %v674 = vld [vmem:[%s232 + $0x3d0] sm:$0xff]
        %v675 = vld [vmem:[%s232 + $0x3d8] sm:$0xff]
        %v676 = vld [vmem:[%s232 + $0x3e0] sm:$0xff]
        %v677 = vld [vmem:[%s232 + $0x3e8] sm:$0xff]
        %v678 = vld [vmem:[%s232 + $0x3f0] sm:$0xff]
        %v679 = vld [vmem:[%s232 + $0x3f8] sm:$0xff]
        %v680 = vld [vmem:[%s232 + $0x400] sm:$0xff]
        %v681 = vld [vmem:[%s232 + $0x408] sm:$0xff]
        %v682 = vld [vmem:[%s232 + $0x410] sm:$0xff]
        %v683 = vld [vmem:[%s232 + $0x418] sm:$0xff]
        %v684 = vld [vmem:[%s232 + $0x420] sm:$0xff]
        %v685 = vld [vmem:[%s232 + $0x428] sm:$0xff]
        %v686 = vld [vmem:[%s232 + $0x430] sm:$0xff]
        %v687 = vld [vmem:[%s232 + $0x438] sm:$0xff]
        %v688 = vld [vmem:[%s232 + $0x440] sm:$0xff]
        %v689 = vld [vmem:[%s232 + $0x448] sm:$0xff]
        %v690 = vld [vmem:[%s232 + $0x450] sm:$0xff]
        %v691 = vld [vmem:[%s232 + $0x458] sm:$0xff]
        %v692 = vld [vmem:[%s232 + $0x460] sm:$0xff]
        %v693 = vld [vmem:[%s232 + $0x468] sm:$0xff]
        %v694 = vld [vmem:[%s232 + $0x470] sm:$0xff]
        %v695 = vld [vmem:[%s232 + $0x478] sm:$0xff]
        %v696 = vld [vmem:[%s232 + $0x480] sm:$0xff]
        %v697 = vld [vmem:[%s232 + $0x488] sm:$0xff]
        %v698 = vld [vmem:[%s232 + $0x490] sm:$0xff]
        %v699 = vld [vmem:[%s232 + $0x498] sm:$0xff]
        %v700 = vld [vmem:[%s232 + $0x4a0] sm:$0xff]
        %v701 = vld [vmem:[%s232 + $0x4a8] sm:$0xff]
        %v702 = vld [vmem:[%s232 + $0x4b0] sm:$0xff]
        %v703 = vld [vmem:[%s232 + $0x4b8] sm:$0xff]
        %v704 = vld [vmem:[%s232 + $0x4c0] sm:$0xff]
        %v705 = vld [vmem:[%s232 + $0x4c8] sm:$0xff]
        %v706 = vld [vmem:[%s232 + $0x4d0] sm:$0xff]
        %v707 = vld [vmem:[%s232 + $0x4d8] sm:$0xff]
        %v708 = vld [vmem:[%s232 + $0x4e0] sm:$0xff]
        %v709 = vld [vmem:[%s232 + $0x4e8] sm:$0xff]
        %v710 = vld [vmem:[%s232 + $0x4f0] sm:$0xff]
        %v711 = vld [vmem:[%s232 + $0x4f8] sm:$0xff]
        %v712 = vld [vmem:[%s232 + $0x500] sm:$0xff]
        %v713 = vld [vmem:[%s232 + $0x508] sm:$0xff]
        %v714 = vld [vmem:[%s232 + $0x510] sm:$0xff]
        %v715 = vld [vmem:[%s232 + $0x518] sm:$0xff]
        %v716 = vld [vmem:[%s232 + $0x520] sm:$0xff]
        %v717 = vld [vmem:[%s232 + $0x528] sm:$0xff]
        %v718 = vld [vmem:[%s232 + $0x530] sm:$0xff]
        %v719 = vld [vmem:[%s232 + $0x538] sm:$0xff]
        %v720 = vld [vmem:[%s232 + $0x540] sm:$0xff]
        %v721 = vld [vmem:[%s232 + $0x548] sm:$0xff]
        %v722 = vld [vmem:[%s232 + $0x550] sm:$0xff]
        %v723 = vld [vmem:[%s232 + $0x558] sm:$0xff]
        %v724 = vld [vmem:[%s232 + $0x560] sm:$0xff]
        %v725 = vld [vmem:[%s232 + $0x568] sm:$0xff]
        %v726 = vld [vmem:[%s232 + $0x570] sm:$0xff]
        %v727 = vld [vmem:[%s232 + $0x578] sm:$0xff]
        %v728 = vld [vmem:[%s232 + $0x580] sm:$0xff]
        %v729 = vld [vmem:[%s232 + $0x588] sm:$0xff]
        %v730 = vld [vmem:[%s232 + $0x590] sm:$0xff]
        %v731 = vld [vmem:[%s232 + $0x598] sm:$0xff]
        %v732 = vld [vmem:[%s232 + $0x5a0] sm:$0xff]
        %v733 = vld [vmem:[%s232 + $0x5a8] sm:$0xff]
        %v734 = vld [vmem:[%s232 + $0x5b0] sm:$0xff]
        %v735 = vld [vmem:[%s232 + $0x5b8] sm:$0xff]
        %v736 = vld [vmem:[%s232 + $0x5c0] sm:$0xff]
        %v737 = vld [vmem:[%s232 + $0x5c8] sm:$0xff]
        %v738 = vld [vmem:[%s232 + $0x5d0] sm:$0xff]
        %v739 = vld [vmem:[%s232 + $0x5d8] sm:$0xff]
        %v740 = vld [vmem:[%s232 + $0x5e0] sm:$0xff]
        %v741 = vld [vmem:[%s232 + $0x5e8] sm:$0xff]
        %v742 = vld [vmem:[%s232 + $0x5f0] sm:$0xff]
        %v743 = vld [vmem:[%s232 + $0x5f8] sm:$0xff]
        %v744 = vld [vmem:[%s232 + $0x600] sm:$0xff]
        %v745 = vld [vmem:[%s232 + $0x608] sm:$0xff]
        %v746 = vld [vmem:[%s232 + $0x610] sm:$0xff]
        %v747 = vld [vmem:[%s232 + $0x618] sm:$0xff]
        %v748 = vld [vmem:[%s232 + $0x620] sm:$0xff]
        %v749 = vld [vmem:[%s232 + $0x628] sm:$0xff]
        %v750 = vld [vmem:[%s232 + $0x630] sm:$0xff]
        %v751 = vld [vmem:[%s232 + $0x638] sm:$0xff]
        %v752 = vld [vmem:[%s232 + $0x640] sm:$0xff]
        %v753 = vld [vmem:[%s232 + $0x648] sm:$0xff]
        %v754 = vld [vmem:[%s232 + $0x650] sm:$0xff]
        %v755 = vld [vmem:[%s232 + $0x658] sm:$0xff]
        %v756 = vld [vmem:[%s232 + $0x660] sm:$0xff]
        %v757 = vld [vmem:[%s232 + $0x668] sm:$0xff]
        %v758 = vld [vmem:[%s232 + $0x670] sm:$0xff]
        %v759 = vld [vmem:[%s232 + $0x678] sm:$0xff]
        %v760 = vld [vmem:[%s232 + $0x680] sm:$0xff]
        %v761 = vld [vmem:[%s232 + $0x688] sm:$0xff]
        %v762 = vld [vmem:[%s232 + $0x690] sm:$0xff]
        %v763 = vld [vmem:[%s232 + $0x698] sm:$0xff]
        %v764 = vld [vmem:[%s232 + $0x6a0] sm:$0xff]
        %v765 = vld [vmem:[%s232 + $0x6a8] sm:$0xff]
        %v766 = vld [vmem:[%s232 + $0x6b0] sm:$0xff]
        %v767 = vld [vmem:[%s232 + $0x6b8] sm:$0xff]
        %v768 = vld [vmem:[%s232 + $0x6c0] sm:$0xff]
        %v769 = vld [vmem:[%s232 + $0x6c8] sm:$0xff]
        %v770 = vld [vmem:[%s232 + $0x6d0] sm:$0xff]
        %v771 = vld [vmem:[%s232 + $0x6d8] sm:$0xff]
        %v772 = vld [vmem:[%s232 + $0x6e0] sm:$0xff]
        %v773 = vld [vmem:[%s232 + $0x6e8] sm:$0xff]
        %v774 = vld [vmem:[%s232 + $0x6f0] sm:$0xff]
        %v775 = vld [vmem:[%s232 + $0x6f8] sm:$0xff]
        %v776 = vld [vmem:[%s232 + $0x700] sm:$0xff]
        %v777 = vld [vmem:[%s232 + $0x708] sm:$0xff]
        %v778 = vld [vmem:[%s232 + $0x710] sm:$0xff]
        %v779 = vld [vmem:[%s232 + $0x718] sm:$0xff]
        %v780 = vld [vmem:[%s232 + $0x720] sm:$0xff]
        %v781 = vld [vmem:[%s232 + $0x728] sm:$0xff]
        %v782 = vld [vmem:[%s232 + $0x730] sm:$0xff]
        %v783 = vld [vmem:[%s232 + $0x738] sm:$0xff]
        %v784 = vld [vmem:[%s232 + $0x740] sm:$0xff]
        %v785 = vld [vmem:[%s232 + $0x748] sm:$0xff]
        %v786 = vld [vmem:[%s232 + $0x750] sm:$0xff]
        %v787 = vld [vmem:[%s232 + $0x758] sm:$0xff]
        %v788 = vld [vmem:[%s232 + $0x760] sm:$0xff]
        %v789 = vld [vmem:[%s232 + $0x768] sm:$0xff]
        %v790 = vld [vmem:[%s232 + $0x770] sm:$0xff]
        %v791 = vld [vmem:[%s232 + $0x778] sm:$0xff]
        %v792 = vld [vmem:[%s232 + $0x780] sm:$0xff]
        %v793 = vld [vmem:[%s232 + $0x788] sm:$0xff]
        %v794 = vld [vmem:[%s232 + $0x790] sm:$0xff]
        %v795 = vld [vmem:[%s232 + $0x798] sm:$0xff]
        %v796 = vld [vmem:[%s232 + $0x7a0] sm:$0xff]
        %v797 = vld [vmem:[%s232 + $0x7a8] sm:$0xff]
        %v798 = vld [vmem:[%s232 + $0x7b0] sm:$0xff]
        %v799 = vld [vmem:[%s232 + $0x7b8] sm:$0xff]
        %v800 = vld [vmem:[%s232 + $0x7c0] sm:$0xff]
        %v801 = vld [vmem:[%s232 + $0x7c8] sm:$0xff]
        %v802 = vld [vmem:[%s232 + $0x7d0] sm:$0xff]
        %v803 = vld [vmem:[%s232 + $0x7d8] sm:$0xff]
        %v804 = vld [vmem:[%s232 + $0x7e0] sm:$0xff]
        %v805 = vld [vmem:[%s232 + $0x7e8] sm:$0xff]
        %v806 = vld [vmem:[%s232 + $0x7f0] sm:$0xff]
        %v807 = vld [vmem:[%s232 + $0x7f8] sm:$0xff]
        %v808 = vld [vmem:[%s232 + $0x800] sm:$0xff]
        %v809 = vld [vmem:[%s232 + $0x808] sm:$0xff]
        %v810 = vld [vmem:[%s232 + $0x810] sm:$0xff]
        %v811 = vld [vmem:[%s232 + $0x818] sm:$0xff]
        %v812 = vld [vmem:[%s232 + $0x820] sm:$0xff]
        %v813 = vld [vmem:[%s232 + $0x828] sm:$0xff]
        %v814 = vld [vmem:[%s232 + $0x830] sm:$0xff]
        %v815 = vld [vmem:[%s232 + $0x838] sm:$0xff]
        %v816 = vld [vmem:[%s232 + $0x840] sm:$0xff]
        %v817 = vld [vmem:[%s232 + $0x848] sm:$0xff]
        %v818 = vld [vmem:[%s232 + $0x850] sm:$0xff]
        %v819 = vld [vmem:[%s232 + $0x858] sm:$0xff]
        %v820 = vld [vmem:[%s232 + $0x860] sm:$0xff]
        %v821 = vld [vmem:[%s232 + $0x868] sm:$0xff]
        %v822 = vld [vmem:[%s232 + $0x870] sm:$0xff]
        %v823 = vld [vmem:[%s232 + $0x878] sm:$0xff]
        %v824 = vld [vmem:[%s232 + $0x880] sm:$0xff]
        %v825 = vld [vmem:[%s232 + $0x888] sm:$0xff]
        %v826 = vld [vmem:[%s232 + $0x890] sm:$0xff]
        %v827 = vld [vmem:[%s232 + $0x898] sm:$0xff]
        %v828 = vld [vmem:[%s232 + $0x8a0] sm:$0xff]
        %v829 = vld [vmem:[%s232 + $0x8a8] sm:$0xff]
        %v830 = vld [vmem:[%s232 + $0x8b0] sm:$0xff]
        %v831 = vld [vmem:[%s232 + $0x8b8] sm:$0xff]
        %v832 = vld [vmem:[%s232 + $0x8c0] sm:$0xff]
        %v833 = vld [vmem:[%s232 + $0x8c8] sm:$0xff]
        %v834 = vld [vmem:[%s232 + $0x8d0] sm:$0xff]
        %v835 = vld [vmem:[%s232 + $0x8d8] sm:$0xff]
        %v836 = vld [vmem:[%s232 + $0x8e0] sm:$0xff]
        %v837 = vld [vmem:[%s232 + $0x8e8] sm:$0xff]
        %v838 = vld [vmem:[%s232 + $0x8f0] sm:$0xff]
        %v839 = vld [vmem:[%s232 + $0x8f8] sm:$0xff]
        %v840 = vld [vmem:[%s232 + $0x900] sm:$0xff]
        %v841 = vld [vmem:[%s232 + $0x908] sm:$0xff]
        %v842 = vld [vmem:[%s232 + $0x910] sm:$0xff]
        %v843 = vld [vmem:[%s232 + $0x918] sm:$0xff]
        %v844 = vld [vmem:[%s232 + $0x920] sm:$0xff]
        %v845 = vld [vmem:[%s232 + $0x928] sm:$0xff]
        %v846 = vld [vmem:[%s232 + $0x930] sm:$0xff]
        %v847 = vld [vmem:[%s232 + $0x938] sm:$0xff]
        %v848 = vld [vmem:[%s232 + $0x940] sm:$0xff]
        %v849 = vld [vmem:[%s232 + $0x948] sm:$0xff]
        %v850 = vld [vmem:[%s232 + $0x950] sm:$0xff]
        %v851 = vld [vmem:[%s232 + $0x958] sm:$0xff]
        %v852 = vld [vmem:[%s232 + $0x960] sm:$0xff]
        %v853 = vld [vmem:[%s232 + $0x968] sm:$0xff]
        %v854 = vld [vmem:[%s232 + $0x970] sm:$0xff]
        %v855 = vld [vmem:[%s232 + $0x978] sm:$0xff]
        %v856 = vld [vmem:[%s232 + $0x980] sm:$0xff]
        %v857 = vld [vmem:[%s232 + $0x988] sm:$0xff]
        %v858 = vld [vmem:[%s232 + $0x990] sm:$0xff]
        %v859 = vld [vmem:[%s232 + $0x998] sm:$0xff]
        %v860 = vld [vmem:[%s232 + $0x9a0] sm:$0xff]
        %v861 = vld [vmem:[%s232 + $0x9a8] sm:$0xff]
        %v862 = vld [vmem:[%s232 + $0x9b0] sm:$0xff]
        %v863 = vld [vmem:[%s232 + $0x9b8] sm:$0xff]
        %v864 = vld [vmem:[%s232 + $0x9c0] sm:$0xff]
        %v865 = vld [vmem:[%s232 + $0x9c8] sm:$0xff]
        %v866 = vld [vmem:[%s232 + $0x9d0] sm:$0xff]
        %v867 = vld [vmem:[%s232 + $0x9d8] sm:$0xff]
        %v868 = vld [vmem:[%s232 + $0x9e0] sm:$0xff]
        %v869 = vld [vmem:[%s232 + $0x9e8] sm:$0xff]
        %v870 = vld [vmem:[%s232 + $0x9f0] sm:$0xff]
        %v871 = vld [vmem:[%s232 + $0x9f8] sm:$0xff]
        %v872 = vld [vmem:[%s232 + $0xa00] sm:$0xff]
        %v873 = vld [vmem:[%s232 + $0xa08] sm:$0xff]
        %v874 = vld [vmem:[%s232 + $0xa10] sm:$0xff]
        %v875 = vld [vmem:[%s232 + $0xa18] sm:$0xff]
        %v876 = vld [vmem:[%s232 + $0xa20] sm:$0xff]
        %v877 = vld [vmem:[%s232 + $0xa28] sm:$0xff]
        %v878 = vld [vmem:[%s232 + $0xa30] sm:$0xff]
        %v879 = vld [vmem:[%s232 + $0xa38] sm:$0xff]
        %v880 = vld [vmem:[%s232 + $0xa40] sm:$0xff]
        %v881 = vld [vmem:[%s232 + $0xa48] sm:$0xff]
        %v882 = vld [vmem:[%s232 + $0xa50] sm:$0xff]
        %v883 = vld [vmem:[%s232 + $0xa58] sm:$0xff]
        %v884 = vld [vmem:[%s232 + $0xa60] sm:$0xff]
        %v885 = vld [vmem:[%s232 + $0xa68] sm:$0xff]
        %v886 = vld [vmem:[%s232 + $0xa70] sm:$0xff]
        %v887 = vld [vmem:[%s232 + $0xa78] sm:$0xff]
        %v888 = vld [vmem:[%s232 + $0xa80] sm:$0xff]
        %v889 = vld [vmem:[%s232 + $0xa88] sm:$0xff]
        %v890 = vld [vmem:[%s232 + $0xa90] sm:$0xff]
        %v891 = vld [vmem:[%s232 + $0xa98] sm:$0xff]
        %v892 = vld [vmem:[%s232 + $0xaa0] sm:$0xff]
        %v893 = vld [vmem:[%s232 + $0xaa8] sm:$0xff]
        %v894 = vld [vmem:[%s232 + $0xab0] sm:$0xff]
        %v895 = vld [vmem:[%s232 + $0xab8] sm:$0xff]
        %v896 = vld [vmem:[%s232 + $0xac0] sm:$0xff]
        %v897 = vld [vmem:[%s232 + $0xac8] sm:$0xff]
        %v898 = vld [vmem:[%s232 + $0xad0] sm:$0xff]
        %v899 = vld [vmem:[%s232 + $0xad8] sm:$0xff]
        %v900 = vld [vmem:[%s232 + $0xae0] sm:$0xff]
        %v901 = vld [vmem:[%s232 + $0xae8] sm:$0xff]
        %v902 = vld [vmem:[%s232 + $0xaf0] sm:$0xff]
        %v903 = vld [vmem:[%s232 + $0xaf8] sm:$0xff]
        %v904 = vld [vmem:[%s232 + $0xb00] sm:$0xff]
        %v905 = vld [vmem:[%s232 + $0xb08] sm:$0xff]
        %v906 = vld [vmem:[%s232 + $0xb10] sm:$0xff]
        %v907 = vld [vmem:[%s232 + $0xb18] sm:$0xff]
        %v908 = vld [vmem:[%s232 + $0xb20] sm:$0xff]
        %v909 = vld [vmem:[%s232 + $0xb28] sm:$0xff]
        %v910 = vld [vmem:[%s232 + $0xb30] sm:$0xff]
        %v911 = vld [vmem:[%s232 + $0xb38] sm:$0xff]
        %v912 = vld [vmem:[%s232 + $0xb40] sm:$0xff]
        %v913 = vld [vmem:[%s232 + $0xb48] sm:$0xff]
        %v914 = vld [vmem:[%s232 + $0xb50] sm:$0xff]
        %v915 = vld [vmem:[%s232 + $0xb58] sm:$0xff]
        %v916 = vld [vmem:[%s232 + $0xb60] sm:$0xff]
        %v917 = vld [vmem:[%s232 + $0xb68] sm:$0xff]
        %v918 = vld [vmem:[%s232 + $0xb70] sm:$0xff]
        %v919 = vld [vmem:[%s232 + $0xb78] sm:$0xff]
        %v920 = vld [vmem:[%s232 + $0xb80] sm:$0xff]
        %v921 = vld [vmem:[%s232 + $0xb88] sm:$0xff]
        %v922 = vld [vmem:[%s232 + $0xb90] sm:$0xff]
        %v923 = vld [vmem:[%s232 + $0xb98] sm:$0xff]
        %v924 = vld [vmem:[%s232 + $0xba0] sm:$0xff]
        %v925 = vld [vmem:[%s232 + $0xba8] sm:$0xff]
        %v926 = vld [vmem:[%s232 + $0xbb0] sm:$0xff]
        %v927 = vld [vmem:[%s232 + $0xbb8] sm:$0xff]
        %v928 = vld [vmem:[%s232 + $0xbc0] sm:$0xff]
        %v929 = vld [vmem:[%s232 + $0xbc8] sm:$0xff]
        %v930 = vld [vmem:[%s232 + $0xbd0] sm:$0xff]
        %v931 = vld [vmem:[%s232 + $0xbd8] sm:$0xff]
        %v932 = vld [vmem:[%s232 + $0xbe0] sm:$0xff]
        %v933 = vld [vmem:[%s232 + $0xbe8] sm:$0xff]
        %v934 = vld [vmem:[%s232 + $0xbf0] sm:$0xff]
        %v935 = vld [vmem:[%s232 + $0xbf8] sm:$0xff]
        %v936 = vld [vmem:[%s232 + $0xc00] sm:$0xff]
        %v937 = vld [vmem:[%s232 + $0xc08] sm:$0xff]
        %v938 = vld [vmem:[%s232 + $0xc10] sm:$0xff]
        %v939 = vld [vmem:[%s232 + $0xc18] sm:$0xff]
        %v940 = vld [vmem:[%s232 + $0xc20] sm:$0xff]
        %v941 = vld [vmem:[%s232 + $0xc28] sm:$0xff]
        %v942 = vld [vmem:[%s232 + $0xc30] sm:$0xff]
        %v943 = vld [vmem:[%s232 + $0xc38] sm:$0xff]
        %v944 = vld [vmem:[%s232 + $0xc40] sm:$0xff]
        %v945 = vld [vmem:[%s232 + $0xc48] sm:$0xff]
        %v946 = vld [vmem:[%s232 + $0xc50] sm:$0xff]
        %v947 = vld [vmem:[%s232 + $0xc58] sm:$0xff]
        %v948 = vld [vmem:[%s232 + $0xc60] sm:$0xff]
        %v949 = vld [vmem:[%s232 + $0xc68] sm:$0xff]
        %v950 = vld [vmem:[%s232 + $0xc70] sm:$0xff]
        %v951 = vld [vmem:[%s232 + $0xc78] sm:$0xff]
        %v952 = vld [vmem:[%s232 + $0xc80] sm:$0xff]
        %v953 = vld [vmem:[%s232 + $0xc88] sm:$0xff]
        %v954 = vld [vmem:[%s232 + $0xc90] sm:$0xff]
        %v955 = vld [vmem:[%s232 + $0xc98] sm:$0xff]
        %v956 = vld [vmem:[%s232 + $0xca0] sm:$0xff]
        %v957 = vld [vmem:[%s232 + $0xca8] sm:$0xff]
        %v958 = vld [vmem:[%s232 + $0xcb0] sm:$0xff]
        %v959 = vld [vmem:[%s232 + $0xcb8] sm:$0xff]
        %v960 = vld [vmem:[%s232 + $0xcc0] sm:$0xff]
        %v961 = vld [vmem:[%s232 + $0xcc8] sm:$0xff]
        %v962 = vld [vmem:[%s232 + $0xcd0] sm:$0xff]
        %v963 = vld [vmem:[%s232 + $0xcd8] sm:$0xff]
        %v964 = vld [vmem:[%s232 + $0xce0] sm:$0xff]
        %v965 = vld [vmem:[%s232 + $0xce8] sm:$0xff]
        %v966 = vld [vmem:[%s232 + $0xcf0] sm:$0xff]
        %v967 = vld [vmem:[%s232 + $0xcf8] sm:$0xff]
        %v968 = vld [vmem:[%s232 + $0xd00] sm:$0xff]
        %v969 = vld [vmem:[%s232 + $0xd08] sm:$0xff]
        %v970 = vld [vmem:[%s232 + $0xd10] sm:$0xff]
        %v971 = vld [vmem:[%s232 + $0xd18] sm:$0xff]
        %v972 = vld [vmem:[%s232 + $0xd20] sm:$0xff]
        %v973 = vld [vmem:[%s232 + $0xd28] sm:$0xff]
        %v974 = vld [vmem:[%s232 + $0xd30] sm:$0xff]
        %v975 = vld [vmem:[%s232 + $0xd38] sm:$0xff]
        %v976 = vld [vmem:[%s232 + $0xd40] sm:$0xff]
        %v977 = vld [vmem:[%s232 + $0xd48] sm:$0xff]
        %v978 = vld [vmem:[%s232 + $0xd50] sm:$0xff]
        %v979 = vld [vmem:[%s232 + $0xd58] sm:$0xff]
        %v980 = vld [vmem:[%s232 + $0xd60] sm:$0xff]
        %v981 = vld [vmem:[%s232 + $0xd68] sm:$0xff]
        %v982 = vld [vmem:[%s232 + $0xd70] sm:$0xff]
        %v983 = vld [vmem:[%s232 + $0xd78] sm:$0xff]
        %v984 = vld [vmem:[%s232 + $0xd80] sm:$0xff]
        %v985 = vld [vmem:[%s232 + $0xd88] sm:$0xff]
        %v986 = vld [vmem:[%s232 + $0xd90] sm:$0xff]
        %v987 = vld [vmem:[%s232 + $0xd98] sm:$0xff]
        %v988 = vld [vmem:[%s232 + $0xda0] sm:$0xff]
        %v989 = vld [vmem:[%s232 + $0xda8] sm:$0xff]
        %v990 = vld [vmem:[%s232 + $0xdb0] sm:$0xff]
        %v991 = vld [vmem:[%s232 + $0xdb8] sm:$0xff]
        %v992 = vld [vmem:[%s232 + $0xdc0] sm:$0xff]
        %v993 = vld [vmem:[%s232 + $0xdc8] sm:$0xff]
        %v994 = vld [vmem:[%s232 + $0xdd0] sm:$0xff]
        %v995 = vld [vmem:[%s232 + $0xdd8] sm:$0xff]
        %v996 = vld [vmem:[%s232 + $0xde0] sm:$0xff]
        %v997 = vld [vmem:[%s232 + $0xde8] sm:$0xff]
        %v998 = vld [vmem:[%s232 + $0xdf0] sm:$0xff]
        %v999 = vld [vmem:[%s232 + $0xdf8] sm:$0xff]
        %v1000 = vld [vmem:[%s232 + $0xe00] sm:$0xff]
        %v1001 = vld [vmem:[%s232 + $0xe08] sm:$0xff]
        %v1002 = vld [vmem:[%s232 + $0xe10] sm:$0xff]
        %v1003 = vld [vmem:[%s232 + $0xe18] sm:$0xff]
        %v1004 = vld [vmem:[%s232 + $0xe20] sm:$0xff]
        %v1005 = vld [vmem:[%s232 + $0xe28] sm:$0xff]
        %v1006 = vld [vmem:[%s232 + $0xe30] sm:$0xff]
        %v1007 = vld [vmem:[%s232 + $0xe38] sm:$0xff]
        %v1008 = vld [vmem:[%s232 + $0xe40] sm:$0xff]
        %v1009 = vld [vmem:[%s232 + $0xe48] sm:$0xff]
        %v1010 = vld [vmem:[%s232 + $0xe50] sm:$0xff]
        %v1011 = vld [vmem:[%s232 + $0xe58] sm:$0xff]
        %v1012 = vld [vmem:[%s232 + $0xe60] sm:$0xff]
        %v1013 = vld [vmem:[%s232 + $0xe68] sm:$0xff]
        %v1014 = vld [vmem:[%s232 + $0xe70] sm:$0xff]
        %v1015 = vld [vmem:[%s232 + $0xe78] sm:$0xff]
        %v1016 = vld [vmem:[%s232 + $0xe80] sm:$0xff]
        %v1017 = vld [vmem:[%s232 + $0xe88] sm:$0xff]
        %v1018 = vld [vmem:[%s232 + $0xe90] sm:$0xff]
        %v1019 = vld [vmem:[%s232 + $0xe98] sm:$0xff]
        %v1020 = vld [vmem:[%s232 + $0xea0] sm:$0xff]
        %v1021 = vld [vmem:[%s232 + $0xea8] sm:$0xff]
        %v1022 = vld [vmem:[%s232 + $0xeb0] sm:$0xff]
        %v1023 = vld [vmem:[%s232 + $0xeb8] sm:$0xff]
        %v1024 = vld [vmem:[%s232 + $0xec0] sm:$0xff]
        %v1025 = vld [vmem:[%s232 + $0xec8] sm:$0xff]
        %v1026 = vld [vmem:[%s232 + $0xed0] sm:$0xff]
        %v1027 = vld [vmem:[%s232 + $0xed8] sm:$0xff]
        %v1028 = vld [vmem:[%s232 + $0xee0] sm:$0xff]
        %v1029 = vld [vmem:[%s232 + $0xee8] sm:$0xff]
        %v1030 = vld [vmem:[%s232 + $0xef0] sm:$0xff]
        %v1031 = vld [vmem:[%s232 + $0xef8] sm:$0xff]
        %v1032 = vld [vmem:[%s232 + $0xf00] sm:$0xff]
        %v1033 = vld [vmem:[%s232 + $0xf08] sm:$0xff]
        %v1034 = vld [vmem:[%s232 + $0xf10] sm:$0xff]
        %v1035 = vld [vmem:[%s232 + $0xf18] sm:$0xff]
        %v1036 = vld [vmem:[%s232 + $0xf20] sm:$0xff]
        %v1037 = vld [vmem:[%s232 + $0xf28] sm:$0xff]
        %v1038 = vld [vmem:[%s232 + $0xf30] sm:$0xff]
        %v1039 = vld [vmem:[%s232 + $0xf38] sm:$0xff]
        %v1040 = vld [vmem:[%s232 + $0xf40] sm:$0xff]
        %v1041 = vld [vmem:[%s232 + $0xf48] sm:$0xff]
        %v1042 = vld [vmem:[%s232 + $0xf50] sm:$0xff]
        %v1043 = vld [vmem:[%s232 + $0xf58] sm:$0xff]
        %v1044 = vld [vmem:[%s232 + $0xf60] sm:$0xff]
        %v1045 = vld [vmem:[%s232 + $0xf68] sm:$0xff]
        %v1046 = vld [vmem:[%s232 + $0xf70] sm:$0xff]
        %v1047 = vld [vmem:[%s232 + $0xf78] sm:$0xff]
        %v1048 = vld [vmem:[%s232 + $0xf80] sm:$0xff]
        %v1049 = vld [vmem:[%s232 + $0xf88] sm:$0xff]
        %v1050 = vld [vmem:[%s232 + $0xf90] sm:$0xff]
        %v1051 = vld [vmem:[%s232 + $0xf98] sm:$0xff]
        %v1052 = vld [vmem:[%s232 + $0xfa0] sm:$0xff]
        %v1053 = vld [vmem:[%s232 + $0xfa8] sm:$0xff]
        %v1054 = vld [vmem:[%s232 + $0xfb0] sm:$0xff]
        %v1055 = vld [vmem:[%s232 + $0xfb8] sm:$0xff]
        %v1056 = vld [vmem:[%s232 + $0xfc0] sm:$0xff]
        %v1057 = vld [vmem:[%s232 + $0xfc8] sm:$0xff]
        %v1058 = vld [vmem:[%s232 + $0xfd0] sm:$0xff]
        %v1059 = vld [vmem:[%s232 + $0xfd8] sm:$0xff]
        %v1060 = vld [vmem:[%s232 + $0xfe0] sm:$0xff]
        %v1061 = vld [vmem:[%s232 + $0xfe8] sm:$0xff]
        %v1062 = vld [vmem:[%s232 + $0xff0] sm:$0xff]
        %v1063 = vld [vmem:[%s232 + $0xff8] sm:$0xff]
        %v1064 = vld [vmem:[%s232 + $0x1000] sm:$0xff]
        %v1065 = vld [vmem:[%s232 + $0x1008] sm:$0xff]
        %v1066 = vld [vmem:[%s232 + $0x1010] sm:$0xff]
        %v1067 = vld [vmem:[%s232 + $0x1018] sm:$0xff]
        %v1068 = vld [vmem:[%s232 + $0x1020] sm:$0xff]
        %v1069 = vld [vmem:[%s232 + $0x1028] sm:$0xff]
        %v1070 = vld [vmem:[%s232 + $0x1030] sm:$0xff]
        %v1071 = vld [vmem:[%s232 + $0x1038] sm:$0xff]
        %v1072 = vld [vmem:[%s232 + $0x1040] sm:$0xff]
        %v1073 = vld [vmem:[%s232 + $0x1048] sm:$0xff]
        %v1074 = vld [vmem:[%s232 + $0x1050] sm:$0xff]
        %v1075 = vld [vmem:[%s232 + $0x1058] sm:$0xff]
        %v1076 = vld [vmem:[%s232 + $0x1060] sm:$0xff]
        %v1077 = vld [vmem:[%s232 + $0x1068] sm:$0xff]
        %v1078 = vld [vmem:[%s232 + $0x1070] sm:$0xff]
        %v1079 = vld [vmem:[%s232 + $0x1078] sm:$0xff]
        %v1080 = vld [vmem:[%s232 + $0x1080] sm:$0xff]
        %v1081 = vld [vmem:[%s232 + $0x1088] sm:$0xff]
        %v1082 = vld [vmem:[%s232 + $0x1090] sm:$0xff]
        %v1083 = vld [vmem:[%s232 + $0x1098] sm:$0xff]
        %v1084 = vld [vmem:[%s232 + $0x10a0] sm:$0xff]
        %v1085 = vld [vmem:[%s232 + $0x10a8] sm:$0xff]
        %v1086 = vld [vmem:[%s232 + $0x10b0] sm:$0xff]
        %v1087 = vld [vmem:[%s232 + $0x10b8] sm:$0xff]
        %v1088 = vld [vmem:[%s232 + $0x10c0] sm:$0xff]
        %v1089 = vld [vmem:[%s232 + $0x10c8] sm:$0xff]
        %v1090 = vld [vmem:[%s232 + $0x10d0] sm:$0xff]
        %v1091 = vld [vmem:[%s232 + $0x10d8] sm:$0xff]
        %v1092 = vld [vmem:[%s232 + $0x10e0] sm:$0xff]
        %v1093 = vld [vmem:[%s232 + $0x10e8] sm:$0xff]
        %v1094 = vld [vmem:[%s232 + $0x10f0] sm:$0xff]
        %v1095 = vld [vmem:[%s232 + $0x10f8] sm:$0xff]
        %v1096 = vld [vmem:[%s232 + $0x1100] sm:$0xff]
        %v1097 = vld [vmem:[%s232 + $0x1108] sm:$0xff]
        %v1098 = vld [vmem:[%s232 + $0x1110] sm:$0xff]
        %v1099 = vld [vmem:[%s232 + $0x1118] sm:$0xff]
        %v1100 = vld [vmem:[%s232 + $0x1120] sm:$0xff]
        %v1101 = vld [vmem:[%s232 + $0x1128] sm:$0xff]
        %v1102 = vld [vmem:[%s232 + $0x1130] sm:$0xff]
        %v1103 = vld [vmem:[%s232 + $0x1138] sm:$0xff]
        %v1104 = vld [vmem:[%s232 + $0x1140] sm:$0xff]
        %v1105 = vld [vmem:[%s232 + $0x1148] sm:$0xff]
        %v1106 = vld [vmem:[%s232 + $0x1150] sm:$0xff]
        %v1107 = vld [vmem:[%s232 + $0x1158] sm:$0xff]
        %v1108 = vld [vmem:[%s232 + $0x1160] sm:$0xff]
        %v1109 = vld [vmem:[%s232 + $0x1168] sm:$0xff]
        %v1110 = vld [vmem:[%s232 + $0x1170] sm:$0xff]
        %v1111 = vld [vmem:[%s232 + $0x1178] sm:$0xff]
        %v1112 = vld [vmem:[%s232 + $0x1180] sm:$0xff]
        %v1113 = vld [vmem:[%s232 + $0x1188] sm:$0xff]
        %v1114 = vld [vmem:[%s232 + $0x1190] sm:$0xff]
        %v1115 = vld [vmem:[%s232 + $0x1198] sm:$0xff]
        %v1116 = vld [vmem:[%s232 + $0x11a0] sm:$0xff]
        %v1117 = vld [vmem:[%s232 + $0x11a8] sm:$0xff]
        %v1118 = vld [vmem:[%s232 + $0x11b0] sm:$0xff]
        %v1119 = vld [vmem:[%s232 + $0x11b8] sm:$0xff]
        %v1120 = vld [vmem:[%s232 + $0x11c0] sm:$0xff]
        %v1121 = vld [vmem:[%s232 + $0x11c8] sm:$0xff]
        %v1122 = vld [vmem:[%s232 + $0x11d0] sm:$0xff]
        %v1123 = vld [vmem:[%s232 + $0x11d8] sm:$0xff]
        %v1124 = vld [vmem:[%s232 + $0x11e0] sm:$0xff]
        %v1125 = vld [vmem:[%s232 + $0x11e8] sm:$0xff]
        %v1126 = vld [vmem:[%s232 + $0x11f0] sm:$0xff]
        %v1127 = vld [vmem:[%s232 + $0x11f8] sm:$0xff]
        %1128 = vmatprep.subr.mxu0 %v643
        %1129 = vmatpush1.msra.mxu0 %v642
        %1130 = vmatprep.subr.mxu0 %v637
        %1131 = vmatpush1.msra.mxu0 %v636
        %1132 = vmatprep.subr.mxu0 %v631
        %1133 = vmatpush1.msra.mxu0 %v630
        %1134 = vmatprep.subr.mxu0 %v625
        %1135 = vmatpush1.msra.mxu0 %v624
        %1136 = vmatprep.subr.mxu0 %v619
        %1137 = vmatpush1.msra.mxu0 %v618
        %1138 = vmatprep.subr.mxu0 %v613
        %1139 = vmatpush1.msra.mxu0 %v612
        %1140 = vmatprep.subr.mxu0 %v607
        %1141 = vmatpush1.msra.mxu0 %v606
        %1142 = vmatprep.subr.mxu0 %v601
        %1143 = vmatpush1.msra.mxu0 %v600
        %1144 = vmatprep.subr.mxu0 %v595
        %1145 = vmatpush1.msra.mxu0 %v594
        %1146 = vmatprep.subr.mxu0 %v589
        %1147 = vmatpush1.msra.mxu0 %v588
        %1148 = vmatprep.subr.mxu0 %v583
        %1149 = vmatpush1.msra.mxu0 %v582
        %1150 = vmatprep.subr.mxu0 %v577
        %1151 = vmatpush1.msra.mxu0 %v576
        %1152 = vmatprep.subr.mxu0 %v571
        %1153 = vmatpush1.msra.mxu0 %v570
        %1154 = vmatprep.subr.mxu0 %v565
        %1155 = vmatpush1.msra.mxu0 %v564
        %1156 = vmatprep.subr.mxu0 %v559
        %1157 = vmatpush1.msra.mxu0 %v558
        %1158 = vmatprep.subr.mxu0 %v553
        %1159 = vmatpush1.msra.mxu0 %v552
        %1160 = vmatprep.subr.mxu0 %v739
        %1161 = vmatpush2.msra.mxu0 %v738
        %1162 = vmatprep.subr.mxu0 %v733
        %1163 = vmatpush2.msra.mxu0 %v732
        %1164 = vmatprep.subr.mxu0 %v727
        %1165 = vmatpush2.msra.mxu0 %v726
        %1166 = vmatprep.subr.mxu0 %v721
        %1167 = vmatpush2.msra.mxu0 %v720
        %1168 = vmatprep.subr.mxu0 %v715
        %1169 = vmatpush2.msra.mxu0 %v714
        %1170 = vmatprep.subr.mxu0 %v709
        %1171 = vmatpush2.msra.mxu0 %v708
        %1172 = vmatprep.subr.mxu0 %v703
        %1173 = vmatpush2.msra.mxu0 %v702
        %1174 = vmatprep.subr.mxu0 %v697
        %1175 = vmatpush2.msra.mxu0 %v696
        %1176 = vmatprep.subr.mxu0 %v691
        %1177 = vmatpush2.msra.mxu0 %v690
        %1178 = vmatprep.subr.mxu0 %v685
        %1179 = vmatpush2.msra.mxu0 %v684
        %1180 = vmatprep.subr.mxu0 %v679
        %1181 = vmatpush2.msra.mxu0 %v678
        %1182 = vmatprep.subr.mxu0 %v673
        %1183 = vmatpush2.msra.mxu0 %v672
        %1184 = vmatprep.subr.mxu0 %v667
        %1185 = vmatpush2.msra.mxu0 %v666
        %1186 = vmatprep.subr.mxu0 %v661
        %1187 = vmatpush2.msra.mxu0 %v660
        %1188 = vmatprep.subr.mxu0 %v655
        %1189 = vmatpush2.msra.mxu0 %v654
        %1190 = vmatprep.subr.mxu0 %v649
        %1191 = vmatpush2.msra.mxu0 %v648
        %1192 = vmatprep.mubr.f32.mxu0 %v265
        %1193 = vmatmul.mubr.f32.gmra.mxu0 %v264
        %v1194 = vpop.f32.mrf.mxu0
        %v1195 = vadd.f32 0.0, %v1194
        %v1196 = vpop.f32.mrf.mxu0
        %v1197 = vadd.f32 0.0, %v1196
        %1198 = vmatprep.mubr.f32.mxu0 %v271
        %1199 = vmatmul.mubr.f32.gmra.mxu0 %v270
        %v1200 = vpop.f32.mrf.mxu0
        %v1201 = vadd.f32 0.0, %v1200
        %v1202 = vpop.f32.mrf.mxu0
        %v1203 = vadd.f32 0.0, %v1202
        %1204 = vmatprep.mubr.f32.mxu0 %v277
        %1205 = vmatmul.mubr.f32.gmra.mxu0 %v276
        %v1206 = vpop.f32.mrf.mxu0
        %v1207 = vadd.f32 0.0, %v1206
        %v1208 = vpop.f32.mrf.mxu0
        %v1209 = vadd.f32 0.0, %v1208
        %1210 = vmatprep.mubr.f32.mxu0 %v283
        %1211 = vmatmul.mubr.f32.gmra.mxu0 %v282
        %v1212 = vpop.f32.mrf.mxu0
        %v1213 = vadd.f32 0.0, %v1212
        %v1214 = vpop.f32.mrf.mxu0
        %v1215 = vadd.f32 0.0, %v1214
        %1216 = vmatprep.mubr.f32.mxu0 %v289
        %1217 = vmatmul.mubr.f32.gmra.mxu0 %v288
        %v1218 = vpop.f32.mrf.mxu0
        %v1219 = vadd.f32 0.0, %v1218
        %v1220 = vpop.f32.mrf.mxu0
        %v1221 = vadd.f32 0.0, %v1220
        %1222 = vmatprep.mubr.f32.mxu0 %v295
        %1223 = vmatmul.mubr.f32.gmra.mxu0 %v294
        %v1224 = vpop.f32.mrf.mxu0
        %v1225 = vadd.f32 0.0, %v1224
        %v1226 = vpop.f32.mrf.mxu0
        %v1227 = vadd.f32 0.0, %v1226
        %1228 = vmatprep.mubr.f32.mxu0 %v301
        %1229 = vmatmul.mubr.f32.gmra.mxu0 %v300
        %v1230 = vpop.f32.mrf.mxu0
        %v1231 = vadd.f32 0.0, %v1230
        %v1232 = vpop.f32.mrf.mxu0
        %v1233 = vadd.f32 0.0, %v1232
        %1234 = vmatprep.mubr.f32.mxu0 %v307
        %1235 = vmatmul.mubr.f32.gmra.mxu0 %v306
        %v1236 = vpop.f32.mrf.mxu0
        %v1237 = vadd.f32 0.0, %v1236
        %v1238 = vpop.f32.mrf.mxu0
        %v1239 = vadd.f32 0.0, %v1238
        %1240 = vmatprep.mubr.f32.mxu0 %v313
        %1241 = vmatmul.mubr.f32.gmra.mxu0 %v312
        %v1242 = vpop.f32.mrf.mxu0
        %v1243 = vadd.f32 0.0, %v1242
        %v1244 = vpop.f32.mrf.mxu0
        %v1245 = vadd.f32 0.0, %v1244
        %1246 = vmatprep.mubr.f32.mxu0 %v319
        %1247 = vmatmul.mubr.f32.gmra.mxu0 %v318
        %v1248 = vpop.f32.mrf.mxu0
        %v1249 = vadd.f32 0.0, %v1248
        %v1250 = vpop.f32.mrf.mxu0
        %v1251 = vadd.f32 0.0, %v1250
        %1252 = vmatprep.mubr.f32.mxu0 %v325
        %1253 = vmatmul.mubr.f32.gmra.mxu0 %v324
        %v1254 = vpop.f32.mrf.mxu0
        %v1255 = vadd.f32 0.0, %v1254
        %v1256 = vpop.f32.mrf.mxu0
        %v1257 = vadd.f32 0.0, %v1256
        %1258 = vmatprep.mubr.f32.mxu0 %v331
        %1259 = vmatmul.mubr.f32.gmra.mxu0 %v330
        %v1260 = vpop.f32.mrf.mxu0
        %v1261 = vadd.f32 0.0, %v1260
        %v1262 = vpop.f32.mrf.mxu0
        %v1263 = vadd.f32 0.0, %v1262
        %1264 = vmatprep.mubr.f32.mxu0 %v337
        %1265 = vmatmul.mubr.f32.gmra.mxu0 %v336
        %v1266 = vpop.f32.mrf.mxu0
        %v1267 = vadd.f32 0.0, %v1266
        %v1268 = vpop.f32.mrf.mxu0
        %v1269 = vadd.f32 0.0, %v1268
        %1270 = vmatprep.mubr.f32.mxu0 %v343
        %1271 = vmatmul.mubr.f32.gmra.mxu0 %v342
        %v1272 = vpop.f32.mrf.mxu0
        %v1273 = vadd.f32 0.0, %v1272
        %v1274 = vpop.f32.mrf.mxu0
        %v1275 = vadd.f32 0.0, %v1274
        %1276 = vmatprep.mubr.f32.mxu0 %v349
        %1277 = vmatmul.mubr.f32.gmra.mxu0 %v348
        %v1278 = vpop.f32.mrf.mxu0
        %v1279 = vadd.f32 0.0, %v1278
        %v1280 = vpop.f32.mrf.mxu0
        %v1281 = vadd.f32 0.0, %v1280
        %1282 = vmatprep.mubr.f32.mxu0 %v355
        %1283 = vmatmul.mubr.f32.gmra.mxu0 %v354
        %v1284 = vpop.f32.mrf.mxu0
        %v1285 = vadd.f32 0.0, %v1284
        %v1286 = vpop.f32.mrf.mxu0
        %v1287 = vadd.f32 0.0, %v1286
        %1288 = vmatprep.mubr.f32.mxu0 %v361
        %1289 = vmatmul.mubr.f32.gmra.mxu0 %v360
        %v1290 = vpop.f32.mrf.mxu0
        %v1291 = vadd.f32 0.0, %v1290
        %v1292 = vpop.f32.mrf.mxu0
        %v1293 = vadd.f32 0.0, %v1292
        %1294 = vmatprep.mubr.f32.mxu0 %v367
        %1295 = vmatmul.mubr.f32.gmra.mxu0 %v366
        %v1296 = vpop.f32.mrf.mxu0
        %v1297 = vadd.f32 0.0, %v1296
        %v1298 = vpop.f32.mrf.mxu0
        %v1299 = vadd.f32 0.0, %v1298
        %1300 = vmatprep.mubr.f32.mxu0 %v373
        %1301 = vmatmul.mubr.f32.gmra.mxu0 %v372
        %v1302 = vpop.f32.mrf.mxu0
        %v1303 = vadd.f32 0.0, %v1302
        %v1304 = vpop.f32.mrf.mxu0
        %v1305 = vadd.f32 0.0, %v1304
        %1306 = vmatprep.mubr.f32.mxu0 %v379
        %1307 = vmatmul.mubr.f32.gmra.mxu0 %v378
        %v1308 = vpop.f32.mrf.mxu0
        %v1309 = vadd.f32 0.0, %v1308
        %v1310 = vpop.f32.mrf.mxu0
        %v1311 = vadd.f32 0.0, %v1310
        %1312 = vmatprep.mubr.f32.mxu0 %v385
        %1313 = vmatmul.mubr.f32.gmra.mxu0 %v384
        %v1314 = vpop.f32.mrf.mxu0
        %v1315 = vadd.f32 0.0, %v1314
        %v1316 = vpop.f32.mrf.mxu0
        %v1317 = vadd.f32 0.0, %v1316
        %1318 = vmatprep.mubr.f32.mxu0 %v391
        %1319 = vmatmul.mubr.f32.gmra.mxu0 %v390
        %v1320 = vpop.f32.mrf.mxu0
        %v1321 = vadd.f32 0.0, %v1320
        %v1322 = vpop.f32.mrf.mxu0
        %v1323 = vadd.f32 0.0, %v1322
        %1324 = vmatprep.mubr.f32.mxu0 %v397
        %1325 = vmatmul.mubr.f32.gmra.mxu0 %v396
        %v1326 = vpop.f32.mrf.mxu0
        %v1327 = vadd.f32 0.0, %v1326
        %v1328 = vpop.f32.mrf.mxu0
        %v1329 = vadd.f32 0.0, %v1328
        %1330 = vmatprep.mubr.f32.mxu0 %v403
        %1331 = vmatmul.mubr.f32.gmra.mxu0 %v402
        %v1332 = vpop.f32.mrf.mxu0
        %v1333 = vadd.f32 0.0, %v1332
        %v1334 = vpop.f32.mrf.mxu0
        %v1335 = vadd.f32 0.0, %v1334
        %1336 = vmatprep.mubr.f32.mxu0 %v409
        %1337 = vmatmul.mubr.f32.gmra.mxu0 %v408
        %v1338 = vpop.f32.mrf.mxu0
        %v1339 = vadd.f32 0.0, %v1338
        %v1340 = vpop.f32.mrf.mxu0
        %v1341 = vadd.f32 0.0, %v1340
        %1342 = vmatprep.mubr.f32.mxu0 %v415
        %1343 = vmatmul.mubr.f32.gmra.mxu0 %v414
        %v1344 = vpop.f32.mrf.mxu0
        %v1345 = vadd.f32 0.0, %v1344
        %v1346 = vpop.f32.mrf.mxu0
        %v1347 = vadd.f32 0.0, %v1346
        %1348 = vmatprep.mubr.f32.mxu0 %v421
        %1349 = vmatmul.mubr.f32.gmra.mxu0 %v420
        %v1350 = vpop.f32.mrf.mxu0
        %v1351 = vadd.f32 0.0, %v1350
        %v1352 = vpop.f32.mrf.mxu0
        %v1353 = vadd.f32 0.0, %v1352
        %1354 = vmatprep.mubr.f32.mxu0 %v427
        %1355 = vmatmul.mubr.f32.gmra.mxu0 %v426
        %v1356 = vpop.f32.mrf.mxu0
        %v1357 = vadd.f32 0.0, %v1356
        %v1358 = vpop.f32.mrf.mxu0
        %v1359 = vadd.f32 0.0, %v1358
        %1360 = vmatprep.mubr.f32.mxu0 %v433
        %1361 = vmatmul.mubr.f32.gmra.mxu0 %v432
        %v1362 = vpop.f32.mrf.mxu0
        %v1363 = vadd.f32 0.0, %v1362
        %v1364 = vpop.f32.mrf.mxu0
        %v1365 = vadd.f32 0.0, %v1364
        %1366 = vmatprep.mubr.f32.mxu0 %v439
        %1367 = vmatmul.mubr.f32.gmra.mxu0 %v438
        %v1368 = vpop.f32.mrf.mxu0
        %v1369 = vadd.f32 0.0, %v1368
        %v1370 = vpop.f32.mrf.mxu0
        %v1371 = vadd.f32 0.0, %v1370
        %1372 = vmatprep.mubr.f32.mxu0 %v445
        %1373 = vmatmul.mubr.f32.gmra.mxu0 %v444
        %v1374 = vpop.f32.mrf.mxu0
        %v1375 = vadd.f32 0.0, %v1374
        %v1376 = vpop.f32.mrf.mxu0
        %v1377 = vadd.f32 0.0, %v1376
        %1378 = vmatprep.mubr.f32.mxu0 %v451
        %1379 = vmatmul.mubr.f32.gmra.mxu0 %v450
        %v1380 = vpop.f32.mrf.mxu0
        %v1381 = vadd.f32 0.0, %v1380
        %v1382 = vpop.f32.mrf.mxu0
        %v1383 = vadd.f32 0.0, %v1382
        %1384 = vmatprep.mubr.f32.mxu0 %v457
        %1385 = vmatmul.mubr.f32.gmra.mxu0 %v456
        %v1386 = vpop.f32.mrf.mxu0
        %v1387 = vadd.f32 0.0, %v1386
        %v1388 = vpop.f32.mrf.mxu0
        %v1389 = vadd.f32 0.0, %v1388
        %1390 = vmatprep.mubr.f32.mxu0 %v463
        %1391 = vmatmul.mubr.f32.gmra.mxu0 %v462
        %v1392 = vpop.f32.mrf.mxu0
        %v1393 = vadd.f32 0.0, %v1392
        %v1394 = vpop.f32.mrf.mxu0
        %v1395 = vadd.f32 0.0, %v1394
        %1396 = vmatprep.mubr.f32.mxu0 %v469
        %1397 = vmatmul.mubr.f32.gmra.mxu0 %v468
        %v1398 = vpop.f32.mrf.mxu0
        %v1399 = vadd.f32 0.0, %v1398
        %v1400 = vpop.f32.mrf.mxu0
        %v1401 = vadd.f32 0.0, %v1400
        %1402 = vmatprep.mubr.f32.mxu0 %v475
        %1403 = vmatmul.mubr.f32.gmra.mxu0 %v474
        %v1404 = vpop.f32.mrf.mxu0
        %v1405 = vadd.f32 0.0, %v1404
        %v1406 = vpop.f32.mrf.mxu0
        %v1407 = vadd.f32 0.0, %v1406
        %1408 = vmatprep.mubr.f32.mxu0 %v481
        %1409 = vmatmul.mubr.f32.gmra.mxu0 %v480
        %v1410 = vpop.f32.mrf.mxu0
        %v1411 = vadd.f32 0.0, %v1410
        %v1412 = vpop.f32.mrf.mxu0
        %v1413 = vadd.f32 0.0, %v1412
        %1414 = vmatprep.mubr.f32.mxu0 %v487
        %1415 = vmatmul.mubr.f32.gmra.mxu0 %v486
        %v1416 = vpop.f32.mrf.mxu0
        %v1417 = vadd.f32 0.0, %v1416
        %v1418 = vpop.f32.mrf.mxu0
        %v1419 = vadd.f32 0.0, %v1418
        %1420 = vmatprep.mubr.f32.mxu0 %v493
        %1421 = vmatmul.mubr.f32.gmra.mxu0 %v492
        %v1422 = vpop.f32.mrf.mxu0
        %v1423 = vadd.f32 0.0, %v1422
        %v1424 = vpop.f32.mrf.mxu0
        %v1425 = vadd.f32 0.0, %v1424
        %1426 = vmatprep.mubr.f32.mxu0 %v499
        %1427 = vmatmul.mubr.f32.gmra.mxu0 %v498
        %v1428 = vpop.f32.mrf.mxu0
        %v1429 = vadd.f32 0.0, %v1428
        %v1430 = vpop.f32.mrf.mxu0
        %v1431 = vadd.f32 0.0, %v1430
        %1432 = vmatprep.mubr.f32.mxu0 %v505
        %1433 = vmatmul.mubr.f32.gmra.mxu0 %v504
        %v1434 = vpop.f32.mrf.mxu0
        %v1435 = vadd.f32 0.0, %v1434
        %v1436 = vpop.f32.mrf.mxu0
        %v1437 = vadd.f32 0.0, %v1436
        %1438 = vmatprep.mubr.f32.mxu0 %v511
        %1439 = vmatmul.mubr.f32.gmra.mxu0 %v510
        %v1440 = vpop.f32.mrf.mxu0
        %v1441 = vadd.f32 0.0, %v1440
        %v1442 = vpop.f32.mrf.mxu0
        %v1443 = vadd.f32 0.0, %v1442
        %1444 = vmatprep.mubr.f32.mxu0 %v517
        %1445 = vmatmul.mubr.f32.gmra.mxu0 %v516
        %v1446 = vpop.f32.mrf.mxu0
        %v1447 = vadd.f32 0.0, %v1446
        %v1448 = vpop.f32.mrf.mxu0
        %v1449 = vadd.f32 0.0, %v1448
        %1450 = vmatprep.mubr.f32.mxu0 %v523
        %1451 = vmatmul.mubr.f32.gmra.mxu0 %v522
        %v1452 = vpop.f32.mrf.mxu0
        %v1453 = vadd.f32 0.0, %v1452
        %v1454 = vpop.f32.mrf.mxu0
        %v1455 = vadd.f32 0.0, %v1454
        %1456 = vmatprep.mubr.f32.mxu0 %v529
        %1457 = vmatmul.mubr.f32.gmra.mxu0 %v528
        %v1458 = vpop.f32.mrf.mxu0
        %v1459 = vadd.f32 0.0, %v1458
        %v1460 = vpop.f32.mrf.mxu0
        %v1461 = vadd.f32 0.0, %v1460
        %1462 = vmatprep.mubr.f32.mxu0 %v535
        %1463 = vmatmul.mubr.f32.gmra.mxu0 %v534
        %v1464 = vpop.f32.mrf.mxu0
        %v1465 = vadd.f32 0.0, %v1464
        %v1466 = vpop.f32.mrf.mxu0
        %v1467 = vadd.f32 0.0, %v1466
        %1468 = vmatprep.mubr.f32.mxu0 %v541
        %1469 = vmatmul.mubr.f32.gmra.mxu0 %v540
        %v1470 = vpop.f32.mrf.mxu0
        %v1471 = vadd.f32 0.0, %v1470
        %v1472 = vpop.f32.mrf.mxu0
        %v1473 = vadd.f32 0.0, %v1472
        %1474 = vmatprep.mubr.f32.mxu0 %v547
        %1475 = vmatmul.mubr.f32.gmra.mxu0 %v546
        %v1476 = vpop.f32.mrf.mxu0
        %v1477 = vadd.f32 0.0, %v1476
        %v1478 = vpop.f32.mrf.mxu0
        %v1479 = vadd.f32 0.0, %v1478
        %1480 = vdwg.mxu0
        %1481 = vmatprep.subr.mxu0 %v835
        %1482 = vmatpush1.msra.mxu0 %v834
        %1483 = vmatprep.subr.mxu0 %v829
        %1484 = vmatpush1.msra.mxu0 %v828
        %1485 = vmatprep.subr.mxu0 %v823
        %1486 = vmatpush1.msra.mxu0 %v822
        %1487 = vmatprep.subr.mxu0 %v817
        %1488 = vmatpush1.msra.mxu0 %v816
        %1489 = vmatprep.subr.mxu0 %v811
        %1490 = vmatpush1.msra.mxu0 %v810
        %1491 = vmatprep.subr.mxu0 %v805
        %1492 = vmatpush1.msra.mxu0 %v804
        %1493 = vmatprep.subr.mxu0 %v799
        %1494 = vmatpush1.msra.mxu0 %v798
        %1495 = vmatprep.subr.mxu0 %v793
        %1496 = vmatpush1.msra.mxu0 %v792
        %1497 = vmatprep.subr.mxu0 %v787
        %1498 = vmatpush1.msra.mxu0 %v786
        %1499 = vmatprep.subr.mxu0 %v781
        %1500 = vmatpush1.msra.mxu0 %v780
        %1501 = vmatprep.subr.mxu0 %v775
        %1502 = vmatpush1.msra.mxu0 %v774
        %1503 = vmatprep.subr.mxu0 %v769
        %1504 = vmatpush1.msra.mxu0 %v768
        %1505 = vmatprep.subr.mxu0 %v763
        %1506 = vmatpush1.msra.mxu0 %v762
        %1507 = vmatprep.subr.mxu0 %v757
        %1508 = vmatpush1.msra.mxu0 %v756
        %1509 = vmatprep.subr.mxu0 %v751
        %1510 = vmatpush1.msra.mxu0 %v750
        %1511 = vmatprep.subr.mxu0 %v745
        %1512 = vmatpush1.msra.mxu0 %v744
        %1513 = vmatprep.subr.mxu0 %v931
        %1514 = vmatpush2.msra.mxu0 %v930
        %1515 = vmatprep.subr.mxu0 %v925
        %1516 = vmatpush2.msra.mxu0 %v924
        %1517 = vmatprep.subr.mxu0 %v919
        %1518 = vmatpush2.msra.mxu0 %v918
        %1519 = vmatprep.subr.mxu0 %v913
        %1520 = vmatpush2.msra.mxu0 %v912
        %1521 = vmatprep.subr.mxu0 %v907
        %1522 = vmatpush2.msra.mxu0 %v906
        %1523 = vmatprep.subr.mxu0 %v901
        %1524 = vmatpush2.msra.mxu0 %v900
        %1525 = vmatprep.subr.mxu0 %v895
        %1526 = vmatpush2.msra.mxu0 %v894
        %1527 = vmatprep.subr.mxu0 %v889
        %1528 = vmatpush2.msra.mxu0 %v888
        %1529 = vmatprep.subr.mxu0 %v883
        %1530 = vmatpush2.msra.mxu0 %v882
        %1531 = vmatprep.subr.mxu0 %v877
        %1532 = vmatpush2.msra.mxu0 %v876
        %1533 = vmatprep.subr.mxu0 %v871
        %1534 = vmatpush2.msra.mxu0 %v870
        %1535 = vmatprep.subr.mxu0 %v865
        %1536 = vmatpush2.msra.mxu0 %v864
        %1537 = vmatprep.subr.mxu0 %v859
        %1538 = vmatpush2.msra.mxu0 %v858
        %1539 = vmatprep.subr.mxu0 %v853
        %1540 = vmatpush2.msra.mxu0 %v852
        %1541 = vmatprep.subr.mxu0 %v847
        %1542 = vmatpush2.msra.mxu0 %v846
        %1543 = vmatprep.subr.mxu0 %v841
        %1544 = vmatpush2.msra.mxu0 %v840
        %1545 = vmatprep.mubr.f32.mxu0 %v267
        %1546 = vmatmul.mubr.f32.gmra.mxu0 %v266
        %v1547 = vpop.f32.mrf.mxu0
        %v1548 = vadd.f32 %v1195, %v1547
        %v1549 = vpop.f32.mrf.mxu0
        %v1550 = vadd.f32 %v1197, %v1549
        %1551 = vmatprep.mubr.f32.mxu0 %v273
        %1552 = vmatmul.mubr.f32.gmra.mxu0 %v272
        %v1553 = vpop.f32.mrf.mxu0
        %v1554 = vadd.f32 %v1201, %v1553
        %v1555 = vpop.f32.mrf.mxu0
        %v1556 = vadd.f32 %v1203, %v1555
        %1557 = vmatprep.mubr.f32.mxu0 %v279
        %1558 = vmatmul.mubr.f32.gmra.mxu0 %v278
        %v1559 = vpop.f32.mrf.mxu0
        %v1560 = vadd.f32 %v1207, %v1559
        %v1561 = vpop.f32.mrf.mxu0
        %v1562 = vadd.f32 %v1209, %v1561
        %1563 = vmatprep.mubr.f32.mxu0 %v285
        %1564 = vmatmul.mubr.f32.gmra.mxu0 %v284
        %v1565 = vpop.f32.mrf.mxu0
        %v1566 = vadd.f32 %v1213, %v1565
        %v1567 = vpop.f32.mrf.mxu0
        %v1568 = vadd.f32 %v1215, %v1567
        %1569 = vmatprep.mubr.f32.mxu0 %v291
        %1570 = vmatmul.mubr.f32.gmra.mxu0 %v290
        %v1571 = vpop.f32.mrf.mxu0
        %v1572 = vadd.f32 %v1219, %v1571
        %v1573 = vpop.f32.mrf.mxu0
        %v1574 = vadd.f32 %v1221, %v1573
        %1575 = vmatprep.mubr.f32.mxu0 %v297
        %1576 = vmatmul.mubr.f32.gmra.mxu0 %v296
        %v1577 = vpop.f32.mrf.mxu0
        %v1578 = vadd.f32 %v1225, %v1577
        %v1579 = vpop.f32.mrf.mxu0
        %v1580 = vadd.f32 %v1227, %v1579
        %1581 = vmatprep.mubr.f32.mxu0 %v303
        %1582 = vmatmul.mubr.f32.gmra.mxu0 %v302
        %v1583 = vpop.f32.mrf.mxu0
        %v1584 = vadd.f32 %v1231, %v1583
        %v1585 = vpop.f32.mrf.mxu0
        %v1586 = vadd.f32 %v1233, %v1585
        %1587 = vmatprep.mubr.f32.mxu0 %v309
        %1588 = vmatmul.mubr.f32.gmra.mxu0 %v308
        %v1589 = vpop.f32.mrf.mxu0
        %v1590 = vadd.f32 %v1237, %v1589
        %v1591 = vpop.f32.mrf.mxu0
        %v1592 = vadd.f32 %v1239, %v1591
        %1593 = vmatprep.mubr.f32.mxu0 %v315
        %1594 = vmatmul.mubr.f32.gmra.mxu0 %v314
        %v1595 = vpop.f32.mrf.mxu0
        %v1596 = vadd.f32 %v1243, %v1595
        %v1597 = vpop.f32.mrf.mxu0
        %v1598 = vadd.f32 %v1245, %v1597
        %1599 = vmatprep.mubr.f32.mxu0 %v321
        %1600 = vmatmul.mubr.f32.gmra.mxu0 %v320
        %v1601 = vpop.f32.mrf.mxu0
        %v1602 = vadd.f32 %v1249, %v1601
        %v1603 = vpop.f32.mrf.mxu0
        %v1604 = vadd.f32 %v1251, %v1603
        %1605 = vmatprep.mubr.f32.mxu0 %v327
        %1606 = vmatmul.mubr.f32.gmra.mxu0 %v326
        %v1607 = vpop.f32.mrf.mxu0
        %v1608 = vadd.f32 %v1255, %v1607
        %v1609 = vpop.f32.mrf.mxu0
        %v1610 = vadd.f32 %v1257, %v1609
        %1611 = vmatprep.mubr.f32.mxu0 %v333
        %1612 = vmatmul.mubr.f32.gmra.mxu0 %v332
        %v1613 = vpop.f32.mrf.mxu0
        %v1614 = vadd.f32 %v1261, %v1613
        %v1615 = vpop.f32.mrf.mxu0
        %v1616 = vadd.f32 %v1263, %v1615
        %1617 = vmatprep.mubr.f32.mxu0 %v339
        %1618 = vmatmul.mubr.f32.gmra.mxu0 %v338
        %v1619 = vpop.f32.mrf.mxu0
        %v1620 = vadd.f32 %v1267, %v1619
        %v1621 = vpop.f32.mrf.mxu0
        %v1622 = vadd.f32 %v1269, %v1621
        %1623 = vmatprep.mubr.f32.mxu0 %v345
        %1624 = vmatmul.mubr.f32.gmra.mxu0 %v344
        %v1625 = vpop.f32.mrf.mxu0
        %v1626 = vadd.f32 %v1273, %v1625
        %v1627 = vpop.f32.mrf.mxu0
        %v1628 = vadd.f32 %v1275, %v1627
        %1629 = vmatprep.mubr.f32.mxu0 %v351
        %1630 = vmatmul.mubr.f32.gmra.mxu0 %v350
        %v1631 = vpop.f32.mrf.mxu0
        %v1632 = vadd.f32 %v1279, %v1631
        %v1633 = vpop.f32.mrf.mxu0
        %v1634 = vadd.f32 %v1281, %v1633
        %1635 = vmatprep.mubr.f32.mxu0 %v357
        %1636 = vmatmul.mubr.f32.gmra.mxu0 %v356
        %v1637 = vpop.f32.mrf.mxu0
        %v1638 = vadd.f32 %v1285, %v1637
        %v1639 = vpop.f32.mrf.mxu0
        %v1640 = vadd.f32 %v1287, %v1639
        %1641 = vmatprep.mubr.f32.mxu0 %v363
        %1642 = vmatmul.mubr.f32.gmra.mxu0 %v362
        %v1643 = vpop.f32.mrf.mxu0
        %v1644 = vadd.f32 %v1291, %v1643
        %v1645 = vpop.f32.mrf.mxu0
        %v1646 = vadd.f32 %v1293, %v1645
        %1647 = vmatprep.mubr.f32.mxu0 %v369
        %1648 = vmatmul.mubr.f32.gmra.mxu0 %v368
        %v1649 = vpop.f32.mrf.mxu0
        %v1650 = vadd.f32 %v1297, %v1649
        %v1651 = vpop.f32.mrf.mxu0
        %v1652 = vadd.f32 %v1299, %v1651
        %1653 = vmatprep.mubr.f32.mxu0 %v375
        %1654 = vmatmul.mubr.f32.gmra.mxu0 %v374
        %v1655 = vpop.f32.mrf.mxu0
        %v1656 = vadd.f32 %v1303, %v1655
        %v1657 = vpop.f32.mrf.mxu0
        %v1658 = vadd.f32 %v1305, %v1657
        %1659 = vmatprep.mubr.f32.mxu0 %v381
        %1660 = vmatmul.mubr.f32.gmra.mxu0 %v380
        %v1661 = vpop.f32.mrf.mxu0
        %v1662 = vadd.f32 %v1309, %v1661
        %v1663 = vpop.f32.mrf.mxu0
        %v1664 = vadd.f32 %v1311, %v1663
        %1665 = vmatprep.mubr.f32.mxu0 %v387
        %1666 = vmatmul.mubr.f32.gmra.mxu0 %v386
        %v1667 = vpop.f32.mrf.mxu0
        %v1668 = vadd.f32 %v1315, %v1667
        %v1669 = vpop.f32.mrf.mxu0
        %v1670 = vadd.f32 %v1317, %v1669
        %1671 = vmatprep.mubr.f32.mxu0 %v393
        %1672 = vmatmul.mubr.f32.gmra.mxu0 %v392
        %v1673 = vpop.f32.mrf.mxu0
        %v1674 = vadd.f32 %v1321, %v1673
        %v1675 = vpop.f32.mrf.mxu0
        %v1676 = vadd.f32 %v1323, %v1675
        %1677 = vmatprep.mubr.f32.mxu0 %v399
        %1678 = vmatmul.mubr.f32.gmra.mxu0 %v398
        %v1679 = vpop.f32.mrf.mxu0
        %v1680 = vadd.f32 %v1327, %v1679
        %v1681 = vpop.f32.mrf.mxu0
        %v1682 = vadd.f32 %v1329, %v1681
        %1683 = vmatprep.mubr.f32.mxu0 %v405
        %1684 = vmatmul.mubr.f32.gmra.mxu0 %v404
        %v1685 = vpop.f32.mrf.mxu0
        %v1686 = vadd.f32 %v1333, %v1685
        %v1687 = vpop.f32.mrf.mxu0
        %v1688 = vadd.f32 %v1335, %v1687
        %1689 = vmatprep.mubr.f32.mxu0 %v411
        %1690 = vmatmul.mubr.f32.gmra.mxu0 %v410
        %v1691 = vpop.f32.mrf.mxu0
        %v1692 = vadd.f32 %v1339, %v1691
        %v1693 = vpop.f32.mrf.mxu0
        %v1694 = vadd.f32 %v1341, %v1693
        %1695 = vmatprep.mubr.f32.mxu0 %v417
        %1696 = vmatmul.mubr.f32.gmra.mxu0 %v416
        %v1697 = vpop.f32.mrf.mxu0
        %v1698 = vadd.f32 %v1345, %v1697
        %v1699 = vpop.f32.mrf.mxu0
        %v1700 = vadd.f32 %v1347, %v1699
        %1701 = vmatprep.mubr.f32.mxu0 %v423
        %1702 = vmatmul.mubr.f32.gmra.mxu0 %v422
        %v1703 = vpop.f32.mrf.mxu0
        %v1704 = vadd.f32 %v1351, %v1703
        %v1705 = vpop.f32.mrf.mxu0
        %v1706 = vadd.f32 %v1353, %v1705
        %1707 = vmatprep.mubr.f32.mxu0 %v429
        %1708 = vmatmul.mubr.f32.gmra.mxu0 %v428
        %v1709 = vpop.f32.mrf.mxu0
        %v1710 = vadd.f32 %v1357, %v1709
        %v1711 = vpop.f32.mrf.mxu0
        %v1712 = vadd.f32 %v1359, %v1711
        %1713 = vmatprep.mubr.f32.mxu0 %v435
        %1714 = vmatmul.mubr.f32.gmra.mxu0 %v434
        %v1715 = vpop.f32.mrf.mxu0
        %v1716 = vadd.f32 %v1363, %v1715
        %v1717 = vpop.f32.mrf.mxu0
        %v1718 = vadd.f32 %v1365, %v1717
        %1719 = vmatprep.mubr.f32.mxu0 %v441
        %1720 = vmatmul.mubr.f32.gmra.mxu0 %v440
        %v1721 = vpop.f32.mrf.mxu0
        %v1722 = vadd.f32 %v1369, %v1721
        %v1723 = vpop.f32.mrf.mxu0
        %v1724 = vadd.f32 %v1371, %v1723
        %1725 = vmatprep.mubr.f32.mxu0 %v447
        %1726 = vmatmul.mubr.f32.gmra.mxu0 %v446
        %v1727 = vpop.f32.mrf.mxu0
        %v1728 = vadd.f32 %v1375, %v1727
        %v1729 = vpop.f32.mrf.mxu0
        %v1730 = vadd.f32 %v1377, %v1729
        %1731 = vmatprep.mubr.f32.mxu0 %v453
        %1732 = vmatmul.mubr.f32.gmra.mxu0 %v452
        %v1733 = vpop.f32.mrf.mxu0
        %v1734 = vadd.f32 %v1381, %v1733
        %v1735 = vpop.f32.mrf.mxu0
        %v1736 = vadd.f32 %v1383, %v1735
        %1737 = vmatprep.mubr.f32.mxu0 %v459
        %1738 = vmatmul.mubr.f32.gmra.mxu0 %v458
        %v1739 = vpop.f32.mrf.mxu0
        %v1740 = vadd.f32 %v1387, %v1739
        %v1741 = vpop.f32.mrf.mxu0
        %v1742 = vadd.f32 %v1389, %v1741
        %1743 = vmatprep.mubr.f32.mxu0 %v465
        %1744 = vmatmul.mubr.f32.gmra.mxu0 %v464
        %v1745 = vpop.f32.mrf.mxu0
        %v1746 = vadd.f32 %v1393, %v1745
        %v1747 = vpop.f32.mrf.mxu0
        %v1748 = vadd.f32 %v1395, %v1747
        %1749 = vmatprep.mubr.f32.mxu0 %v471
        %1750 = vmatmul.mubr.f32.gmra.mxu0 %v470
        %v1751 = vpop.f32.mrf.mxu0
        %v1752 = vadd.f32 %v1399, %v1751
        %v1753 = vpop.f32.mrf.mxu0
        %v1754 = vadd.f32 %v1401, %v1753
        %1755 = vmatprep.mubr.f32.mxu0 %v477
        %1756 = vmatmul.mubr.f32.gmra.mxu0 %v476
        %v1757 = vpop.f32.mrf.mxu0
        %v1758 = vadd.f32 %v1405, %v1757
        %v1759 = vpop.f32.mrf.mxu0
        %v1760 = vadd.f32 %v1407, %v1759
        %1761 = vmatprep.mubr.f32.mxu0 %v483
        %1762 = vmatmul.mubr.f32.gmra.mxu0 %v482
        %v1763 = vpop.f32.mrf.mxu0
        %v1764 = vadd.f32 %v1411, %v1763
        %v1765 = vpop.f32.mrf.mxu0
        %v1766 = vadd.f32 %v1413, %v1765
        %1767 = vmatprep.mubr.f32.mxu0 %v489
        %1768 = vmatmul.mubr.f32.gmra.mxu0 %v488
        %v1769 = vpop.f32.mrf.mxu0
        %v1770 = vadd.f32 %v1417, %v1769
        %v1771 = vpop.f32.mrf.mxu0
        %v1772 = vadd.f32 %v1419, %v1771
        %1773 = vmatprep.mubr.f32.mxu0 %v495
        %1774 = vmatmul.mubr.f32.gmra.mxu0 %v494
        %v1775 = vpop.f32.mrf.mxu0
        %v1776 = vadd.f32 %v1423, %v1775
        %v1777 = vpop.f32.mrf.mxu0
        %v1778 = vadd.f32 %v1425, %v1777
        %1779 = vmatprep.mubr.f32.mxu0 %v501
        %1780 = vmatmul.mubr.f32.gmra.mxu0 %v500
        %v1781 = vpop.f32.mrf.mxu0
        %v1782 = vadd.f32 %v1429, %v1781
        %v1783 = vpop.f32.mrf.mxu0
        %v1784 = vadd.f32 %v1431, %v1783
        %1785 = vmatprep.mubr.f32.mxu0 %v507
        %1786 = vmatmul.mubr.f32.gmra.mxu0 %v506
        %v1787 = vpop.f32.mrf.mxu0
        %v1788 = vadd.f32 %v1435, %v1787
        %v1789 = vpop.f32.mrf.mxu0
        %v1790 = vadd.f32 %v1437, %v1789
        %1791 = vmatprep.mubr.f32.mxu0 %v513
        %1792 = vmatmul.mubr.f32.gmra.mxu0 %v512
        %v1793 = vpop.f32.mrf.mxu0
        %v1794 = vadd.f32 %v1441, %v1793
        %v1795 = vpop.f32.mrf.mxu0
        %v1796 = vadd.f32 %v1443, %v1795
        %1797 = vmatprep.mubr.f32.mxu0 %v519
        %1798 = vmatmul.mubr.f32.gmra.mxu0 %v518
        %v1799 = vpop.f32.mrf.mxu0
        %v1800 = vadd.f32 %v1447, %v1799
        %v1801 = vpop.f32.mrf.mxu0
        %v1802 = vadd.f32 %v1449, %v1801
        %1803 = vmatprep.mubr.f32.mxu0 %v525
        %1804 = vmatmul.mubr.f32.gmra.mxu0 %v524
        %v1805 = vpop.f32.mrf.mxu0
        %v1806 = vadd.f32 %v1453, %v1805
        %v1807 = vpop.f32.mrf.mxu0
        %v1808 = vadd.f32 %v1455, %v1807
        %1809 = vmatprep.mubr.f32.mxu0 %v531
        %1810 = vmatmul.mubr.f32.gmra.mxu0 %v530
        %v1811 = vpop.f32.mrf.mxu0
        %v1812 = vadd.f32 %v1459, %v1811
        %v1813 = vpop.f32.mrf.mxu0
        %v1814 = vadd.f32 %v1461, %v1813
        %1815 = vmatprep.mubr.f32.mxu0 %v537
        %1816 = vmatmul.mubr.f32.gmra.mxu0 %v536
        %v1817 = vpop.f32.mrf.mxu0
        %v1818 = vadd.f32 %v1465, %v1817
        %v1819 = vpop.f32.mrf.mxu0
        %v1820 = vadd.f32 %v1467, %v1819
        %1821 = vmatprep.mubr.f32.mxu0 %v543
        %1822 = vmatmul.mubr.f32.gmra.mxu0 %v542
        %v1823 = vpop.f32.mrf.mxu0
        %v1824 = vadd.f32 %v1471, %v1823
        %v1825 = vpop.f32.mrf.mxu0
        %v1826 = vadd.f32 %v1473, %v1825
        %1827 = vmatprep.mubr.f32.mxu0 %v549
        %1828 = vmatmul.mubr.f32.gmra.mxu0 %v548
        %v1829 = vpop.f32.mrf.mxu0
        %v1830 = vadd.f32 %v1477, %v1829
        %v1831 = vpop.f32.mrf.mxu0
        %v1832 = vadd.f32 %v1479, %v1831
        %1833 = vdwg.mxu0
        %1834 = vmatprep.subr.mxu0 %v1027
        %1835 = vmatpush1.msra.mxu0 %v1026
        %1836 = vmatprep.subr.mxu0 %v1021
        %1837 = vmatpush1.msra.mxu0 %v1020
        %1838 = vmatprep.subr.mxu0 %v1015
        %1839 = vmatpush1.msra.mxu0 %v1014
        %1840 = vmatprep.subr.mxu0 %v1009
        %1841 = vmatpush1.msra.mxu0 %v1008
        %1842 = vmatprep.subr.mxu0 %v1003
        %1843 = vmatpush1.msra.mxu0 %v1002
        %1844 = vmatprep.subr.mxu0 %v997
        %1845 = vmatpush1.msra.mxu0 %v996
        %1846 = vmatprep.subr.mxu0 %v991
        %1847 = vmatpush1.msra.mxu0 %v990
        %1848 = vmatprep.subr.mxu0 %v985
        %1849 = vmatpush1.msra.mxu0 %v984
        %1850 = vmatprep.subr.mxu0 %v979
        %1851 = vmatpush1.msra.mxu0 %v978
        %1852 = vmatprep.subr.mxu0 %v973
        %1853 = vmatpush1.msra.mxu0 %v972
        %1854 = vmatprep.subr.mxu0 %v967
        %1855 = vmatpush1.msra.mxu0 %v966
        %1856 = vmatprep.subr.mxu0 %v961
        %1857 = vmatpush1.msra.mxu0 %v960
        %1858 = vmatprep.subr.mxu0 %v955
        %1859 = vmatpush1.msra.mxu0 %v954
        %1860 = vmatprep.subr.mxu0 %v949
        %1861 = vmatpush1.msra.mxu0 %v948
        %1862 = vmatprep.subr.mxu0 %v943
        %1863 = vmatpush1.msra.mxu0 %v942
        %1864 = vmatprep.subr.mxu0 %v937
        %1865 = vmatpush1.msra.mxu0 %v936
        %1866 = vmatprep.subr.mxu0 %v1123
        %1867 = vmatpush2.msra.mxu0 %v1122
        %1868 = vmatprep.subr.mxu0 %v1117
        %1869 = vmatpush2.msra.mxu0 %v1116
        %1870 = vmatprep.subr.mxu0 %v1111
        %1871 = vmatpush2.msra.mxu0 %v1110
        %1872 = vmatprep.subr.mxu0 %v1105
        %1873 = vmatpush2.msra.mxu0 %v1104
        %1874 = vmatprep.subr.mxu0 %v1099
        %1875 = vmatpush2.msra.mxu0 %v1098
        %1876 = vmatprep.subr.mxu0 %v1093
        %1877 = vmatpush2.msra.mxu0 %v1092
        %1878 = vmatprep.subr.mxu0 %v1087
        %1879 = vmatpush2.msra.mxu0 %v1086
        %1880 = vmatprep.subr.mxu0 %v1081
        %1881 = vmatpush2.msra.mxu0 %v1080
        %1882 = vmatprep.subr.mxu0 %v1075
        %1883 = vmatpush2.msra.mxu0 %v1074
        %1884 = vmatprep.subr.mxu0 %v1069
        %1885 = vmatpush2.msra.mxu0 %v1068
        %1886 = vmatprep.subr.mxu0 %v1063
        %1887 = vmatpush2.msra.mxu0 %v1062
        %1888 = vmatprep.subr.mxu0 %v1057
        %1889 = vmatpush2.msra.mxu0 %v1056
        %1890 = vmatprep.subr.mxu0 %v1051
        %1891 = vmatpush2.msra.mxu0 %v1050
        %1892 = vmatprep.subr.mxu0 %v1045
        %1893 = vmatpush2.msra.mxu0 %v1044
        %1894 = vmatprep.subr.mxu0 %v1039
        %1895 = vmatpush2.msra.mxu0 %v1038
        %1896 = vmatprep.subr.mxu0 %v1033
        %1897 = vmatpush2.msra.mxu0 %v1032
        %1898 = vmatprep.mubr.f32.mxu0 %v269
        %1899 = vmatmul.mubr.f32.gmra.mxu0 %v268
        %v1900 = vpop.f32.mrf.mxu0
        %v1901 = vadd.f32 %v1548, %v1900
        %v1902 = vpop.f32.mrf.mxu0
        %v1903 = vadd.f32 %v1550, %v1902
        %1904 = vmatprep.mubr.f32.mxu0 %v275
        %1905 = vmatmul.mubr.f32.gmra.mxu0 %v274
        %v1906 = vpop.f32.mrf.mxu0
        %v1907 = vadd.f32 %v1554, %v1906
        %v1908 = vpop.f32.mrf.mxu0
        %v1909 = vadd.f32 %v1556, %v1908
        %1910 = vmatprep.mubr.f32.mxu0 %v281
        %1911 = vmatmul.mubr.f32.gmra.mxu0 %v280
        %v1912 = vpop.f32.mrf.mxu0
        %v1913 = vadd.f32 %v1560, %v1912
        %v1914 = vpop.f32.mrf.mxu0
        %v1915 = vadd.f32 %v1562, %v1914
        %1916 = vmatprep.mubr.f32.mxu0 %v287
        %1917 = vmatmul.mubr.f32.gmra.mxu0 %v286
        %v1918 = vpop.f32.mrf.mxu0
        %v1919 = vadd.f32 %v1566, %v1918
        %v1920 = vpop.f32.mrf.mxu0
        %v1921 = vadd.f32 %v1568, %v1920
        %1922 = vmatprep.mubr.f32.mxu0 %v293
        %1923 = vmatmul.mubr.f32.gmra.mxu0 %v292
        %v1924 = vpop.f32.mrf.mxu0
        %v1925 = vadd.f32 %v1572, %v1924
        %v1926 = vpop.f32.mrf.mxu0
        %v1927 = vadd.f32 %v1574, %v1926
        %1928 = vmatprep.mubr.f32.mxu0 %v299
        %1929 = vmatmul.mubr.f32.gmra.mxu0 %v298
        %v1930 = vpop.f32.mrf.mxu0
        %v1931 = vadd.f32 %v1578, %v1930
        %v1932 = vpop.f32.mrf.mxu0
        %v1933 = vadd.f32 %v1580, %v1932
        %1934 = vmatprep.mubr.f32.mxu0 %v305
        %1935 = vmatmul.mubr.f32.gmra.mxu0 %v304
        %v1936 = vpop.f32.mrf.mxu0
        %v1937 = vadd.f32 %v1584, %v1936
        %v1938 = vpop.f32.mrf.mxu0
        %v1939 = vadd.f32 %v1586, %v1938
        %1940 = vmatprep.mubr.f32.mxu0 %v311
        %1941 = vmatmul.mubr.f32.gmra.mxu0 %v310
        %v1942 = vpop.f32.mrf.mxu0
        %v1943 = vadd.f32 %v1590, %v1942
        %v1944 = vpop.f32.mrf.mxu0
        %v1945 = vadd.f32 %v1592, %v1944
        %1946 = vmatprep.mubr.f32.mxu0 %v317
        %1947 = vmatmul.mubr.f32.gmra.mxu0 %v316
        %v1948 = vpop.f32.mrf.mxu0
        %v1949 = vadd.f32 %v1596, %v1948
        %v1950 = vpop.f32.mrf.mxu0
        %v1951 = vadd.f32 %v1598, %v1950
        %1952 = vmatprep.mubr.f32.mxu0 %v323
        %1953 = vmatmul.mubr.f32.gmra.mxu0 %v322
        %v1954 = vpop.f32.mrf.mxu0
        %v1955 = vadd.f32 %v1602, %v1954
        %v1956 = vpop.f32.mrf.mxu0
        %v1957 = vadd.f32 %v1604, %v1956
        %1958 = vmatprep.mubr.f32.mxu0 %v329
        %1959 = vmatmul.mubr.f32.gmra.mxu0 %v328
        %v1960 = vpop.f32.mrf.mxu0
        %v1961 = vadd.f32 %v1608, %v1960
        %v1962 = vpop.f32.mrf.mxu0
        %v1963 = vadd.f32 %v1610, %v1962
        %1964 = vmatprep.mubr.f32.mxu0 %v335
        %1965 = vmatmul.mubr.f32.gmra.mxu0 %v334
        %v1966 = vpop.f32.mrf.mxu0
        %v1967 = vadd.f32 %v1614, %v1966
        %v1968 = vpop.f32.mrf.mxu0
        %v1969 = vadd.f32 %v1616, %v1968
        %1970 = vmatprep.mubr.f32.mxu0 %v341
        %1971 = vmatmul.mubr.f32.gmra.mxu0 %v340
        %v1972 = vpop.f32.mrf.mxu0
        %v1973 = vadd.f32 %v1620, %v1972
        %v1974 = vpop.f32.mrf.mxu0
        %v1975 = vadd.f32 %v1622, %v1974
        %1976 = vmatprep.mubr.f32.mxu0 %v347
        %1977 = vmatmul.mubr.f32.gmra.mxu0 %v346
        %v1978 = vpop.f32.mrf.mxu0
        %v1979 = vadd.f32 %v1626, %v1978
        %v1980 = vpop.f32.mrf.mxu0
        %v1981 = vadd.f32 %v1628, %v1980
        %1982 = vmatprep.mubr.f32.mxu0 %v353
        %1983 = vmatmul.mubr.f32.gmra.mxu0 %v352
        %v1984 = vpop.f32.mrf.mxu0
        %v1985 = vadd.f32 %v1632, %v1984
        %v1986 = vpop.f32.mrf.mxu0
        %v1987 = vadd.f32 %v1634, %v1986
        %1988 = vmatprep.mubr.f32.mxu0 %v359
        %1989 = vmatmul.mubr.f32.gmra.mxu0 %v358
        %v1990 = vpop.f32.mrf.mxu0
        %v1991 = vadd.f32 %v1638, %v1990
        %v1992 = vpop.f32.mrf.mxu0
        %v1993 = vadd.f32 %v1640, %v1992
        %1994 = vmatprep.mubr.f32.mxu0 %v365
        %1995 = vmatmul.mubr.f32.gmra.mxu0 %v364
        %v1996 = vpop.f32.mrf.mxu0
        %v1997 = vadd.f32 %v1644, %v1996
        %v1998 = vpop.f32.mrf.mxu0
        %v1999 = vadd.f32 %v1646, %v1998
        %2000 = vmatprep.mubr.f32.mxu0 %v371
        %2001 = vmatmul.mubr.f32.gmra.mxu0 %v370
        %v2002 = vpop.f32.mrf.mxu0
        %v2003 = vadd.f32 %v1650, %v2002
        %v2004 = vpop.f32.mrf.mxu0
        %v2005 = vadd.f32 %v1652, %v2004
        %2006 = vmatprep.mubr.f32.mxu0 %v377
        %2007 = vmatmul.mubr.f32.gmra.mxu0 %v376
        %v2008 = vpop.f32.mrf.mxu0
        %v2009 = vadd.f32 %v1656, %v2008
        %v2010 = vpop.f32.mrf.mxu0
        %v2011 = vadd.f32 %v1658, %v2010
        %2012 = vmatprep.mubr.f32.mxu0 %v383
        %2013 = vmatmul.mubr.f32.gmra.mxu0 %v382
        %v2014 = vpop.f32.mrf.mxu0
        %v2015 = vadd.f32 %v1662, %v2014
        %v2016 = vpop.f32.mrf.mxu0
        %v2017 = vadd.f32 %v1664, %v2016
        %2018 = vmatprep.mubr.f32.mxu0 %v389
        %2019 = vmatmul.mubr.f32.gmra.mxu0 %v388
        %v2020 = vpop.f32.mrf.mxu0
        %v2021 = vadd.f32 %v1668, %v2020
        %v2022 = vpop.f32.mrf.mxu0
        %v2023 = vadd.f32 %v1670, %v2022
        %2024 = vmatprep.mubr.f32.mxu0 %v395
        %2025 = vmatmul.mubr.f32.gmra.mxu0 %v394
        %v2026 = vpop.f32.mrf.mxu0
        %v2027 = vadd.f32 %v1674, %v2026
        %v2028 = vpop.f32.mrf.mxu0
        %v2029 = vadd.f32 %v1676, %v2028
        %2030 = vmatprep.mubr.f32.mxu0 %v401
        %2031 = vmatmul.mubr.f32.gmra.mxu0 %v400
        %v2032 = vpop.f32.mrf.mxu0
        %v2033 = vadd.f32 %v1680, %v2032
        %v2034 = vpop.f32.mrf.mxu0
        %v2035 = vadd.f32 %v1682, %v2034
        %2036 = vmatprep.mubr.f32.mxu0 %v407
        %2037 = vmatmul.mubr.f32.gmra.mxu0 %v406
        %v2038 = vpop.f32.mrf.mxu0
        %v2039 = vadd.f32 %v1686, %v2038
        %v2040 = vpop.f32.mrf.mxu0
        %v2041 = vadd.f32 %v1688, %v2040
        %2042 = vmatprep.mubr.f32.mxu0 %v413
        %2043 = vmatmul.mubr.f32.gmra.mxu0 %v412
        %v2044 = vpop.f32.mrf.mxu0
        %v2045 = vadd.f32 %v1692, %v2044
        %v2046 = vpop.f32.mrf.mxu0
        %v2047 = vadd.f32 %v1694, %v2046
        %2048 = vmatprep.mubr.f32.mxu0 %v419
        %2049 = vmatmul.mubr.f32.gmra.mxu0 %v418
        %v2050 = vpop.f32.mrf.mxu0
        %v2051 = vadd.f32 %v1698, %v2050
        %v2052 = vpop.f32.mrf.mxu0
        %v2053 = vadd.f32 %v1700, %v2052
        %2054 = vmatprep.mubr.f32.mxu0 %v425
        %2055 = vmatmul.mubr.f32.gmra.mxu0 %v424
        %v2056 = vpop.f32.mrf.mxu0
        %v2057 = vadd.f32 %v1704, %v2056
        %v2058 = vpop.f32.mrf.mxu0
        %v2059 = vadd.f32 %v1706, %v2058
        %2060 = vmatprep.mubr.f32.mxu0 %v431
        %2061 = vmatmul.mubr.f32.gmra.mxu0 %v430
        %v2062 = vpop.f32.mrf.mxu0
        %v2063 = vadd.f32 %v1710, %v2062
        %v2064 = vpop.f32.mrf.mxu0
        %v2065 = vadd.f32 %v1712, %v2064
        %2066 = vmatprep.mubr.f32.mxu0 %v437
        %2067 = vmatmul.mubr.f32.gmra.mxu0 %v436
        %v2068 = vpop.f32.mrf.mxu0
        %v2069 = vadd.f32 %v1716, %v2068
        %v2070 = vpop.f32.mrf.mxu0
        %v2071 = vadd.f32 %v1718, %v2070
        %2072 = vmatprep.mubr.f32.mxu0 %v443
        %2073 = vmatmul.mubr.f32.gmra.mxu0 %v442
        %v2074 = vpop.f32.mrf.mxu0
        %v2075 = vadd.f32 %v1722, %v2074
        %v2076 = vpop.f32.mrf.mxu0
        %v2077 = vadd.f32 %v1724, %v2076
        %2078 = vmatprep.mubr.f32.mxu0 %v449
        %2079 = vmatmul.mubr.f32.gmra.mxu0 %v448
        %v2080 = vpop.f32.mrf.mxu0
        %v2081 = vadd.f32 %v1728, %v2080
        %v2082 = vpop.f32.mrf.mxu0
        %v2083 = vadd.f32 %v1730, %v2082
        %2084 = vmatprep.mubr.f32.mxu0 %v455
        %2085 = vmatmul.mubr.f32.gmra.mxu0 %v454
        %v2086 = vpop.f32.mrf.mxu0
        %v2087 = vadd.f32 %v1734, %v2086
        %v2088 = vpop.f32.mrf.mxu0
        %v2089 = vadd.f32 %v1736, %v2088
        %2090 = vmatprep.mubr.f32.mxu0 %v461
        %2091 = vmatmul.mubr.f32.gmra.mxu0 %v460
        %v2092 = vpop.f32.mrf.mxu0
        %v2093 = vadd.f32 %v1740, %v2092
        %v2094 = vpop.f32.mrf.mxu0
        %v2095 = vadd.f32 %v1742, %v2094
        %2096 = vmatprep.mubr.f32.mxu0 %v467
        %2097 = vmatmul.mubr.f32.gmra.mxu0 %v466
        %v2098 = vpop.f32.mrf.mxu0
        %v2099 = vadd.f32 %v1746, %v2098
        %v2100 = vpop.f32.mrf.mxu0
        %v2101 = vadd.f32 %v1748, %v2100
        %2102 = vmatprep.mubr.f32.mxu0 %v473
        %2103 = vmatmul.mubr.f32.gmra.mxu0 %v472
        %v2104 = vpop.f32.mrf.mxu0
        %v2105 = vadd.f32 %v1752, %v2104
        %v2106 = vpop.f32.mrf.mxu0
        %v2107 = vadd.f32 %v1754, %v2106
        %2108 = vmatprep.mubr.f32.mxu0 %v479
        %2109 = vmatmul.mubr.f32.gmra.mxu0 %v478
        %v2110 = vpop.f32.mrf.mxu0
        %v2111 = vadd.f32 %v1758, %v2110
        %v2112 = vpop.f32.mrf.mxu0
        %v2113 = vadd.f32 %v1760, %v2112
        %2114 = vmatprep.mubr.f32.mxu0 %v485
        %2115 = vmatmul.mubr.f32.gmra.mxu0 %v484
        %v2116 = vpop.f32.mrf.mxu0
        %v2117 = vadd.f32 %v1764, %v2116
        %v2118 = vpop.f32.mrf.mxu0
        %v2119 = vadd.f32 %v1766, %v2118
        %2120 = vmatprep.mubr.f32.mxu0 %v491
        %2121 = vmatmul.mubr.f32.gmra.mxu0 %v490
        %v2122 = vpop.f32.mrf.mxu0
        %v2123 = vadd.f32 %v1770, %v2122
        %v2124 = vpop.f32.mrf.mxu0
        %v2125 = vadd.f32 %v1772, %v2124
        %2126 = vmatprep.mubr.f32.mxu0 %v497
        %2127 = vmatmul.mubr.f32.gmra.mxu0 %v496
        %v2128 = vpop.f32.mrf.mxu0
        %v2129 = vadd.f32 %v1776, %v2128
        %v2130 = vpop.f32.mrf.mxu0
        %v2131 = vadd.f32 %v1778, %v2130
        %2132 = vmatprep.mubr.f32.mxu0 %v503
        %2133 = vmatmul.mubr.f32.gmra.mxu0 %v502
        %v2134 = vpop.f32.mrf.mxu0
        %v2135 = vadd.f32 %v1782, %v2134
        %v2136 = vpop.f32.mrf.mxu0
        %v2137 = vadd.f32 %v1784, %v2136
        %2138 = vmatprep.mubr.f32.mxu0 %v509
        %2139 = vmatmul.mubr.f32.gmra.mxu0 %v508
        %v2140 = vpop.f32.mrf.mxu0
        %v2141 = vadd.f32 %v1788, %v2140
        %v2142 = vpop.f32.mrf.mxu0
        %v2143 = vadd.f32 %v1790, %v2142
        %2144 = vmatprep.mubr.f32.mxu0 %v515
        %2145 = vmatmul.mubr.f32.gmra.mxu0 %v514
        %v2146 = vpop.f32.mrf.mxu0
        %v2147 = vadd.f32 %v1794, %v2146
        %v2148 = vpop.f32.mrf.mxu0
        %v2149 = vadd.f32 %v1796, %v2148
        %2150 = vmatprep.mubr.f32.mxu0 %v521
        %2151 = vmatmul.mubr.f32.gmra.mxu0 %v520
        %v2152 = vpop.f32.mrf.mxu0
        %v2153 = vadd.f32 %v1800, %v2152
        %v2154 = vpop.f32.mrf.mxu0
        %v2155 = vadd.f32 %v1802, %v2154
        %2156 = vmatprep.mubr.f32.mxu0 %v527
        %2157 = vmatmul.mubr.f32.gmra.mxu0 %v526
        %v2158 = vpop.f32.mrf.mxu0
        %v2159 = vadd.f32 %v1806, %v2158
        %v2160 = vpop.f32.mrf.mxu0
        %v2161 = vadd.f32 %v1808, %v2160
        %2162 = vmatprep.mubr.f32.mxu0 %v533
        %2163 = vmatmul.mubr.f32.gmra.mxu0 %v532
        %v2164 = vpop.f32.mrf.mxu0
        %v2165 = vadd.f32 %v1812, %v2164
        %v2166 = vpop.f32.mrf.mxu0
        %v2167 = vadd.f32 %v1814, %v2166
        %2168 = vmatprep.mubr.f32.mxu0 %v539
        %2169 = vmatmul.mubr.f32.gmra.mxu0 %v538
        %v2170 = vpop.f32.mrf.mxu0
        %v2171 = vadd.f32 %v1818, %v2170
        %v2172 = vpop.f32.mrf.mxu0
        %v2173 = vadd.f32 %v1820, %v2172
        %2174 = vmatprep.mubr.f32.mxu0 %v545
        %2175 = vmatmul.mubr.f32.gmra.mxu0 %v544
        %v2176 = vpop.f32.mrf.mxu0
        %v2177 = vadd.f32 %v1824, %v2176
        %v2178 = vpop.f32.mrf.mxu0
        %v2179 = vadd.f32 %v1826, %v2178
        %2180 = vmatprep.mubr.f32.mxu0 %v551
        %2181 = vmatmul.mubr.f32.gmra.mxu0 %v550
        %v2182 = vpop.f32.mrf.mxu0
        %v2183 = vadd.f32 %v1830, %v2182
        %v2184 = vpop.f32.mrf.mxu0
        %v2185 = vadd.f32 %v1832, %v2184
        %2186 = vdwg.mxu0
        %2187 = vmatprep.subr.mxu0 %v645
        %2188 = vmatpush1.msra.mxu0 %v644
        %2189 = vmatprep.subr.mxu0 %v639
        %2190 = vmatpush1.msra.mxu0 %v638
        %2191 = vmatprep.subr.mxu0 %v633
        %2192 = vmatpush1.msra.mxu0 %v632
        %2193 = vmatprep.subr.mxu0 %v627
        %2194 = vmatpush1.msra.mxu0 %v626
        %2195 = vmatprep.subr.mxu0 %v621
        %2196 = vmatpush1.msra.mxu0 %v620
        %2197 = vmatprep.subr.mxu0 %v615
        %2198 = vmatpush1.msra.mxu0 %v614
        %2199 = vmatprep.subr.mxu0 %v609
        %2200 = vmatpush1.msra.mxu0 %v608
        %2201 = vmatprep.subr.mxu0 %v603
        %2202 = vmatpush1.msra.mxu0 %v602
        %2203 = vmatprep.subr.mxu0 %v597
        %2204 = vmatpush1.msra.mxu0 %v596
        %2205 = vmatprep.subr.mxu0 %v591
        %2206 = vmatpush1.msra.mxu0 %v590
        %2207 = vmatprep.subr.mxu0 %v585
        %2208 = vmatpush1.msra.mxu0 %v584
        %2209 = vmatprep.subr.mxu0 %v579
        %2210 = vmatpush1.msra.mxu0 %v578
        %2211 = vmatprep.subr.mxu0 %v573
        %2212 = vmatpush1.msra.mxu0 %v572
        %2213 = vmatprep.subr.mxu0 %v567
        %2214 = vmatpush1.msra.mxu0 %v566
        %2215 = vmatprep.subr.mxu0 %v561
        %2216 = vmatpush1.msra.mxu0 %v560
        %2217 = vmatprep.subr.mxu0 %v555
        %2218 = vmatpush1.msra.mxu0 %v554
        %2219 = vmatprep.subr.mxu0 %v741
        %2220 = vmatpush2.msra.mxu0 %v740
        %2221 = vmatprep.subr.mxu0 %v735
        %2222 = vmatpush2.msra.mxu0 %v734
        %2223 = vmatprep.subr.mxu0 %v729
        %2224 = vmatpush2.msra.mxu0 %v728
        %2225 = vmatprep.subr.mxu0 %v723
        %2226 = vmatpush2.msra.mxu0 %v722
        %2227 = vmatprep.subr.mxu0 %v717
        %2228 = vmatpush2.msra.mxu0 %v716
        %2229 = vmatprep.subr.mxu0 %v711
        %2230 = vmatpush2.msra.mxu0 %v710
        %2231 = vmatprep.subr.mxu0 %v705
        %2232 = vmatpush2.msra.mxu0 %v704
        %2233 = vmatprep.subr.mxu0 %v699
        %2234 = vmatpush2.msra.mxu0 %v698
        %2235 = vmatprep.subr.mxu0 %v693
        %2236 = vmatpush2.msra.mxu0 %v692
        %2237 = vmatprep.subr.mxu0 %v687
        %2238 = vmatpush2.msra.mxu0 %v686
        %2239 = vmatprep.subr.mxu0 %v681
        %2240 = vmatpush2.msra.mxu0 %v680
        %2241 = vmatprep.subr.mxu0 %v675
        %2242 = vmatpush2.msra.mxu0 %v674
        %2243 = vmatprep.subr.mxu0 %v669
        %2244 = vmatpush2.msra.mxu0 %v668
        %2245 = vmatprep.subr.mxu0 %v663
        %2246 = vmatpush2.msra.mxu0 %v662
        %2247 = vmatprep.subr.mxu0 %v657
        %2248 = vmatpush2.msra.mxu0 %v656
        %2249 = vmatprep.subr.mxu0 %v651
        %2250 = vmatpush2.msra.mxu0 %v650
        %2251 = vmatprep.mubr.f32.mxu0 %v265
        %2252 = vmatmul.mubr.f32.gmra.mxu0 %v264
        %v2253 = vpop.f32.mrf.mxu0
        %v2254 = vadd.f32 0.0, %v2253
        %v2255 = vpop.f32.mrf.mxu0
        %v2256 = vadd.f32 0.0, %v2255
        %2257 = vmatprep.mubr.f32.mxu0 %v271
        %2258 = vmatmul.mubr.f32.gmra.mxu0 %v270
        %v2259 = vpop.f32.mrf.mxu0
        %v2260 = vadd.f32 0.0, %v2259
        %v2261 = vpop.f32.mrf.mxu0
        %v2262 = vadd.f32 0.0, %v2261
        %2263 = vmatprep.mubr.f32.mxu0 %v277
        %2264 = vmatmul.mubr.f32.gmra.mxu0 %v276
        %v2265 = vpop.f32.mrf.mxu0
        %v2266 = vadd.f32 0.0, %v2265
        %v2267 = vpop.f32.mrf.mxu0
        %v2268 = vadd.f32 0.0, %v2267
        %2269 = vmatprep.mubr.f32.mxu0 %v283
        %2270 = vmatmul.mubr.f32.gmra.mxu0 %v282
        %v2271 = vpop.f32.mrf.mxu0
        %v2272 = vadd.f32 0.0, %v2271
        %v2273 = vpop.f32.mrf.mxu0
        %v2274 = vadd.f32 0.0, %v2273
        %2275 = vmatprep.mubr.f32.mxu0 %v289
        %2276 = vmatmul.mubr.f32.gmra.mxu0 %v288
        %v2277 = vpop.f32.mrf.mxu0
        %v2278 = vadd.f32 0.0, %v2277
        %v2279 = vpop.f32.mrf.mxu0
        %v2280 = vadd.f32 0.0, %v2279
        %2281 = vmatprep.mubr.f32.mxu0 %v295
        %2282 = vmatmul.mubr.f32.gmra.mxu0 %v294
        %v2283 = vpop.f32.mrf.mxu0
        %v2284 = vadd.f32 0.0, %v2283
        %v2285 = vpop.f32.mrf.mxu0
        %v2286 = vadd.f32 0.0, %v2285
        %2287 = vmatprep.mubr.f32.mxu0 %v301
        %2288 = vmatmul.mubr.f32.gmra.mxu0 %v300
        %v2289 = vpop.f32.mrf.mxu0
        %v2290 = vadd.f32 0.0, %v2289
        %v2291 = vpop.f32.mrf.mxu0
        %v2292 = vadd.f32 0.0, %v2291
        %2293 = vmatprep.mubr.f32.mxu0 %v307
        %2294 = vmatmul.mubr.f32.gmra.mxu0 %v306
        %v2295 = vpop.f32.mrf.mxu0
        %v2296 = vadd.f32 0.0, %v2295
        %v2297 = vpop.f32.mrf.mxu0
        %v2298 = vadd.f32 0.0, %v2297
        %2299 = vmatprep.mubr.f32.mxu0 %v313
        %2300 = vmatmul.mubr.f32.gmra.mxu0 %v312
        %v2301 = vpop.f32.mrf.mxu0
        %v2302 = vadd.f32 0.0, %v2301
        %v2303 = vpop.f32.mrf.mxu0
        %v2304 = vadd.f32 0.0, %v2303
        %2305 = vmatprep.mubr.f32.mxu0 %v319
        %2306 = vmatmul.mubr.f32.gmra.mxu0 %v318
        %v2307 = vpop.f32.mrf.mxu0
        %v2308 = vadd.f32 0.0, %v2307
        %v2309 = vpop.f32.mrf.mxu0
        %v2310 = vadd.f32 0.0, %v2309
        %2311 = vmatprep.mubr.f32.mxu0 %v325
        %2312 = vmatmul.mubr.f32.gmra.mxu0 %v324
        %v2313 = vpop.f32.mrf.mxu0
        %v2314 = vadd.f32 0.0, %v2313
        %v2315 = vpop.f32.mrf.mxu0
        %v2316 = vadd.f32 0.0, %v2315
        %2317 = vmatprep.mubr.f32.mxu0 %v331
        %2318 = vmatmul.mubr.f32.gmra.mxu0 %v330
        %v2319 = vpop.f32.mrf.mxu0
        %v2320 = vadd.f32 0.0, %v2319
        %v2321 = vpop.f32.mrf.mxu0
        %v2322 = vadd.f32 0.0, %v2321
        %2323 = vmatprep.mubr.f32.mxu0 %v337
        %2324 = vmatmul.mubr.f32.gmra.mxu0 %v336
        %v2325 = vpop.f32.mrf.mxu0
        %v2326 = vadd.f32 0.0, %v2325
        %v2327 = vpop.f32.mrf.mxu0
        %v2328 = vadd.f32 0.0, %v2327
        %2329 = vmatprep.mubr.f32.mxu0 %v343
        %2330 = vmatmul.mubr.f32.gmra.mxu0 %v342
        %v2331 = vpop.f32.mrf.mxu0
        %v2332 = vadd.f32 0.0, %v2331
        %v2333 = vpop.f32.mrf.mxu0
        %v2334 = vadd.f32 0.0, %v2333
        %2335 = vmatprep.mubr.f32.mxu0 %v349
        %2336 = vmatmul.mubr.f32.gmra.mxu0 %v348
        %v2337 = vpop.f32.mrf.mxu0
        %v2338 = vadd.f32 0.0, %v2337
        %v2339 = vpop.f32.mrf.mxu0
        %v2340 = vadd.f32 0.0, %v2339
        %2341 = vmatprep.mubr.f32.mxu0 %v355
        %2342 = vmatmul.mubr.f32.gmra.mxu0 %v354
        %v2343 = vpop.f32.mrf.mxu0
        %v2344 = vadd.f32 0.0, %v2343
        %v2345 = vpop.f32.mrf.mxu0
        %v2346 = vadd.f32 0.0, %v2345
        %2347 = vmatprep.mubr.f32.mxu0 %v361
        %2348 = vmatmul.mubr.f32.gmra.mxu0 %v360
        %v2349 = vpop.f32.mrf.mxu0
        %v2350 = vadd.f32 0.0, %v2349
        %v2351 = vpop.f32.mrf.mxu0
        %v2352 = vadd.f32 0.0, %v2351
        %2353 = vmatprep.mubr.f32.mxu0 %v367
        %2354 = vmatmul.mubr.f32.gmra.mxu0 %v366
        %v2355 = vpop.f32.mrf.mxu0
        %v2356 = vadd.f32 0.0, %v2355
        %v2357 = vpop.f32.mrf.mxu0
        %v2358 = vadd.f32 0.0, %v2357
        %2359 = vmatprep.mubr.f32.mxu0 %v373
        %2360 = vmatmul.mubr.f32.gmra.mxu0 %v372
        %v2361 = vpop.f32.mrf.mxu0
        %v2362 = vadd.f32 0.0, %v2361
        %v2363 = vpop.f32.mrf.mxu0
        %v2364 = vadd.f32 0.0, %v2363
        %2365 = vmatprep.mubr.f32.mxu0 %v379
        %2366 = vmatmul.mubr.f32.gmra.mxu0 %v378
        %v2367 = vpop.f32.mrf.mxu0
        %v2368 = vadd.f32 0.0, %v2367
        %v2369 = vpop.f32.mrf.mxu0
        %v2370 = vadd.f32 0.0, %v2369
        %2371 = vmatprep.mubr.f32.mxu0 %v385
        %2372 = vmatmul.mubr.f32.gmra.mxu0 %v384
        %v2373 = vpop.f32.mrf.mxu0
        %v2374 = vadd.f32 0.0, %v2373
        %v2375 = vpop.f32.mrf.mxu0
        %v2376 = vadd.f32 0.0, %v2375
        %2377 = vmatprep.mubr.f32.mxu0 %v391
        %2378 = vmatmul.mubr.f32.gmra.mxu0 %v390
        %v2379 = vpop.f32.mrf.mxu0
        %v2380 = vadd.f32 0.0, %v2379
        %v2381 = vpop.f32.mrf.mxu0
        %v2382 = vadd.f32 0.0, %v2381
        %2383 = vmatprep.mubr.f32.mxu0 %v397
        %2384 = vmatmul.mubr.f32.gmra.mxu0 %v396
        %v2385 = vpop.f32.mrf.mxu0
        %v2386 = vadd.f32 0.0, %v2385
        %v2387 = vpop.f32.mrf.mxu0
        %v2388 = vadd.f32 0.0, %v2387
        %2389 = vmatprep.mubr.f32.mxu0 %v403
        %2390 = vmatmul.mubr.f32.gmra.mxu0 %v402
        %v2391 = vpop.f32.mrf.mxu0
        %v2392 = vadd.f32 0.0, %v2391
        %v2393 = vpop.f32.mrf.mxu0
        %v2394 = vadd.f32 0.0, %v2393
        %2395 = vmatprep.mubr.f32.mxu0 %v409
        %2396 = vmatmul.mubr.f32.gmra.mxu0 %v408
        %v2397 = vpop.f32.mrf.mxu0
        %v2398 = vadd.f32 0.0, %v2397
        %v2399 = vpop.f32.mrf.mxu0
        %v2400 = vadd.f32 0.0, %v2399
        %2401 = vmatprep.mubr.f32.mxu0 %v415
        %2402 = vmatmul.mubr.f32.gmra.mxu0 %v414
        %v2403 = vpop.f32.mrf.mxu0
        %v2404 = vadd.f32 0.0, %v2403
        %v2405 = vpop.f32.mrf.mxu0
        %v2406 = vadd.f32 0.0, %v2405
        %2407 = vmatprep.mubr.f32.mxu0 %v421
        %2408 = vmatmul.mubr.f32.gmra.mxu0 %v420
        %v2409 = vpop.f32.mrf.mxu0
        %v2410 = vadd.f32 0.0, %v2409
        %v2411 = vpop.f32.mrf.mxu0
        %v2412 = vadd.f32 0.0, %v2411
        %2413 = vmatprep.mubr.f32.mxu0 %v427
        %2414 = vmatmul.mubr.f32.gmra.mxu0 %v426
        %v2415 = vpop.f32.mrf.mxu0
        %v2416 = vadd.f32 0.0, %v2415
        %v2417 = vpop.f32.mrf.mxu0
        %v2418 = vadd.f32 0.0, %v2417
        %2419 = vmatprep.mubr.f32.mxu0 %v433
        %2420 = vmatmul.mubr.f32.gmra.mxu0 %v432
        %v2421 = vpop.f32.mrf.mxu0
        %v2422 = vadd.f32 0.0, %v2421
        %v2423 = vpop.f32.mrf.mxu0
        %v2424 = vadd.f32 0.0, %v2423
        %2425 = vmatprep.mubr.f32.mxu0 %v439
        %2426 = vmatmul.mubr.f32.gmra.mxu0 %v438
        %v2427 = vpop.f32.mrf.mxu0
        %v2428 = vadd.f32 0.0, %v2427
        %v2429 = vpop.f32.mrf.mxu0
        %v2430 = vadd.f32 0.0, %v2429
        %2431 = vmatprep.mubr.f32.mxu0 %v445
        %2432 = vmatmul.mubr.f32.gmra.mxu0 %v444
        %v2433 = vpop.f32.mrf.mxu0
        %v2434 = vadd.f32 0.0, %v2433
        %v2435 = vpop.f32.mrf.mxu0
        %v2436 = vadd.f32 0.0, %v2435
        %2437 = vmatprep.mubr.f32.mxu0 %v451
        %2438 = vmatmul.mubr.f32.gmra.mxu0 %v450
        %v2439 = vpop.f32.mrf.mxu0
        %v2440 = vadd.f32 0.0, %v2439
        %v2441 = vpop.f32.mrf.mxu0
        %v2442 = vadd.f32 0.0, %v2441
        %2443 = vmatprep.mubr.f32.mxu0 %v457
        %2444 = vmatmul.mubr.f32.gmra.mxu0 %v456
        %v2445 = vpop.f32.mrf.mxu0
        %v2446 = vadd.f32 0.0, %v2445
        %v2447 = vpop.f32.mrf.mxu0
        %v2448 = vadd.f32 0.0, %v2447
        %2449 = vmatprep.mubr.f32.mxu0 %v463
        %2450 = vmatmul.mubr.f32.gmra.mxu0 %v462
        %v2451 = vpop.f32.mrf.mxu0
        %v2452 = vadd.f32 0.0, %v2451
        %v2453 = vpop.f32.mrf.mxu0
        %v2454 = vadd.f32 0.0, %v2453
        %2455 = vmatprep.mubr.f32.mxu0 %v469
        %2456 = vmatmul.mubr.f32.gmra.mxu0 %v468
        %v2457 = vpop.f32.mrf.mxu0
        %v2458 = vadd.f32 0.0, %v2457
        %v2459 = vpop.f32.mrf.mxu0
        %v2460 = vadd.f32 0.0, %v2459
        %2461 = vmatprep.mubr.f32.mxu0 %v475
        %2462 = vmatmul.mubr.f32.gmra.mxu0 %v474
        %v2463 = vpop.f32.mrf.mxu0
        %v2464 = vadd.f32 0.0, %v2463
        %v2465 = vpop.f32.mrf.mxu0
        %v2466 = vadd.f32 0.0, %v2465
        %2467 = vmatprep.mubr.f32.mxu0 %v481
        %2468 = vmatmul.mubr.f32.gmra.mxu0 %v480
        %v2469 = vpop.f32.mrf.mxu0
        %v2470 = vadd.f32 0.0, %v2469
        %v2471 = vpop.f32.mrf.mxu0
        %v2472 = vadd.f32 0.0, %v2471
        %2473 = vmatprep.mubr.f32.mxu0 %v487
        %2474 = vmatmul.mubr.f32.gmra.mxu0 %v486
        %v2475 = vpop.f32.mrf.mxu0
        %v2476 = vadd.f32 0.0, %v2475
        %v2477 = vpop.f32.mrf.mxu0
        %v2478 = vadd.f32 0.0, %v2477
        %2479 = vmatprep.mubr.f32.mxu0 %v493
        %2480 = vmatmul.mubr.f32.gmra.mxu0 %v492
        %v2481 = vpop.f32.mrf.mxu0
        %v2482 = vadd.f32 0.0, %v2481
        %v2483 = vpop.f32.mrf.mxu0
        %v2484 = vadd.f32 0.0, %v2483
        %2485 = vmatprep.mubr.f32.mxu0 %v499
        %2486 = vmatmul.mubr.f32.gmra.mxu0 %v498
        %v2487 = vpop.f32.mrf.mxu0
        %v2488 = vadd.f32 0.0, %v2487
        %v2489 = vpop.f32.mrf.mxu0
        %v2490 = vadd.f32 0.0, %v2489
        %2491 = vmatprep.mubr.f32.mxu0 %v505
        %2492 = vmatmul.mubr.f32.gmra.mxu0 %v504
        %v2493 = vpop.f32.mrf.mxu0
        %v2494 = vadd.f32 0.0, %v2493
        %v2495 = vpop.f32.mrf.mxu0
        %v2496 = vadd.f32 0.0, %v2495
        %2497 = vmatprep.mubr.f32.mxu0 %v511
        %2498 = vmatmul.mubr.f32.gmra.mxu0 %v510
        %v2499 = vpop.f32.mrf.mxu0
        %v2500 = vadd.f32 0.0, %v2499
        %v2501 = vpop.f32.mrf.mxu0
        %v2502 = vadd.f32 0.0, %v2501
        %2503 = vmatprep.mubr.f32.mxu0 %v517
        %2504 = vmatmul.mubr.f32.gmra.mxu0 %v516
        %v2505 = vpop.f32.mrf.mxu0
        %v2506 = vadd.f32 0.0, %v2505
        %v2507 = vpop.f32.mrf.mxu0
        %v2508 = vadd.f32 0.0, %v2507
        %2509 = vmatprep.mubr.f32.mxu0 %v523
        %2510 = vmatmul.mubr.f32.gmra.mxu0 %v522
        %v2511 = vpop.f32.mrf.mxu0
        %v2512 = vadd.f32 0.0, %v2511
        %v2513 = vpop.f32.mrf.mxu0
        %v2514 = vadd.f32 0.0, %v2513
        %2515 = vmatprep.mubr.f32.mxu0 %v529
        %2516 = vmatmul.mubr.f32.gmra.mxu0 %v528
        %v2517 = vpop.f32.mrf.mxu0
        %v2518 = vadd.f32 0.0, %v2517
        %v2519 = vpop.f32.mrf.mxu0
        %v2520 = vadd.f32 0.0, %v2519
        %2521 = vmatprep.mubr.f32.mxu0 %v535
        %2522 = vmatmul.mubr.f32.gmra.mxu0 %v534
        %v2523 = vpop.f32.mrf.mxu0
        %v2524 = vadd.f32 0.0, %v2523
        %v2525 = vpop.f32.mrf.mxu0
        %v2526 = vadd.f32 0.0, %v2525
        %2527 = vmatprep.mubr.f32.mxu0 %v541
        %2528 = vmatmul.mubr.f32.gmra.mxu0 %v540
        %v2529 = vpop.f32.mrf.mxu0
        %v2530 = vadd.f32 0.0, %v2529
        %v2531 = vpop.f32.mrf.mxu0
        %v2532 = vadd.f32 0.0, %v2531
        %2533 = vmatprep.mubr.f32.mxu0 %v547
        %2534 = vmatmul.mubr.f32.gmra.mxu0 %v546
        %v2535 = vpop.f32.mrf.mxu0
        %v2536 = vadd.f32 0.0, %v2535
        %v2537 = vpop.f32.mrf.mxu0
        %v2538 = vadd.f32 0.0, %v2537
        %2539 = vdwg.mxu0
        %2540 = vmatprep.subr.mxu0 %v837
        %2541 = vmatpush1.msra.mxu0 %v836
        %2542 = vmatprep.subr.mxu0 %v831
        %2543 = vmatpush1.msra.mxu0 %v830
        %2544 = vmatprep.subr.mxu0 %v825
        %2545 = vmatpush1.msra.mxu0 %v824
        %2546 = vmatprep.subr.mxu0 %v819
        %2547 = vmatpush1.msra.mxu0 %v818
        %2548 = vmatprep.subr.mxu0 %v813
        %2549 = vmatpush1.msra.mxu0 %v812
        %2550 = vmatprep.subr.mxu0 %v807
        %2551 = vmatpush1.msra.mxu0 %v806
        %2552 = vmatprep.subr.mxu0 %v801
        %2553 = vmatpush1.msra.mxu0 %v800
        %2554 = vmatprep.subr.mxu0 %v795
        %2555 = vmatpush1.msra.mxu0 %v794
        %2556 = vmatprep.subr.mxu0 %v789
        %2557 = vmatpush1.msra.mxu0 %v788
        %2558 = vmatprep.subr.mxu0 %v783
        %2559 = vmatpush1.msra.mxu0 %v782
        %2560 = vmatprep.subr.mxu0 %v777
        %2561 = vmatpush1.msra.mxu0 %v776
        %2562 = vmatprep.subr.mxu0 %v771
        %2563 = vmatpush1.msra.mxu0 %v770
        %2564 = vmatprep.subr.mxu0 %v765
        %2565 = vmatpush1.msra.mxu0 %v764
        %2566 = vmatprep.subr.mxu0 %v759
        %2567 = vmatpush1.msra.mxu0 %v758
        %2568 = vmatprep.subr.mxu0 %v753
        %2569 = vmatpush1.msra.mxu0 %v752
        %2570 = vmatprep.subr.mxu0 %v747
        %2571 = vmatpush1.msra.mxu0 %v746
        %2572 = vmatprep.subr.mxu0 %v933
        %2573 = vmatpush2.msra.mxu0 %v932
        %2574 = vmatprep.subr.mxu0 %v927
        %2575 = vmatpush2.msra.mxu0 %v926
        %2576 = vmatprep.subr.mxu0 %v921
        %2577 = vmatpush2.msra.mxu0 %v920
        %2578 = vmatprep.subr.mxu0 %v915
        %2579 = vmatpush2.msra.mxu0 %v914
        %2580 = vmatprep.subr.mxu0 %v909
        %2581 = vmatpush2.msra.mxu0 %v908
        %2582 = vmatprep.subr.mxu0 %v903
        %2583 = vmatpush2.msra.mxu0 %v902
        %2584 = vmatprep.subr.mxu0 %v897
        %2585 = vmatpush2.msra.mxu0 %v896
        %2586 = vmatprep.subr.mxu0 %v891
        %2587 = vmatpush2.msra.mxu0 %v890
        %2588 = vmatprep.subr.mxu0 %v885
        %2589 = vmatpush2.msra.mxu0 %v884
        %2590 = vmatprep.subr.mxu0 %v879
        %2591 = vmatpush2.msra.mxu0 %v878
        %2592 = vmatprep.subr.mxu0 %v873
        %2593 = vmatpush2.msra.mxu0 %v872
        %2594 = vmatprep.subr.mxu0 %v867
        %2595 = vmatpush2.msra.mxu0 %v866
        %2596 = vmatprep.subr.mxu0 %v861
        %2597 = vmatpush2.msra.mxu0 %v860
        %2598 = vmatprep.subr.mxu0 %v855
        %2599 = vmatpush2.msra.mxu0 %v854
        %2600 = vmatprep.subr.mxu0 %v849
        %2601 = vmatpush2.msra.mxu0 %v848
        %2602 = vmatprep.subr.mxu0 %v843
        %2603 = vmatpush2.msra.mxu0 %v842
        %2604 = vmatprep.mubr.f32.mxu0 %v267
        %2605 = vmatmul.mubr.f32.gmra.mxu0 %v266
        %v2606 = vpop.f32.mrf.mxu0
        %v2607 = vadd.f32 %v2254, %v2606
        %v2608 = vpop.f32.mrf.mxu0
        %v2609 = vadd.f32 %v2256, %v2608
        %2610 = vmatprep.mubr.f32.mxu0 %v273
        %2611 = vmatmul.mubr.f32.gmra.mxu0 %v272
        %v2612 = vpop.f32.mrf.mxu0
        %v2613 = vadd.f32 %v2260, %v2612
        %v2614 = vpop.f32.mrf.mxu0
        %v2615 = vadd.f32 %v2262, %v2614
        %2616 = vmatprep.mubr.f32.mxu0 %v279
        %2617 = vmatmul.mubr.f32.gmra.mxu0 %v278
        %v2618 = vpop.f32.mrf.mxu0
        %v2619 = vadd.f32 %v2266, %v2618
        %v2620 = vpop.f32.mrf.mxu0
        %v2621 = vadd.f32 %v2268, %v2620
        %2622 = vmatprep.mubr.f32.mxu0 %v285
        %2623 = vmatmul.mubr.f32.gmra.mxu0 %v284
        %v2624 = vpop.f32.mrf.mxu0
        %v2625 = vadd.f32 %v2272, %v2624
        %v2626 = vpop.f32.mrf.mxu0
        %v2627 = vadd.f32 %v2274, %v2626
        %2628 = vmatprep.mubr.f32.mxu0 %v291
        %2629 = vmatmul.mubr.f32.gmra.mxu0 %v290
        %v2630 = vpop.f32.mrf.mxu0
        %v2631 = vadd.f32 %v2278, %v2630
        %v2632 = vpop.f32.mrf.mxu0
        %v2633 = vadd.f32 %v2280, %v2632
        %2634 = vmatprep.mubr.f32.mxu0 %v297
        %2635 = vmatmul.mubr.f32.gmra.mxu0 %v296
        %v2636 = vpop.f32.mrf.mxu0
        %v2637 = vadd.f32 %v2284, %v2636
        %v2638 = vpop.f32.mrf.mxu0
        %v2639 = vadd.f32 %v2286, %v2638
        %2640 = vmatprep.mubr.f32.mxu0 %v303
        %2641 = vmatmul.mubr.f32.gmra.mxu0 %v302
        %v2642 = vpop.f32.mrf.mxu0
        %v2643 = vadd.f32 %v2290, %v2642
        %v2644 = vpop.f32.mrf.mxu0
        %v2645 = vadd.f32 %v2292, %v2644
        %2646 = vmatprep.mubr.f32.mxu0 %v309
        %2647 = vmatmul.mubr.f32.gmra.mxu0 %v308
        %v2648 = vpop.f32.mrf.mxu0
        %v2649 = vadd.f32 %v2296, %v2648
        %v2650 = vpop.f32.mrf.mxu0
        %v2651 = vadd.f32 %v2298, %v2650
        %2652 = vmatprep.mubr.f32.mxu0 %v315
        %2653 = vmatmul.mubr.f32.gmra.mxu0 %v314
        %v2654 = vpop.f32.mrf.mxu0
        %v2655 = vadd.f32 %v2302, %v2654
        %v2656 = vpop.f32.mrf.mxu0
        %v2657 = vadd.f32 %v2304, %v2656
        %2658 = vmatprep.mubr.f32.mxu0 %v321
        %2659 = vmatmul.mubr.f32.gmra.mxu0 %v320
        %v2660 = vpop.f32.mrf.mxu0
        %v2661 = vadd.f32 %v2308, %v2660
        %v2662 = vpop.f32.mrf.mxu0
        %v2663 = vadd.f32 %v2310, %v2662
        %2664 = vmatprep.mubr.f32.mxu0 %v327
        %2665 = vmatmul.mubr.f32.gmra.mxu0 %v326
        %v2666 = vpop.f32.mrf.mxu0
        %v2667 = vadd.f32 %v2314, %v2666
        %v2668 = vpop.f32.mrf.mxu0
        %v2669 = vadd.f32 %v2316, %v2668
        %2670 = vmatprep.mubr.f32.mxu0 %v333
        %2671 = vmatmul.mubr.f32.gmra.mxu0 %v332
        %v2672 = vpop.f32.mrf.mxu0
        %v2673 = vadd.f32 %v2320, %v2672
        %v2674 = vpop.f32.mrf.mxu0
        %v2675 = vadd.f32 %v2322, %v2674
        %2676 = vmatprep.mubr.f32.mxu0 %v339
        %2677 = vmatmul.mubr.f32.gmra.mxu0 %v338
        %v2678 = vpop.f32.mrf.mxu0
        %v2679 = vadd.f32 %v2326, %v2678
        %v2680 = vpop.f32.mrf.mxu0
        %v2681 = vadd.f32 %v2328, %v2680
        %2682 = vmatprep.mubr.f32.mxu0 %v345
        %2683 = vmatmul.mubr.f32.gmra.mxu0 %v344
        %v2684 = vpop.f32.mrf.mxu0
        %v2685 = vadd.f32 %v2332, %v2684
        %v2686 = vpop.f32.mrf.mxu0
        %v2687 = vadd.f32 %v2334, %v2686
        %2688 = vmatprep.mubr.f32.mxu0 %v351
        %2689 = vmatmul.mubr.f32.gmra.mxu0 %v350
        %v2690 = vpop.f32.mrf.mxu0
        %v2691 = vadd.f32 %v2338, %v2690
        %v2692 = vpop.f32.mrf.mxu0
        %v2693 = vadd.f32 %v2340, %v2692
        %2694 = vmatprep.mubr.f32.mxu0 %v357
        %2695 = vmatmul.mubr.f32.gmra.mxu0 %v356
        %v2696 = vpop.f32.mrf.mxu0
        %v2697 = vadd.f32 %v2344, %v2696
        %v2698 = vpop.f32.mrf.mxu0
        %v2699 = vadd.f32 %v2346, %v2698
        %2700 = vmatprep.mubr.f32.mxu0 %v363
        %2701 = vmatmul.mubr.f32.gmra.mxu0 %v362
        %v2702 = vpop.f32.mrf.mxu0
        %v2703 = vadd.f32 %v2350, %v2702
        %v2704 = vpop.f32.mrf.mxu0
        %v2705 = vadd.f32 %v2352, %v2704
        %2706 = vmatprep.mubr.f32.mxu0 %v369
        %2707 = vmatmul.mubr.f32.gmra.mxu0 %v368
        %v2708 = vpop.f32.mrf.mxu0
        %v2709 = vadd.f32 %v2356, %v2708
        %v2710 = vpop.f32.mrf.mxu0
        %v2711 = vadd.f32 %v2358, %v2710
        %2712 = vmatprep.mubr.f32.mxu0 %v375
        %2713 = vmatmul.mubr.f32.gmra.mxu0 %v374
        %v2714 = vpop.f32.mrf.mxu0
        %v2715 = vadd.f32 %v2362, %v2714
        %v2716 = vpop.f32.mrf.mxu0
        %v2717 = vadd.f32 %v2364, %v2716
        %2718 = vmatprep.mubr.f32.mxu0 %v381
        %2719 = vmatmul.mubr.f32.gmra.mxu0 %v380
        %v2720 = vpop.f32.mrf.mxu0
        %v2721 = vadd.f32 %v2368, %v2720
        %v2722 = vpop.f32.mrf.mxu0
        %v2723 = vadd.f32 %v2370, %v2722
        %2724 = vmatprep.mubr.f32.mxu0 %v387
        %2725 = vmatmul.mubr.f32.gmra.mxu0 %v386
        %v2726 = vpop.f32.mrf.mxu0
        %v2727 = vadd.f32 %v2374, %v2726
        %v2728 = vpop.f32.mrf.mxu0
        %v2729 = vadd.f32 %v2376, %v2728
        %2730 = vmatprep.mubr.f32.mxu0 %v393
        %2731 = vmatmul.mubr.f32.gmra.mxu0 %v392
        %v2732 = vpop.f32.mrf.mxu0
        %v2733 = vadd.f32 %v2380, %v2732
        %v2734 = vpop.f32.mrf.mxu0
        %v2735 = vadd.f32 %v2382, %v2734
        %2736 = vmatprep.mubr.f32.mxu0 %v399
        %2737 = vmatmul.mubr.f32.gmra.mxu0 %v398
        %v2738 = vpop.f32.mrf.mxu0
        %v2739 = vadd.f32 %v2386, %v2738
        %v2740 = vpop.f32.mrf.mxu0
        %v2741 = vadd.f32 %v2388, %v2740
        %2742 = vmatprep.mubr.f32.mxu0 %v405
        %2743 = vmatmul.mubr.f32.gmra.mxu0 %v404
        %v2744 = vpop.f32.mrf.mxu0
        %v2745 = vadd.f32 %v2392, %v2744
        %v2746 = vpop.f32.mrf.mxu0
        %v2747 = vadd.f32 %v2394, %v2746
        %2748 = vmatprep.mubr.f32.mxu0 %v411
        %2749 = vmatmul.mubr.f32.gmra.mxu0 %v410
        %v2750 = vpop.f32.mrf.mxu0
        %v2751 = vadd.f32 %v2398, %v2750
        %v2752 = vpop.f32.mrf.mxu0
        %v2753 = vadd.f32 %v2400, %v2752
        %2754 = vmatprep.mubr.f32.mxu0 %v417
        %2755 = vmatmul.mubr.f32.gmra.mxu0 %v416
        %v2756 = vpop.f32.mrf.mxu0
        %v2757 = vadd.f32 %v2404, %v2756
        %v2758 = vpop.f32.mrf.mxu0
        %v2759 = vadd.f32 %v2406, %v2758
        %2760 = vmatprep.mubr.f32.mxu0 %v423
        %2761 = vmatmul.mubr.f32.gmra.mxu0 %v422
        %v2762 = vpop.f32.mrf.mxu0
        %v2763 = vadd.f32 %v2410, %v2762
        %v2764 = vpop.f32.mrf.mxu0
        %v2765 = vadd.f32 %v2412, %v2764
        %2766 = vmatprep.mubr.f32.mxu0 %v429
        %2767 = vmatmul.mubr.f32.gmra.mxu0 %v428
        %v2768 = vpop.f32.mrf.mxu0
        %v2769 = vadd.f32 %v2416, %v2768
        %v2770 = vpop.f32.mrf.mxu0
        %v2771 = vadd.f32 %v2418, %v2770
        %2772 = vmatprep.mubr.f32.mxu0 %v435
        %2773 = vmatmul.mubr.f32.gmra.mxu0 %v434
        %v2774 = vpop.f32.mrf.mxu0
        %v2775 = vadd.f32 %v2422, %v2774
        %v2776 = vpop.f32.mrf.mxu0
        %v2777 = vadd.f32 %v2424, %v2776
        %2778 = vmatprep.mubr.f32.mxu0 %v441
        %2779 = vmatmul.mubr.f32.gmra.mxu0 %v440
        %v2780 = vpop.f32.mrf.mxu0
        %v2781 = vadd.f32 %v2428, %v2780
        %v2782 = vpop.f32.mrf.mxu0
        %v2783 = vadd.f32 %v2430, %v2782
        %2784 = vmatprep.mubr.f32.mxu0 %v447
        %2785 = vmatmul.mubr.f32.gmra.mxu0 %v446
        %v2786 = vpop.f32.mrf.mxu0
        %v2787 = vadd.f32 %v2434, %v2786
        %v2788 = vpop.f32.mrf.mxu0
        %v2789 = vadd.f32 %v2436, %v2788
        %2790 = vmatprep.mubr.f32.mxu0 %v453
        %2791 = vmatmul.mubr.f32.gmra.mxu0 %v452
        %v2792 = vpop.f32.mrf.mxu0
        %v2793 = vadd.f32 %v2440, %v2792
        %v2794 = vpop.f32.mrf.mxu0
        %v2795 = vadd.f32 %v2442, %v2794
        %2796 = vmatprep.mubr.f32.mxu0 %v459
        %2797 = vmatmul.mubr.f32.gmra.mxu0 %v458
        %v2798 = vpop.f32.mrf.mxu0
        %v2799 = vadd.f32 %v2446, %v2798
        %v2800 = vpop.f32.mrf.mxu0
        %v2801 = vadd.f32 %v2448, %v2800
        %2802 = vmatprep.mubr.f32.mxu0 %v465
        %2803 = vmatmul.mubr.f32.gmra.mxu0 %v464
        %v2804 = vpop.f32.mrf.mxu0
        %v2805 = vadd.f32 %v2452, %v2804
        %v2806 = vpop.f32.mrf.mxu0
        %v2807 = vadd.f32 %v2454, %v2806
        %2808 = vmatprep.mubr.f32.mxu0 %v471
        %2809 = vmatmul.mubr.f32.gmra.mxu0 %v470
        %v2810 = vpop.f32.mrf.mxu0
        %v2811 = vadd.f32 %v2458, %v2810
        %v2812 = vpop.f32.mrf.mxu0
        %v2813 = vadd.f32 %v2460, %v2812
        %2814 = vmatprep.mubr.f32.mxu0 %v477
        %2815 = vmatmul.mubr.f32.gmra.mxu0 %v476
        %v2816 = vpop.f32.mrf.mxu0
        %v2817 = vadd.f32 %v2464, %v2816
        %v2818 = vpop.f32.mrf.mxu0
        %v2819 = vadd.f32 %v2466, %v2818
        %2820 = vmatprep.mubr.f32.mxu0 %v483
        %2821 = vmatmul.mubr.f32.gmra.mxu0 %v482
        %v2822 = vpop.f32.mrf.mxu0
        %v2823 = vadd.f32 %v2470, %v2822
        %v2824 = vpop.f32.mrf.mxu0
        %v2825 = vadd.f32 %v2472, %v2824
        %2826 = vmatprep.mubr.f32.mxu0 %v489
        %2827 = vmatmul.mubr.f32.gmra.mxu0 %v488
        %v2828 = vpop.f32.mrf.mxu0
        %v2829 = vadd.f32 %v2476, %v2828
        %v2830 = vpop.f32.mrf.mxu0
        %v2831 = vadd.f32 %v2478, %v2830
        %2832 = vmatprep.mubr.f32.mxu0 %v495
        %2833 = vmatmul.mubr.f32.gmra.mxu0 %v494
        %v2834 = vpop.f32.mrf.mxu0
        %v2835 = vadd.f32 %v2482, %v2834
        %v2836 = vpop.f32.mrf.mxu0
        %v2837 = vadd.f32 %v2484, %v2836
        %2838 = vmatprep.mubr.f32.mxu0 %v501
        %2839 = vmatmul.mubr.f32.gmra.mxu0 %v500
        %v2840 = vpop.f32.mrf.mxu0
        %v2841 = vadd.f32 %v2488, %v2840
        %v2842 = vpop.f32.mrf.mxu0
        %v2843 = vadd.f32 %v2490, %v2842
        %2844 = vmatprep.mubr.f32.mxu0 %v507
        %2845 = vmatmul.mubr.f32.gmra.mxu0 %v506
        %v2846 = vpop.f32.mrf.mxu0
        %v2847 = vadd.f32 %v2494, %v2846
        %v2848 = vpop.f32.mrf.mxu0
        %v2849 = vadd.f32 %v2496, %v2848
        %2850 = vmatprep.mubr.f32.mxu0 %v513
        %2851 = vmatmul.mubr.f32.gmra.mxu0 %v512
        %v2852 = vpop.f32.mrf.mxu0
        %v2853 = vadd.f32 %v2500, %v2852
        %v2854 = vpop.f32.mrf.mxu0
        %v2855 = vadd.f32 %v2502, %v2854
        %2856 = vmatprep.mubr.f32.mxu0 %v519
        %2857 = vmatmul.mubr.f32.gmra.mxu0 %v518
        %v2858 = vpop.f32.mrf.mxu0
        %v2859 = vadd.f32 %v2506, %v2858
        %v2860 = vpop.f32.mrf.mxu0
        %v2861 = vadd.f32 %v2508, %v2860
        %2862 = vmatprep.mubr.f32.mxu0 %v525
        %2863 = vmatmul.mubr.f32.gmra.mxu0 %v524
        %v2864 = vpop.f32.mrf.mxu0
        %v2865 = vadd.f32 %v2512, %v2864
        %v2866 = vpop.f32.mrf.mxu0
        %v2867 = vadd.f32 %v2514, %v2866
        %2868 = vmatprep.mubr.f32.mxu0 %v531
        %2869 = vmatmul.mubr.f32.gmra.mxu0 %v530
        %v2870 = vpop.f32.mrf.mxu0
        %v2871 = vadd.f32 %v2518, %v2870
        %v2872 = vpop.f32.mrf.mxu0
        %v2873 = vadd.f32 %v2520, %v2872
        %2874 = vmatprep.mubr.f32.mxu0 %v537
        %2875 = vmatmul.mubr.f32.gmra.mxu0 %v536
        %v2876 = vpop.f32.mrf.mxu0
        %v2877 = vadd.f32 %v2524, %v2876
        %v2878 = vpop.f32.mrf.mxu0
        %v2879 = vadd.f32 %v2526, %v2878
        %2880 = vmatprep.mubr.f32.mxu0 %v543
        %2881 = vmatmul.mubr.f32.gmra.mxu0 %v542
        %v2882 = vpop.f32.mrf.mxu0
        %v2883 = vadd.f32 %v2530, %v2882
        %v2884 = vpop.f32.mrf.mxu0
        %v2885 = vadd.f32 %v2532, %v2884
        %2886 = vmatprep.mubr.f32.mxu0 %v549
        %2887 = vmatmul.mubr.f32.gmra.mxu0 %v548
        %v2888 = vpop.f32.mrf.mxu0
        %v2889 = vadd.f32 %v2536, %v2888
        %v2890 = vpop.f32.mrf.mxu0
        %v2891 = vadd.f32 %v2538, %v2890
        %2892 = vdwg.mxu0
        %2893 = vmatprep.subr.mxu0 %v1029
        %2894 = vmatpush1.msra.mxu0 %v1028
        %2895 = vmatprep.subr.mxu0 %v1023
        %2896 = vmatpush1.msra.mxu0 %v1022
        %2897 = vmatprep.subr.mxu0 %v1017
        %2898 = vmatpush1.msra.mxu0 %v1016
        %2899 = vmatprep.subr.mxu0 %v1011
        %2900 = vmatpush1.msra.mxu0 %v1010
        %2901 = vmatprep.subr.mxu0 %v1005
        %2902 = vmatpush1.msra.mxu0 %v1004
        %2903 = vmatprep.subr.mxu0 %v999
        %2904 = vmatpush1.msra.mxu0 %v998
        %2905 = vmatprep.subr.mxu0 %v993
        %2906 = vmatpush1.msra.mxu0 %v992
        %2907 = vmatprep.subr.mxu0 %v987
        %2908 = vmatpush1.msra.mxu0 %v986
        %2909 = vmatprep.subr.mxu0 %v981
        %2910 = vmatpush1.msra.mxu0 %v980
        %2911 = vmatprep.subr.mxu0 %v975
        %2912 = vmatpush1.msra.mxu0 %v974
        %2913 = vmatprep.subr.mxu0 %v969
        %2914 = vmatpush1.msra.mxu0 %v968
        %2915 = vmatprep.subr.mxu0 %v963
        %2916 = vmatpush1.msra.mxu0 %v962
        %2917 = vmatprep.subr.mxu0 %v957
        %2918 = vmatpush1.msra.mxu0 %v956
        %2919 = vmatprep.subr.mxu0 %v951
        %2920 = vmatpush1.msra.mxu0 %v950
        %2921 = vmatprep.subr.mxu0 %v945
        %2922 = vmatpush1.msra.mxu0 %v944
        %2923 = vmatprep.subr.mxu0 %v939
        %2924 = vmatpush1.msra.mxu0 %v938
        %2925 = vmatprep.subr.mxu0 %v1125
        %2926 = vmatpush2.msra.mxu0 %v1124
        %2927 = vmatprep.subr.mxu0 %v1119
        %2928 = vmatpush2.msra.mxu0 %v1118
        %2929 = vmatprep.subr.mxu0 %v1113
        %2930 = vmatpush2.msra.mxu0 %v1112
        %2931 = vmatprep.subr.mxu0 %v1107
        %2932 = vmatpush2.msra.mxu0 %v1106
        %2933 = vmatprep.subr.mxu0 %v1101
        %2934 = vmatpush2.msra.mxu0 %v1100
        %2935 = vmatprep.subr.mxu0 %v1095
        %2936 = vmatpush2.msra.mxu0 %v1094
        %2937 = vmatprep.subr.mxu0 %v1089
        %2938 = vmatpush2.msra.mxu0 %v1088
        %2939 = vmatprep.subr.mxu0 %v1083
        %2940 = vmatpush2.msra.mxu0 %v1082
        %2941 = vmatprep.subr.mxu0 %v1077
        %2942 = vmatpush2.msra.mxu0 %v1076
        %2943 = vmatprep.subr.mxu0 %v1071
        %2944 = vmatpush2.msra.mxu0 %v1070
        %2945 = vmatprep.subr.mxu0 %v1065
        %2946 = vmatpush2.msra.mxu0 %v1064
        %2947 = vmatprep.subr.mxu0 %v1059
        %2948 = vmatpush2.msra.mxu0 %v1058
        %2949 = vmatprep.subr.mxu0 %v1053
        %2950 = vmatpush2.msra.mxu0 %v1052
        %2951 = vmatprep.subr.mxu0 %v1047
        %2952 = vmatpush2.msra.mxu0 %v1046
        %2953 = vmatprep.subr.mxu0 %v1041
        %2954 = vmatpush2.msra.mxu0 %v1040
        %2955 = vmatprep.subr.mxu0 %v1035
        %2956 = vmatpush2.msra.mxu0 %v1034
        %2957 = vmatprep.mubr.f32.mxu0 %v269
        %2958 = vmatmul.mubr.f32.gmra.mxu0 %v268
        %v2959 = vpop.f32.mrf.mxu0
        %v2960 = vadd.f32 %v2607, %v2959
        %v2961 = vpop.f32.mrf.mxu0
        %v2962 = vadd.f32 %v2609, %v2961
        %2963 = vmatprep.mubr.f32.mxu0 %v275
        %2964 = vmatmul.mubr.f32.gmra.mxu0 %v274
        %v2965 = vpop.f32.mrf.mxu0
        %v2966 = vadd.f32 %v2613, %v2965
        %v2967 = vpop.f32.mrf.mxu0
        %v2968 = vadd.f32 %v2615, %v2967
        %2969 = vmatprep.mubr.f32.mxu0 %v281
        %2970 = vmatmul.mubr.f32.gmra.mxu0 %v280
        %v2971 = vpop.f32.mrf.mxu0
        %v2972 = vadd.f32 %v2619, %v2971
        %v2973 = vpop.f32.mrf.mxu0
        %v2974 = vadd.f32 %v2621, %v2973
        %2975 = vmatprep.mubr.f32.mxu0 %v287
        %2976 = vmatmul.mubr.f32.gmra.mxu0 %v286
        %v2977 = vpop.f32.mrf.mxu0
        %v2978 = vadd.f32 %v2625, %v2977
        %v2979 = vpop.f32.mrf.mxu0
        %v2980 = vadd.f32 %v2627, %v2979
        %2981 = vmatprep.mubr.f32.mxu0 %v293
        %2982 = vmatmul.mubr.f32.gmra.mxu0 %v292
        %v2983 = vpop.f32.mrf.mxu0
        %v2984 = vadd.f32 %v2631, %v2983
        %v2985 = vpop.f32.mrf.mxu0
        %v2986 = vadd.f32 %v2633, %v2985
        %2987 = vmatprep.mubr.f32.mxu0 %v299
        %2988 = vmatmul.mubr.f32.gmra.mxu0 %v298
        %v2989 = vpop.f32.mrf.mxu0
        %v2990 = vadd.f32 %v2637, %v2989
        %v2991 = vpop.f32.mrf.mxu0
        %v2992 = vadd.f32 %v2639, %v2991
        %2993 = vmatprep.mubr.f32.mxu0 %v305
        %2994 = vmatmul.mubr.f32.gmra.mxu0 %v304
        %v2995 = vpop.f32.mrf.mxu0
        %v2996 = vadd.f32 %v2643, %v2995
        %v2997 = vpop.f32.mrf.mxu0
        %v2998 = vadd.f32 %v2645, %v2997
        %2999 = vmatprep.mubr.f32.mxu0 %v311
        %3000 = vmatmul.mubr.f32.gmra.mxu0 %v310
        %v3001 = vpop.f32.mrf.mxu0
        %v3002 = vadd.f32 %v2649, %v3001
        %v3003 = vpop.f32.mrf.mxu0
        %v3004 = vadd.f32 %v2651, %v3003
        %3005 = vmatprep.mubr.f32.mxu0 %v317
        %3006 = vmatmul.mubr.f32.gmra.mxu0 %v316
        %v3007 = vpop.f32.mrf.mxu0
        %v3008 = vadd.f32 %v2655, %v3007
        %v3009 = vpop.f32.mrf.mxu0
        %v3010 = vadd.f32 %v2657, %v3009
        %3011 = vmatprep.mubr.f32.mxu0 %v323
        %3012 = vmatmul.mubr.f32.gmra.mxu0 %v322
        %v3013 = vpop.f32.mrf.mxu0
        %v3014 = vadd.f32 %v2661, %v3013
        %v3015 = vpop.f32.mrf.mxu0
        %v3016 = vadd.f32 %v2663, %v3015
        %3017 = vmatprep.mubr.f32.mxu0 %v329
        %3018 = vmatmul.mubr.f32.gmra.mxu0 %v328
        %v3019 = vpop.f32.mrf.mxu0
        %v3020 = vadd.f32 %v2667, %v3019
        %v3021 = vpop.f32.mrf.mxu0
        %v3022 = vadd.f32 %v2669, %v3021
        %3023 = vmatprep.mubr.f32.mxu0 %v335
        %3024 = vmatmul.mubr.f32.gmra.mxu0 %v334
        %v3025 = vpop.f32.mrf.mxu0
        %v3026 = vadd.f32 %v2673, %v3025
        %v3027 = vpop.f32.mrf.mxu0
        %v3028 = vadd.f32 %v2675, %v3027
        %3029 = vmatprep.mubr.f32.mxu0 %v341
        %3030 = vmatmul.mubr.f32.gmra.mxu0 %v340
        %v3031 = vpop.f32.mrf.mxu0
        %v3032 = vadd.f32 %v2679, %v3031
        %v3033 = vpop.f32.mrf.mxu0
        %v3034 = vadd.f32 %v2681, %v3033
        %3035 = vmatprep.mubr.f32.mxu0 %v347
        %3036 = vmatmul.mubr.f32.gmra.mxu0 %v346
        %v3037 = vpop.f32.mrf.mxu0
        %v3038 = vadd.f32 %v2685, %v3037
        %v3039 = vpop.f32.mrf.mxu0
        %v3040 = vadd.f32 %v2687, %v3039
        %3041 = vmatprep.mubr.f32.mxu0 %v353
        %3042 = vmatmul.mubr.f32.gmra.mxu0 %v352
        %v3043 = vpop.f32.mrf.mxu0
        %v3044 = vadd.f32 %v2691, %v3043
        %v3045 = vpop.f32.mrf.mxu0
        %v3046 = vadd.f32 %v2693, %v3045
        %3047 = vmatprep.mubr.f32.mxu0 %v359
        %3048 = vmatmul.mubr.f32.gmra.mxu0 %v358
        %v3049 = vpop.f32.mrf.mxu0
        %v3050 = vadd.f32 %v2697, %v3049
        %v3051 = vpop.f32.mrf.mxu0
        %v3052 = vadd.f32 %v2699, %v3051
        %3053 = vmatprep.mubr.f32.mxu0 %v365
        %3054 = vmatmul.mubr.f32.gmra.mxu0 %v364
        %v3055 = vpop.f32.mrf.mxu0
        %v3056 = vadd.f32 %v2703, %v3055
        %v3057 = vpop.f32.mrf.mxu0
        %v3058 = vadd.f32 %v2705, %v3057
        %3059 = vmatprep.mubr.f32.mxu0 %v371
        %3060 = vmatmul.mubr.f32.gmra.mxu0 %v370
        %v3061 = vpop.f32.mrf.mxu0
        %v3062 = vadd.f32 %v2709, %v3061
        %v3063 = vpop.f32.mrf.mxu0
        %v3064 = vadd.f32 %v2711, %v3063
        %3065 = vmatprep.mubr.f32.mxu0 %v377
        %3066 = vmatmul.mubr.f32.gmra.mxu0 %v376
        %v3067 = vpop.f32.mrf.mxu0
        %v3068 = vadd.f32 %v2715, %v3067
        %v3069 = vpop.f32.mrf.mxu0
        %v3070 = vadd.f32 %v2717, %v3069
        %3071 = vmatprep.mubr.f32.mxu0 %v383
        %3072 = vmatmul.mubr.f32.gmra.mxu0 %v382
        %v3073 = vpop.f32.mrf.mxu0
        %v3074 = vadd.f32 %v2721, %v3073
        %v3075 = vpop.f32.mrf.mxu0
        %v3076 = vadd.f32 %v2723, %v3075
        %3077 = vmatprep.mubr.f32.mxu0 %v389
        %3078 = vmatmul.mubr.f32.gmra.mxu0 %v388
        %v3079 = vpop.f32.mrf.mxu0
        %v3080 = vadd.f32 %v2727, %v3079
        %v3081 = vpop.f32.mrf.mxu0
        %v3082 = vadd.f32 %v2729, %v3081
        %3083 = vmatprep.mubr.f32.mxu0 %v395
        %3084 = vmatmul.mubr.f32.gmra.mxu0 %v394
        %v3085 = vpop.f32.mrf.mxu0
        %v3086 = vadd.f32 %v2733, %v3085
        %v3087 = vpop.f32.mrf.mxu0
        %v3088 = vadd.f32 %v2735, %v3087
        %3089 = vmatprep.mubr.f32.mxu0 %v401
        %3090 = vmatmul.mubr.f32.gmra.mxu0 %v400
        %v3091 = vpop.f32.mrf.mxu0
        %v3092 = vadd.f32 %v2739, %v3091
        %v3093 = vpop.f32.mrf.mxu0
        %v3094 = vadd.f32 %v2741, %v3093
        %3095 = vmatprep.mubr.f32.mxu0 %v407
        %3096 = vmatmul.mubr.f32.gmra.mxu0 %v406
        %v3097 = vpop.f32.mrf.mxu0
        %v3098 = vadd.f32 %v2745, %v3097
        %v3099 = vpop.f32.mrf.mxu0
        %v3100 = vadd.f32 %v2747, %v3099
        %3101 = vmatprep.mubr.f32.mxu0 %v413
        %3102 = vmatmul.mubr.f32.gmra.mxu0 %v412
        %v3103 = vpop.f32.mrf.mxu0
        %v3104 = vadd.f32 %v2751, %v3103
        %v3105 = vpop.f32.mrf.mxu0
        %v3106 = vadd.f32 %v2753, %v3105
        %3107 = vmatprep.mubr.f32.mxu0 %v419
        %3108 = vmatmul.mubr.f32.gmra.mxu0 %v418
        %v3109 = vpop.f32.mrf.mxu0
        %v3110 = vadd.f32 %v2757, %v3109
        %v3111 = vpop.f32.mrf.mxu0
        %v3112 = vadd.f32 %v2759, %v3111
        %3113 = vmatprep.mubr.f32.mxu0 %v425
        %3114 = vmatmul.mubr.f32.gmra.mxu0 %v424
        %v3115 = vpop.f32.mrf.mxu0
        %v3116 = vadd.f32 %v2763, %v3115
        %v3117 = vpop.f32.mrf.mxu0
        %v3118 = vadd.f32 %v2765, %v3117
        %3119 = vmatprep.mubr.f32.mxu0 %v431
        %3120 = vmatmul.mubr.f32.gmra.mxu0 %v430
        %v3121 = vpop.f32.mrf.mxu0
        %v3122 = vadd.f32 %v2769, %v3121
        %v3123 = vpop.f32.mrf.mxu0
        %v3124 = vadd.f32 %v2771, %v3123
        %3125 = vmatprep.mubr.f32.mxu0 %v437
        %3126 = vmatmul.mubr.f32.gmra.mxu0 %v436
        %v3127 = vpop.f32.mrf.mxu0
        %v3128 = vadd.f32 %v2775, %v3127
        %v3129 = vpop.f32.mrf.mxu0
        %v3130 = vadd.f32 %v2777, %v3129
        %3131 = vmatprep.mubr.f32.mxu0 %v443
        %3132 = vmatmul.mubr.f32.gmra.mxu0 %v442
        %v3133 = vpop.f32.mrf.mxu0
        %v3134 = vadd.f32 %v2781, %v3133
        %v3135 = vpop.f32.mrf.mxu0
        %v3136 = vadd.f32 %v2783, %v3135
        %3137 = vmatprep.mubr.f32.mxu0 %v449
        %3138 = vmatmul.mubr.f32.gmra.mxu0 %v448
        %v3139 = vpop.f32.mrf.mxu0
        %v3140 = vadd.f32 %v2787, %v3139
        %v3141 = vpop.f32.mrf.mxu0
        %v3142 = vadd.f32 %v2789, %v3141
        %3143 = vmatprep.mubr.f32.mxu0 %v455
        %3144 = vmatmul.mubr.f32.gmra.mxu0 %v454
        %v3145 = vpop.f32.mrf.mxu0
        %v3146 = vadd.f32 %v2793, %v3145
        %v3147 = vpop.f32.mrf.mxu0
        %v3148 = vadd.f32 %v2795, %v3147
        %3149 = vmatprep.mubr.f32.mxu0 %v461
        %3150 = vmatmul.mubr.f32.gmra.mxu0 %v460
        %v3151 = vpop.f32.mrf.mxu0
        %v3152 = vadd.f32 %v2799, %v3151
        %v3153 = vpop.f32.mrf.mxu0
        %v3154 = vadd.f32 %v2801, %v3153
        %3155 = vmatprep.mubr.f32.mxu0 %v467
        %3156 = vmatmul.mubr.f32.gmra.mxu0 %v466
        %v3157 = vpop.f32.mrf.mxu0
        %v3158 = vadd.f32 %v2805, %v3157
        %v3159 = vpop.f32.mrf.mxu0
        %v3160 = vadd.f32 %v2807, %v3159
        %3161 = vmatprep.mubr.f32.mxu0 %v473
        %3162 = vmatmul.mubr.f32.gmra.mxu0 %v472
        %v3163 = vpop.f32.mrf.mxu0
        %v3164 = vadd.f32 %v2811, %v3163
        %v3165 = vpop.f32.mrf.mxu0
        %v3166 = vadd.f32 %v2813, %v3165
        %3167 = vmatprep.mubr.f32.mxu0 %v479
        %3168 = vmatmul.mubr.f32.gmra.mxu0 %v478
        %v3169 = vpop.f32.mrf.mxu0
        %v3170 = vadd.f32 %v2817, %v3169
        %v3171 = vpop.f32.mrf.mxu0
        %v3172 = vadd.f32 %v2819, %v3171
        %3173 = vmatprep.mubr.f32.mxu0 %v485
        %3174 = vmatmul.mubr.f32.gmra.mxu0 %v484
        %v3175 = vpop.f32.mrf.mxu0
        %v3176 = vadd.f32 %v2823, %v3175
        %v3177 = vpop.f32.mrf.mxu0
        %v3178 = vadd.f32 %v2825, %v3177
        %3179 = vmatprep.mubr.f32.mxu0 %v491
        %3180 = vmatmul.mubr.f32.gmra.mxu0 %v490
        %v3181 = vpop.f32.mrf.mxu0
        %v3182 = vadd.f32 %v2829, %v3181
        %v3183 = vpop.f32.mrf.mxu0
        %v3184 = vadd.f32 %v2831, %v3183
        %3185 = vmatprep.mubr.f32.mxu0 %v497
        %3186 = vmatmul.mubr.f32.gmra.mxu0 %v496
        %v3187 = vpop.f32.mrf.mxu0
        %v3188 = vadd.f32 %v2835, %v3187
        %v3189 = vpop.f32.mrf.mxu0
        %v3190 = vadd.f32 %v2837, %v3189
        %3191 = vmatprep.mubr.f32.mxu0 %v503
        %3192 = vmatmul.mubr.f32.gmra.mxu0 %v502
        %v3193 = vpop.f32.mrf.mxu0
        %v3194 = vadd.f32 %v2841, %v3193
        %v3195 = vpop.f32.mrf.mxu0
        %v3196 = vadd.f32 %v2843, %v3195
        %3197 = vmatprep.mubr.f32.mxu0 %v509
        %3198 = vmatmul.mubr.f32.gmra.mxu0 %v508
        %v3199 = vpop.f32.mrf.mxu0
        %v3200 = vadd.f32 %v2847, %v3199
        %v3201 = vpop.f32.mrf.mxu0
        %v3202 = vadd.f32 %v2849, %v3201
        %3203 = vmatprep.mubr.f32.mxu0 %v515
        %3204 = vmatmul.mubr.f32.gmra.mxu0 %v514
        %v3205 = vpop.f32.mrf.mxu0
        %v3206 = vadd.f32 %v2853, %v3205
        %v3207 = vpop.f32.mrf.mxu0
        %v3208 = vadd.f32 %v2855, %v3207
        %3209 = vmatprep.mubr.f32.mxu0 %v521
        %3210 = vmatmul.mubr.f32.gmra.mxu0 %v520
        %v3211 = vpop.f32.mrf.mxu0
        %v3212 = vadd.f32 %v2859, %v3211
        %v3213 = vpop.f32.mrf.mxu0
        %v3214 = vadd.f32 %v2861, %v3213
        %3215 = vmatprep.mubr.f32.mxu0 %v527
        %3216 = vmatmul.mubr.f32.gmra.mxu0 %v526
        %v3217 = vpop.f32.mrf.mxu0
        %v3218 = vadd.f32 %v2865, %v3217
        %v3219 = vpop.f32.mrf.mxu0
        %v3220 = vadd.f32 %v2867, %v3219
        %3221 = vmatprep.mubr.f32.mxu0 %v533
        %3222 = vmatmul.mubr.f32.gmra.mxu0 %v532
        %v3223 = vpop.f32.mrf.mxu0
        %v3224 = vadd.f32 %v2871, %v3223
        %v3225 = vpop.f32.mrf.mxu0
        %v3226 = vadd.f32 %v2873, %v3225
        %3227 = vmatprep.mubr.f32.mxu0 %v539
        %3228 = vmatmul.mubr.f32.gmra.mxu0 %v538
        %v3229 = vpop.f32.mrf.mxu0
        %v3230 = vadd.f32 %v2877, %v3229
        %v3231 = vpop.f32.mrf.mxu0
        %v3232 = vadd.f32 %v2879, %v3231
        %3233 = vmatprep.mubr.f32.mxu0 %v545
        %3234 = vmatmul.mubr.f32.gmra.mxu0 %v544
        %v3235 = vpop.f32.mrf.mxu0
        %v3236 = vadd.f32 %v2883, %v3235
        %v3237 = vpop.f32.mrf.mxu0
        %v3238 = vadd.f32 %v2885, %v3237
        %3239 = vmatprep.mubr.f32.mxu0 %v551
        %3240 = vmatmul.mubr.f32.gmra.mxu0 %v550
        %v3241 = vpop.f32.mrf.mxu0
        %v3242 = vadd.f32 %v2889, %v3241
        %v3243 = vpop.f32.mrf.mxu0
        %v3244 = vadd.f32 %v2891, %v3243
        %3245 = vdwg.mxu0
        %3246 = vmatprep.subr.mxu0 %v647
        %3247 = vmatpush1.msra.mxu0 %v646
        %3248 = vmatprep.subr.mxu0 %v641
        %3249 = vmatpush1.msra.mxu0 %v640
        %3250 = vmatprep.subr.mxu0 %v635
        %3251 = vmatpush1.msra.mxu0 %v634
        %3252 = vmatprep.subr.mxu0 %v629
        %3253 = vmatpush1.msra.mxu0 %v628
        %3254 = vmatprep.subr.mxu0 %v623
        %3255 = vmatpush1.msra.mxu0 %v622
        %3256 = vmatprep.subr.mxu0 %v617
        %3257 = vmatpush1.msra.mxu0 %v616
        %3258 = vmatprep.subr.mxu0 %v611
        %3259 = vmatpush1.msra.mxu0 %v610
        %3260 = vmatprep.subr.mxu0 %v605
        %3261 = vmatpush1.msra.mxu0 %v604
        %3262 = vmatprep.subr.mxu0 %v599
        %3263 = vmatpush1.msra.mxu0 %v598
        %3264 = vmatprep.subr.mxu0 %v593
        %3265 = vmatpush1.msra.mxu0 %v592
        %3266 = vmatprep.subr.mxu0 %v587
        %3267 = vmatpush1.msra.mxu0 %v586
        %3268 = vmatprep.subr.mxu0 %v581
        %3269 = vmatpush1.msra.mxu0 %v580
        %3270 = vmatprep.subr.mxu0 %v575
        %3271 = vmatpush1.msra.mxu0 %v574
        %3272 = vmatprep.subr.mxu0 %v569
        %3273 = vmatpush1.msra.mxu0 %v568
        %3274 = vmatprep.subr.mxu0 %v563
        %3275 = vmatpush1.msra.mxu0 %v562
        %3276 = vmatprep.subr.mxu0 %v557
        %3277 = vmatpush1.msra.mxu0 %v556
        %3278 = vmatprep.subr.mxu0 %v743
        %3279 = vmatpush2.msra.mxu0 %v742
        %3280 = vmatprep.subr.mxu0 %v737
        %3281 = vmatpush2.msra.mxu0 %v736
        %3282 = vmatprep.subr.mxu0 %v731
        %3283 = vmatpush2.msra.mxu0 %v730
        %3284 = vmatprep.subr.mxu0 %v725
        %3285 = vmatpush2.msra.mxu0 %v724
        %3286 = vmatprep.subr.mxu0 %v719
        %3287 = vmatpush2.msra.mxu0 %v718
        %3288 = vmatprep.subr.mxu0 %v713
        %3289 = vmatpush2.msra.mxu0 %v712
        %3290 = vmatprep.subr.mxu0 %v707
        %3291 = vmatpush2.msra.mxu0 %v706
        %3292 = vmatprep.subr.mxu0 %v701
        %3293 = vmatpush2.msra.mxu0 %v700
        %3294 = vmatprep.subr.mxu0 %v695
        %3295 = vmatpush2.msra.mxu0 %v694
        %3296 = vmatprep.subr.mxu0 %v689
        %3297 = vmatpush2.msra.mxu0 %v688
        %3298 = vmatprep.subr.mxu0 %v683
        %3299 = vmatpush2.msra.mxu0 %v682
        %3300 = vmatprep.subr.mxu0 %v677
        %3301 = vmatpush2.msra.mxu0 %v676
        %3302 = vmatprep.subr.mxu0 %v671
        %3303 = vmatpush2.msra.mxu0 %v670
        %3304 = vmatprep.subr.mxu0 %v665
        %3305 = vmatpush2.msra.mxu0 %v664
        %3306 = vmatprep.subr.mxu0 %v659
        %3307 = vmatpush2.msra.mxu0 %v658
        %3308 = vmatprep.subr.mxu0 %v653
        %3309 = vmatpush2.msra.mxu0 %v652
        %3310 = vmatprep.mubr.f32.mxu0 %v265
        %3311 = vmatmul.mubr.f32.gmra.mxu0 %v264
        %v3312 = vpop.f32.mrf.mxu0
        %v3313 = vadd.f32 0.0, %v3312
        %v3314 = vpop.f32.mrf.mxu0
        %v3315 = vadd.f32 0.0, %v3314
        %3316 = vmatprep.mubr.f32.mxu0 %v271
        %3317 = vmatmul.mubr.f32.gmra.mxu0 %v270
        %v3318 = vpop.f32.mrf.mxu0
        %v3319 = vadd.f32 0.0, %v3318
        %v3320 = vpop.f32.mrf.mxu0
        %v3321 = vadd.f32 0.0, %v3320
        %3322 = vmatprep.mubr.f32.mxu0 %v277
        %3323 = vmatmul.mubr.f32.gmra.mxu0 %v276
        %v3324 = vpop.f32.mrf.mxu0
        %v3325 = vadd.f32 0.0, %v3324
        %v3326 = vpop.f32.mrf.mxu0
        %v3327 = vadd.f32 0.0, %v3326
        %3328 = vmatprep.mubr.f32.mxu0 %v283
        %3329 = vmatmul.mubr.f32.gmra.mxu0 %v282
        %v3330 = vpop.f32.mrf.mxu0
        %v3331 = vadd.f32 0.0, %v3330
        %v3332 = vpop.f32.mrf.mxu0
        %v3333 = vadd.f32 0.0, %v3332
        %3334 = vmatprep.mubr.f32.mxu0 %v289
        %3335 = vmatmul.mubr.f32.gmra.mxu0 %v288
        %v3336 = vpop.f32.mrf.mxu0
        %v3337 = vadd.f32 0.0, %v3336
        %v3338 = vpop.f32.mrf.mxu0
        %v3339 = vadd.f32 0.0, %v3338
        %3340 = vmatprep.mubr.f32.mxu0 %v295
        %3341 = vmatmul.mubr.f32.gmra.mxu0 %v294
        %v3342 = vpop.f32.mrf.mxu0
        %v3343 = vadd.f32 0.0, %v3342
        %v3344 = vpop.f32.mrf.mxu0
        %v3345 = vadd.f32 0.0, %v3344
        %3346 = vmatprep.mubr.f32.mxu0 %v301
        %3347 = vmatmul.mubr.f32.gmra.mxu0 %v300
        %v3348 = vpop.f32.mrf.mxu0
        %v3349 = vadd.f32 0.0, %v3348
        %v3350 = vpop.f32.mrf.mxu0
        %v3351 = vadd.f32 0.0, %v3350
        %3352 = vmatprep.mubr.f32.mxu0 %v307
        %3353 = vmatmul.mubr.f32.gmra.mxu0 %v306
        %v3354 = vpop.f32.mrf.mxu0
        %v3355 = vadd.f32 0.0, %v3354
        %v3356 = vpop.f32.mrf.mxu0
        %v3357 = vadd.f32 0.0, %v3356
        %3358 = vmatprep.mubr.f32.mxu0 %v313
        %3359 = vmatmul.mubr.f32.gmra.mxu0 %v312
        %v3360 = vpop.f32.mrf.mxu0
        %v3361 = vadd.f32 0.0, %v3360
        %v3362 = vpop.f32.mrf.mxu0
        %v3363 = vadd.f32 0.0, %v3362
        %3364 = vmatprep.mubr.f32.mxu0 %v319
        %3365 = vmatmul.mubr.f32.gmra.mxu0 %v318
        %v3366 = vpop.f32.mrf.mxu0
        %v3367 = vadd.f32 0.0, %v3366
        %v3368 = vpop.f32.mrf.mxu0
        %v3369 = vadd.f32 0.0, %v3368
        %3370 = vmatprep.mubr.f32.mxu0 %v325
        %3371 = vmatmul.mubr.f32.gmra.mxu0 %v324
        %v3372 = vpop.f32.mrf.mxu0
        %v3373 = vadd.f32 0.0, %v3372
        %v3374 = vpop.f32.mrf.mxu0
        %v3375 = vadd.f32 0.0, %v3374
        %3376 = vmatprep.mubr.f32.mxu0 %v331
        %3377 = vmatmul.mubr.f32.gmra.mxu0 %v330
        %v3378 = vpop.f32.mrf.mxu0
        %v3379 = vadd.f32 0.0, %v3378
        %v3380 = vpop.f32.mrf.mxu0
        %v3381 = vadd.f32 0.0, %v3380
        %3382 = vmatprep.mubr.f32.mxu0 %v337
        %3383 = vmatmul.mubr.f32.gmra.mxu0 %v336
        %v3384 = vpop.f32.mrf.mxu0
        %v3385 = vadd.f32 0.0, %v3384
        %v3386 = vpop.f32.mrf.mxu0
        %v3387 = vadd.f32 0.0, %v3386
        %3388 = vmatprep.mubr.f32.mxu0 %v343
        %3389 = vmatmul.mubr.f32.gmra.mxu0 %v342
        %v3390 = vpop.f32.mrf.mxu0
        %v3391 = vadd.f32 0.0, %v3390
        %v3392 = vpop.f32.mrf.mxu0
        %v3393 = vadd.f32 0.0, %v3392
        %3394 = vmatprep.mubr.f32.mxu0 %v349
        %3395 = vmatmul.mubr.f32.gmra.mxu0 %v348
        %v3396 = vpop.f32.mrf.mxu0
        %v3397 = vadd.f32 0.0, %v3396
        %v3398 = vpop.f32.mrf.mxu0
        %v3399 = vadd.f32 0.0, %v3398
        %3400 = vmatprep.mubr.f32.mxu0 %v355
        %3401 = vmatmul.mubr.f32.gmra.mxu0 %v354
        %v3402 = vpop.f32.mrf.mxu0
        %v3403 = vadd.f32 0.0, %v3402
        %v3404 = vpop.f32.mrf.mxu0
        %v3405 = vadd.f32 0.0, %v3404
        %3406 = vmatprep.mubr.f32.mxu0 %v361
        %3407 = vmatmul.mubr.f32.gmra.mxu0 %v360
        %v3408 = vpop.f32.mrf.mxu0
        %v3409 = vadd.f32 0.0, %v3408
        %v3410 = vpop.f32.mrf.mxu0
        %v3411 = vadd.f32 0.0, %v3410
        %3412 = vmatprep.mubr.f32.mxu0 %v367
        %3413 = vmatmul.mubr.f32.gmra.mxu0 %v366
        %v3414 = vpop.f32.mrf.mxu0
        %v3415 = vadd.f32 0.0, %v3414
        %v3416 = vpop.f32.mrf.mxu0
        %v3417 = vadd.f32 0.0, %v3416
        %3418 = vmatprep.mubr.f32.mxu0 %v373
        %3419 = vmatmul.mubr.f32.gmra.mxu0 %v372
        %v3420 = vpop.f32.mrf.mxu0
        %v3421 = vadd.f32 0.0, %v3420
        %v3422 = vpop.f32.mrf.mxu0
        %v3423 = vadd.f32 0.0, %v3422
        %3424 = vmatprep.mubr.f32.mxu0 %v379
        %3425 = vmatmul.mubr.f32.gmra.mxu0 %v378
        %v3426 = vpop.f32.mrf.mxu0
        %v3427 = vadd.f32 0.0, %v3426
        %v3428 = vpop.f32.mrf.mxu0
        %v3429 = vadd.f32 0.0, %v3428
        %3430 = vmatprep.mubr.f32.mxu0 %v385
        %3431 = vmatmul.mubr.f32.gmra.mxu0 %v384
        %v3432 = vpop.f32.mrf.mxu0
        %v3433 = vadd.f32 0.0, %v3432
        %v3434 = vpop.f32.mrf.mxu0
        %v3435 = vadd.f32 0.0, %v3434
        %3436 = vmatprep.mubr.f32.mxu0 %v391
        %3437 = vmatmul.mubr.f32.gmra.mxu0 %v390
        %v3438 = vpop.f32.mrf.mxu0
        %v3439 = vadd.f32 0.0, %v3438
        %v3440 = vpop.f32.mrf.mxu0
        %v3441 = vadd.f32 0.0, %v3440
        %3442 = vmatprep.mubr.f32.mxu0 %v397
        %3443 = vmatmul.mubr.f32.gmra.mxu0 %v396
        %v3444 = vpop.f32.mrf.mxu0
        %v3445 = vadd.f32 0.0, %v3444
        %v3446 = vpop.f32.mrf.mxu0
        %v3447 = vadd.f32 0.0, %v3446
        %3448 = vmatprep.mubr.f32.mxu0 %v403
        %3449 = vmatmul.mubr.f32.gmra.mxu0 %v402
        %v3450 = vpop.f32.mrf.mxu0
        %v3451 = vadd.f32 0.0, %v3450
        %v3452 = vpop.f32.mrf.mxu0
        %v3453 = vadd.f32 0.0, %v3452
        %3454 = vmatprep.mubr.f32.mxu0 %v409
        %3455 = vmatmul.mubr.f32.gmra.mxu0 %v408
        %v3456 = vpop.f32.mrf.mxu0
        %v3457 = vadd.f32 0.0, %v3456
        %v3458 = vpop.f32.mrf.mxu0
        %v3459 = vadd.f32 0.0, %v3458
        %3460 = vmatprep.mubr.f32.mxu0 %v415
        %3461 = vmatmul.mubr.f32.gmra.mxu0 %v414
        %v3462 = vpop.f32.mrf.mxu0
        %v3463 = vadd.f32 0.0, %v3462
        %v3464 = vpop.f32.mrf.mxu0
        %v3465 = vadd.f32 0.0, %v3464
        %3466 = vmatprep.mubr.f32.mxu0 %v421
        %3467 = vmatmul.mubr.f32.gmra.mxu0 %v420
        %v3468 = vpop.f32.mrf.mxu0
        %v3469 = vadd.f32 0.0, %v3468
        %v3470 = vpop.f32.mrf.mxu0
        %v3471 = vadd.f32 0.0, %v3470
        %3472 = vmatprep.mubr.f32.mxu0 %v427
        %3473 = vmatmul.mubr.f32.gmra.mxu0 %v426
        %v3474 = vpop.f32.mrf.mxu0
        %v3475 = vadd.f32 0.0, %v3474
        %v3476 = vpop.f32.mrf.mxu0
        %v3477 = vadd.f32 0.0, %v3476
        %3478 = vmatprep.mubr.f32.mxu0 %v433
        %3479 = vmatmul.mubr.f32.gmra.mxu0 %v432
        %v3480 = vpop.f32.mrf.mxu0
        %v3481 = vadd.f32 0.0, %v3480
        %v3482 = vpop.f32.mrf.mxu0
        %v3483 = vadd.f32 0.0, %v3482
        %3484 = vmatprep.mubr.f32.mxu0 %v439
        %3485 = vmatmul.mubr.f32.gmra.mxu0 %v438
        %v3486 = vpop.f32.mrf.mxu0
        %v3487 = vadd.f32 0.0, %v3486
        %v3488 = vpop.f32.mrf.mxu0
        %v3489 = vadd.f32 0.0, %v3488
        %3490 = vmatprep.mubr.f32.mxu0 %v445
        %3491 = vmatmul.mubr.f32.gmra.mxu0 %v444
        %v3492 = vpop.f32.mrf.mxu0
        %v3493 = vadd.f32 0.0, %v3492
        %v3494 = vpop.f32.mrf.mxu0
        %v3495 = vadd.f32 0.0, %v3494
        %3496 = vmatprep.mubr.f32.mxu0 %v451
        %3497 = vmatmul.mubr.f32.gmra.mxu0 %v450
        %v3498 = vpop.f32.mrf.mxu0
        %v3499 = vadd.f32 0.0, %v3498
        %v3500 = vpop.f32.mrf.mxu0
        %v3501 = vadd.f32 0.0, %v3500
        %3502 = vmatprep.mubr.f32.mxu0 %v457
        %3503 = vmatmul.mubr.f32.gmra.mxu0 %v456
        %v3504 = vpop.f32.mrf.mxu0
        %v3505 = vadd.f32 0.0, %v3504
        %v3506 = vpop.f32.mrf.mxu0
        %v3507 = vadd.f32 0.0, %v3506
        %3508 = vmatprep.mubr.f32.mxu0 %v463
        %3509 = vmatmul.mubr.f32.gmra.mxu0 %v462
        %v3510 = vpop.f32.mrf.mxu0
        %v3511 = vadd.f32 0.0, %v3510
        %v3512 = vpop.f32.mrf.mxu0
        %v3513 = vadd.f32 0.0, %v3512
        %3514 = vmatprep.mubr.f32.mxu0 %v469
        %3515 = vmatmul.mubr.f32.gmra.mxu0 %v468
        %v3516 = vpop.f32.mrf.mxu0
        %v3517 = vadd.f32 0.0, %v3516
        %v3518 = vpop.f32.mrf.mxu0
        %v3519 = vadd.f32 0.0, %v3518
        %3520 = vmatprep.mubr.f32.mxu0 %v475
        %3521 = vmatmul.mubr.f32.gmra.mxu0 %v474
        %v3522 = vpop.f32.mrf.mxu0
        %v3523 = vadd.f32 0.0, %v3522
        %v3524 = vpop.f32.mrf.mxu0
        %v3525 = vadd.f32 0.0, %v3524
        %3526 = vmatprep.mubr.f32.mxu0 %v481
        %3527 = vmatmul.mubr.f32.gmra.mxu0 %v480
        %v3528 = vpop.f32.mrf.mxu0
        %v3529 = vadd.f32 0.0, %v3528
        %v3530 = vpop.f32.mrf.mxu0
        %v3531 = vadd.f32 0.0, %v3530
        %3532 = vmatprep.mubr.f32.mxu0 %v487
        %3533 = vmatmul.mubr.f32.gmra.mxu0 %v486
        %v3534 = vpop.f32.mrf.mxu0
        %v3535 = vadd.f32 0.0, %v3534
        %v3536 = vpop.f32.mrf.mxu0
        %v3537 = vadd.f32 0.0, %v3536
        %3538 = vmatprep.mubr.f32.mxu0 %v493
        %3539 = vmatmul.mubr.f32.gmra.mxu0 %v492
        %v3540 = vpop.f32.mrf.mxu0
        %v3541 = vadd.f32 0.0, %v3540
        %v3542 = vpop.f32.mrf.mxu0
        %v3543 = vadd.f32 0.0, %v3542
        %3544 = vmatprep.mubr.f32.mxu0 %v499
        %3545 = vmatmul.mubr.f32.gmra.mxu0 %v498
        %v3546 = vpop.f32.mrf.mxu0
        %v3547 = vadd.f32 0.0, %v3546
        %v3548 = vpop.f32.mrf.mxu0
        %v3549 = vadd.f32 0.0, %v3548
        %3550 = vmatprep.mubr.f32.mxu0 %v505
        %3551 = vmatmul.mubr.f32.gmra.mxu0 %v504
        %v3552 = vpop.f32.mrf.mxu0
        %v3553 = vadd.f32 0.0, %v3552
        %v3554 = vpop.f32.mrf.mxu0
        %v3555 = vadd.f32 0.0, %v3554
        %3556 = vmatprep.mubr.f32.mxu0 %v511
        %3557 = vmatmul.mubr.f32.gmra.mxu0 %v510
        %v3558 = vpop.f32.mrf.mxu0
        %v3559 = vadd.f32 0.0, %v3558
        %v3560 = vpop.f32.mrf.mxu0
        %v3561 = vadd.f32 0.0, %v3560
        %3562 = vmatprep.mubr.f32.mxu0 %v517
        %3563 = vmatmul.mubr.f32.gmra.mxu0 %v516
        %v3564 = vpop.f32.mrf.mxu0
        %v3565 = vadd.f32 0.0, %v3564
        %v3566 = vpop.f32.mrf.mxu0
        %v3567 = vadd.f32 0.0, %v3566
        %3568 = vmatprep.mubr.f32.mxu0 %v523
        %3569 = vmatmul.mubr.f32.gmra.mxu0 %v522
        %v3570 = vpop.f32.mrf.mxu0
        %v3571 = vadd.f32 0.0, %v3570
        %v3572 = vpop.f32.mrf.mxu0
        %v3573 = vadd.f32 0.0, %v3572
        %3574 = vmatprep.mubr.f32.mxu0 %v529
        %3575 = vmatmul.mubr.f32.gmra.mxu0 %v528
        %v3576 = vpop.f32.mrf.mxu0
        %v3577 = vadd.f32 0.0, %v3576
        %v3578 = vpop.f32.mrf.mxu0
        %v3579 = vadd.f32 0.0, %v3578
        %3580 = vmatprep.mubr.f32.mxu0 %v535
        %3581 = vmatmul.mubr.f32.gmra.mxu0 %v534
        %v3582 = vpop.f32.mrf.mxu0
        %v3583 = vadd.f32 0.0, %v3582
        %v3584 = vpop.f32.mrf.mxu0
        %v3585 = vadd.f32 0.0, %v3584
        %3586 = vmatprep.mubr.f32.mxu0 %v541
        %3587 = vmatmul.mubr.f32.gmra.mxu0 %v540
        %v3588 = vpop.f32.mrf.mxu0
        %v3589 = vadd.f32 0.0, %v3588
        %v3590 = vpop.f32.mrf.mxu0
        %v3591 = vadd.f32 0.0, %v3590
        %3592 = vmatprep.mubr.f32.mxu0 %v547
        %3593 = vmatmul.mubr.f32.gmra.mxu0 %v546
        %v3594 = vpop.f32.mrf.mxu0
        %v3595 = vadd.f32 0.0, %v3594
        %v3596 = vpop.f32.mrf.mxu0
        %v3597 = vadd.f32 0.0, %v3596
        %3598 = vdwg.mxu0
        %3599 = vmatprep.subr.mxu0 %v839
        %3600 = vmatpush1.msra.mxu0 %v838
        %3601 = vmatprep.subr.mxu0 %v833
        %3602 = vmatpush1.msra.mxu0 %v832
        %3603 = vmatprep.subr.mxu0 %v827
        %3604 = vmatpush1.msra.mxu0 %v826
        %3605 = vmatprep.subr.mxu0 %v821
        %3606 = vmatpush1.msra.mxu0 %v820
        %3607 = vmatprep.subr.mxu0 %v815
        %3608 = vmatpush1.msra.mxu0 %v814
        %3609 = vmatprep.subr.mxu0 %v809
        %3610 = vmatpush1.msra.mxu0 %v808
        %3611 = vmatprep.subr.mxu0 %v803
        %3612 = vmatpush1.msra.mxu0 %v802
        %3613 = vmatprep.subr.mxu0 %v797
        %3614 = vmatpush1.msra.mxu0 %v796
        %3615 = vmatprep.subr.mxu0 %v791
        %3616 = vmatpush1.msra.mxu0 %v790
        %3617 = vmatprep.subr.mxu0 %v785
        %3618 = vmatpush1.msra.mxu0 %v784
        %3619 = vmatprep.subr.mxu0 %v779
        %3620 = vmatpush1.msra.mxu0 %v778
        %3621 = vmatprep.subr.mxu0 %v773
        %3622 = vmatpush1.msra.mxu0 %v772
        %3623 = vmatprep.subr.mxu0 %v767
        %3624 = vmatpush1.msra.mxu0 %v766
        %3625 = vmatprep.subr.mxu0 %v761
        %3626 = vmatpush1.msra.mxu0 %v760
        %3627 = vmatprep.subr.mxu0 %v755
        %3628 = vmatpush1.msra.mxu0 %v754
        %3629 = vmatprep.subr.mxu0 %v749
        %3630 = vmatpush1.msra.mxu0 %v748
        %3631 = vmatprep.subr.mxu0 %v935
        %3632 = vmatpush2.msra.mxu0 %v934
        %3633 = vmatprep.subr.mxu0 %v929
        %3634 = vmatpush2.msra.mxu0 %v928
        %3635 = vmatprep.subr.mxu0 %v923
        %3636 = vmatpush2.msra.mxu0 %v922
        %3637 = vmatprep.subr.mxu0 %v917
        %3638 = vmatpush2.msra.mxu0 %v916
        %3639 = vmatprep.subr.mxu0 %v911
        %3640 = vmatpush2.msra.mxu0 %v910
        %3641 = vmatprep.subr.mxu0 %v905
        %3642 = vmatpush2.msra.mxu0 %v904
        %3643 = vmatprep.subr.mxu0 %v899
        %3644 = vmatpush2.msra.mxu0 %v898
        %3645 = vmatprep.subr.mxu0 %v893
        %3646 = vmatpush2.msra.mxu0 %v892
        %3647 = vmatprep.subr.mxu0 %v887
        %3648 = vmatpush2.msra.mxu0 %v886
        %3649 = vmatprep.subr.mxu0 %v881
        %3650 = vmatpush2.msra.mxu0 %v880
        %3651 = vmatprep.subr.mxu0 %v875
        %3652 = vmatpush2.msra.mxu0 %v874
        %3653 = vmatprep.subr.mxu0 %v869
        %3654 = vmatpush2.msra.mxu0 %v868
        %3655 = vmatprep.subr.mxu0 %v863
        %3656 = vmatpush2.msra.mxu0 %v862
        %3657 = vmatprep.subr.mxu0 %v857
        %3658 = vmatpush2.msra.mxu0 %v856
        %3659 = vmatprep.subr.mxu0 %v851
        %3660 = vmatpush2.msra.mxu0 %v850
        %3661 = vmatprep.subr.mxu0 %v845
        %3662 = vmatpush2.msra.mxu0 %v844
        %3663 = vmatprep.mubr.f32.mxu0 %v267
        %3664 = vmatmul.mubr.f32.gmra.mxu0 %v266
        %v3665 = vpop.f32.mrf.mxu0
        %v3666 = vadd.f32 %v3313, %v3665
        %v3667 = vpop.f32.mrf.mxu0
        %v3668 = vadd.f32 %v3315, %v3667
        %3669 = vmatprep.mubr.f32.mxu0 %v273
        %3670 = vmatmul.mubr.f32.gmra.mxu0 %v272
        %v3671 = vpop.f32.mrf.mxu0
        %v3672 = vadd.f32 %v3319, %v3671
        %v3673 = vpop.f32.mrf.mxu0
        %v3674 = vadd.f32 %v3321, %v3673
        %3675 = vmatprep.mubr.f32.mxu0 %v279
        %3676 = vmatmul.mubr.f32.gmra.mxu0 %v278
        %v3677 = vpop.f32.mrf.mxu0
        %v3678 = vadd.f32 %v3325, %v3677
        %v3679 = vpop.f32.mrf.mxu0
        %v3680 = vadd.f32 %v3327, %v3679
        %3681 = vmatprep.mubr.f32.mxu0 %v285
        %3682 = vmatmul.mubr.f32.gmra.mxu0 %v284
        %v3683 = vpop.f32.mrf.mxu0
        %v3684 = vadd.f32 %v3331, %v3683
        %v3685 = vpop.f32.mrf.mxu0
        %v3686 = vadd.f32 %v3333, %v3685
        %3687 = vmatprep.mubr.f32.mxu0 %v291
        %3688 = vmatmul.mubr.f32.gmra.mxu0 %v290
        %v3689 = vpop.f32.mrf.mxu0
        %v3690 = vadd.f32 %v3337, %v3689
        %v3691 = vpop.f32.mrf.mxu0
        %v3692 = vadd.f32 %v3339, %v3691
        %3693 = vmatprep.mubr.f32.mxu0 %v297
        %3694 = vmatmul.mubr.f32.gmra.mxu0 %v296
        %v3695 = vpop.f32.mrf.mxu0
        %v3696 = vadd.f32 %v3343, %v3695
        %v3697 = vpop.f32.mrf.mxu0
        %v3698 = vadd.f32 %v3345, %v3697
        %3699 = vmatprep.mubr.f32.mxu0 %v303
        %3700 = vmatmul.mubr.f32.gmra.mxu0 %v302
        %v3701 = vpop.f32.mrf.mxu0
        %v3702 = vadd.f32 %v3349, %v3701
        %v3703 = vpop.f32.mrf.mxu0
        %v3704 = vadd.f32 %v3351, %v3703
        %3705 = vmatprep.mubr.f32.mxu0 %v309
        %3706 = vmatmul.mubr.f32.gmra.mxu0 %v308
        %v3707 = vpop.f32.mrf.mxu0
        %v3708 = vadd.f32 %v3355, %v3707
        %v3709 = vpop.f32.mrf.mxu0
        %v3710 = vadd.f32 %v3357, %v3709
        %3711 = vmatprep.mubr.f32.mxu0 %v315
        %3712 = vmatmul.mubr.f32.gmra.mxu0 %v314
        %v3713 = vpop.f32.mrf.mxu0
        %v3714 = vadd.f32 %v3361, %v3713
        %v3715 = vpop.f32.mrf.mxu0
        %v3716 = vadd.f32 %v3363, %v3715
        %3717 = vmatprep.mubr.f32.mxu0 %v321
        %3718 = vmatmul.mubr.f32.gmra.mxu0 %v320
        %v3719 = vpop.f32.mrf.mxu0
        %v3720 = vadd.f32 %v3367, %v3719
        %v3721 = vpop.f32.mrf.mxu0
        %v3722 = vadd.f32 %v3369, %v3721
        %3723 = vmatprep.mubr.f32.mxu0 %v327
        %3724 = vmatmul.mubr.f32.gmra.mxu0 %v326
        %v3725 = vpop.f32.mrf.mxu0
        %v3726 = vadd.f32 %v3373, %v3725
        %v3727 = vpop.f32.mrf.mxu0
        %v3728 = vadd.f32 %v3375, %v3727
        %3729 = vmatprep.mubr.f32.mxu0 %v333
        %3730 = vmatmul.mubr.f32.gmra.mxu0 %v332
        %v3731 = vpop.f32.mrf.mxu0
        %v3732 = vadd.f32 %v3379, %v3731
        %v3733 = vpop.f32.mrf.mxu0
        %v3734 = vadd.f32 %v3381, %v3733
        %3735 = vmatprep.mubr.f32.mxu0 %v339
        %3736 = vmatmul.mubr.f32.gmra.mxu0 %v338
        %v3737 = vpop.f32.mrf.mxu0
        %v3738 = vadd.f32 %v3385, %v3737
        %v3739 = vpop.f32.mrf.mxu0
        %v3740 = vadd.f32 %v3387, %v3739
        %3741 = vmatprep.mubr.f32.mxu0 %v345
        %3742 = vmatmul.mubr.f32.gmra.mxu0 %v344
        %v3743 = vpop.f32.mrf.mxu0
        %v3744 = vadd.f32 %v3391, %v3743
        %v3745 = vpop.f32.mrf.mxu0
        %v3746 = vadd.f32 %v3393, %v3745
        %3747 = vmatprep.mubr.f32.mxu0 %v351
        %3748 = vmatmul.mubr.f32.gmra.mxu0 %v350
        %v3749 = vpop.f32.mrf.mxu0
        %v3750 = vadd.f32 %v3397, %v3749
        %v3751 = vpop.f32.mrf.mxu0
        %v3752 = vadd.f32 %v3399, %v3751
        %3753 = vmatprep.mubr.f32.mxu0 %v357
        %3754 = vmatmul.mubr.f32.gmra.mxu0 %v356
        %v3755 = vpop.f32.mrf.mxu0
        %v3756 = vadd.f32 %v3403, %v3755
        %v3757 = vpop.f32.mrf.mxu0
        %v3758 = vadd.f32 %v3405, %v3757
        %3759 = vmatprep.mubr.f32.mxu0 %v363
        %3760 = vmatmul.mubr.f32.gmra.mxu0 %v362
        %v3761 = vpop.f32.mrf.mxu0
        %v3762 = vadd.f32 %v3409, %v3761
        %v3763 = vpop.f32.mrf.mxu0
        %v3764 = vadd.f32 %v3411, %v3763
        %3765 = vmatprep.mubr.f32.mxu0 %v369
        %3766 = vmatmul.mubr.f32.gmra.mxu0 %v368
        %v3767 = vpop.f32.mrf.mxu0
        %v3768 = vadd.f32 %v3415, %v3767
        %v3769 = vpop.f32.mrf.mxu0
        %v3770 = vadd.f32 %v3417, %v3769
        %3771 = vmatprep.mubr.f32.mxu0 %v375
        %3772 = vmatmul.mubr.f32.gmra.mxu0 %v374
        %v3773 = vpop.f32.mrf.mxu0
        %v3774 = vadd.f32 %v3421, %v3773
        %v3775 = vpop.f32.mrf.mxu0
        %v3776 = vadd.f32 %v3423, %v3775
        %3777 = vmatprep.mubr.f32.mxu0 %v381
        %3778 = vmatmul.mubr.f32.gmra.mxu0 %v380
        %v3779 = vpop.f32.mrf.mxu0
        %v3780 = vadd.f32 %v3427, %v3779
        %v3781 = vpop.f32.mrf.mxu0
        %v3782 = vadd.f32 %v3429, %v3781
        %3783 = vmatprep.mubr.f32.mxu0 %v387
        %3784 = vmatmul.mubr.f32.gmra.mxu0 %v386
        %v3785 = vpop.f32.mrf.mxu0
        %v3786 = vadd.f32 %v3433, %v3785
        %v3787 = vpop.f32.mrf.mxu0
        %v3788 = vadd.f32 %v3435, %v3787
        %3789 = vmatprep.mubr.f32.mxu0 %v393
        %3790 = vmatmul.mubr.f32.gmra.mxu0 %v392
        %v3791 = vpop.f32.mrf.mxu0
        %v3792 = vadd.f32 %v3439, %v3791
        %v3793 = vpop.f32.mrf.mxu0
        %v3794 = vadd.f32 %v3441, %v3793
        %3795 = vmatprep.mubr.f32.mxu0 %v399
        %3796 = vmatmul.mubr.f32.gmra.mxu0 %v398
        %v3797 = vpop.f32.mrf.mxu0
        %v3798 = vadd.f32 %v3445, %v3797
        %v3799 = vpop.f32.mrf.mxu0
        %v3800 = vadd.f32 %v3447, %v3799
        %3801 = vmatprep.mubr.f32.mxu0 %v405
        %3802 = vmatmul.mubr.f32.gmra.mxu0 %v404
        %v3803 = vpop.f32.mrf.mxu0
        %v3804 = vadd.f32 %v3451, %v3803
        %v3805 = vpop.f32.mrf.mxu0
        %v3806 = vadd.f32 %v3453, %v3805
        %3807 = vmatprep.mubr.f32.mxu0 %v411
        %3808 = vmatmul.mubr.f32.gmra.mxu0 %v410
        %v3809 = vpop.f32.mrf.mxu0
        %v3810 = vadd.f32 %v3457, %v3809
        %v3811 = vpop.f32.mrf.mxu0
        %v3812 = vadd.f32 %v3459, %v3811
        %3813 = vmatprep.mubr.f32.mxu0 %v417
        %3814 = vmatmul.mubr.f32.gmra.mxu0 %v416
        %v3815 = vpop.f32.mrf.mxu0
        %v3816 = vadd.f32 %v3463, %v3815
        %v3817 = vpop.f32.mrf.mxu0
        %v3818 = vadd.f32 %v3465, %v3817
        %3819 = vmatprep.mubr.f32.mxu0 %v423
        %3820 = vmatmul.mubr.f32.gmra.mxu0 %v422
        %v3821 = vpop.f32.mrf.mxu0
        %v3822 = vadd.f32 %v3469, %v3821
        %v3823 = vpop.f32.mrf.mxu0
        %v3824 = vadd.f32 %v3471, %v3823
        %3825 = vmatprep.mubr.f32.mxu0 %v429
        %3826 = vmatmul.mubr.f32.gmra.mxu0 %v428
        %v3827 = vpop.f32.mrf.mxu0
        %v3828 = vadd.f32 %v3475, %v3827
        %v3829 = vpop.f32.mrf.mxu0
        %v3830 = vadd.f32 %v3477, %v3829
        %3831 = vmatprep.mubr.f32.mxu0 %v435
        %3832 = vmatmul.mubr.f32.gmra.mxu0 %v434
        %v3833 = vpop.f32.mrf.mxu0
        %v3834 = vadd.f32 %v3481, %v3833
        %v3835 = vpop.f32.mrf.mxu0
        %v3836 = vadd.f32 %v3483, %v3835
        %3837 = vmatprep.mubr.f32.mxu0 %v441
        %3838 = vmatmul.mubr.f32.gmra.mxu0 %v440
        %v3839 = vpop.f32.mrf.mxu0
        %v3840 = vadd.f32 %v3487, %v3839
        %v3841 = vpop.f32.mrf.mxu0
        %v3842 = vadd.f32 %v3489, %v3841
        %3843 = vmatprep.mubr.f32.mxu0 %v447
        %3844 = vmatmul.mubr.f32.gmra.mxu0 %v446
        %v3845 = vpop.f32.mrf.mxu0
        %v3846 = vadd.f32 %v3493, %v3845
        %v3847 = vpop.f32.mrf.mxu0
        %v3848 = vadd.f32 %v3495, %v3847
        %3849 = vmatprep.mubr.f32.mxu0 %v453
        %3850 = vmatmul.mubr.f32.gmra.mxu0 %v452
        %v3851 = vpop.f32.mrf.mxu0
        %v3852 = vadd.f32 %v3499, %v3851
        %v3853 = vpop.f32.mrf.mxu0
        %v3854 = vadd.f32 %v3501, %v3853
        %3855 = vmatprep.mubr.f32.mxu0 %v459
        %3856 = vmatmul.mubr.f32.gmra.mxu0 %v458
        %v3857 = vpop.f32.mrf.mxu0
        %v3858 = vadd.f32 %v3505, %v3857
        %v3859 = vpop.f32.mrf.mxu0
        %v3860 = vadd.f32 %v3507, %v3859
        %3861 = vmatprep.mubr.f32.mxu0 %v465
        %3862 = vmatmul.mubr.f32.gmra.mxu0 %v464
        %v3863 = vpop.f32.mrf.mxu0
        %v3864 = vadd.f32 %v3511, %v3863
        %v3865 = vpop.f32.mrf.mxu0
        %v3866 = vadd.f32 %v3513, %v3865
        %3867 = vmatprep.mubr.f32.mxu0 %v471
        %3868 = vmatmul.mubr.f32.gmra.mxu0 %v470
        %v3869 = vpop.f32.mrf.mxu0
        %v3870 = vadd.f32 %v3517, %v3869
        %v3871 = vpop.f32.mrf.mxu0
        %v3872 = vadd.f32 %v3519, %v3871
        %3873 = vmatprep.mubr.f32.mxu0 %v477
        %3874 = vmatmul.mubr.f32.gmra.mxu0 %v476
        %v3875 = vpop.f32.mrf.mxu0
        %v3876 = vadd.f32 %v3523, %v3875
        %v3877 = vpop.f32.mrf.mxu0
        %v3878 = vadd.f32 %v3525, %v3877
        %3879 = vmatprep.mubr.f32.mxu0 %v483
        %3880 = vmatmul.mubr.f32.gmra.mxu0 %v482
        %v3881 = vpop.f32.mrf.mxu0
        %v3882 = vadd.f32 %v3529, %v3881
        %v3883 = vpop.f32.mrf.mxu0
        %v3884 = vadd.f32 %v3531, %v3883
        %3885 = vmatprep.mubr.f32.mxu0 %v489
        %3886 = vmatmul.mubr.f32.gmra.mxu0 %v488
        %v3887 = vpop.f32.mrf.mxu0
        %v3888 = vadd.f32 %v3535, %v3887
        %v3889 = vpop.f32.mrf.mxu0
        %v3890 = vadd.f32 %v3537, %v3889
        %3891 = vmatprep.mubr.f32.mxu0 %v495
        %3892 = vmatmul.mubr.f32.gmra.mxu0 %v494
        %v3893 = vpop.f32.mrf.mxu0
        %v3894 = vadd.f32 %v3541, %v3893
        %v3895 = vpop.f32.mrf.mxu0
        %v3896 = vadd.f32 %v3543, %v3895
        %3897 = vmatprep.mubr.f32.mxu0 %v501
        %3898 = vmatmul.mubr.f32.gmra.mxu0 %v500
        %v3899 = vpop.f32.mrf.mxu0
        %v3900 = vadd.f32 %v3547, %v3899
        %v3901 = vpop.f32.mrf.mxu0
        %v3902 = vadd.f32 %v3549, %v3901
        %3903 = vmatprep.mubr.f32.mxu0 %v507
        %3904 = vmatmul.mubr.f32.gmra.mxu0 %v506
        %v3905 = vpop.f32.mrf.mxu0
        %v3906 = vadd.f32 %v3553, %v3905
        %v3907 = vpop.f32.mrf.mxu0
        %v3908 = vadd.f32 %v3555, %v3907
        %3909 = vmatprep.mubr.f32.mxu0 %v513
        %3910 = vmatmul.mubr.f32.gmra.mxu0 %v512
        %v3911 = vpop.f32.mrf.mxu0
        %v3912 = vadd.f32 %v3559, %v3911
        %v3913 = vpop.f32.mrf.mxu0
        %v3914 = vadd.f32 %v3561, %v3913
        %3915 = vmatprep.mubr.f32.mxu0 %v519
        %3916 = vmatmul.mubr.f32.gmra.mxu0 %v518
        %v3917 = vpop.f32.mrf.mxu0
        %v3918 = vadd.f32 %v3565, %v3917
        %v3919 = vpop.f32.mrf.mxu0
        %v3920 = vadd.f32 %v3567, %v3919
        %3921 = vmatprep.mubr.f32.mxu0 %v525
        %3922 = vmatmul.mubr.f32.gmra.mxu0 %v524
        %v3923 = vpop.f32.mrf.mxu0
        %v3924 = vadd.f32 %v3571, %v3923
        %v3925 = vpop.f32.mrf.mxu0
        %v3926 = vadd.f32 %v3573, %v3925
        %3927 = vmatprep.mubr.f32.mxu0 %v531
        %3928 = vmatmul.mubr.f32.gmra.mxu0 %v530
        %v3929 = vpop.f32.mrf.mxu0
        %v3930 = vadd.f32 %v3577, %v3929
        %v3931 = vpop.f32.mrf.mxu0
        %v3932 = vadd.f32 %v3579, %v3931
        %3933 = vmatprep.mubr.f32.mxu0 %v537
        %3934 = vmatmul.mubr.f32.gmra.mxu0 %v536
        %v3935 = vpop.f32.mrf.mxu0
        %v3936 = vadd.f32 %v3583, %v3935
        %v3937 = vpop.f32.mrf.mxu0
        %v3938 = vadd.f32 %v3585, %v3937
        %3939 = vmatprep.mubr.f32.mxu0 %v543
        %3940 = vmatmul.mubr.f32.gmra.mxu0 %v542
        %v3941 = vpop.f32.mrf.mxu0
        %v3942 = vadd.f32 %v3589, %v3941
        %v3943 = vpop.f32.mrf.mxu0
        %v3944 = vadd.f32 %v3591, %v3943
        %3945 = vmatprep.mubr.f32.mxu0 %v549
        %3946 = vmatmul.mubr.f32.gmra.mxu0 %v548
        %v3947 = vpop.f32.mrf.mxu0
        %v3948 = vadd.f32 %v3595, %v3947
        %v3949 = vpop.f32.mrf.mxu0
        %v3950 = vadd.f32 %v3597, %v3949
        %3951 = vdwg.mxu0
        %3952 = vmatprep.subr.mxu0 %v1031
        %3953 = vmatpush1.msra.mxu0 %v1030
        %3954 = vmatprep.subr.mxu0 %v1025
        %3955 = vmatpush1.msra.mxu0 %v1024
        %3956 = vmatprep.subr.mxu0 %v1019
        %3957 = vmatpush1.msra.mxu0 %v1018
        %3958 = vmatprep.subr.mxu0 %v1013
        %3959 = vmatpush1.msra.mxu0 %v1012
        %3960 = vmatprep.subr.mxu0 %v1007
        %3961 = vmatpush1.msra.mxu0 %v1006
        %3962 = vmatprep.subr.mxu0 %v1001
        %3963 = vmatpush1.msra.mxu0 %v1000
        %3964 = vmatprep.subr.mxu0 %v995
        %3965 = vmatpush1.msra.mxu0 %v994
        %3966 = vmatprep.subr.mxu0 %v989
        %3967 = vmatpush1.msra.mxu0 %v988
        %3968 = vmatprep.subr.mxu0 %v983
        %3969 = vmatpush1.msra.mxu0 %v982
        %3970 = vmatprep.subr.mxu0 %v977
        %3971 = vmatpush1.msra.mxu0 %v976
        %3972 = vmatprep.subr.mxu0 %v971
        %3973 = vmatpush1.msra.mxu0 %v970
        %3974 = vmatprep.subr.mxu0 %v965
        %3975 = vmatpush1.msra.mxu0 %v964
        %3976 = vmatprep.subr.mxu0 %v959
        %3977 = vmatpush1.msra.mxu0 %v958
        %3978 = vmatprep.subr.mxu0 %v953
        %3979 = vmatpush1.msra.mxu0 %v952
        %3980 = vmatprep.subr.mxu0 %v947
        %3981 = vmatpush1.msra.mxu0 %v946
        %3982 = vmatprep.subr.mxu0 %v941
        %3983 = vmatpush1.msra.mxu0 %v940
        %3984 = vmatprep.subr.mxu0 %v1127
        %3985 = vmatpush2.msra.mxu0 %v1126
        %3986 = vmatprep.subr.mxu0 %v1121
        %3987 = vmatpush2.msra.mxu0 %v1120
        %3988 = vmatprep.subr.mxu0 %v1115
        %3989 = vmatpush2.msra.mxu0 %v1114
        %3990 = vmatprep.subr.mxu0 %v1109
        %3991 = vmatpush2.msra.mxu0 %v1108
        %3992 = vmatprep.subr.mxu0 %v1103
        %3993 = vmatpush2.msra.mxu0 %v1102
        %3994 = vmatprep.subr.mxu0 %v1097
        %3995 = vmatpush2.msra.mxu0 %v1096
        %3996 = vmatprep.subr.mxu0 %v1091
        %3997 = vmatpush2.msra.mxu0 %v1090
        %3998 = vmatprep.subr.mxu0 %v1085
        %3999 = vmatpush2.msra.mxu0 %v1084
        %4000 = vmatprep.subr.mxu0 %v1079
        %4001 = vmatpush2.msra.mxu0 %v1078
        %4002 = vmatprep.subr.mxu0 %v1073
        %4003 = vmatpush2.msra.mxu0 %v1072
        %4004 = vmatprep.subr.mxu0 %v1067
        %4005 = vmatpush2.msra.mxu0 %v1066
        %4006 = vmatprep.subr.mxu0 %v1061
        %4007 = vmatpush2.msra.mxu0 %v1060
        %4008 = vmatprep.subr.mxu0 %v1055
        %4009 = vmatpush2.msra.mxu0 %v1054
        %4010 = vmatprep.subr.mxu0 %v1049
        %4011 = vmatpush2.msra.mxu0 %v1048
        %4012 = vmatprep.subr.mxu0 %v1043
        %4013 = vmatpush2.msra.mxu0 %v1042
        %4014 = vmatprep.subr.mxu0 %v1037
        %4015 = vmatpush2.msra.mxu0 %v1036
        %4016 = vmatprep.mubr.f32.mxu0 %v269
        %4017 = vmatmul.mubr.f32.gmra.mxu0 %v268
        %v4018 = vpop.f32.mrf.mxu0
        %v4019 = vadd.f32 %v3666, %v4018
        %v4020 = vpop.f32.mrf.mxu0
        %v4021 = vadd.f32 %v3668, %v4020
        %4022 = vmatprep.mubr.f32.mxu0 %v275
        %4023 = vmatmul.mubr.f32.gmra.mxu0 %v274
        %v4024 = vpop.f32.mrf.mxu0
        %v4025 = vadd.f32 %v3672, %v4024
        %v4026 = vpop.f32.mrf.mxu0
        %v4027 = vadd.f32 %v3674, %v4026
        %4028 = vmatprep.mubr.f32.mxu0 %v281
        %4029 = vmatmul.mubr.f32.gmra.mxu0 %v280
        %v4030 = vpop.f32.mrf.mxu0
        %v4031 = vadd.f32 %v3678, %v4030
        %v4032 = vpop.f32.mrf.mxu0
        %v4033 = vadd.f32 %v3680, %v4032
        %4034 = vmatprep.mubr.f32.mxu0 %v287
        %4035 = vmatmul.mubr.f32.gmra.mxu0 %v286
        %v4036 = vpop.f32.mrf.mxu0
        %v4037 = vadd.f32 %v3684, %v4036
        %v4038 = vpop.f32.mrf.mxu0
        %v4039 = vadd.f32 %v3686, %v4038
        %4040 = vmatprep.mubr.f32.mxu0 %v293
        %4041 = vmatmul.mubr.f32.gmra.mxu0 %v292
        %v4042 = vpop.f32.mrf.mxu0
        %v4043 = vadd.f32 %v3690, %v4042
        %v4044 = vpop.f32.mrf.mxu0
        %v4045 = vadd.f32 %v3692, %v4044
        %4046 = vmatprep.mubr.f32.mxu0 %v299
        %4047 = vmatmul.mubr.f32.gmra.mxu0 %v298
        %v4048 = vpop.f32.mrf.mxu0
        %v4049 = vadd.f32 %v3696, %v4048
        %v4050 = vpop.f32.mrf.mxu0
        %v4051 = vadd.f32 %v3698, %v4050
        %4052 = vmatprep.mubr.f32.mxu0 %v305
        %4053 = vmatmul.mubr.f32.gmra.mxu0 %v304
        %v4054 = vpop.f32.mrf.mxu0
        %v4055 = vadd.f32 %v3702, %v4054
        %v4056 = vpop.f32.mrf.mxu0
        %v4057 = vadd.f32 %v3704, %v4056
        %4058 = vmatprep.mubr.f32.mxu0 %v311
        %4059 = vmatmul.mubr.f32.gmra.mxu0 %v310
        %v4060 = vpop.f32.mrf.mxu0
        %v4061 = vadd.f32 %v3708, %v4060
        %v4062 = vpop.f32.mrf.mxu0
        %v4063 = vadd.f32 %v3710, %v4062
        %4064 = vmatprep.mubr.f32.mxu0 %v317
        %4065 = vmatmul.mubr.f32.gmra.mxu0 %v316
        %v4066 = vpop.f32.mrf.mxu0
        %v4067 = vadd.f32 %v3714, %v4066
        %v4068 = vpop.f32.mrf.mxu0
        %v4069 = vadd.f32 %v3716, %v4068
        %4070 = vmatprep.mubr.f32.mxu0 %v323
        %4071 = vmatmul.mubr.f32.gmra.mxu0 %v322
        %v4072 = vpop.f32.mrf.mxu0
        %v4073 = vadd.f32 %v3720, %v4072
        %v4074 = vpop.f32.mrf.mxu0
        %v4075 = vadd.f32 %v3722, %v4074
        %4076 = vmatprep.mubr.f32.mxu0 %v329
        %4077 = vmatmul.mubr.f32.gmra.mxu0 %v328
        %v4078 = vpop.f32.mrf.mxu0
        %v4079 = vadd.f32 %v3726, %v4078
        %v4080 = vpop.f32.mrf.mxu0
        %v4081 = vadd.f32 %v3728, %v4080
        %4082 = vmatprep.mubr.f32.mxu0 %v335
        %4083 = vmatmul.mubr.f32.gmra.mxu0 %v334
        %v4084 = vpop.f32.mrf.mxu0
        %v4085 = vadd.f32 %v3732, %v4084
        %v4086 = vpop.f32.mrf.mxu0
        %v4087 = vadd.f32 %v3734, %v4086
        %4088 = vmatprep.mubr.f32.mxu0 %v341
        %4089 = vmatmul.mubr.f32.gmra.mxu0 %v340
        %v4090 = vpop.f32.mrf.mxu0
        %v4091 = vadd.f32 %v3738, %v4090
        %v4092 = vpop.f32.mrf.mxu0
        %v4093 = vadd.f32 %v3740, %v4092
        %4094 = vmatprep.mubr.f32.mxu0 %v347
        %4095 = vmatmul.mubr.f32.gmra.mxu0 %v346
        %v4096 = vpop.f32.mrf.mxu0
        %v4097 = vadd.f32 %v3744, %v4096
        %v4098 = vpop.f32.mrf.mxu0
        %v4099 = vadd.f32 %v3746, %v4098
        %4100 = vmatprep.mubr.f32.mxu0 %v353
        %4101 = vmatmul.mubr.f32.gmra.mxu0 %v352
        %v4102 = vpop.f32.mrf.mxu0
        %v4103 = vadd.f32 %v3750, %v4102
        %v4104 = vpop.f32.mrf.mxu0
        %v4105 = vadd.f32 %v3752, %v4104
        %4106 = vmatprep.mubr.f32.mxu0 %v359
        %4107 = vmatmul.mubr.f32.gmra.mxu0 %v358
        %v4108 = vpop.f32.mrf.mxu0
        %v4109 = vadd.f32 %v3756, %v4108
        %v4110 = vpop.f32.mrf.mxu0
        %v4111 = vadd.f32 %v3758, %v4110
        %4112 = vmatprep.mubr.f32.mxu0 %v365
        %4113 = vmatmul.mubr.f32.gmra.mxu0 %v364
        %v4114 = vpop.f32.mrf.mxu0
        %v4115 = vadd.f32 %v3762, %v4114
        %v4116 = vpop.f32.mrf.mxu0
        %v4117 = vadd.f32 %v3764, %v4116
        %4118 = vmatprep.mubr.f32.mxu0 %v371
        %4119 = vmatmul.mubr.f32.gmra.mxu0 %v370
        %v4120 = vpop.f32.mrf.mxu0
        %v4121 = vadd.f32 %v3768, %v4120
        %v4122 = vpop.f32.mrf.mxu0
        %v4123 = vadd.f32 %v3770, %v4122
        %4124 = vmatprep.mubr.f32.mxu0 %v377
        %4125 = vmatmul.mubr.f32.gmra.mxu0 %v376
        %v4126 = vpop.f32.mrf.mxu0
        %v4127 = vadd.f32 %v3774, %v4126
        %v4128 = vpop.f32.mrf.mxu0
        %v4129 = vadd.f32 %v3776, %v4128
        %4130 = vmatprep.mubr.f32.mxu0 %v383
        %4131 = vmatmul.mubr.f32.gmra.mxu0 %v382
        %v4132 = vpop.f32.mrf.mxu0
        %v4133 = vadd.f32 %v3780, %v4132
        %v4134 = vpop.f32.mrf.mxu0
        %v4135 = vadd.f32 %v3782, %v4134
        %4136 = vmatprep.mubr.f32.mxu0 %v389
        %4137 = vmatmul.mubr.f32.gmra.mxu0 %v388
        %v4138 = vpop.f32.mrf.mxu0
        %v4139 = vadd.f32 %v3786, %v4138
        %v4140 = vpop.f32.mrf.mxu0
        %v4141 = vadd.f32 %v3788, %v4140
        %4142 = vmatprep.mubr.f32.mxu0 %v395
        %4143 = vmatmul.mubr.f32.gmra.mxu0 %v394
        %v4144 = vpop.f32.mrf.mxu0
        %v4145 = vadd.f32 %v3792, %v4144
        %v4146 = vpop.f32.mrf.mxu0
        %v4147 = vadd.f32 %v3794, %v4146
        %4148 = vmatprep.mubr.f32.mxu0 %v401
        %4149 = vmatmul.mubr.f32.gmra.mxu0 %v400
        %v4150 = vpop.f32.mrf.mxu0
        %v4151 = vadd.f32 %v3798, %v4150
        %v4152 = vpop.f32.mrf.mxu0
        %v4153 = vadd.f32 %v3800, %v4152
        %4154 = vmatprep.mubr.f32.mxu0 %v407
        %4155 = vmatmul.mubr.f32.gmra.mxu0 %v406
        %v4156 = vpop.f32.mrf.mxu0
        %v4157 = vadd.f32 %v3804, %v4156
        %v4158 = vpop.f32.mrf.mxu0
        %v4159 = vadd.f32 %v3806, %v4158
        %4160 = vmatprep.mubr.f32.mxu0 %v413
        %4161 = vmatmul.mubr.f32.gmra.mxu0 %v412
        %v4162 = vpop.f32.mrf.mxu0
        %v4163 = vadd.f32 %v3810, %v4162
        %v4164 = vpop.f32.mrf.mxu0
        %v4165 = vadd.f32 %v3812, %v4164
        %4166 = vmatprep.mubr.f32.mxu0 %v419
        %4167 = vmatmul.mubr.f32.gmra.mxu0 %v418
        %v4168 = vpop.f32.mrf.mxu0
        %v4169 = vadd.f32 %v3816, %v4168
        %v4170 = vpop.f32.mrf.mxu0
        %v4171 = vadd.f32 %v3818, %v4170
        %4172 = vmatprep.mubr.f32.mxu0 %v425
        %4173 = vmatmul.mubr.f32.gmra.mxu0 %v424
        %v4174 = vpop.f32.mrf.mxu0
        %v4175 = vadd.f32 %v3822, %v4174
        %v4176 = vpop.f32.mrf.mxu0
        %v4177 = vadd.f32 %v3824, %v4176
        %4178 = vmatprep.mubr.f32.mxu0 %v431
        %4179 = vmatmul.mubr.f32.gmra.mxu0 %v430
        %v4180 = vpop.f32.mrf.mxu0
        %v4181 = vadd.f32 %v3828, %v4180
        %v4182 = vpop.f32.mrf.mxu0
        %v4183 = vadd.f32 %v3830, %v4182
        %4184 = vmatprep.mubr.f32.mxu0 %v437
        %4185 = vmatmul.mubr.f32.gmra.mxu0 %v436
        %v4186 = vpop.f32.mrf.mxu0
        %v4187 = vadd.f32 %v3834, %v4186
        %v4188 = vpop.f32.mrf.mxu0
        %v4189 = vadd.f32 %v3836, %v4188
        %4190 = vmatprep.mubr.f32.mxu0 %v443
        %4191 = vmatmul.mubr.f32.gmra.mxu0 %v442
        %v4192 = vpop.f32.mrf.mxu0
        %v4193 = vadd.f32 %v3840, %v4192
        %v4194 = vpop.f32.mrf.mxu0
        %v4195 = vadd.f32 %v3842, %v4194
        %4196 = vmatprep.mubr.f32.mxu0 %v449
        %4197 = vmatmul.mubr.f32.gmra.mxu0 %v448
        %v4198 = vpop.f32.mrf.mxu0
        %v4199 = vadd.f32 %v3846, %v4198
        %v4200 = vpop.f32.mrf.mxu0
        %v4201 = vadd.f32 %v3848, %v4200
        %4202 = vmatprep.mubr.f32.mxu0 %v455
        %4203 = vmatmul.mubr.f32.gmra.mxu0 %v454
        %v4204 = vpop.f32.mrf.mxu0
        %v4205 = vadd.f32 %v3852, %v4204
        %v4206 = vpop.f32.mrf.mxu0
        %v4207 = vadd.f32 %v3854, %v4206
        %4208 = vmatprep.mubr.f32.mxu0 %v461
        %4209 = vmatmul.mubr.f32.gmra.mxu0 %v460
        %v4210 = vpop.f32.mrf.mxu0
        %v4211 = vadd.f32 %v3858, %v4210
        %v4212 = vpop.f32.mrf.mxu0
        %v4213 = vadd.f32 %v3860, %v4212
        %4214 = vmatprep.mubr.f32.mxu0 %v467
        %4215 = vmatmul.mubr.f32.gmra.mxu0 %v466
        %v4216 = vpop.f32.mrf.mxu0
        %v4217 = vadd.f32 %v3864, %v4216
        %v4218 = vpop.f32.mrf.mxu0
        %v4219 = vadd.f32 %v3866, %v4218
        %4220 = vmatprep.mubr.f32.mxu0 %v473
        %4221 = vmatmul.mubr.f32.gmra.mxu0 %v472
        %v4222 = vpop.f32.mrf.mxu0
        %v4223 = vadd.f32 %v3870, %v4222
        %v4224 = vpop.f32.mrf.mxu0
        %v4225 = vadd.f32 %v3872, %v4224
        %4226 = vmatprep.mubr.f32.mxu0 %v479
        %4227 = vmatmul.mubr.f32.gmra.mxu0 %v478
        %v4228 = vpop.f32.mrf.mxu0
        %v4229 = vadd.f32 %v3876, %v4228
        %v4230 = vpop.f32.mrf.mxu0
        %v4231 = vadd.f32 %v3878, %v4230
        %4232 = vmatprep.mubr.f32.mxu0 %v485
        %4233 = vmatmul.mubr.f32.gmra.mxu0 %v484
        %v4234 = vpop.f32.mrf.mxu0
        %v4235 = vadd.f32 %v3882, %v4234
        %v4236 = vpop.f32.mrf.mxu0
        %v4237 = vadd.f32 %v3884, %v4236
        %4238 = vmatprep.mubr.f32.mxu0 %v491
        %4239 = vmatmul.mubr.f32.gmra.mxu0 %v490
        %v4240 = vpop.f32.mrf.mxu0
        %v4241 = vadd.f32 %v3888, %v4240
        %v4242 = vpop.f32.mrf.mxu0
        %v4243 = vadd.f32 %v3890, %v4242
        %4244 = vmatprep.mubr.f32.mxu0 %v497
        %4245 = vmatmul.mubr.f32.gmra.mxu0 %v496
        %v4246 = vpop.f32.mrf.mxu0
        %v4247 = vadd.f32 %v3894, %v4246
        %v4248 = vpop.f32.mrf.mxu0
        %v4249 = vadd.f32 %v3896, %v4248
        %4250 = vmatprep.mubr.f32.mxu0 %v503
        %4251 = vmatmul.mubr.f32.gmra.mxu0 %v502
        %v4252 = vpop.f32.mrf.mxu0
        %v4253 = vadd.f32 %v3900, %v4252
        %v4254 = vpop.f32.mrf.mxu0
        %v4255 = vadd.f32 %v3902, %v4254
        %4256 = vmatprep.mubr.f32.mxu0 %v509
        %4257 = vmatmul.mubr.f32.gmra.mxu0 %v508
        %v4258 = vpop.f32.mrf.mxu0
        %v4259 = vadd.f32 %v3906, %v4258
        %v4260 = vpop.f32.mrf.mxu0
        %v4261 = vadd.f32 %v3908, %v4260
        %4262 = vmatprep.mubr.f32.mxu0 %v515
        %4263 = vmatmul.mubr.f32.gmra.mxu0 %v514
        %v4264 = vpop.f32.mrf.mxu0
        %v4265 = vadd.f32 %v3912, %v4264
        %v4266 = vpop.f32.mrf.mxu0
        %v4267 = vadd.f32 %v3914, %v4266
        %4268 = vmatprep.mubr.f32.mxu0 %v521
        %4269 = vmatmul.mubr.f32.gmra.mxu0 %v520
        %v4270 = vpop.f32.mrf.mxu0
        %v4271 = vadd.f32 %v3918, %v4270
        %v4272 = vpop.f32.mrf.mxu0
        %v4273 = vadd.f32 %v3920, %v4272
        %4274 = vmatprep.mubr.f32.mxu0 %v527
        %4275 = vmatmul.mubr.f32.gmra.mxu0 %v526
        %v4276 = vpop.f32.mrf.mxu0
        %v4277 = vadd.f32 %v3924, %v4276
        %v4278 = vpop.f32.mrf.mxu0
        %v4279 = vadd.f32 %v3926, %v4278
        %4280 = vmatprep.mubr.f32.mxu0 %v533
        %4281 = vmatmul.mubr.f32.gmra.mxu0 %v532
        %v4282 = vpop.f32.mrf.mxu0
        %v4283 = vadd.f32 %v3930, %v4282
        %v4284 = vpop.f32.mrf.mxu0
        %v4285 = vadd.f32 %v3932, %v4284
        %4286 = vmatprep.mubr.f32.mxu0 %v539
        %4287 = vmatmul.mubr.f32.gmra.mxu0 %v538
        %v4288 = vpop.f32.mrf.mxu0
        %v4289 = vadd.f32 %v3936, %v4288
        %v4290 = vpop.f32.mrf.mxu0
        %v4291 = vadd.f32 %v3938, %v4290
        %4292 = vmatprep.mubr.f32.mxu0 %v545
        %4293 = vmatmul.mubr.f32.gmra.mxu0 %v544
        %v4294 = vpop.f32.mrf.mxu0
        %v4295 = vadd.f32 %v3942, %v4294
        %v4296 = vpop.f32.mrf.mxu0
        %v4297 = vadd.f32 %v3944, %v4296
        %4298 = vmatprep.mubr.f32.mxu0 %v551
        %4299 = vmatmul.mubr.f32.gmra.mxu0 %v550
        %v4300 = vpop.f32.mrf.mxu0
        %v4301 = vadd.f32 %v3948, %v4300
        %v4302 = vpop.f32.mrf.mxu0
        %v4303 = vadd.f32 %v3950, %v4302
        %4304 = vdwg.mxu0
        %p4305 = scmp.eq.s32.totalorder %s26, 0
        // Predicated region
        $region45: #{tpu_custom_call.1} parent=31 // pred_check
          %p4306 = pneg %p4305
        $region46: #{tpu_custom_call.1} parent=31 // pred_check_branch
          %4308 = sbr.rel (%p4306) target = $region48
        $region47: #{tpu_custom_call.1} parent=31 // pred_region
          %v4309 = vld [vmem:[#allocation7] sm:$0x3f]
          %v4311 = vlaneseq
          %v4312 = vshrl.u32 %v4311, 7
          %v4313 = vsub.s32 0, %v4312
          %v4314 = vrot.slane %v4309, %v4313
          %v4315 = vlaneseq
          %v4316 = vshrl.u32 %v4315, 7
          %v4317 = vsub.s32 1, %v4316
          %v4318 = vrot.slane %v4309, %v4317
          %v4319 = vlaneseq
          %v4320 = vshrl.u32 %v4319, 7
          %v4321 = vsub.s32 2, %v4320
          %v4322 = vrot.slane %v4309, %v4321
          %v4323 = vlaneseq
          %v4324 = vshrl.u32 %v4323, 7
          %v4325 = vsub.s32 3, %v4324
          %v4326 = vrot.slane %v4309, %v4325
          %v4327 = vlaneseq
          %v4328 = vshrl.u32 %v4327, 7
          %v4329 = vsub.s32 4, %v4328
          %v4330 = vrot.slane %v4309, %v4329
          %v4331 = vlaneseq
          %v4332 = vshrl.u32 %v4331, 7
          %v4333 = vsub.s32 5, %v4332
          %v4334 = vrot.slane %v4309, %v4333
          %v4341 = vadd.f32 %v1901, %v4314
          %v4342 = vadd.f32 %v1903, %v4318
          %v4343 = vadd.f32 %v2960, %v4322
          %v4344 = vadd.f32 %v2962, %v4326
          %v4345 = vadd.f32 %v4019, %v4330
          %v4346 = vadd.f32 %v4021, %v4334
          %v4347 = vadd.f32 %v1907, %v4314
          %v4348 = vadd.f32 %v1909, %v4318
          %v4349 = vadd.f32 %v2966, %v4322
          %v4350 = vadd.f32 %v2968, %v4326
          %v4351 = vadd.f32 %v4025, %v4330
          %v4352 = vadd.f32 %v4027, %v4334
          %v4353 = vadd.f32 %v1913, %v4314
          %v4354 = vadd.f32 %v1915, %v4318
          %v4355 = vadd.f32 %v2972, %v4322
          %v4356 = vadd.f32 %v2974, %v4326
          %v4357 = vadd.f32 %v4031, %v4330
          %v4358 = vadd.f32 %v4033, %v4334
          %v4359 = vadd.f32 %v1919, %v4314
          %v4360 = vadd.f32 %v1921, %v4318
          %v4361 = vadd.f32 %v2978, %v4322
          %v4362 = vadd.f32 %v2980, %v4326
          %v4363 = vadd.f32 %v4037, %v4330
          %v4364 = vadd.f32 %v4039, %v4334
          %v4365 = vadd.f32 %v1925, %v4314
          %v4366 = vadd.f32 %v1927, %v4318
          %v4367 = vadd.f32 %v2984, %v4322
          %v4368 = vadd.f32 %v2986, %v4326
          %v4369 = vadd.f32 %v4043, %v4330
          %v4370 = vadd.f32 %v4045, %v4334
          %v4371 = vadd.f32 %v1931, %v4314
          %v4372 = vadd.f32 %v1933, %v4318
          %v4373 = vadd.f32 %v2990, %v4322
          %v4374 = vadd.f32 %v2992, %v4326
          %v4375 = vadd.f32 %v4049, %v4330
          %v4376 = vadd.f32 %v4051, %v4334
          %v4377 = vadd.f32 %v1937, %v4314
          %v4378 = vadd.f32 %v1939, %v4318
          %v4379 = vadd.f32 %v2996, %v4322
          %v4380 = vadd.f32 %v2998, %v4326
          %v4381 = vadd.f32 %v4055, %v4330
          %v4382 = vadd.f32 %v4057, %v4334
          %v4383 = vadd.f32 %v1943, %v4314
          %v4384 = vadd.f32 %v1945, %v4318
          %v4385 = vadd.f32 %v3002, %v4322
          %v4386 = vadd.f32 %v3004, %v4326
          %v4387 = vadd.f32 %v4061, %v4330
          %v4388 = vadd.f32 %v4063, %v4334
          %v4389 = vadd.f32 %v1949, %v4314
          %v4390 = vadd.f32 %v1951, %v4318
          %v4391 = vadd.f32 %v3008, %v4322
          %v4392 = vadd.f32 %v3010, %v4326
          %v4393 = vadd.f32 %v4067, %v4330
          %v4394 = vadd.f32 %v4069, %v4334
          %v4395 = vadd.f32 %v1955, %v4314
          %v4396 = vadd.f32 %v1957, %v4318
          %v4397 = vadd.f32 %v3014, %v4322
          %v4398 = vadd.f32 %v3016, %v4326
          %v4399 = vadd.f32 %v4073, %v4330
          %v4400 = vadd.f32 %v4075, %v4334
          %v4401 = vadd.f32 %v1961, %v4314
          %v4402 = vadd.f32 %v1963, %v4318
          %v4403 = vadd.f32 %v3020, %v4322
          %v4404 = vadd.f32 %v3022, %v4326
          %v4405 = vadd.f32 %v4079, %v4330
          %v4406 = vadd.f32 %v4081, %v4334
          %v4407 = vadd.f32 %v1967, %v4314
          %v4408 = vadd.f32 %v1969, %v4318
          %v4409 = vadd.f32 %v3026, %v4322
          %v4410 = vadd.f32 %v3028, %v4326
          %v4411 = vadd.f32 %v4085, %v4330
          %v4412 = vadd.f32 %v4087, %v4334
          %v4413 = vadd.f32 %v1973, %v4314
          %v4414 = vadd.f32 %v1975, %v4318
          %v4415 = vadd.f32 %v3032, %v4322
          %v4416 = vadd.f32 %v3034, %v4326
          %v4417 = vadd.f32 %v4091, %v4330
          %v4418 = vadd.f32 %v4093, %v4334
          %v4419 = vadd.f32 %v1979, %v4314
          %v4420 = vadd.f32 %v1981, %v4318
          %v4421 = vadd.f32 %v3038, %v4322
          %v4422 = vadd.f32 %v3040, %v4326
          %v4423 = vadd.f32 %v4097, %v4330
          %v4424 = vadd.f32 %v4099, %v4334
          %v4425 = vadd.f32 %v1985, %v4314
          %v4426 = vadd.f32 %v1987, %v4318
          %v4427 = vadd.f32 %v3044, %v4322
          %v4428 = vadd.f32 %v3046, %v4326
          %v4429 = vadd.f32 %v4103, %v4330
          %v4430 = vadd.f32 %v4105, %v4334
          %v4431 = vadd.f32 %v1991, %v4314
          %v4432 = vadd.f32 %v1993, %v4318
          %v4433 = vadd.f32 %v3050, %v4322
          %v4434 = vadd.f32 %v3052, %v4326
          %v4435 = vadd.f32 %v4109, %v4330
          %v4436 = vadd.f32 %v4111, %v4334
          %v4437 = vadd.f32 %v1997, %v4314
          %v4438 = vadd.f32 %v1999, %v4318
          %v4439 = vadd.f32 %v3056, %v4322
          %v4440 = vadd.f32 %v3058, %v4326
          %v4441 = vadd.f32 %v4115, %v4330
          %v4442 = vadd.f32 %v4117, %v4334
          %v4443 = vadd.f32 %v2003, %v4314
          %v4444 = vadd.f32 %v2005, %v4318
          %v4445 = vadd.f32 %v3062, %v4322
          %v4446 = vadd.f32 %v3064, %v4326
          %v4447 = vadd.f32 %v4121, %v4330
          %v4448 = vadd.f32 %v4123, %v4334
          %v4449 = vadd.f32 %v2009, %v4314
          %v4450 = vadd.f32 %v2011, %v4318
          %v4451 = vadd.f32 %v3068, %v4322
          %v4452 = vadd.f32 %v3070, %v4326
          %v4453 = vadd.f32 %v4127, %v4330
          %v4454 = vadd.f32 %v4129, %v4334
          %v4455 = vadd.f32 %v2015, %v4314
          %v4456 = vadd.f32 %v2017, %v4318
          %v4457 = vadd.f32 %v3074, %v4322
          %v4458 = vadd.f32 %v3076, %v4326
          %v4459 = vadd.f32 %v4133, %v4330
          %v4460 = vadd.f32 %v4135, %v4334
          %v4461 = vadd.f32 %v2021, %v4314
          %v4462 = vadd.f32 %v2023, %v4318
          %v4463 = vadd.f32 %v3080, %v4322
          %v4464 = vadd.f32 %v3082, %v4326
          %v4465 = vadd.f32 %v4139, %v4330
          %v4466 = vadd.f32 %v4141, %v4334
          %v4467 = vadd.f32 %v2027, %v4314
          %v4468 = vadd.f32 %v2029, %v4318
          %v4469 = vadd.f32 %v3086, %v4322
          %v4470 = vadd.f32 %v3088, %v4326
          %v4471 = vadd.f32 %v4145, %v4330
          %v4472 = vadd.f32 %v4147, %v4334
          %v4473 = vadd.f32 %v2033, %v4314
          %v4474 = vadd.f32 %v2035, %v4318
          %v4475 = vadd.f32 %v3092, %v4322
          %v4476 = vadd.f32 %v3094, %v4326
          %v4477 = vadd.f32 %v4151, %v4330
          %v4478 = vadd.f32 %v4153, %v4334
          %v4479 = vadd.f32 %v2039, %v4314
          %v4480 = vadd.f32 %v2041, %v4318
          %v4481 = vadd.f32 %v3098, %v4322
          %v4482 = vadd.f32 %v3100, %v4326
          %v4483 = vadd.f32 %v4157, %v4330
          %v4484 = vadd.f32 %v4159, %v4334
          %v4485 = vadd.f32 %v2045, %v4314
          %v4486 = vadd.f32 %v2047, %v4318
          %v4487 = vadd.f32 %v3104, %v4322
          %v4488 = vadd.f32 %v3106, %v4326
          %v4489 = vadd.f32 %v4163, %v4330
          %v4490 = vadd.f32 %v4165, %v4334
          %v4491 = vadd.f32 %v2051, %v4314
          %v4492 = vadd.f32 %v2053, %v4318
          %v4493 = vadd.f32 %v3110, %v4322
          %v4494 = vadd.f32 %v3112, %v4326
          %v4495 = vadd.f32 %v4169, %v4330
          %v4496 = vadd.f32 %v4171, %v4334
          %v4497 = vadd.f32 %v2057, %v4314
          %v4498 = vadd.f32 %v2059, %v4318
          %v4499 = vadd.f32 %v3116, %v4322
          %v4500 = vadd.f32 %v3118, %v4326
          %v4501 = vadd.f32 %v4175, %v4330
          %v4502 = vadd.f32 %v4177, %v4334
          %v4503 = vadd.f32 %v2063, %v4314
          %v4504 = vadd.f32 %v2065, %v4318
          %v4505 = vadd.f32 %v3122, %v4322
          %v4506 = vadd.f32 %v3124, %v4326
          %v4507 = vadd.f32 %v4181, %v4330
          %v4508 = vadd.f32 %v4183, %v4334
          %v4509 = vadd.f32 %v2069, %v4314
          %v4510 = vadd.f32 %v2071, %v4318
          %v4511 = vadd.f32 %v3128, %v4322
          %v4512 = vadd.f32 %v3130, %v4326
          %v4513 = vadd.f32 %v4187, %v4330
          %v4514 = vadd.f32 %v4189, %v4334
          %v4515 = vadd.f32 %v2075, %v4314
          %v4516 = vadd.f32 %v2077, %v4318
          %v4517 = vadd.f32 %v3134, %v4322
          %v4518 = vadd.f32 %v3136, %v4326
          %v4519 = vadd.f32 %v4193, %v4330
          %v4520 = vadd.f32 %v4195, %v4334
          %v4521 = vadd.f32 %v2081, %v4314
          %v4522 = vadd.f32 %v2083, %v4318
          %v4523 = vadd.f32 %v3140, %v4322
          %v4524 = vadd.f32 %v3142, %v4326
          %v4525 = vadd.f32 %v4199, %v4330
          %v4526 = vadd.f32 %v4201, %v4334
          %v4527 = vadd.f32 %v2087, %v4314
          %v4528 = vadd.f32 %v2089, %v4318
          %v4529 = vadd.f32 %v3146, %v4322
          %v4530 = vadd.f32 %v3148, %v4326
          %v4531 = vadd.f32 %v4205, %v4330
          %v4532 = vadd.f32 %v4207, %v4334
          %v4533 = vadd.f32 %v2093, %v4314
          %v4534 = vadd.f32 %v2095, %v4318
          %v4535 = vadd.f32 %v3152, %v4322
          %v4536 = vadd.f32 %v3154, %v4326
          %v4537 = vadd.f32 %v4211, %v4330
          %v4538 = vadd.f32 %v4213, %v4334
          %v4539 = vadd.f32 %v2099, %v4314
          %v4540 = vadd.f32 %v2101, %v4318
          %v4541 = vadd.f32 %v3158, %v4322
          %v4542 = vadd.f32 %v3160, %v4326
          %v4543 = vadd.f32 %v4217, %v4330
          %v4544 = vadd.f32 %v4219, %v4334
          %v4545 = vadd.f32 %v2105, %v4314
          %v4546 = vadd.f32 %v2107, %v4318
          %v4547 = vadd.f32 %v3164, %v4322
          %v4548 = vadd.f32 %v3166, %v4326
          %v4549 = vadd.f32 %v4223, %v4330
          %v4550 = vadd.f32 %v4225, %v4334
          %v4551 = vadd.f32 %v2111, %v4314
          %v4552 = vadd.f32 %v2113, %v4318
          %v4553 = vadd.f32 %v3170, %v4322
          %v4554 = vadd.f32 %v3172, %v4326
          %v4555 = vadd.f32 %v4229, %v4330
          %v4556 = vadd.f32 %v4231, %v4334
          %v4557 = vadd.f32 %v2117, %v4314
          %v4558 = vadd.f32 %v2119, %v4318
          %v4559 = vadd.f32 %v3176, %v4322
          %v4560 = vadd.f32 %v3178, %v4326
          %v4561 = vadd.f32 %v4235, %v4330
          %v4562 = vadd.f32 %v4237, %v4334
          %v4563 = vadd.f32 %v2123, %v4314
          %v4564 = vadd.f32 %v2125, %v4318
          %v4565 = vadd.f32 %v3182, %v4322
          %v4566 = vadd.f32 %v3184, %v4326
          %v4567 = vadd.f32 %v4241, %v4330
          %v4568 = vadd.f32 %v4243, %v4334
          %v4569 = vadd.f32 %v2129, %v4314
          %v4570 = vadd.f32 %v2131, %v4318
          %v4571 = vadd.f32 %v3188, %v4322
          %v4572 = vadd.f32 %v3190, %v4326
          %v4573 = vadd.f32 %v4247, %v4330
          %v4574 = vadd.f32 %v4249, %v4334
          %v4575 = vadd.f32 %v2135, %v4314
          %v4576 = vadd.f32 %v2137, %v4318
          %v4577 = vadd.f32 %v3194, %v4322
          %v4578 = vadd.f32 %v3196, %v4326
          %v4579 = vadd.f32 %v4253, %v4330
          %v4580 = vadd.f32 %v4255, %v4334
          %v4581 = vadd.f32 %v2141, %v4314
          %v4582 = vadd.f32 %v2143, %v4318
          %v4583 = vadd.f32 %v3200, %v4322
          %v4584 = vadd.f32 %v3202, %v4326
          %v4585 = vadd.f32 %v4259, %v4330
          %v4586 = vadd.f32 %v4261, %v4334
          %v4587 = vadd.f32 %v2147, %v4314
          %v4588 = vadd.f32 %v2149, %v4318
          %v4589 = vadd.f32 %v3206, %v4322
          %v4590 = vadd.f32 %v3208, %v4326
          %v4591 = vadd.f32 %v4265, %v4330
          %v4592 = vadd.f32 %v4267, %v4334
          %v4593 = vadd.f32 %v2153, %v4314
          %v4594 = vadd.f32 %v2155, %v4318
          %v4595 = vadd.f32 %v3212, %v4322
          %v4596 = vadd.f32 %v3214, %v4326
          %v4597 = vadd.f32 %v4271, %v4330
          %v4598 = vadd.f32 %v4273, %v4334
          %v4599 = vadd.f32 %v2159, %v4314
          %v4600 = vadd.f32 %v2161, %v4318
          %v4601 = vadd.f32 %v3218, %v4322
          %v4602 = vadd.f32 %v3220, %v4326
          %v4603 = vadd.f32 %v4277, %v4330
          %v4604 = vadd.f32 %v4279, %v4334
          %v4605 = vadd.f32 %v2165, %v4314
          %v4606 = vadd.f32 %v2167, %v4318
          %v4607 = vadd.f32 %v3224, %v4322
          %v4608 = vadd.f32 %v3226, %v4326
          %v4609 = vadd.f32 %v4283, %v4330
          %v4610 = vadd.f32 %v4285, %v4334
          %v4611 = vadd.f32 %v2171, %v4314
          %v4612 = vadd.f32 %v2173, %v4318
          %v4613 = vadd.f32 %v3230, %v4322
          %v4614 = vadd.f32 %v3232, %v4326
          %v4615 = vadd.f32 %v4289, %v4330
          %v4616 = vadd.f32 %v4291, %v4334
          %v4617 = vadd.f32 %v2177, %v4314
          %v4618 = vadd.f32 %v2179, %v4318
          %v4619 = vadd.f32 %v3236, %v4322
          %v4620 = vadd.f32 %v3238, %v4326
          %v4621 = vadd.f32 %v4295, %v4330
          %v4622 = vadd.f32 %v4297, %v4334
          %v4623 = vadd.f32 %v2183, %v4314
          %v4624 = vadd.f32 %v2185, %v4318
          %v4625 = vadd.f32 %v3242, %v4322
          %v4626 = vadd.f32 %v3244, %v4326
          %v4627 = vadd.f32 %v4301, %v4330
          %v4628 = vadd.f32 %v4303, %v4334
          %4629 = vst [vmem:[#allocation8] sm:$0xff] %v4341
          %4630 = vst [vmem:[#allocation8 + $0x8] sm:$0xff] %v4342
          %4631 = vst [vmem:[#allocation8 + $0x10] sm:$0xff] %v4343
          %4632 = vst [vmem:[#allocation8 + $0x18] sm:$0xff] %v4344
          %4633 = vst [vmem:[#allocation8 + $0x20] sm:$0xff] %v4345
          %4634 = vst [vmem:[#allocation8 + $0x28] sm:$0xff] %v4346
          %4635 = vst [vmem:[#allocation8 + $0x30] sm:$0xff] %v4347
          %4636 = vst [vmem:[#allocation8 + $0x38] sm:$0xff] %v4348
          %4637 = vst [vmem:[#allocation8 + $0x40] sm:$0xff] %v4349
          %4638 = vst [vmem:[#allocation8 + $0x48] sm:$0xff] %v4350
          %4639 = vst [vmem:[#allocation8 + $0x50] sm:$0xff] %v4351
          %4640 = vst [vmem:[#allocation8 + $0x58] sm:$0xff] %v4352
          %4641 = vst [vmem:[#allocation8 + $0x60] sm:$0xff] %v4353
          %4642 = vst [vmem:[#allocation8 + $0x68] sm:$0xff] %v4354
          %4643 = vst [vmem:[#allocation8 + $0x70] sm:$0xff] %v4355
          %4644 = vst [vmem:[#allocation8 + $0x78] sm:$0xff] %v4356
          %4645 = vst [vmem:[#allocation8 + $0x80] sm:$0xff] %v4357
          %4646 = vst [vmem:[#allocation8 + $0x88] sm:$0xff] %v4358
          %4647 = vst [vmem:[#allocation8 + $0x90] sm:$0xff] %v4359
          %4648 = vst [vmem:[#allocation8 + $0x98] sm:$0xff] %v4360
          %4649 = vst [vmem:[#allocation8 + $0xa0] sm:$0xff] %v4361
          %4650 = vst [vmem:[#allocation8 + $0xa8] sm:$0xff] %v4362
          %4651 = vst [vmem:[#allocation8 + $0xb0] sm:$0xff] %v4363
          %4652 = vst [vmem:[#allocation8 + $0xb8] sm:$0xff] %v4364
          %4653 = vst [vmem:[#allocation8 + $0xc0] sm:$0xff] %v4365
          %4654 = vst [vmem:[#allocation8 + $0xc8] sm:$0xff] %v4366
          %4655 = vst [vmem:[#allocation8 + $0xd0] sm:$0xff] %v4367
          %4656 = vst [vmem:[#allocation8 + $0xd8] sm:$0xff] %v4368
          %4657 = vst [vmem:[#allocation8 + $0xe0] sm:$0xff] %v4369
          %4658 = vst [vmem:[#allocation8 + $0xe8] sm:$0xff] %v4370
          %4659 = vst [vmem:[#allocation8 + $0xf0] sm:$0xff] %v4371
          %4660 = vst [vmem:[#allocation8 + $0xf8] sm:$0xff] %v4372
          %4661 = vst [vmem:[#allocation8 + $0x100] sm:$0xff] %v4373
          %4662 = vst [vmem:[#allocation8 + $0x108] sm:$0xff] %v4374
          %4663 = vst [vmem:[#allocation8 + $0x110] sm:$0xff] %v4375
          %4664 = vst [vmem:[#allocation8 + $0x118] sm:$0xff] %v4376
          %4665 = vst [vmem:[#allocation8 + $0x120] sm:$0xff] %v4377
          %4666 = vst [vmem:[#allocation8 + $0x128] sm:$0xff] %v4378
          %4667 = vst [vmem:[#allocation8 + $0x130] sm:$0xff] %v4379
          %4668 = vst [vmem:[#allocation8 + $0x138] sm:$0xff] %v4380
          %4669 = vst [vmem:[#allocation8 + $0x140] sm:$0xff] %v4381
          %4670 = vst [vmem:[#allocation8 + $0x148] sm:$0xff] %v4382
          %4671 = vst [vmem:[#allocation8 + $0x150] sm:$0xff] %v4383
          %4672 = vst [vmem:[#allocation8 + $0x158] sm:$0xff] %v4384
          %4673 = vst [vmem:[#allocation8 + $0x160] sm:$0xff] %v4385
          %4674 = vst [vmem:[#allocation8 + $0x168] sm:$0xff] %v4386
          %4675 = vst [vmem:[#allocation8 + $0x170] sm:$0xff] %v4387
          %4676 = vst [vmem:[#allocation8 + $0x178] sm:$0xff] %v4388
          %4677 = vst [vmem:[#allocation8 + $0x180] sm:$0xff] %v4389
          %4678 = vst [vmem:[#allocation8 + $0x188] sm:$0xff] %v4390
          %4679 = vst [vmem:[#allocation8 + $0x190] sm:$0xff] %v4391
          %4680 = vst [vmem:[#allocation8 + $0x198] sm:$0xff] %v4392
          %4681 = vst [vmem:[#allocation8 + $0x1a0] sm:$0xff] %v4393
          %4682 = vst [vmem:[#allocation8 + $0x1a8] sm:$0xff] %v4394
          %4683 = vst [vmem:[#allocation8 + $0x1b0] sm:$0xff] %v4395
          %4684 = vst [vmem:[#allocation8 + $0x1b8] sm:$0xff] %v4396
          %4685 = vst [vmem:[#allocation8 + $0x1c0] sm:$0xff] %v4397
          %4686 = vst [vmem:[#allocation8 + $0x1c8] sm:$0xff] %v4398
          %4687 = vst [vmem:[#allocation8 + $0x1d0] sm:$0xff] %v4399
          %4688 = vst [vmem:[#allocation8 + $0x1d8] sm:$0xff] %v4400
          %4689 = vst [vmem:[#allocation8 + $0x1e0] sm:$0xff] %v4401
          %4690 = vst [vmem:[#allocation8 + $0x1e8] sm:$0xff] %v4402
          %4691 = vst [vmem:[#allocation8 + $0x1f0] sm:$0xff] %v4403
          %4692 = vst [vmem:[#allocation8 + $0x1f8] sm:$0xff] %v4404
          %4693 = vst [vmem:[#allocation8 + $0x200] sm:$0xff] %v4405
          %4694 = vst [vmem:[#allocation8 + $0x208] sm:$0xff] %v4406
          %4695 = vst [vmem:[#allocation8 + $0x210] sm:$0xff] %v4407
          %4696 = vst [vmem:[#allocation8 + $0x218] sm:$0xff] %v4408
          %4697 = vst [vmem:[#allocation8 + $0x220] sm:$0xff] %v4409
          %4698 = vst [vmem:[#allocation8 + $0x228] sm:$0xff] %v4410
          %4699 = vst [vmem:[#allocation8 + $0x230] sm:$0xff] %v4411
          %4700 = vst [vmem:[#allocation8 + $0x238] sm:$0xff] %v4412
          %4701 = vst [vmem:[#allocation8 + $0x240] sm:$0xff] %v4413
          %4702 = vst [vmem:[#allocation8 + $0x248] sm:$0xff] %v4414
          %4703 = vst [vmem:[#allocation8 + $0x250] sm:$0xff] %v4415
          %4704 = vst [vmem:[#allocation8 + $0x258] sm:$0xff] %v4416
          %4705 = vst [vmem:[#allocation8 + $0x260] sm:$0xff] %v4417
          %4706 = vst [vmem:[#allocation8 + $0x268] sm:$0xff] %v4418
          %4707 = vst [vmem:[#allocation8 + $0x270] sm:$0xff] %v4419
          %4708 = vst [vmem:[#allocation8 + $0x278] sm:$0xff] %v4420
          %4709 = vst [vmem:[#allocation8 + $0x280] sm:$0xff] %v4421
          %4710 = vst [vmem:[#allocation8 + $0x288] sm:$0xff] %v4422
          %4711 = vst [vmem:[#allocation8 + $0x290] sm:$0xff] %v4423
          %4712 = vst [vmem:[#allocation8 + $0x298] sm:$0xff] %v4424
          %4713 = vst [vmem:[#allocation8 + $0x2a0] sm:$0xff] %v4425
          %4714 = vst [vmem:[#allocation8 + $0x2a8] sm:$0xff] %v4426
          %4715 = vst [vmem:[#allocation8 + $0x2b0] sm:$0xff] %v4427
          %4716 = vst [vmem:[#allocation8 + $0x2b8] sm:$0xff] %v4428
          %4717 = vst [vmem:[#allocation8 + $0x2c0] sm:$0xff] %v4429
          %4718 = vst [vmem:[#allocation8 + $0x2c8] sm:$0xff] %v4430
          %4719 = vst [vmem:[#allocation8 + $0x2d0] sm:$0xff] %v4431
          %4720 = vst [vmem:[#allocation8 + $0x2d8] sm:$0xff] %v4432
          %4721 = vst [vmem:[#allocation8 + $0x2e0] sm:$0xff] %v4433
          %4722 = vst [vmem:[#allocation8 + $0x2e8] sm:$0xff] %v4434
          %4723 = vst [vmem:[#allocation8 + $0x2f0] sm:$0xff] %v4435
          %4724 = vst [vmem:[#allocation8 + $0x2f8] sm:$0xff] %v4436
          %4725 = vst [vmem:[#allocation8 + $0x300] sm:$0xff] %v4437
          %4726 = vst [vmem:[#allocation8 + $0x308] sm:$0xff] %v4438
          %4727 = vst [vmem:[#allocation8 + $0x310] sm:$0xff] %v4439
          %4728 = vst [vmem:[#allocation8 + $0x318] sm:$0xff] %v4440
          %4729 = vst [vmem:[#allocation8 + $0x320] sm:$0xff] %v4441
          %4730 = vst [vmem:[#allocation8 + $0x328] sm:$0xff] %v4442
          %4731 = vst [vmem:[#allocation8 + $0x330] sm:$0xff] %v4443
          %4732 = vst [vmem:[#allocation8 + $0x338] sm:$0xff] %v4444
          %4733 = vst [vmem:[#allocation8 + $0x340] sm:$0xff] %v4445
          %4734 = vst [vmem:[#allocation8 + $0x348] sm:$0xff] %v4446
          %4735 = vst [vmem:[#allocation8 + $0x350] sm:$0xff] %v4447
          %4736 = vst [vmem:[#allocation8 + $0x358] sm:$0xff] %v4448
          %4737 = vst [vmem:[#allocation8 + $0x360] sm:$0xff] %v4449
          %4738 = vst [vmem:[#allocation8 + $0x368] sm:$0xff] %v4450
          %4739 = vst [vmem:[#allocation8 + $0x370] sm:$0xff] %v4451
          %4740 = vst [vmem:[#allocation8 + $0x378] sm:$0xff] %v4452
          %4741 = vst [vmem:[#allocation8 + $0x380] sm:$0xff] %v4453
          %4742 = vst [vmem:[#allocation8 + $0x388] sm:$0xff] %v4454
          %4743 = vst [vmem:[#allocation8 + $0x390] sm:$0xff] %v4455
          %4744 = vst [vmem:[#allocation8 + $0x398] sm:$0xff] %v4456
          %4745 = vst [vmem:[#allocation8 + $0x3a0] sm:$0xff] %v4457
          %4746 = vst [vmem:[#allocation8 + $0x3a8] sm:$0xff] %v4458
          %4747 = vst [vmem:[#allocation8 + $0x3b0] sm:$0xff] %v4459
          %4748 = vst [vmem:[#allocation8 + $0x3b8] sm:$0xff] %v4460
          %4749 = vst [vmem:[#allocation8 + $0x3c0] sm:$0xff] %v4461
          %4750 = vst [vmem:[#allocation8 + $0x3c8] sm:$0xff] %v4462
          %4751 = vst [vmem:[#allocation8 + $0x3d0] sm:$0xff] %v4463
          %4752 = vst [vmem:[#allocation8 + $0x3d8] sm:$0xff] %v4464
          %4753 = vst [vmem:[#allocation8 + $0x3e0] sm:$0xff] %v4465
          %4754 = vst [vmem:[#allocation8 + $0x3e8] sm:$0xff] %v4466
          %4755 = vst [vmem:[#allocation8 + $0x3f0] sm:$0xff] %v4467
          %4756 = vst [vmem:[#allocation8 + $0x3f8] sm:$0xff] %v4468
          %4757 = vst [vmem:[#allocation8 + $0x400] sm:$0xff] %v4469
          %4758 = vst [vmem:[#allocation8 + $0x408] sm:$0xff] %v4470
          %4759 = vst [vmem:[#allocation8 + $0x410] sm:$0xff] %v4471
          %4760 = vst [vmem:[#allocation8 + $0x418] sm:$0xff] %v4472
          %4761 = vst [vmem:[#allocation8 + $0x420] sm:$0xff] %v4473
          %4762 = vst [vmem:[#allocation8 + $0x428] sm:$0xff] %v4474
          %4763 = vst [vmem:[#allocation8 + $0x430] sm:$0xff] %v4475
          %4764 = vst [vmem:[#allocation8 + $0x438] sm:$0xff] %v4476
          %4765 = vst [vmem:[#allocation8 + $0x440] sm:$0xff] %v4477
          %4766 = vst [vmem:[#allocation8 + $0x448] sm:$0xff] %v4478
          %4767 = vst [vmem:[#allocation8 + $0x450] sm:$0xff] %v4479
          %4768 = vst [vmem:[#allocation8 + $0x458] sm:$0xff] %v4480
          %4769 = vst [vmem:[#allocation8 + $0x460] sm:$0xff] %v4481
          %4770 = vst [vmem:[#allocation8 + $0x468] sm:$0xff] %v4482
          %4771 = vst [vmem:[#allocation8 + $0x470] sm:$0xff] %v4483
          %4772 = vst [vmem:[#allocation8 + $0x478] sm:$0xff] %v4484
          %4773 = vst [vmem:[#allocation8 + $0x480] sm:$0xff] %v4485
          %4774 = vst [vmem:[#allocation8 + $0x488] sm:$0xff] %v4486
          %4775 = vst [vmem:[#allocation8 + $0x490] sm:$0xff] %v4487
          %4776 = vst [vmem:[#allocation8 + $0x498] sm:$0xff] %v4488
          %4777 = vst [vmem:[#allocation8 + $0x4a0] sm:$0xff] %v4489
          %4778 = vst [vmem:[#allocation8 + $0x4a8] sm:$0xff] %v4490
          %4779 = vst [vmem:[#allocation8 + $0x4b0] sm:$0xff] %v4491
          %4780 = vst [vmem:[#allocation8 + $0x4b8] sm:$0xff] %v4492
          %4781 = vst [vmem:[#allocation8 + $0x4c0] sm:$0xff] %v4493
          %4782 = vst [vmem:[#allocation8 + $0x4c8] sm:$0xff] %v4494
          %4783 = vst [vmem:[#allocation8 + $0x4d0] sm:$0xff] %v4495
          %4784 = vst [vmem:[#allocation8 + $0x4d8] sm:$0xff] %v4496
          %4785 = vst [vmem:[#allocation8 + $0x4e0] sm:$0xff] %v4497
          %4786 = vst [vmem:[#allocation8 + $0x4e8] sm:$0xff] %v4498
          %4787 = vst [vmem:[#allocation8 + $0x4f0] sm:$0xff] %v4499
          %4788 = vst [vmem:[#allocation8 + $0x4f8] sm:$0xff] %v4500
          %4789 = vst [vmem:[#allocation8 + $0x500] sm:$0xff] %v4501
          %4790 = vst [vmem:[#allocation8 + $0x508] sm:$0xff] %v4502
          %4791 = vst [vmem:[#allocation8 + $0x510] sm:$0xff] %v4503
          %4792 = vst [vmem:[#allocation8 + $0x518] sm:$0xff] %v4504
          %4793 = vst [vmem:[#allocation8 + $0x520] sm:$0xff] %v4505
          %4794 = vst [vmem:[#allocation8 + $0x528] sm:$0xff] %v4506
          %4795 = vst [vmem:[#allocation8 + $0x530] sm:$0xff] %v4507
          %4796 = vst [vmem:[#allocation8 + $0x538] sm:$0xff] %v4508
          %4797 = vst [vmem:[#allocation8 + $0x540] sm:$0xff] %v4509
          %4798 = vst [vmem:[#allocation8 + $0x548] sm:$0xff] %v4510
          %4799 = vst [vmem:[#allocation8 + $0x550] sm:$0xff] %v4511
          %4800 = vst [vmem:[#allocation8 + $0x558] sm:$0xff] %v4512
          %4801 = vst [vmem:[#allocation8 + $0x560] sm:$0xff] %v4513
          %4802 = vst [vmem:[#allocation8 + $0x568] sm:$0xff] %v4514
          %4803 = vst [vmem:[#allocation8 + $0x570] sm:$0xff] %v4515
          %4804 = vst [vmem:[#allocation8 + $0x578] sm:$0xff] %v4516
          %4805 = vst [vmem:[#allocation8 + $0x580] sm:$0xff] %v4517
          %4806 = vst [vmem:[#allocation8 + $0x588] sm:$0xff] %v4518
          %4807 = vst [vmem:[#allocation8 + $0x590] sm:$0xff] %v4519
          %4808 = vst [vmem:[#allocation8 + $0x598] sm:$0xff] %v4520
          %4809 = vst [vmem:[#allocation8 + $0x5a0] sm:$0xff] %v4521
          %4810 = vst [vmem:[#allocation8 + $0x5a8] sm:$0xff] %v4522
          %4811 = vst [vmem:[#allocation8 + $0x5b0] sm:$0xff] %v4523
          %4812 = vst [vmem:[#allocation8 + $0x5b8] sm:$0xff] %v4524
          %4813 = vst [vmem:[#allocation8 + $0x5c0] sm:$0xff] %v4525
          %4814 = vst [vmem:[#allocation8 + $0x5c8] sm:$0xff] %v4526
          %4815 = vst [vmem:[#allocation8 + $0x5d0] sm:$0xff] %v4527
          %4816 = vst [vmem:[#allocation8 + $0x5d8] sm:$0xff] %v4528
          %4817 = vst [vmem:[#allocation8 + $0x5e0] sm:$0xff] %v4529
          %4818 = vst [vmem:[#allocation8 + $0x5e8] sm:$0xff] %v4530
          %4819 = vst [vmem:[#allocation8 + $0x5f0] sm:$0xff] %v4531
          %4820 = vst [vmem:[#allocation8 + $0x5f8] sm:$0xff] %v4532
          %4821 = vst [vmem:[#allocation8 + $0x600] sm:$0xff] %v4533
          %4822 = vst [vmem:[#allocation8 + $0x608] sm:$0xff] %v4534
          %4823 = vst [vmem:[#allocation8 + $0x610] sm:$0xff] %v4535
          %4824 = vst [vmem:[#allocation8 + $0x618] sm:$0xff] %v4536
          %4825 = vst [vmem:[#allocation8 + $0x620] sm:$0xff] %v4537
          %4826 = vst [vmem:[#allocation8 + $0x628] sm:$0xff] %v4538
          %4827 = vst [vmem:[#allocation8 + $0x630] sm:$0xff] %v4539
          %4828 = vst [vmem:[#allocation8 + $0x638] sm:$0xff] %v4540
          %4829 = vst [vmem:[#allocation8 + $0x640] sm:$0xff] %v4541
          %4830 = vst [vmem:[#allocation8 + $0x648] sm:$0xff] %v4542
          %4831 = vst [vmem:[#allocation8 + $0x650] sm:$0xff] %v4543
          %4832 = vst [vmem:[#allocation8 + $0x658] sm:$0xff] %v4544
          %4833 = vst [vmem:[#allocation8 + $0x660] sm:$0xff] %v4545
          %4834 = vst [vmem:[#allocation8 + $0x668] sm:$0xff] %v4546
          %4835 = vst [vmem:[#allocation8 + $0x670] sm:$0xff] %v4547
          %4836 = vst [vmem:[#allocation8 + $0x678] sm:$0xff] %v4548
          %4837 = vst [vmem:[#allocation8 + $0x680] sm:$0xff] %v4549
          %4838 = vst [vmem:[#allocation8 + $0x688] sm:$0xff] %v4550
          %4839 = vst [vmem:[#allocation8 + $0x690] sm:$0xff] %v4551
          %4840 = vst [vmem:[#allocation8 + $0x698] sm:$0xff] %v4552
          %4841 = vst [vmem:[#allocation8 + $0x6a0] sm:$0xff] %v4553
          %4842 = vst [vmem:[#allocation8 + $0x6a8] sm:$0xff] %v4554
          %4843 = vst [vmem:[#allocation8 + $0x6b0] sm:$0xff] %v4555
          %4844 = vst [vmem:[#allocation8 + $0x6b8] sm:$0xff] %v4556
          %4845 = vst [vmem:[#allocation8 + $0x6c0] sm:$0xff] %v4557
          %4846 = vst [vmem:[#allocation8 + $0x6c8] sm:$0xff] %v4558
          %4847 = vst [vmem:[#allocation8 + $0x6d0] sm:$0xff] %v4559
          %4848 = vst [vmem:[#allocation8 + $0x6d8] sm:$0xff] %v4560
          %4849 = vst [vmem:[#allocation8 + $0x6e0] sm:$0xff] %v4561
          %4850 = vst [vmem:[#allocation8 + $0x6e8] sm:$0xff] %v4562
          %4851 = vst [vmem:[#allocation8 + $0x6f0] sm:$0xff] %v4563
          %4852 = vst [vmem:[#allocation8 + $0x6f8] sm:$0xff] %v4564
          %4853 = vst [vmem:[#allocation8 + $0x700] sm:$0xff] %v4565
          %4854 = vst [vmem:[#allocation8 + $0x708] sm:$0xff] %v4566
          %4855 = vst [vmem:[#allocation8 + $0x710] sm:$0xff] %v4567
          %4856 = vst [vmem:[#allocation8 + $0x718] sm:$0xff] %v4568
          %4857 = vst [vmem:[#allocation8 + $0x720] sm:$0xff] %v4569
          %4858 = vst [vmem:[#allocation8 + $0x728] sm:$0xff] %v4570
          %4859 = vst [vmem:[#allocation8 + $0x730] sm:$0xff] %v4571
          %4860 = vst [vmem:[#allocation8 + $0x738] sm:$0xff] %v4572
          %4861 = vst [vmem:[#allocation8 + $0x740] sm:$0xff] %v4573
          %4862 = vst [vmem:[#allocation8 + $0x748] sm:$0xff] %v4574
          %4863 = vst [vmem:[#allocation8 + $0x750] sm:$0xff] %v4575
          %4864 = vst [vmem:[#allocation8 + $0x758] sm:$0xff] %v4576
          %4865 = vst [vmem:[#allocation8 + $0x760] sm:$0xff] %v4577
          %4866 = vst [vmem:[#allocation8 + $0x768] sm:$0xff] %v4578
          %4867 = vst [vmem:[#allocation8 + $0x770] sm:$0xff] %v4579
          %4868 = vst [vmem:[#allocation8 + $0x778] sm:$0xff] %v4580
          %4869 = vst [vmem:[#allocation8 + $0x780] sm:$0xff] %v4581
          %4870 = vst [vmem:[#allocation8 + $0x788] sm:$0xff] %v4582
          %4871 = vst [vmem:[#allocation8 + $0x790] sm:$0xff] %v4583
          %4872 = vst [vmem:[#allocation8 + $0x798] sm:$0xff] %v4584
          %4873 = vst [vmem:[#allocation8 + $0x7a0] sm:$0xff] %v4585
          %4874 = vst [vmem:[#allocation8 + $0x7a8] sm:$0xff] %v4586
          %4875 = vst [vmem:[#allocation8 + $0x7b0] sm:$0xff] %v4587
          %4876 = vst [vmem:[#allocation8 + $0x7b8] sm:$0xff] %v4588
          %4877 = vst [vmem:[#allocation8 + $0x7c0] sm:$0xff] %v4589
          %4878 = vst [vmem:[#allocation8 + $0x7c8] sm:$0xff] %v4590
          %4879 = vst [vmem:[#allocation8 + $0x7d0] sm:$0xff] %v4591
          %4880 = vst [vmem:[#allocation8 + $0x7d8] sm:$0xff] %v4592
          %4881 = vst [vmem:[#allocation8 + $0x7e0] sm:$0xff] %v4593
          %4882 = vst [vmem:[#allocation8 + $0x7e8] sm:$0xff] %v4594
          %4883 = vst [vmem:[#allocation8 + $0x7f0] sm:$0xff] %v4595
          %4884 = vst [vmem:[#allocation8 + $0x7f8] sm:$0xff] %v4596
          %4885 = vst [vmem:[#allocation8 + $0x800] sm:$0xff] %v4597
          %4886 = vst [vmem:[#allocation8 + $0x808] sm:$0xff] %v4598
          %4887 = vst [vmem:[#allocation8 + $0x810] sm:$0xff] %v4599
          %4888 = vst [vmem:[#allocation8 + $0x818] sm:$0xff] %v4600
          %4889 = vst [vmem:[#allocation8 + $0x820] sm:$0xff] %v4601
          %4890 = vst [vmem:[#allocation8 + $0x828] sm:$0xff] %v4602
          %4891 = vst [vmem:[#allocation8 + $0x830] sm:$0xff] %v4603
          %4892 = vst [vmem:[#allocation8 + $0x838] sm:$0xff] %v4604
          %4893 = vst [vmem:[#allocation8 + $0x840] sm:$0xff] %v4605
          %4894 = vst [vmem:[#allocation8 + $0x848] sm:$0xff] %v4606
          %4895 = vst [vmem:[#allocation8 + $0x850] sm:$0xff] %v4607
          %4896 = vst [vmem:[#allocation8 + $0x858] sm:$0xff] %v4608
          %4897 = vst [vmem:[#allocation8 + $0x860] sm:$0xff] %v4609
          %4898 = vst [vmem:[#allocation8 + $0x868] sm:$0xff] %v4610
          %4899 = vst [vmem:[#allocation8 + $0x870] sm:$0xff] %v4611
          %4900 = vst [vmem:[#allocation8 + $0x878] sm:$0xff] %v4612
          %4901 = vst [vmem:[#allocation8 + $0x880] sm:$0xff] %v4613
          %4902 = vst [vmem:[#allocation8 + $0x888] sm:$0xff] %v4614
          %4903 = vst [vmem:[#allocation8 + $0x890] sm:$0xff] %v4615
          %4904 = vst [vmem:[#allocation8 + $0x898] sm:$0xff] %v4616
          %4905 = vst [vmem:[#allocation8 + $0x8a0] sm:$0xff] %v4617
          %4906 = vst [vmem:[#allocation8 + $0x8a8] sm:$0xff] %v4618
          %4907 = vst [vmem:[#allocation8 + $0x8b0] sm:$0xff] %v4619
          %4908 = vst [vmem:[#allocation8 + $0x8b8] sm:$0xff] %v4620
          %4909 = vst [vmem:[#allocation8 + $0x8c0] sm:$0xff] %v4621
          %4910 = vst [vmem:[#allocation8 + $0x8c8] sm:$0xff] %v4622
          %4911 = vst [vmem:[#allocation8 + $0x8d0] sm:$0xff] %v4623
          %4912 = vst [vmem:[#allocation8 + $0x8d8] sm:$0xff] %v4624
          %4913 = vst [vmem:[#allocation8 + $0x8e0] sm:$0xff] %v4625
          %4914 = vst [vmem:[#allocation8 + $0x8e8] sm:$0xff] %v4626
          %4915 = vst [vmem:[#allocation8 + $0x8f0] sm:$0xff] %v4627
          %4916 = vst [vmem:[#allocation8 + $0x8f8] sm:$0xff] %v4628
        $region48: #{tpu_custom_call.1} parent=31 // pred_fallthru
          _
        %p4917 = scmp.ne.s32.totalorder %s26, 0
        // Predicated region
        $region49: #{tpu_custom_call.1} parent=31 // pred_check
          %p4918 = pneg %p4917
        $region50: #{tpu_custom_call.1} parent=31 // pred_check_branch
          %4920 = sbr.rel (%p4918) target = $region52
        $region51: #{tpu_custom_call.1} parent=31 // pred_region
          %v4921 = vld [vmem:[#allocation8] sm:$0xff]
          %v4922 = vld [vmem:[#allocation8 + $0x8] sm:$0xff]
          %v4923 = vld [vmem:[#allocation8 + $0x10] sm:$0xff]
          %v4924 = vld [vmem:[#allocation8 + $0x18] sm:$0xff]
          %v4925 = vld [vmem:[#allocation8 + $0x20] sm:$0xff]
          %v4926 = vld [vmem:[#allocation8 + $0x28] sm:$0xff]
          %v4927 = vld [vmem:[#allocation8 + $0x30] sm:$0xff]
          %v4928 = vld [vmem:[#allocation8 + $0x38] sm:$0xff]
          %v4929 = vld [vmem:[#allocation8 + $0x40] sm:$0xff]
          %v4930 = vld [vmem:[#allocation8 + $0x48] sm:$0xff]
          %v4931 = vld [vmem:[#allocation8 + $0x50] sm:$0xff]
          %v4932 = vld [vmem:[#allocation8 + $0x58] sm:$0xff]
          %v4933 = vld [vmem:[#allocation8 + $0x60] sm:$0xff]
          %v4934 = vld [vmem:[#allocation8 + $0x68] sm:$0xff]
          %v4935 = vld [vmem:[#allocation8 + $0x70] sm:$0xff]
          %v4936 = vld [vmem:[#allocation8 + $0x78] sm:$0xff]
          %v4937 = vld [vmem:[#allocation8 + $0x80] sm:$0xff]
          %v4938 = vld [vmem:[#allocation8 + $0x88] sm:$0xff]
          %v4939 = vld [vmem:[#allocation8 + $0x90] sm:$0xff]
          %v4940 = vld [vmem:[#allocation8 + $0x98] sm:$0xff]
          %v4941 = vld [vmem:[#allocation8 + $0xa0] sm:$0xff]
          %v4942 = vld [vmem:[#allocation8 + $0xa8] sm:$0xff]
          %v4943 = vld [vmem:[#allocation8 + $0xb0] sm:$0xff]
          %v4944 = vld [vmem:[#allocation8 + $0xb8] sm:$0xff]
          %v4945 = vld [vmem:[#allocation8 + $0xc0] sm:$0xff]
          %v4946 = vld [vmem:[#allocation8 + $0xc8] sm:$0xff]
          %v4947 = vld [vmem:[#allocation8 + $0xd0] sm:$0xff]
          %v4948 = vld [vmem:[#allocation8 + $0xd8] sm:$0xff]
          %v4949 = vld [vmem:[#allocation8 + $0xe0] sm:$0xff]
          %v4950 = vld [vmem:[#allocation8 + $0xe8] sm:$0xff]
          %v4951 = vld [vmem:[#allocation8 + $0xf0] sm:$0xff]
          %v4952 = vld [vmem:[#allocation8 + $0xf8] sm:$0xff]
          %v4953 = vld [vmem:[#allocation8 + $0x100] sm:$0xff]
          %v4954 = vld [vmem:[#allocation8 + $0x108] sm:$0xff]
          %v4955 = vld [vmem:[#allocation8 + $0x110] sm:$0xff]
          %v4956 = vld [vmem:[#allocation8 + $0x118] sm:$0xff]
          %v4957 = vld [vmem:[#allocation8 + $0x120] sm:$0xff]
          %v4958 = vld [vmem:[#allocation8 + $0x128] sm:$0xff]
          %v4959 = vld [vmem:[#allocation8 + $0x130] sm:$0xff]
          %v4960 = vld [vmem:[#allocation8 + $0x138] sm:$0xff]
          %v4961 = vld [vmem:[#allocation8 + $0x140] sm:$0xff]
          %v4962 = vld [vmem:[#allocation8 + $0x148] sm:$0xff]
          %v4963 = vld [vmem:[#allocation8 + $0x150] sm:$0xff]
          %v4964 = vld [vmem:[#allocation8 + $0x158] sm:$0xff]
          %v4965 = vld [vmem:[#allocation8 + $0x160] sm:$0xff]
          %v4966 = vld [vmem:[#allocation8 + $0x168] sm:$0xff]
          %v4967 = vld [vmem:[#allocation8 + $0x170] sm:$0xff]
          %v4968 = vld [vmem:[#allocation8 + $0x178] sm:$0xff]
          %v4969 = vld [vmem:[#allocation8 + $0x180] sm:$0xff]
          %v4970 = vld [vmem:[#allocation8 + $0x188] sm:$0xff]
          %v4971 = vld [vmem:[#allocation8 + $0x190] sm:$0xff]
          %v4972 = vld [vmem:[#allocation8 + $0x198] sm:$0xff]
          %v4973 = vld [vmem:[#allocation8 + $0x1a0] sm:$0xff]
          %v4974 = vld [vmem:[#allocation8 + $0x1a8] sm:$0xff]
          %v4975 = vld [vmem:[#allocation8 + $0x1b0] sm:$0xff]
          %v4976 = vld [vmem:[#allocation8 + $0x1b8] sm:$0xff]
          %v4977 = vld [vmem:[#allocation8 + $0x1c0] sm:$0xff]
          %v4978 = vld [vmem:[#allocation8 + $0x1c8] sm:$0xff]
          %v4979 = vld [vmem:[#allocation8 + $0x1d0] sm:$0xff]
          %v4980 = vld [vmem:[#allocation8 + $0x1d8] sm:$0xff]
          %v4981 = vld [vmem:[#allocation8 + $0x1e0] sm:$0xff]
          %v4982 = vld [vmem:[#allocation8 + $0x1e8] sm:$0xff]
          %v4983 = vld [vmem:[#allocation8 + $0x1f0] sm:$0xff]
          %v4984 = vld [vmem:[#allocation8 + $0x1f8] sm:$0xff]
          %v4985 = vld [vmem:[#allocation8 + $0x200] sm:$0xff]
          %v4986 = vld [vmem:[#allocation8 + $0x208] sm:$0xff]
          %v4987 = vld [vmem:[#allocation8 + $0x210] sm:$0xff]
          %v4988 = vld [vmem:[#allocation8 + $0x218] sm:$0xff]
          %v4989 = vld [vmem:[#allocation8 + $0x220] sm:$0xff]
          %v4990 = vld [vmem:[#allocation8 + $0x228] sm:$0xff]
          %v4991 = vld [vmem:[#allocation8 + $0x230] sm:$0xff]
          %v4992 = vld [vmem:[#allocation8 + $0x238] sm:$0xff]
          %v4993 = vld [vmem:[#allocation8 + $0x240] sm:$0xff]
          %v4994 = vld [vmem:[#allocation8 + $0x248] sm:$0xff]
          %v4995 = vld [vmem:[#allocation8 + $0x250] sm:$0xff]
          %v4996 = vld [vmem:[#allocation8 + $0x258] sm:$0xff]
          %v4997 = vld [vmem:[#allocation8 + $0x260] sm:$0xff]
          %v4998 = vld [vmem:[#allocation8 + $0x268] sm:$0xff]
          %v4999 = vld [vmem:[#allocation8 + $0x270] sm:$0xff]
          %v5000 = vld [vmem:[#allocation8 + $0x278] sm:$0xff]
          %v5001 = vld [vmem:[#allocation8 + $0x280] sm:$0xff]
          %v5002 = vld [vmem:[#allocation8 + $0x288] sm:$0xff]
          %v5003 = vld [vmem:[#allocation8 + $0x290] sm:$0xff]
          %v5004 = vld [vmem:[#allocation8 + $0x298] sm:$0xff]
          %v5005 = vld [vmem:[#allocation8 + $0x2a0] sm:$0xff]
          %v5006 = vld [vmem:[#allocation8 + $0x2a8] sm:$0xff]
          %v5007 = vld [vmem:[#allocation8 + $0x2b0] sm:$0xff]
          %v5008 = vld [vmem:[#allocation8 + $0x2b8] sm:$0xff]
          %v5009 = vld [vmem:[#allocation8 + $0x2c0] sm:$0xff]
          %v5010 = vld [vmem:[#allocation8 + $0x2c8] sm:$0xff]
          %v5011 = vld [vmem:[#allocation8 + $0x2d0] sm:$0xff]
          %v5012 = vld [vmem:[#allocation8 + $0x2d8] sm:$0xff]
          %v5013 = vld [vmem:[#allocation8 + $0x2e0] sm:$0xff]
          %v5014 = vld [vmem:[#allocation8 + $0x2e8] sm:$0xff]
          %v5015 = vld [vmem:[#allocation8 + $0x2f0] sm:$0xff]
          %v5016 = vld [vmem:[#allocation8 + $0x2f8] sm:$0xff]
          %v5017 = vld [vmem:[#allocation8 + $0x300] sm:$0xff]
          %v5018 = vld [vmem:[#allocation8 + $0x308] sm:$0xff]
          %v5019 = vld [vmem:[#allocation8 + $0x310] sm:$0xff]
          %v5020 = vld [vmem:[#allocation8 + $0x318] sm:$0xff]
          %v5021 = vld [vmem:[#allocation8 + $0x320] sm:$0xff]
          %v5022 = vld [vmem:[#allocation8 + $0x328] sm:$0xff]
          %v5023 = vld [vmem:[#allocation8 + $0x330] sm:$0xff]
          %v5024 = vld [vmem:[#allocation8 + $0x338] sm:$0xff]
          %v5025 = vld [vmem:[#allocation8 + $0x340] sm:$0xff]
          %v5026 = vld [vmem:[#allocation8 + $0x348] sm:$0xff]
          %v5027 = vld [vmem:[#allocation8 + $0x350] sm:$0xff]
          %v5028 = vld [vmem:[#allocation8 + $0x358] sm:$0xff]
          %v5029 = vld [vmem:[#allocation8 + $0x360] sm:$0xff]
          %v5030 = vld [vmem:[#allocation8 + $0x368] sm:$0xff]
          %v5031 = vld [vmem:[#allocation8 + $0x370] sm:$0xff]
          %v5032 = vld [vmem:[#allocation8 + $0x378] sm:$0xff]
          %v5033 = vld [vmem:[#allocation8 + $0x380] sm:$0xff]
          %v5034 = vld [vmem:[#allocation8 + $0x388] sm:$0xff]
          %v5035 = vld [vmem:[#allocation8 + $0x390] sm:$0xff]
          %v5036 = vld [vmem:[#allocation8 + $0x398] sm:$0xff]
          %v5037 = vld [vmem:[#allocation8 + $0x3a0] sm:$0xff]
          %v5038 = vld [vmem:[#allocation8 + $0x3a8] sm:$0xff]
          %v5039 = vld [vmem:[#allocation8 + $0x3b0] sm:$0xff]
          %v5040 = vld [vmem:[#allocation8 + $0x3b8] sm:$0xff]
          %v5041 = vld [vmem:[#allocation8 + $0x3c0] sm:$0xff]
          %v5042 = vld [vmem:[#allocation8 + $0x3c8] sm:$0xff]
          %v5043 = vld [vmem:[#allocation8 + $0x3d0] sm:$0xff]
          %v5044 = vld [vmem:[#allocation8 + $0x3d8] sm:$0xff]
          %v5045 = vld [vmem:[#allocation8 + $0x3e0] sm:$0xff]
          %v5046 = vld [vmem:[#allocation8 + $0x3e8] sm:$0xff]
          %v5047 = vld [vmem:[#allocation8 + $0x3f0] sm:$0xff]
          %v5048 = vld [vmem:[#allocation8 + $0x3f8] sm:$0xff]
          %v5049 = vld [vmem:[#allocation8 + $0x400] sm:$0xff]
          %v5050 = vld [vmem:[#allocation8 + $0x408] sm:$0xff]
          %v5051 = vld [vmem:[#allocation8 + $0x410] sm:$0xff]
          %v5052 = vld [vmem:[#allocation8 + $0x418] sm:$0xff]
          %v5053 = vld [vmem:[#allocation8 + $0x420] sm:$0xff]
          %v5054 = vld [vmem:[#allocation8 + $0x428] sm:$0xff]
          %v5055 = vld [vmem:[#allocation8 + $0x430] sm:$0xff]
          %v5056 = vld [vmem:[#allocation8 + $0x438] sm:$0xff]
          %v5057 = vld [vmem:[#allocation8 + $0x440] sm:$0xff]
          %v5058 = vld [vmem:[#allocation8 + $0x448] sm:$0xff]
          %v5059 = vld [vmem:[#allocation8 + $0x450] sm:$0xff]
          %v5060 = vld [vmem:[#allocation8 + $0x458] sm:$0xff]
          %v5061 = vld [vmem:[#allocation8 + $0x460] sm:$0xff]
          %v5062 = vld [vmem:[#allocation8 + $0x468] sm:$0xff]
          %v5063 = vld [vmem:[#allocation8 + $0x470] sm:$0xff]
          %v5064 = vld [vmem:[#allocation8 + $0x478] sm:$0xff]
          %v5065 = vld [vmem:[#allocation8 + $0x480] sm:$0xff]
          %v5066 = vld [vmem:[#allocation8 + $0x488] sm:$0xff]
          %v5067 = vld [vmem:[#allocation8 + $0x490] sm:$0xff]
          %v5068 = vld [vmem:[#allocation8 + $0x498] sm:$0xff]
          %v5069 = vld [vmem:[#allocation8 + $0x4a0] sm:$0xff]
          %v5070 = vld [vmem:[#allocation8 + $0x4a8] sm:$0xff]
          %v5071 = vld [vmem:[#allocation8 + $0x4b0] sm:$0xff]
          %v5072 = vld [vmem:[#allocation8 + $0x4b8] sm:$0xff]
          %v5073 = vld [vmem:[#allocation8 + $0x4c0] sm:$0xff]
          %v5074 = vld [vmem:[#allocation8 + $0x4c8] sm:$0xff]
          %v5075 = vld [vmem:[#allocation8 + $0x4d0] sm:$0xff]
          %v5076 = vld [vmem:[#allocation8 + $0x4d8] sm:$0xff]
          %v5077 = vld [vmem:[#allocation8 + $0x4e0] sm:$0xff]
          %v5078 = vld [vmem:[#allocation8 + $0x4e8] sm:$0xff]
          %v5079 = vld [vmem:[#allocation8 + $0x4f0] sm:$0xff]
          %v5080 = vld [vmem:[#allocation8 + $0x4f8] sm:$0xff]
          %v5081 = vld [vmem:[#allocation8 + $0x500] sm:$0xff]
          %v5082 = vld [vmem:[#allocation8 + $0x508] sm:$0xff]
          %v5083 = vld [vmem:[#allocation8 + $0x510] sm:$0xff]
          %v5084 = vld [vmem:[#allocation8 + $0x518] sm:$0xff]
          %v5085 = vld [vmem:[#allocation8 + $0x520] sm:$0xff]
          %v5086 = vld [vmem:[#allocation8 + $0x528] sm:$0xff]
          %v5087 = vld [vmem:[#allocation8 + $0x530] sm:$0xff]
          %v5088 = vld [vmem:[#allocation8 + $0x538] sm:$0xff]
          %v5089 = vld [vmem:[#allocation8 + $0x540] sm:$0xff]
          %v5090 = vld [vmem:[#allocation8 + $0x548] sm:$0xff]
          %v5091 = vld [vmem:[#allocation8 + $0x550] sm:$0xff]
          %v5092 = vld [vmem:[#allocation8 + $0x558] sm:$0xff]
          %v5093 = vld [vmem:[#allocation8 + $0x560] sm:$0xff]
          %v5094 = vld [vmem:[#allocation8 + $0x568] sm:$0xff]
          %v5095 = vld [vmem:[#allocation8 + $0x570] sm:$0xff]
          %v5096 = vld [vmem:[#allocation8 + $0x578] sm:$0xff]
          %v5097 = vld [vmem:[#allocation8 + $0x580] sm:$0xff]
          %v5098 = vld [vmem:[#allocation8 + $0x588] sm:$0xff]
          %v5099 = vld [vmem:[#allocation8 + $0x590] sm:$0xff]
          %v5100 = vld [vmem:[#allocation8 + $0x598] sm:$0xff]
          %v5101 = vld [vmem:[#allocation8 + $0x5a0] sm:$0xff]
          %v5102 = vld [vmem:[#allocation8 + $0x5a8] sm:$0xff]
          %v5103 = vld [vmem:[#allocation8 + $0x5b0] sm:$0xff]
          %v5104 = vld [vmem:[#allocation8 + $0x5b8] sm:$0xff]
          %v5105 = vld [vmem:[#allocation8 + $0x5c0] sm:$0xff]
          %v5106 = vld [vmem:[#allocation8 + $0x5c8] sm:$0xff]
          %v5107 = vld [vmem:[#allocation8 + $0x5d0] sm:$0xff]
          %v5108 = vld [vmem:[#allocation8 + $0x5d8] sm:$0xff]
          %v5109 = vld [vmem:[#allocation8 + $0x5e0] sm:$0xff]
          %v5110 = vld [vmem:[#allocation8 + $0x5e8] sm:$0xff]
          %v5111 = vld [vmem:[#allocation8 + $0x5f0] sm:$0xff]
          %v5112 = vld [vmem:[#allocation8 + $0x5f8] sm:$0xff]
          %v5113 = vld [vmem:[#allocation8 + $0x600] sm:$0xff]
          %v5114 = vld [vmem:[#allocation8 + $0x608] sm:$0xff]
          %v5115 = vld [vmem:[#allocation8 + $0x610] sm:$0xff]
          %v5116 = vld [vmem:[#allocation8 + $0x618] sm:$0xff]
          %v5117 = vld [vmem:[#allocation8 + $0x620] sm:$0xff]
          %v5118 = vld [vmem:[#allocation8 + $0x628] sm:$0xff]
          %v5119 = vld [vmem:[#allocation8 + $0x630] sm:$0xff]
          %v5120 = vld [vmem:[#allocation8 + $0x638] sm:$0xff]
          %v5121 = vld [vmem:[#allocation8 + $0x640] sm:$0xff]
          %v5122 = vld [vmem:[#allocation8 + $0x648] sm:$0xff]
          %v5123 = vld [vmem:[#allocation8 + $0x650] sm:$0xff]
          %v5124 = vld [vmem:[#allocation8 + $0x658] sm:$0xff]
          %v5125 = vld [vmem:[#allocation8 + $0x660] sm:$0xff]
          %v5126 = vld [vmem:[#allocation8 + $0x668] sm:$0xff]
          %v5127 = vld [vmem:[#allocation8 + $0x670] sm:$0xff]
          %v5128 = vld [vmem:[#allocation8 + $0x678] sm:$0xff]
          %v5129 = vld [vmem:[#allocation8 + $0x680] sm:$0xff]
          %v5130 = vld [vmem:[#allocation8 + $0x688] sm:$0xff]
          %v5131 = vld [vmem:[#allocation8 + $0x690] sm:$0xff]
          %v5132 = vld [vmem:[#allocation8 + $0x698] sm:$0xff]
          %v5133 = vld [vmem:[#allocation8 + $0x6a0] sm:$0xff]
          %v5134 = vld [vmem:[#allocation8 + $0x6a8] sm:$0xff]
          %v5135 = vld [vmem:[#allocation8 + $0x6b0] sm:$0xff]
          %v5136 = vld [vmem:[#allocation8 + $0x6b8] sm:$0xff]
          %v5137 = vld [vmem:[#allocation8 + $0x6c0] sm:$0xff]
          %v5138 = vld [vmem:[#allocation8 + $0x6c8] sm:$0xff]
          %v5139 = vld [vmem:[#allocation8 + $0x6d0] sm:$0xff]
          %v5140 = vld [vmem:[#allocation8 + $0x6d8] sm:$0xff]
          %v5141 = vld [vmem:[#allocation8 + $0x6e0] sm:$0xff]
          %v5142 = vld [vmem:[#allocation8 + $0x6e8] sm:$0xff]
          %v5143 = vld [vmem:[#allocation8 + $0x6f0] sm:$0xff]
          %v5144 = vld [vmem:[#allocation8 + $0x6f8] sm:$0xff]
          %v5145 = vld [vmem:[#allocation8 + $0x700] sm:$0xff]
          %v5146 = vld [vmem:[#allocation8 + $0x708] sm:$0xff]
          %v5147 = vld [vmem:[#allocation8 + $0x710] sm:$0xff]
          %v5148 = vld [vmem:[#allocation8 + $0x718] sm:$0xff]
          %v5149 = vld [vmem:[#allocation8 + $0x720] sm:$0xff]
          %v5150 = vld [vmem:[#allocation8 + $0x728] sm:$0xff]
          %v5151 = vld [vmem:[#allocation8 + $0x730] sm:$0xff]
          %v5152 = vld [vmem:[#allocation8 + $0x738] sm:$0xff]
          %v5153 = vld [vmem:[#allocation8 + $0x740] sm:$0xff]
          %v5154 = vld [vmem:[#allocation8 + $0x748] sm:$0xff]
          %v5155 = vld [vmem:[#allocation8 + $0x750] sm:$0xff]
          %v5156 = vld [vmem:[#allocation8 + $0x758] sm:$0xff]
          %v5157 = vld [vmem:[#allocation8 + $0x760] sm:$0xff]
          %v5158 = vld [vmem:[#allocation8 + $0x768] sm:$0xff]
          %v5159 = vld [vmem:[#allocation8 + $0x770] sm:$0xff]
          %v5160 = vld [vmem:[#allocation8 + $0x778] sm:$0xff]
          %v5161 = vld [vmem:[#allocation8 + $0x780] sm:$0xff]
          %v5162 = vld [vmem:[#allocation8 + $0x788] sm:$0xff]
          %v5163 = vld [vmem:[#allocation8 + $0x790] sm:$0xff]
          %v5164 = vld [vmem:[#allocation8 + $0x798] sm:$0xff]
          %v5165 = vld [vmem:[#allocation8 + $0x7a0] sm:$0xff]
          %v5166 = vld [vmem:[#allocation8 + $0x7a8] sm:$0xff]
          %v5167 = vld [vmem:[#allocation8 + $0x7b0] sm:$0xff]
          %v5168 = vld [vmem:[#allocation8 + $0x7b8] sm:$0xff]
          %v5169 = vld [vmem:[#allocation8 + $0x7c0] sm:$0xff]
          %v5170 = vld [vmem:[#allocation8 + $0x7c8] sm:$0xff]
          %v5171 = vld [vmem:[#allocation8 + $0x7d0] sm:$0xff]
          %v5172 = vld [vmem:[#allocation8 + $0x7d8] sm:$0xff]
          %v5173 = vld [vmem:[#allocation8 + $0x7e0] sm:$0xff]
          %v5174 = vld [vmem:[#allocation8 + $0x7e8] sm:$0xff]
          %v5175 = vld [vmem:[#allocation8 + $0x7f0] sm:$0xff]
          %v5176 = vld [vmem:[#allocation8 + $0x7f8] sm:$0xff]
          %v5177 = vld [vmem:[#allocation8 + $0x800] sm:$0xff]
          %v5178 = vld [vmem:[#allocation8 + $0x808] sm:$0xff]
          %v5179 = vld [vmem:[#allocation8 + $0x810] sm:$0xff]
          %v5180 = vld [vmem:[#allocation8 + $0x818] sm:$0xff]
          %v5181 = vld [vmem:[#allocation8 + $0x820] sm:$0xff]
          %v5182 = vld [vmem:[#allocation8 + $0x828] sm:$0xff]
          %v5183 = vld [vmem:[#allocation8 + $0x830] sm:$0xff]
          %v5184 = vld [vmem:[#allocation8 + $0x838] sm:$0xff]
          %v5185 = vld [vmem:[#allocation8 + $0x840] sm:$0xff]
          %v5186 = vld [vmem:[#allocation8 + $0x848] sm:$0xff]
          %v5187 = vld [vmem:[#allocation8 + $0x850] sm:$0xff]
          %v5188 = vld [vmem:[#allocation8 + $0x858] sm:$0xff]
          %v5189 = vld [vmem:[#allocation8 + $0x860] sm:$0xff]
          %v5190 = vld [vmem:[#allocation8 + $0x868] sm:$0xff]
          %v5191 = vld [vmem:[#allocation8 + $0x870] sm:$0xff]
          %v5192 = vld [vmem:[#allocation8 + $0x878] sm:$0xff]
          %v5193 = vld [vmem:[#allocation8 + $0x880] sm:$0xff]
          %v5194 = vld [vmem:[#allocation8 + $0x888] sm:$0xff]
          %v5195 = vld [vmem:[#allocation8 + $0x890] sm:$0xff]
          %v5196 = vld [vmem:[#allocation8 + $0x898] sm:$0xff]
          %v5197 = vld [vmem:[#allocation8 + $0x8a0] sm:$0xff]
          %v5198 = vld [vmem:[#allocation8 + $0x8a8] sm:$0xff]
          %v5199 = vld [vmem:[#allocation8 + $0x8b0] sm:$0xff]
          %v5200 = vld [vmem:[#allocation8 + $0x8b8] sm:$0xff]
          %v5201 = vld [vmem:[#allocation8 + $0x8c0] sm:$0xff]
          %v5202 = vld [vmem:[#allocation8 + $0x8c8] sm:$0xff]
          %v5203 = vld [vmem:[#allocation8 + $0x8d0] sm:$0xff]
          %v5204 = vld [vmem:[#allocation8 + $0x8d8] sm:$0xff]
          %v5205 = vld [vmem:[#allocation8 + $0x8e0] sm:$0xff]
          %v5206 = vld [vmem:[#allocation8 + $0x8e8] sm:$0xff]
          %v5207 = vld [vmem:[#allocation8 + $0x8f0] sm:$0xff]
          %v5208 = vld [vmem:[#allocation8 + $0x8f8] sm:$0xff]
          %v5209 = vadd.f32 %v4921, %v1901
          %v5210 = vadd.f32 %v4922, %v1903
          %v5211 = vadd.f32 %v4923, %v2960
          %v5212 = vadd.f32 %v4924, %v2962
          %v5213 = vadd.f32 %v4925, %v4019
          %v5214 = vadd.f32 %v4926, %v4021
          %v5215 = vadd.f32 %v4927, %v1907
          %v5216 = vadd.f32 %v4928, %v1909
          %v5217 = vadd.f32 %v4929, %v2966
          %v5218 = vadd.f32 %v4930, %v2968
          %v5219 = vadd.f32 %v4931, %v4025
          %v5220 = vadd.f32 %v4932, %v4027
          %v5221 = vadd.f32 %v4933, %v1913
          %v5222 = vadd.f32 %v4934, %v1915
          %v5223 = vadd.f32 %v4935, %v2972
          %v5224 = vadd.f32 %v4936, %v2974
          %v5225 = vadd.f32 %v4937, %v4031
          %v5226 = vadd.f32 %v4938, %v4033
          %v5227 = vadd.f32 %v4939, %v1919
          %v5228 = vadd.f32 %v4940, %v1921
          %v5229 = vadd.f32 %v4941, %v2978
          %v5230 = vadd.f32 %v4942, %v2980
          %v5231 = vadd.f32 %v4943, %v4037
          %v5232 = vadd.f32 %v4944, %v4039
          %v5233 = vadd.f32 %v4945, %v1925
          %v5234 = vadd.f32 %v4946, %v1927
          %v5235 = vadd.f32 %v4947, %v2984
          %v5236 = vadd.f32 %v4948, %v2986
          %v5237 = vadd.f32 %v4949, %v4043
          %v5238 = vadd.f32 %v4950, %v4045
          %v5239 = vadd.f32 %v4951, %v1931
          %v5240 = vadd.f32 %v4952, %v1933
          %v5241 = vadd.f32 %v4953, %v2990
          %v5242 = vadd.f32 %v4954, %v2992
          %v5243 = vadd.f32 %v4955, %v4049
          %v5244 = vadd.f32 %v4956, %v4051
          %v5245 = vadd.f32 %v4957, %v1937
          %v5246 = vadd.f32 %v4958, %v1939
          %v5247 = vadd.f32 %v4959, %v2996
          %v5248 = vadd.f32 %v4960, %v2998
          %v5249 = vadd.f32 %v4961, %v4055
          %v5250 = vadd.f32 %v4962, %v4057
          %v5251 = vadd.f32 %v4963, %v1943
          %v5252 = vadd.f32 %v4964, %v1945
          %v5253 = vadd.f32 %v4965, %v3002
          %v5254 = vadd.f32 %v4966, %v3004
          %v5255 = vadd.f32 %v4967, %v4061
          %v5256 = vadd.f32 %v4968, %v4063
          %v5257 = vadd.f32 %v4969, %v1949
          %v5258 = vadd.f32 %v4970, %v1951
          %v5259 = vadd.f32 %v4971, %v3008
          %v5260 = vadd.f32 %v4972, %v3010
          %v5261 = vadd.f32 %v4973, %v4067
          %v5262 = vadd.f32 %v4974, %v4069
          %v5263 = vadd.f32 %v4975, %v1955
          %v5264 = vadd.f32 %v4976, %v1957
          %v5265 = vadd.f32 %v4977, %v3014
          %v5266 = vadd.f32 %v4978, %v3016
          %v5267 = vadd.f32 %v4979, %v4073
          %v5268 = vadd.f32 %v4980, %v4075
          %v5269 = vadd.f32 %v4981, %v1961
          %v5270 = vadd.f32 %v4982, %v1963
          %v5271 = vadd.f32 %v4983, %v3020
          %v5272 = vadd.f32 %v4984, %v3022
          %v5273 = vadd.f32 %v4985, %v4079
          %v5274 = vadd.f32 %v4986, %v4081
          %v5275 = vadd.f32 %v4987, %v1967
          %v5276 = vadd.f32 %v4988, %v1969
          %v5277 = vadd.f32 %v4989, %v3026
          %v5278 = vadd.f32 %v4990, %v3028
          %v5279 = vadd.f32 %v4991, %v4085
          %v5280 = vadd.f32 %v4992, %v4087
          %v5281 = vadd.f32 %v4993, %v1973
          %v5282 = vadd.f32 %v4994, %v1975
          %v5283 = vadd.f32 %v4995, %v3032
          %v5284 = vadd.f32 %v4996, %v3034
          %v5285 = vadd.f32 %v4997, %v4091
          %v5286 = vadd.f32 %v4998, %v4093
          %v5287 = vadd.f32 %v4999, %v1979
          %v5288 = vadd.f32 %v5000, %v1981
          %v5289 = vadd.f32 %v5001, %v3038
          %v5290 = vadd.f32 %v5002, %v3040
          %v5291 = vadd.f32 %v5003, %v4097
          %v5292 = vadd.f32 %v5004, %v4099
          %v5293 = vadd.f32 %v5005, %v1985
          %v5294 = vadd.f32 %v5006, %v1987
          %v5295 = vadd.f32 %v5007, %v3044
          %v5296 = vadd.f32 %v5008, %v3046
          %v5297 = vadd.f32 %v5009, %v4103
          %v5298 = vadd.f32 %v5010, %v4105
          %v5299 = vadd.f32 %v5011, %v1991
          %v5300 = vadd.f32 %v5012, %v1993
          %v5301 = vadd.f32 %v5013, %v3050
          %v5302 = vadd.f32 %v5014, %v3052
          %v5303 = vadd.f32 %v5015, %v4109
          %v5304 = vadd.f32 %v5016, %v4111
          %v5305 = vadd.f32 %v5017, %v1997
          %v5306 = vadd.f32 %v5018, %v1999
          %v5307 = vadd.f32 %v5019, %v3056
          %v5308 = vadd.f32 %v5020, %v3058
          %v5309 = vadd.f32 %v5021, %v4115
          %v5310 = vadd.f32 %v5022, %v4117
          %v5311 = vadd.f32 %v5023, %v2003
          %v5312 = vadd.f32 %v5024, %v2005
          %v5313 = vadd.f32 %v5025, %v3062
          %v5314 = vadd.f32 %v5026, %v3064
          %v5315 = vadd.f32 %v5027, %v4121
          %v5316 = vadd.f32 %v5028, %v4123
          %v5317 = vadd.f32 %v5029, %v2009
          %v5318 = vadd.f32 %v5030, %v2011
          %v5319 = vadd.f32 %v5031, %v3068
          %v5320 = vadd.f32 %v5032, %v3070
          %v5321 = vadd.f32 %v5033, %v4127
          %v5322 = vadd.f32 %v5034, %v4129
          %v5323 = vadd.f32 %v5035, %v2015
          %v5324 = vadd.f32 %v5036, %v2017
          %v5325 = vadd.f32 %v5037, %v3074
          %v5326 = vadd.f32 %v5038, %v3076
          %v5327 = vadd.f32 %v5039, %v4133
          %v5328 = vadd.f32 %v5040, %v4135
          %v5329 = vadd.f32 %v5041, %v2021
          %v5330 = vadd.f32 %v5042, %v2023
          %v5331 = vadd.f32 %v5043, %v3080
          %v5332 = vadd.f32 %v5044, %v3082
          %v5333 = vadd.f32 %v5045, %v4139
          %v5334 = vadd.f32 %v5046, %v4141
          %v5335 = vadd.f32 %v5047, %v2027
          %v5336 = vadd.f32 %v5048, %v2029
          %v5337 = vadd.f32 %v5049, %v3086
          %v5338 = vadd.f32 %v5050, %v3088
          %v5339 = vadd.f32 %v5051, %v4145
          %v5340 = vadd.f32 %v5052, %v4147
          %v5341 = vadd.f32 %v5053, %v2033
          %v5342 = vadd.f32 %v5054, %v2035
          %v5343 = vadd.f32 %v5055, %v3092
          %v5344 = vadd.f32 %v5056, %v3094
          %v5345 = vadd.f32 %v5057, %v4151
          %v5346 = vadd.f32 %v5058, %v4153
          %v5347 = vadd.f32 %v5059, %v2039
          %v5348 = vadd.f32 %v5060, %v2041
          %v5349 = vadd.f32 %v5061, %v3098
          %v5350 = vadd.f32 %v5062, %v3100
          %v5351 = vadd.f32 %v5063, %v4157
          %v5352 = vadd.f32 %v5064, %v4159
          %v5353 = vadd.f32 %v5065, %v2045
          %v5354 = vadd.f32 %v5066, %v2047
          %v5355 = vadd.f32 %v5067, %v3104
          %v5356 = vadd.f32 %v5068, %v3106
          %v5357 = vadd.f32 %v5069, %v4163
          %v5358 = vadd.f32 %v5070, %v4165
          %v5359 = vadd.f32 %v5071, %v2051
          %v5360 = vadd.f32 %v5072, %v2053
          %v5361 = vadd.f32 %v5073, %v3110
          %v5362 = vadd.f32 %v5074, %v3112
          %v5363 = vadd.f32 %v5075, %v4169
          %v5364 = vadd.f32 %v5076, %v4171
          %v5365 = vadd.f32 %v5077, %v2057
          %v5366 = vadd.f32 %v5078, %v2059
          %v5367 = vadd.f32 %v5079, %v3116
          %v5368 = vadd.f32 %v5080, %v3118
          %v5369 = vadd.f32 %v5081, %v4175
          %v5370 = vadd.f32 %v5082, %v4177
          %v5371 = vadd.f32 %v5083, %v2063
          %v5372 = vadd.f32 %v5084, %v2065
          %v5373 = vadd.f32 %v5085, %v3122
          %v5374 = vadd.f32 %v5086, %v3124
          %v5375 = vadd.f32 %v5087, %v4181
          %v5376 = vadd.f32 %v5088, %v4183
          %v5377 = vadd.f32 %v5089, %v2069
          %v5378 = vadd.f32 %v5090, %v2071
          %v5379 = vadd.f32 %v5091, %v3128
          %v5380 = vadd.f32 %v5092, %v3130
          %v5381 = vadd.f32 %v5093, %v4187
          %v5382 = vadd.f32 %v5094, %v4189
          %v5383 = vadd.f32 %v5095, %v2075
          %v5384 = vadd.f32 %v5096, %v2077
          %v5385 = vadd.f32 %v5097, %v3134
          %v5386 = vadd.f32 %v5098, %v3136
          %v5387 = vadd.f32 %v5099, %v4193
          %v5388 = vadd.f32 %v5100, %v4195
          %v5389 = vadd.f32 %v5101, %v2081
          %v5390 = vadd.f32 %v5102, %v2083
          %v5391 = vadd.f32 %v5103, %v3140
          %v5392 = vadd.f32 %v5104, %v3142
          %v5393 = vadd.f32 %v5105, %v4199
          %v5394 = vadd.f32 %v5106, %v4201
          %v5395 = vadd.f32 %v5107, %v2087
          %v5396 = vadd.f32 %v5108, %v2089
          %v5397 = vadd.f32 %v5109, %v3146
          %v5398 = vadd.f32 %v5110, %v3148
          %v5399 = vadd.f32 %v5111, %v4205
          %v5400 = vadd.f32 %v5112, %v4207
          %v5401 = vadd.f32 %v5113, %v2093
          %v5402 = vadd.f32 %v5114, %v2095
          %v5403 = vadd.f32 %v5115, %v3152
          %v5404 = vadd.f32 %v5116, %v3154
          %v5405 = vadd.f32 %v5117, %v4211
          %v5406 = vadd.f32 %v5118, %v4213
          %v5407 = vadd.f32 %v5119, %v2099
          %v5408 = vadd.f32 %v5120, %v2101
          %v5409 = vadd.f32 %v5121, %v3158
          %v5410 = vadd.f32 %v5122, %v3160
          %v5411 = vadd.f32 %v5123, %v4217
          %v5412 = vadd.f32 %v5124, %v4219
          %v5413 = vadd.f32 %v5125, %v2105
          %v5414 = vadd.f32 %v5126, %v2107
          %v5415 = vadd.f32 %v5127, %v3164
          %v5416 = vadd.f32 %v5128, %v3166
          %v5417 = vadd.f32 %v5129, %v4223
          %v5418 = vadd.f32 %v5130, %v4225
          %v5419 = vadd.f32 %v5131, %v2111
          %v5420 = vadd.f32 %v5132, %v2113
          %v5421 = vadd.f32 %v5133, %v3170
          %v5422 = vadd.f32 %v5134, %v3172
          %v5423 = vadd.f32 %v5135, %v4229
          %v5424 = vadd.f32 %v5136, %v4231
          %v5425 = vadd.f32 %v5137, %v2117
          %v5426 = vadd.f32 %v5138, %v2119
          %v5427 = vadd.f32 %v5139, %v3176
          %v5428 = vadd.f32 %v5140, %v3178
          %v5429 = vadd.f32 %v5141, %v4235
          %v5430 = vadd.f32 %v5142, %v4237
          %v5431 = vadd.f32 %v5143, %v2123
          %v5432 = vadd.f32 %v5144, %v2125
          %v5433 = vadd.f32 %v5145, %v3182
          %v5434 = vadd.f32 %v5146, %v3184
          %v5435 = vadd.f32 %v5147, %v4241
          %v5436 = vadd.f32 %v5148, %v4243
          %v5437 = vadd.f32 %v5149, %v2129
          %v5438 = vadd.f32 %v5150, %v2131
          %v5439 = vadd.f32 %v5151, %v3188
          %v5440 = vadd.f32 %v5152, %v3190
          %v5441 = vadd.f32 %v5153, %v4247
          %v5442 = vadd.f32 %v5154, %v4249
          %v5443 = vadd.f32 %v5155, %v2135
          %v5444 = vadd.f32 %v5156, %v2137
          %v5445 = vadd.f32 %v5157, %v3194
          %v5446 = vadd.f32 %v5158, %v3196
          %v5447 = vadd.f32 %v5159, %v4253
          %v5448 = vadd.f32 %v5160, %v4255
          %v5449 = vadd.f32 %v5161, %v2141
          %v5450 = vadd.f32 %v5162, %v2143
          %v5451 = vadd.f32 %v5163, %v3200
          %v5452 = vadd.f32 %v5164, %v3202
          %v5453 = vadd.f32 %v5165, %v4259
          %v5454 = vadd.f32 %v5166, %v4261
          %v5455 = vadd.f32 %v5167, %v2147
          %v5456 = vadd.f32 %v5168, %v2149
          %v5457 = vadd.f32 %v5169, %v3206
          %v5458 = vadd.f32 %v5170, %v3208
          %v5459 = vadd.f32 %v5171, %v4265
          %v5460 = vadd.f32 %v5172, %v4267
          %v5461 = vadd.f32 %v5173, %v2153
          %v5462 = vadd.f32 %v5174, %v2155
          %v5463 = vadd.f32 %v5175, %v3212
          %v5464 = vadd.f32 %v5176, %v3214
          %v5465 = vadd.f32 %v5177, %v4271
          %v5466 = vadd.f32 %v5178, %v4273
          %v5467 = vadd.f32 %v5179, %v2159
          %v5468 = vadd.f32 %v5180, %v2161
          %v5469 = vadd.f32 %v5181, %v3218
          %v5470 = vadd.f32 %v5182, %v3220
          %v5471 = vadd.f32 %v5183, %v4277
          %v5472 = vadd.f32 %v5184, %v4279
          %v5473 = vadd.f32 %v5185, %v2165
          %v5474 = vadd.f32 %v5186, %v2167
          %v5475 = vadd.f32 %v5187, %v3224
          %v5476 = vadd.f32 %v5188, %v3226
          %v5477 = vadd.f32 %v5189, %v4283
          %v5478 = vadd.f32 %v5190, %v4285
          %v5479 = vadd.f32 %v5191, %v2171
          %v5480 = vadd.f32 %v5192, %v2173
          %v5481 = vadd.f32 %v5193, %v3230
          %v5482 = vadd.f32 %v5194, %v3232
          %v5483 = vadd.f32 %v5195, %v4289
          %v5484 = vadd.f32 %v5196, %v4291
          %v5485 = vadd.f32 %v5197, %v2177
          %v5486 = vadd.f32 %v5198, %v2179
          %v5487 = vadd.f32 %v5199, %v3236
          %v5488 = vadd.f32 %v5200, %v3238
          %v5489 = vadd.f32 %v5201, %v4295
          %v5490 = vadd.f32 %v5202, %v4297
          %v5491 = vadd.f32 %v5203, %v2183
          %v5492 = vadd.f32 %v5204, %v2185
          %v5493 = vadd.f32 %v5205, %v3242
          %v5494 = vadd.f32 %v5206, %v3244
          %v5495 = vadd.f32 %v5207, %v4301
          %v5496 = vadd.f32 %v5208, %v4303
          %5497 = vst [vmem:[#allocation8] sm:$0xff] %v5209
          %5498 = vst [vmem:[#allocation8 + $0x8] sm:$0xff] %v5210
          %5499 = vst [vmem:[#allocation8 + $0x10] sm:$0xff] %v5211
          %5500 = vst [vmem:[#allocation8 + $0x18] sm:$0xff] %v5212
          %5501 = vst [vmem:[#allocation8 + $0x20] sm:$0xff] %v5213
          %5502 = vst [vmem:[#allocation8 + $0x28] sm:$0xff] %v5214
          %5503 = vst [vmem:[#allocation8 + $0x30] sm:$0xff] %v5215
          %5504 = vst [vmem:[#allocation8 + $0x38] sm:$0xff] %v5216
          %5505 = vst [vmem:[#allocation8 + $0x40] sm:$0xff] %v5217
          %5506 = vst [vmem:[#allocation8 + $0x48] sm:$0xff] %v5218
          %5507 = vst [vmem:[#allocation8 + $0x50] sm:$0xff] %v5219
          %5508 = vst [vmem:[#allocation8 + $0x58] sm:$0xff] %v5220
          %5509 = vst [vmem:[#allocation8 + $0x60] sm:$0xff] %v5221
          %5510 = vst [vmem:[#allocation8 + $0x68] sm:$0xff] %v5222
          %5511 = vst [vmem:[#allocation8 + $0x70] sm:$0xff] %v5223
          %5512 = vst [vmem:[#allocation8 + $0x78] sm:$0xff] %v5224
          %5513 = vst [vmem:[#allocation8 + $0x80] sm:$0xff] %v5225
          %5514 = vst [vmem:[#allocation8 + $0x88] sm:$0xff] %v5226
          %5515 = vst [vmem:[#allocation8 + $0x90] sm:$0xff] %v5227
          %5516 = vst [vmem:[#allocation8 + $0x98] sm:$0xff] %v5228
          %5517 = vst [vmem:[#allocation8 + $0xa0] sm:$0xff] %v5229
          %5518 = vst [vmem:[#allocation8 + $0xa8] sm:$0xff] %v5230
          %5519 = vst [vmem:[#allocation8 + $0xb0] sm:$0xff] %v5231
          %5520 = vst [vmem:[#allocation8 + $0xb8] sm:$0xff] %v5232
          %5521 = vst [vmem:[#allocation8 + $0xc0] sm:$0xff] %v5233
          %5522 = vst [vmem:[#allocation8 + $0xc8] sm:$0xff] %v5234
          %5523 = vst [vmem:[#allocation8 + $0xd0] sm:$0xff] %v5235
          %5524 = vst [vmem:[#allocation8 + $0xd8] sm:$0xff] %v5236
          %5525 = vst [vmem:[#allocation8 + $0xe0] sm:$0xff] %v5237
          %5526 = vst [vmem:[#allocation8 + $0xe8] sm:$0xff] %v5238
          %5527 = vst [vmem:[#allocation8 + $0xf0] sm:$0xff] %v5239
          %5528 = vst [vmem:[#allocation8 + $0xf8] sm:$0xff] %v5240
          %5529 = vst [vmem:[#allocation8 + $0x100] sm:$0xff] %v5241
          %5530 = vst [vmem:[#allocation8 + $0x108] sm:$0xff] %v5242
          %5531 = vst [vmem:[#allocation8 + $0x110] sm:$0xff] %v5243
          %5532 = vst [vmem:[#allocation8 + $0x118] sm:$0xff] %v5244
          %5533 = vst [vmem:[#allocation8 + $0x120] sm:$0xff] %v5245
          %5534 = vst [vmem:[#allocation8 + $0x128] sm:$0xff] %v5246
          %5535 = vst [vmem:[#allocation8 + $0x130] sm:$0xff] %v5247
          %5536 = vst [vmem:[#allocation8 + $0x138] sm:$0xff] %v5248
          %5537 = vst [vmem:[#allocation8 + $0x140] sm:$0xff] %v5249
          %5538 = vst [vmem:[#allocation8 + $0x148] sm:$0xff] %v5250
          %5539 = vst [vmem:[#allocation8 + $0x150] sm:$0xff] %v5251
          %5540 = vst [vmem:[#allocation8 + $0x158] sm:$0xff] %v5252
          %5541 = vst [vmem:[#allocation8 + $0x160] sm:$0xff] %v5253
          %5542 = vst [vmem:[#allocation8 + $0x168] sm:$0xff] %v5254
          %5543 = vst [vmem:[#allocation8 + $0x170] sm:$0xff] %v5255
          %5544 = vst [vmem:[#allocation8 + $0x178] sm:$0xff] %v5256
          %5545 = vst [vmem:[#allocation8 + $0x180] sm:$0xff] %v5257
          %5546 = vst [vmem:[#allocation8 + $0x188] sm:$0xff] %v5258
          %5547 = vst [vmem:[#allocation8 + $0x190] sm:$0xff] %v5259
          %5548 = vst [vmem:[#allocation8 + $0x198] sm:$0xff] %v5260
          %5549 = vst [vmem:[#allocation8 + $0x1a0] sm:$0xff] %v5261
          %5550 = vst [vmem:[#allocation8 + $0x1a8] sm:$0xff] %v5262
          %5551 = vst [vmem:[#allocation8 + $0x1b0] sm:$0xff] %v5263
          %5552 = vst [vmem:[#allocation8 + $0x1b8] sm:$0xff] %v5264
          %5553 = vst [vmem:[#allocation8 + $0x1c0] sm:$0xff] %v5265
          %5554 = vst [vmem:[#allocation8 + $0x1c8] sm:$0xff] %v5266
          %5555 = vst [vmem:[#allocation8 + $0x1d0] sm:$0xff] %v5267
          %5556 = vst [vmem:[#allocation8 + $0x1d8] sm:$0xff] %v5268
          %5557 = vst [vmem:[#allocation8 + $0x1e0] sm:$0xff] %v5269
          %5558 = vst [vmem:[#allocation8 + $0x1e8] sm:$0xff] %v5270
          %5559 = vst [vmem:[#allocation8 + $0x1f0] sm:$0xff] %v5271
          %5560 = vst [vmem:[#allocation8 + $0x1f8] sm:$0xff] %v5272
          %5561 = vst [vmem:[#allocation8 + $0x200] sm:$0xff] %v5273
          %5562 = vst [vmem:[#allocation8 + $0x208] sm:$0xff] %v5274
          %5563 = vst [vmem:[#allocation8 + $0x210] sm:$0xff] %v5275
          %5564 = vst [vmem:[#allocation8 + $0x218] sm:$0xff] %v5276
          %5565 = vst [vmem:[#allocation8 + $0x220] sm:$0xff] %v5277
          %5566 = vst [vmem:[#allocation8 + $0x228] sm:$0xff] %v5278
          %5567 = vst [vmem:[#allocation8 + $0x230] sm:$0xff] %v5279
          %5568 = vst [vmem:[#allocation8 + $0x238] sm:$0xff] %v5280
          %5569 = vst [vmem:[#allocation8 + $0x240] sm:$0xff] %v5281
          %5570 = vst [vmem:[#allocation8 + $0x248] sm:$0xff] %v5282
          %5571 = vst [vmem:[#allocation8 + $0x250] sm:$0xff] %v5283
          %5572 = vst [vmem:[#allocation8 + $0x258] sm:$0xff] %v5284
          %5573 = vst [vmem:[#allocation8 + $0x260] sm:$0xff] %v5285
          %5574 = vst [vmem:[#allocation8 + $0x268] sm:$0xff] %v5286
          %5575 = vst [vmem:[#allocation8 + $0x270] sm:$0xff] %v5287
          %5576 = vst [vmem:[#allocation8 + $0x278] sm:$0xff] %v5288
          %5577 = vst [vmem:[#allocation8 + $0x280] sm:$0xff] %v5289
          %5578 = vst [vmem:[#allocation8 + $0x288] sm:$0xff] %v5290
          %5579 = vst [vmem:[#allocation8 + $0x290] sm:$0xff] %v5291
          %5580 = vst [vmem:[#allocation8 + $0x298] sm:$0xff] %v5292
          %5581 = vst [vmem:[#allocation8 + $0x2a0] sm:$0xff] %v5293
          %5582 = vst [vmem:[#allocation8 + $0x2a8] sm:$0xff] %v5294
          %5583 = vst [vmem:[#allocation8 + $0x2b0] sm:$0xff] %v5295
          %5584 = vst [vmem:[#allocation8 + $0x2b8] sm:$0xff] %v5296
          %5585 = vst [vmem:[#allocation8 + $0x2c0] sm:$0xff] %v5297
          %5586 = vst [vmem:[#allocation8 + $0x2c8] sm:$0xff] %v5298
          %5587 = vst [vmem:[#allocation8 + $0x2d0] sm:$0xff] %v5299
          %5588 = vst [vmem:[#allocation8 + $0x2d8] sm:$0xff] %v5300
          %5589 = vst [vmem:[#allocation8 + $0x2e0] sm:$0xff] %v5301
          %5590 = vst [vmem:[#allocation8 + $0x2e8] sm:$0xff] %v5302
          %5591 = vst [vmem:[#allocation8 + $0x2f0] sm:$0xff] %v5303
          %5592 = vst [vmem:[#allocation8 + $0x2f8] sm:$0xff] %v5304
          %5593 = vst [vmem:[#allocation8 + $0x300] sm:$0xff] %v5305
          %5594 = vst [vmem:[#allocation8 + $0x308] sm:$0xff] %v5306
          %5595 = vst [vmem:[#allocation8 + $0x310] sm:$0xff] %v5307
          %5596 = vst [vmem:[#allocation8 + $0x318] sm:$0xff] %v5308
          %5597 = vst [vmem:[#allocation8 + $0x320] sm:$0xff] %v5309
          %5598 = vst [vmem:[#allocation8 + $0x328] sm:$0xff] %v5310
          %5599 = vst [vmem:[#allocation8 + $0x330] sm:$0xff] %v5311
          %5600 = vst [vmem:[#allocation8 + $0x338] sm:$0xff] %v5312
          %5601 = vst [vmem:[#allocation8 + $0x340] sm:$0xff] %v5313
          %5602 = vst [vmem:[#allocation8 + $0x348] sm:$0xff] %v5314
          %5603 = vst [vmem:[#allocation8 + $0x350] sm:$0xff] %v5315
          %5604 = vst [vmem:[#allocation8 + $0x358] sm:$0xff] %v5316
          %5605 = vst [vmem:[#allocation8 + $0x360] sm:$0xff] %v5317
          %5606 = vst [vmem:[#allocation8 + $0x368] sm:$0xff] %v5318
          %5607 = vst [vmem:[#allocation8 + $0x370] sm:$0xff] %v5319
          %5608 = vst [vmem:[#allocation8 + $0x378] sm:$0xff] %v5320
          %5609 = vst [vmem:[#allocation8 + $0x380] sm:$0xff] %v5321
          %5610 = vst [vmem:[#allocation8 + $0x388] sm:$0xff] %v5322
          %5611 = vst [vmem:[#allocation8 + $0x390] sm:$0xff] %v5323
          %5612 = vst [vmem:[#allocation8 + $0x398] sm:$0xff] %v5324
          %5613 = vst [vmem:[#allocation8 + $0x3a0] sm:$0xff] %v5325
          %5614 = vst [vmem:[#allocation8 + $0x3a8] sm:$0xff] %v5326
          %5615 = vst [vmem:[#allocation8 + $0x3b0] sm:$0xff] %v5327
          %5616 = vst [vmem:[#allocation8 + $0x3b8] sm:$0xff] %v5328
          %5617 = vst [vmem:[#allocation8 + $0x3c0] sm:$0xff] %v5329
          %5618 = vst [vmem:[#allocation8 + $0x3c8] sm:$0xff] %v5330
          %5619 = vst [vmem:[#allocation8 + $0x3d0] sm:$0xff] %v5331
          %5620 = vst [vmem:[#allocation8 + $0x3d8] sm:$0xff] %v5332
          %5621 = vst [vmem:[#allocation8 + $0x3e0] sm:$0xff] %v5333
          %5622 = vst [vmem:[#allocation8 + $0x3e8] sm:$0xff] %v5334
          %5623 = vst [vmem:[#allocation8 + $0x3f0] sm:$0xff] %v5335
          %5624 = vst [vmem:[#allocation8 + $0x3f8] sm:$0xff] %v5336
          %5625 = vst [vmem:[#allocation8 + $0x400] sm:$0xff] %v5337
          %5626 = vst [vmem:[#allocation8 + $0x408] sm:$0xff] %v5338
          %5627 = vst [vmem:[#allocation8 + $0x410] sm:$0xff] %v5339
          %5628 = vst [vmem:[#allocation8 + $0x418] sm:$0xff] %v5340
          %5629 = vst [vmem:[#allocation8 + $0x420] sm:$0xff] %v5341
          %5630 = vst [vmem:[#allocation8 + $0x428] sm:$0xff] %v5342
          %5631 = vst [vmem:[#allocation8 + $0x430] sm:$0xff] %v5343
          %5632 = vst [vmem:[#allocation8 + $0x438] sm:$0xff] %v5344
          %5633 = vst [vmem:[#allocation8 + $0x440] sm:$0xff] %v5345
          %5634 = vst [vmem:[#allocation8 + $0x448] sm:$0xff] %v5346
          %5635 = vst [vmem:[#allocation8 + $0x450] sm:$0xff] %v5347
          %5636 = vst [vmem:[#allocation8 + $0x458] sm:$0xff] %v5348
          %5637 = vst [vmem:[#allocation8 + $0x460] sm:$0xff] %v5349
          %5638 = vst [vmem:[#allocation8 + $0x468] sm:$0xff] %v5350
          %5639 = vst [vmem:[#allocation8 + $0x470] sm:$0xff] %v5351
          %5640 = vst [vmem:[#allocation8 + $0x478] sm:$0xff] %v5352
          %5641 = vst [vmem:[#allocation8 + $0x480] sm:$0xff] %v5353
          %5642 = vst [vmem:[#allocation8 + $0x488] sm:$0xff] %v5354
          %5643 = vst [vmem:[#allocation8 + $0x490] sm:$0xff] %v5355
          %5644 = vst [vmem:[#allocation8 + $0x498] sm:$0xff] %v5356
          %5645 = vst [vmem:[#allocation8 + $0x4a0] sm:$0xff] %v5357
          %5646 = vst [vmem:[#allocation8 + $0x4a8] sm:$0xff] %v5358
          %5647 = vst [vmem:[#allocation8 + $0x4b0] sm:$0xff] %v5359
          %5648 = vst [vmem:[#allocation8 + $0x4b8] sm:$0xff] %v5360
          %5649 = vst [vmem:[#allocation8 + $0x4c0] sm:$0xff] %v5361
          %5650 = vst [vmem:[#allocation8 + $0x4c8] sm:$0xff] %v5362
          %5651 = vst [vmem:[#allocation8 + $0x4d0] sm:$0xff] %v5363
          %5652 = vst [vmem:[#allocation8 + $0x4d8] sm:$0xff] %v5364
          %5653 = vst [vmem:[#allocation8 + $0x4e0] sm:$0xff] %v5365
          %5654 = vst [vmem:[#allocation8 + $0x4e8] sm:$0xff] %v5366
          %5655 = vst [vmem:[#allocation8 + $0x4f0] sm:$0xff] %v5367
          %5656 = vst [vmem:[#allocation8 + $0x4f8] sm:$0xff] %v5368
          %5657 = vst [vmem:[#allocation8 + $0x500] sm:$0xff] %v5369
          %5658 = vst [vmem:[#allocation8 + $0x508] sm:$0xff] %v5370
          %5659 = vst [vmem:[#allocation8 + $0x510] sm:$0xff] %v5371
          %5660 = vst [vmem:[#allocation8 + $0x518] sm:$0xff] %v5372
          %5661 = vst [vmem:[#allocation8 + $0x520] sm:$0xff] %v5373
          %5662 = vst [vmem:[#allocation8 + $0x528] sm:$0xff] %v5374
          %5663 = vst [vmem:[#allocation8 + $0x530] sm:$0xff] %v5375
          %5664 = vst [vmem:[#allocation8 + $0x538] sm:$0xff] %v5376
          %5665 = vst [vmem:[#allocation8 + $0x540] sm:$0xff] %v5377
          %5666 = vst [vmem:[#allocation8 + $0x548] sm:$0xff] %v5378
          %5667 = vst [vmem:[#allocation8 + $0x550] sm:$0xff] %v5379
          %5668 = vst [vmem:[#allocation8 + $0x558] sm:$0xff] %v5380
          %5669 = vst [vmem:[#allocation8 + $0x560] sm:$0xff] %v5381
          %5670 = vst [vmem:[#allocation8 + $0x568] sm:$0xff] %v5382
          %5671 = vst [vmem:[#allocation8 + $0x570] sm:$0xff] %v5383
          %5672 = vst [vmem:[#allocation8 + $0x578] sm:$0xff] %v5384
          %5673 = vst [vmem:[#allocation8 + $0x580] sm:$0xff] %v5385
          %5674 = vst [vmem:[#allocation8 + $0x588] sm:$0xff] %v5386
          %5675 = vst [vmem:[#allocation8 + $0x590] sm:$0xff] %v5387
          %5676 = vst [vmem:[#allocation8 + $0x598] sm:$0xff] %v5388
          %5677 = vst [vmem:[#allocation8 + $0x5a0] sm:$0xff] %v5389
          %5678 = vst [vmem:[#allocation8 + $0x5a8] sm:$0xff] %v5390
          %5679 = vst [vmem:[#allocation8 + $0x5b0] sm:$0xff] %v5391
          %5680 = vst [vmem:[#allocation8 + $0x5b8] sm:$0xff] %v5392
          %5681 = vst [vmem:[#allocation8 + $0x5c0] sm:$0xff] %v5393
          %5682 = vst [vmem:[#allocation8 + $0x5c8] sm:$0xff] %v5394
          %5683 = vst [vmem:[#allocation8 + $0x5d0] sm:$0xff] %v5395
          %5684 = vst [vmem:[#allocation8 + $0x5d8] sm:$0xff] %v5396
          %5685 = vst [vmem:[#allocation8 + $0x5e0] sm:$0xff] %v5397
          %5686 = vst [vmem:[#allocation8 + $0x5e8] sm:$0xff] %v5398
          %5687 = vst [vmem:[#allocation8 + $0x5f0] sm:$0xff] %v5399
          %5688 = vst [vmem:[#allocation8 + $0x5f8] sm:$0xff] %v5400
          %5689 = vst [vmem:[#allocation8 + $0x600] sm:$0xff] %v5401
          %5690 = vst [vmem:[#allocation8 + $0x608] sm:$0xff] %v5402
          %5691 = vst [vmem:[#allocation8 + $0x610] sm:$0xff] %v5403
          %5692 = vst [vmem:[#allocation8 + $0x618] sm:$0xff] %v5404
          %5693 = vst [vmem:[#allocation8 + $0x620] sm:$0xff] %v5405
          %5694 = vst [vmem:[#allocation8 + $0x628] sm:$0xff] %v5406
          %5695 = vst [vmem:[#allocation8 + $0x630] sm:$0xff] %v5407
          %5696 = vst [vmem:[#allocation8 + $0x638] sm:$0xff] %v5408
          %5697 = vst [vmem:[#allocation8 + $0x640] sm:$0xff] %v5409
          %5698 = vst [vmem:[#allocation8 + $0x648] sm:$0xff] %v5410
          %5699 = vst [vmem:[#allocation8 + $0x650] sm:$0xff] %v5411
          %5700 = vst [vmem:[#allocation8 + $0x658] sm:$0xff] %v5412
          %5701 = vst [vmem:[#allocation8 + $0x660] sm:$0xff] %v5413
          %5702 = vst [vmem:[#allocation8 + $0x668] sm:$0xff] %v5414
          %5703 = vst [vmem:[#allocation8 + $0x670] sm:$0xff] %v5415
          %5704 = vst [vmem:[#allocation8 + $0x678] sm:$0xff] %v5416
          %5705 = vst [vmem:[#allocation8 + $0x680] sm:$0xff] %v5417
          %5706 = vst [vmem:[#allocation8 + $0x688] sm:$0xff] %v5418
          %5707 = vst [vmem:[#allocation8 + $0x690] sm:$0xff] %v5419
          %5708 = vst [vmem:[#allocation8 + $0x698] sm:$0xff] %v5420
          %5709 = vst [vmem:[#allocation8 + $0x6a0] sm:$0xff] %v5421
          %5710 = vst [vmem:[#allocation8 + $0x6a8] sm:$0xff] %v5422
          %5711 = vst [vmem:[#allocation8 + $0x6b0] sm:$0xff] %v5423
          %5712 = vst [vmem:[#allocation8 + $0x6b8] sm:$0xff] %v5424
          %5713 = vst [vmem:[#allocation8 + $0x6c0] sm:$0xff] %v5425
          %5714 = vst [vmem:[#allocation8 + $0x6c8] sm:$0xff] %v5426
          %5715 = vst [vmem:[#allocation8 + $0x6d0] sm:$0xff] %v5427
          %5716 = vst [vmem:[#allocation8 + $0x6d8] sm:$0xff] %v5428
          %5717 = vst [vmem:[#allocation8 + $0x6e0] sm:$0xff] %v5429
          %5718 = vst [vmem:[#allocation8 + $0x6e8] sm:$0xff] %v5430
          %5719 = vst [vmem:[#allocation8 + $0x6f0] sm:$0xff] %v5431
          %5720 = vst [vmem:[#allocation8 + $0x6f8] sm:$0xff] %v5432
          %5721 = vst [vmem:[#allocation8 + $0x700] sm:$0xff] %v5433
          %5722 = vst [vmem:[#allocation8 + $0x708] sm:$0xff] %v5434
          %5723 = vst [vmem:[#allocation8 + $0x710] sm:$0xff] %v5435
          %5724 = vst [vmem:[#allocation8 + $0x718] sm:$0xff] %v5436
          %5725 = vst [vmem:[#allocation8 + $0x720] sm:$0xff] %v5437
          %5726 = vst [vmem:[#allocation8 + $0x728] sm:$0xff] %v5438
          %5727 = vst [vmem:[#allocation8 + $0x730] sm:$0xff] %v5439
          %5728 = vst [vmem:[#allocation8 + $0x738] sm:$0xff] %v5440
          %5729 = vst [vmem:[#allocation8 + $0x740] sm:$0xff] %v5441
          %5730 = vst [vmem:[#allocation8 + $0x748] sm:$0xff] %v5442
          %5731 = vst [vmem:[#allocation8 + $0x750] sm:$0xff] %v5443
          %5732 = vst [vmem:[#allocation8 + $0x758] sm:$0xff] %v5444
          %5733 = vst [vmem:[#allocation8 + $0x760] sm:$0xff] %v5445
          %5734 = vst [vmem:[#allocation8 + $0x768] sm:$0xff] %v5446
          %5735 = vst [vmem:[#allocation8 + $0x770] sm:$0xff] %v5447
          %5736 = vst [vmem:[#allocation8 + $0x778] sm:$0xff] %v5448
          %5737 = vst [vmem:[#allocation8 + $0x780] sm:$0xff] %v5449
          %5738 = vst [vmem:[#allocation8 + $0x788] sm:$0xff] %v5450
          %5739 = vst [vmem:[#allocation8 + $0x790] sm:$0xff] %v5451
          %5740 = vst [vmem:[#allocation8 + $0x798] sm:$0xff] %v5452
          %5741 = vst [vmem:[#allocation8 + $0x7a0] sm:$0xff] %v5453
          %5742 = vst [vmem:[#allocation8 + $0x7a8] sm:$0xff] %v5454
          %5743 = vst [vmem:[#allocation8 + $0x7b0] sm:$0xff] %v5455
          %5744 = vst [vmem:[#allocation8 + $0x7b8] sm:$0xff] %v5456
          %5745 = vst [vmem:[#allocation8 + $0x7c0] sm:$0xff] %v5457
          %5746 = vst [vmem:[#allocation8 + $0x7c8] sm:$0xff] %v5458
          %5747 = vst [vmem:[#allocation8 + $0x7d0] sm:$0xff] %v5459
          %5748 = vst [vmem:[#allocation8 + $0x7d8] sm:$0xff] %v5460
          %5749 = vst [vmem:[#allocation8 + $0x7e0] sm:$0xff] %v5461
          %5750 = vst [vmem:[#allocation8 + $0x7e8] sm:$0xff] %v5462
          %5751 = vst [vmem:[#allocation8 + $0x7f0] sm:$0xff] %v5463
          %5752 = vst [vmem:[#allocation8 + $0x7f8] sm:$0xff] %v5464
          %5753 = vst [vmem:[#allocation8 + $0x800] sm:$0xff] %v5465
          %5754 = vst [vmem:[#allocation8 + $0x808] sm:$0xff] %v5466
          %5755 = vst [vmem:[#allocation8 + $0x810] sm:$0xff] %v5467
          %5756 = vst [vmem:[#allocation8 + $0x818] sm:$0xff] %v5468
          %5757 = vst [vmem:[#allocation8 + $0x820] sm:$0xff] %v5469
          %5758 = vst [vmem:[#allocation8 + $0x828] sm:$0xff] %v5470
          %5759 = vst [vmem:[#allocation8 + $0x830] sm:$0xff] %v5471
          %5760 = vst [vmem:[#allocation8 + $0x838] sm:$0xff] %v5472
          %5761 = vst [vmem:[#allocation8 + $0x840] sm:$0xff] %v5473
          %5762 = vst [vmem:[#allocation8 + $0x848] sm:$0xff] %v5474
          %5763 = vst [vmem:[#allocation8 + $0x850] sm:$0xff] %v5475
          %5764 = vst [vmem:[#allocation8 + $0x858] sm:$0xff] %v5476
          %5765 = vst [vmem:[#allocation8 + $0x860] sm:$0xff] %v5477
          %5766 = vst [vmem:[#allocation8 + $0x868] sm:$0xff] %v5478
          %5767 = vst [vmem:[#allocation8 + $0x870] sm:$0xff] %v5479
          %5768 = vst [vmem:[#allocation8 + $0x878] sm:$0xff] %v5480
          %5769 = vst [vmem:[#allocation8 + $0x880] sm:$0xff] %v5481
          %5770 = vst [vmem:[#allocation8 + $0x888] sm:$0xff] %v5482
          %5771 = vst [vmem:[#allocation8 + $0x890] sm:$0xff] %v5483
          %5772 = vst [vmem:[#allocation8 + $0x898] sm:$0xff] %v5484
          %5773 = vst [vmem:[#allocation8 + $0x8a0] sm:$0xff] %v5485
          %5774 = vst [vmem:[#allocation8 + $0x8a8] sm:$0xff] %v5486
          %5775 = vst [vmem:[#allocation8 + $0x8b0] sm:$0xff] %v5487
          %5776 = vst [vmem:[#allocation8 + $0x8b8] sm:$0xff] %v5488
          %5777 = vst [vmem:[#allocation8 + $0x8c0] sm:$0xff] %v5489
          %5778 = vst [vmem:[#allocation8 + $0x8c8] sm:$0xff] %v5490
          %5779 = vst [vmem:[#allocation8 + $0x8d0] sm:$0xff] %v5491
          %5780 = vst [vmem:[#allocation8 + $0x8d8] sm:$0xff] %v5492
          %5781 = vst [vmem:[#allocation8 + $0x8e0] sm:$0xff] %v5493
          %5782 = vst [vmem:[#allocation8 + $0x8e8] sm:$0xff] %v5494
          %5783 = vst [vmem:[#allocation8 + $0x8f0] sm:$0xff] %v5495
          %5784 = vst [vmem:[#allocation8 + $0x8f8] sm:$0xff] %v5496
        $region52: #{tpu_custom_call.1} parent=31 // pred_fallthru
          _
        // Predicated region
        $region53: #{tpu_custom_call.1} parent=31 // pred_check
          %p5785 = pneg %p131
        $region54: #{tpu_custom_call.1} parent=31 // pred_check_branch
          %5787 = sbr.rel (%p5785) target = $region56
        $region55: #{tpu_custom_call.1} parent=31 // pred_region
          %s5788 = smul.u32 6, %s25
          %s5790 = ssub.s32 36864, 36864
          %5791 = vsyncadd [#allocation4], %s5790
          %s5792 = smul.addr %s5788, 128
          %s5793 = scalar_lea.hbm %s3, %s5792
          %s5794 = sshll.u32 [#allocation8], 4
          %s5795 = int_to_ptr.vmem [resolvable:$true] %s5794
          %5800 = dma.vmem_to_hbm [thread:$0]  %s5795, 36864, %s5793, [#allocation4], 768, 768, 48
        $region56: #{tpu_custom_call.1} parent=31 // pred_fallthru
          _
        // Predicated region
        $region57: #{tpu_custom_call.1} parent=31 // pred_check
          %p5801 = pneg %p131
        $region58: #{tpu_custom_call.1} parent=31 // pred_check_branch
          %5803 = sbr.rel (%p5801) target = $region60
        $region59: #{tpu_custom_call.1} parent=31 // pred_region
          %5804 = dma.done [#allocation4], 36864
        $region60: #{tpu_custom_call.1} parent=31 // pred_fallthru
          _
      $region32: #{tpu_custom_call.1} parent=5 // pred_fallthru
        _
      %p5805 = scmp.le.s32.totalorder 2, %s16
      // Predicated region
      $region61: #{tpu_custom_call.1} parent=5 // pred_check
        %p5806 = pneg %p5805
      $region62: #{tpu_custom_call.1} parent=5 // pred_check_branch
        %5808 = sbr.rel (%p5806) target = $region64
      $region63: #{tpu_custom_call.1} parent=5 // pred_region
        %s5809 = ssub.s32 %s16, 2
      $region64: #{tpu_custom_call.1} parent=5 // pred_fallthru
        _
    $region6: #{tpu_custom_call.1} parent=1 // loop_footer
      %s20 = sadd.s32 1, %s16
    $region7: #{tpu_custom_call.1} parent=1 // loop_footer_branch
      %15 = sbr.rel target = $region3
    $region8: #{tpu_custom_call.1} parent=1 // loop_exit
      _
    %5810 = vsyncpa [#allocation3], 1
    %s5811 = scalar_lea.sflag [#allocation3], 1
    %5812 = vsyncpa %s5811, 1
    %5813 = vsyncpa [#allocation6], 1
    %s5814 = scalar_lea.sflag [#allocation6], 1
    %5815 = vsyncpa %s5814, 1
    %5816 = vsyncpa [#allocation4], 1
    %s5817 = scalar_lea.sflag [#allocation4], 1
    %5818 = vsyncpa %s5817, 1

</llo_original>
